<compile_context>
chip_gen: v5e
topology: v5e:2x2
jax: 0.10.0
libtpu: 0.0.40
codegen_flags: <defaults>
</compile_context>

<pallas_src>
import functools

import numpy as np
import jax
import jax.numpy as jnp
from jax.experimental import pallas as pl
from jax.experimental.pallas import tpu as pltpu


def _round_up(n, m):
    return ((n + m - 1) // m) * m


# --------------------------------------------------------------------------------------
# Fused kernel: conv1+pool -> conv2+pool -> fc1 -> fc2 -> softmax for `tb` images
# --------------------------------------------------------------------------------------
def _facemasknet_kernel(patches_ref, w1_ref, b1_ref, w2_ref, b2_ref,
                        wfc1_ref, bfc1_ref, wfc2_ref, bfc2_ref,
                        out_ref, a1pad_scr, im2col_scr, y2_scr, *, tb, matmul_dtype):
    """Per grid step (batch-major layouts everywhere):
      patches_ref: (tb, 8, 8, 16)   4x4 stride-2 input window per pooled conv1 position
      w1_ref:      (16, 128)        conv1 weights; 4 pool-position column groups of 32 ch
      b1_ref:      (1, 128)         conv1 bias tiled over the 4 groups
      w2_ref:      (288, 64)        conv2 weights, rows ordered (kh, kw, ci)
      b2_ref:      (1, 64)
      wfc1_ref:    (1024, 64)       fc1 weights, rows ordered (ho*4+wo, c) (flatten folded in)
      bfc1_ref:    (1, 64)
      wfc2_ref:    (64, 2)
      bfc2_ref:    (1, 2)
      out_ref:     (tb, 2)          softmax probabilities
      a1pad_scr:   (tb, 10, 10, 32) VMEM scratch: zero-padded conv1+pool activation
      im2col_scr:  (tb*64, 288)     VMEM scratch: conv2 im2col LHS
      y2_scr:      (tb, 8, 8, 64)   VMEM scratch: conv2 + relu activation
    """
    f32 = jnp.float32
    md = matmul_dtype

    # ---- conv1 (+bias, ReLU) at all 4 pool positions in ONE matmul; pool = max over the
    # four 32-channel column groups (ReLU commutes with max-pool). ----
    p = patches_ref[...].reshape(tb * 64, 16)                        # rows = (b, hp, wp)
    y1 = jnp.dot(p, w1_ref[...], preferred_element_type=f32) + b1_ref[...]
    y1 = jnp.maximum(y1, 0.0)
    a1 = jnp.maximum(jnp.maximum(y1[:, 0:32], y1[:, 32:64]),
                     jnp.maximum(y1[:, 64:96], y1[:, 96:128]))       # (64*tb, 32)

    # ---- stage a1 into the padded scratch; zero only the 1-element border (every step,
    # so the kernel is valid under "parallel" grid semantics on multi-TC chips). ----
    zrow = jnp.zeros((tb, 1, 10, 32), f32)
    zcol = jnp.zeros((tb, 8, 1, 32), f32)
    a1pad_scr[:, 0:1, :, :] = zrow
    a1pad_scr[:, 9:10, :, :] = zrow
    a1pad_scr[:, 1:9, 0:1, :] = zcol
    a1pad_scr[:, 1:9, 9:10, :] = zcol
    a1pad_scr[:, 1:9, 1:9, :] = a1.reshape(tb, 8, 8, 32)

    # ---- conv2: on-chip im2col (9 shifted reads of the padded activation) packed into a
    # (64*tb, 288) LHS, then ONE matmul with K = 9 taps * 32 channels. ----
    for kh in range(3):
        for kw in range(3):
            t = kh * 3 + kw
            im2col_scr[:, t * 32:(t + 1) * 32] = (
                a1pad_scr[:, kh:kh + 8, kw:kw + 8, :].reshape(tb * 64, 32))
    y2 = jnp.dot(im2col_scr[...].astype(md), w2_ref[...],
                 preferred_element_type=f32) + b2_ref[...]
    y2_scr[...] = jnp.maximum(y2, 0.0).reshape(tb, 8, 8, 64)         # rows = (b, h, w)

    # ---- 2x2 max-pool + NCHW flatten + fc1 fused: pack the 16 pooled (tb, 64) blocks into
    # a lane-dense (tb, 1024) LHS (flatten permutation folded into wfc1) -> ONE matmul. ----
    pooled = []
    for ho in range(4):
        for wo in range(4):
            q00 = y2_scr[:, 2 * ho:2 * ho + 1, 2 * wo:2 * wo + 1, :].reshape(tb, 64)
            q01 = y2_scr[:, 2 * ho:2 * ho + 1, 2 * wo + 1:2 * wo + 2, :].reshape(tb, 64)
            q10 = y2_scr[:, 2 * ho + 1:2 * ho + 2, 2 * wo:2 * wo + 1, :].reshape(tb, 64)
            q11 = y2_scr[:, 2 * ho + 1:2 * ho + 2, 2 * wo + 1:2 * wo + 2, :].reshape(tb, 64)
            pooled.append(jnp.maximum(jnp.maximum(q00, q01), jnp.maximum(q10, q11)))
    feat = jnp.concatenate(pooled, axis=-1)                          # (tb, 1024) lane-dense
    h1 = jnp.dot(feat.astype(md), wfc1_ref[...],
                 preferred_element_type=f32) + bfc1_ref[...]
    h1 = jnp.maximum(h1, 0.0)

    # ---- fc2 + stable softmax (the only HBM write of the whole network). ----
    logits = jnp.dot(h1.astype(md), wfc2_ref[...],
                     preferred_element_type=f32) + bfc2_ref[...]
    m = jnp.max(logits, axis=1, keepdims=True)
    e = jnp.exp(logits - m)
    out_ref[...] = e / jnp.sum(e, axis=1, keepdims=True)


# --------------------------------------------------------------------------------------
# Wrapper: parameter repacking + batch-major patch extraction + single pallas_call
# --------------------------------------------------------------------------------------
def facemasknet_forward(x_nchw, params, *, batch_tile=64, matmul_dtype=jnp.float32):
    """x_nchw: (B, 1, 16, 16); params with conv weights in HWIO, fc weights as (in, out)."""
    w1, b1, w2, b2, wfc1, bfc1, wfc2, bfc2 = params
    B = x_nchw.shape[0]

    # ---- batch-tile selection: big tile to amortize per-step overhead, but at least two
    # grid steps when the batch allows it (v7x has 2 TensorCores). ----
    bp8 = _round_up(max(B, 1), 8)
    tb = max(8, min(_round_up(batch_tile, 8), bp8))
    if tb >= bp8 and bp8 >= 16:
        tb = _round_up(-(-bp8 // 2), 8)
    Bp = _round_up(B, tb)

    # ---- one-time parameter repacking (pure layout plumbing; precompute in production) ----
    # conv1 weight: 16 window taps -> 4 pool-position column groups of 32 output channels.
    blocks = []
    for ph in range(2):
        for pw in range(2):
            blk = jnp.pad(w1[:, :, 0, :], ((ph, 1 - ph), (pw, 1 - pw), (0, 0)))  # (4,4,32)
            blocks.append(blk.reshape(16, 32))
    w1big = jnp.concatenate(blocks, axis=1).astype(matmul_dtype)      # (16, 128)
    b1big = jnp.tile(b1, 4).reshape(1, 128)
    w2r = w2.reshape(288, 64).astype(matmul_dtype)                    # rows = (kh, kw, ci)
    # fc1 rows are NCHW-flat (c*16 + hw); permute to (hw*64 + c) to match the pooled packing.
    wfc1r = (wfc1.reshape(64, 16, 64).transpose(1, 0, 2)
             .reshape(1024, 64).astype(matmul_dtype))
    wfc2c = wfc2.astype(matmul_dtype)

    # ---- batch-major patch extraction: per pooled conv1 position, its 4x4 stride-2 window ----
    xpad = jnp.pad(x_nchw[:, 0], ((0, 0), (1, 1), (1, 1)))            # (B, 18, 18)
    taps = [xpad[:, dh:dh + 16:2, dw:dw + 16:2]
            for dh in range(4) for dw in range(4)]                    # 16 x (B, 8, 8)
    patches = jnp.stack(taps, axis=-1)                                # (B, 8, 8, 16)
    if Bp != B:
        patches = jnp.pad(patches, ((0, Bp - B), (0, 0), (0, 0), (0, 0)))
    patches = patches.astype(matmul_dtype)

    kernel = functools.partial(_facemasknet_kernel, tb=tb, matmul_dtype=matmul_dtype)
    out = pl.pallas_call(
        kernel,
        out_shape=jax.ShapeDtypeStruct((Bp, 2), jnp.float32),
        grid=(Bp // tb,),
        in_specs=[
            pl.BlockSpec((tb, 8, 8, 16), lambda i: (i, 0, 0, 0)),     # patches (batch-tiled)
            pl.BlockSpec((16, 128), lambda i: (0, 0)),                # w1big
            pl.BlockSpec((1, 128), lambda i: (0, 0)),                 # b1big
            pl.BlockSpec((288, 64), lambda i: (0, 0)),                # w2 (im2col-packed)
            pl.BlockSpec((1, 64), lambda i: (0, 0)),                  # b2
            pl.BlockSpec((1024, 64), lambda i: (0, 0)),               # wfc1 (flatten folded)
            pl.BlockSpec((1, 64), lambda i: (0, 0)),                  # bfc1
            pl.BlockSpec((64, 2), lambda i: (0, 0)),                  # wfc2
            pl.BlockSpec((1, 2), lambda i: (0, 0)),                   # bfc2
        ],
        out_specs=pl.BlockSpec((tb, 2), lambda i: (i, 0)),
        scratch_shapes=[
            pltpu.VMEM((tb, 10, 10, 32), jnp.float32),                # padded conv1+pool act.
            pltpu.VMEM((tb * 64, 288), jnp.float32),                  # conv2 im2col LHS
            pltpu.VMEM((tb, 8, 8, 64), jnp.float32),                  # conv2 activation
        ],
        compiler_params=pltpu.CompilerParams(
            dimension_semantics=("parallel",),
            vmem_limit_bytes=48 * 1024 * 1024),
    )(patches, w1big, b1big, w2r, b2.reshape(1, 64), wfc1r,
      bfc1.reshape(1, 64), wfc2c, bfc2.reshape(1, 2))
    return out[:B]


# --------------------------------------------------------------------------------------
# Pure-JAX reference (correctness check)
# --------------------------------------------------------------------------------------
def facemasknet_reference(x_nchw, params):
    w1, b1, w2, b2, wfc1, bfc1, wfc2, bfc2 = params

    def conv(x, w_hwio, bias):
        y = jax.lax.conv_general_dilated(
            x, w_hwio, window_strides=(1, 1), padding="SAME",
            dimension_numbers=("NHWC", "HWIO", "NHWC"))
        return y + bias.reshape(1, 1, 1, -1)

    def pool(x):
        return jax.lax.reduce_window(
            x, -jnp.inf, jax.lax.max, (1, 2, 2, 1), (1, 2, 2, 1), "VALID")

    x = jnp.transpose(x_nchw, (0, 2, 3, 1))
    h = pool(jax.nn.relu(conv(x, w1, b1)))
    h = pool(jax.nn.relu(conv(h, w2, b2)))
    feat = jnp.transpose(h, (0, 3, 1, 2)).reshape(x.shape[0], -1)    # NCHW flatten
    h = jax.nn.relu(feat @ wfc1 + bfc1)
    return jax.nn.softmax(h @ wfc2 + bfc2, axis=1)


# --------------------------------------------------------------------------------------
if __name__ == "__main__":
    key = jax.random.PRNGKey(0)
    ks = jax.random.split(key, 9)

    # synthetic parameters (conv weights stored HWIO; fc weights stored (in, out))
    w1 = jax.random.normal(ks[1], (3, 3, 1, 32), jnp.float32) * 0.1
    b1 = jax.random.normal(ks[2], (32,), jnp.float32) * 0.1
    w2 = jax.random.normal(ks[3], (3, 3, 32, 64), jnp.float32) * 0.05
    b2 = jax.random.normal(ks[4], (64,), jnp.float32) * 0.1
    wfc1 = jax.random.normal(ks[5], (4 * 4 * 64, 64), jnp.float32) * 0.02
    bfc1 = jax.random.normal(ks[6], (64,), jnp.float32) * 0.1
    wfc2 = jax.random.normal(ks[7], (64, 2), jnp.float32) * 0.1
    bfc2 = jax.random.normal(ks[8], (2,), jnp.float32) * 0.1
    params = (w1, b1, w2, b2, wfc1, bfc1, wfc2, bfc2)

    fwd = jax.jit(facemasknet_forward)

    # primary test: batch = 2, 1-channel 16x16 images (as implied by fc1 = 4*4*64)
    B = 2
    x = jax.random.normal(ks[0], (B, 1, 16, 16), dtype=jnp.float32)
    out = jax.block_until_ready(fwd(x, params))
    ref = facemasknet_reference(x, params)
    np.testing.assert_allclose(np.asarray(out), np.asarray(ref), rtol=1e-4, atol=1e-5)
    assert out.shape == (B, 2)

    # secondary test: exercises multiple grid steps + batch padding
    B2 = 11
    x2 = jax.random.normal(jax.random.PRNGKey(1), (B2, 1, 16, 16), dtype=jnp.float32)
    out2 = jax.block_until_ready(fwd(x2, params))
    ref2 = facemasknet_reference(x2, params)
    np.testing.assert_allclose(np.asarray(out2), np.asarray(ref2), rtol=1e-4, atol=1e-5)
    assert out2.shape == (B2, 2)

    print("KERNEL_OK")
</pallas_src>

<mosaic_0001>
module attributes {stable_mosaic.version = 11 : i64} {
  func.func @_facemasknet_kernel(%arg0: i32, %arg1: memref<8x8x8x16xf32, #tpu.memory_space<vmem>>, %arg2: memref<16x128xf32, #tpu.memory_space<vmem>>, %arg3: memref<1x128xf32, #tpu.memory_space<vmem>>, %arg4: memref<288x64xf32, #tpu.memory_space<vmem>>, %arg5: memref<1x64xf32, #tpu.memory_space<vmem>>, %arg6: memref<1024x64xf32, #tpu.memory_space<vmem>>, %arg7: memref<1x64xf32, #tpu.memory_space<vmem>>, %arg8: memref<64x2xf32, #tpu.memory_space<vmem>>, %arg9: memref<1x2xf32, #tpu.memory_space<vmem>>, %arg10: memref<8x2xf32, #tpu.memory_space<vmem>>, %arg11: memref<8x10x10x32xf32, #tpu.memory_space<vmem>>, %arg12: memref<512x288xf32, #tpu.memory_space<vmem>>, %arg13: memref<8x8x8x64xf32, #tpu.memory_space<vmem>>) attributes {dimension_semantics = [#tpu.dimension_semantics<parallel>], iteration_bounds = array<i64: 1>, scalar_prefetch = 0 : i64, scratch_operands = 3 : i64, tpu.core_type = #tpu.core_type<tc>, window_params = [{transform_indices = @transform_0, window_bounds = array<i64: 8, 8, 8, 16>}, {pipeline_mode = #tpu.pipeline_mode<synchronous>, transform_indices = @transform_1, window_bounds = array<i64: 16, 128>}, {pipeline_mode = #tpu.pipeline_mode<synchronous>, transform_indices = @transform_2, window_bounds = array<i64: 1, 128>}, {pipeline_mode = #tpu.pipeline_mode<synchronous>, transform_indices = @transform_3, window_bounds = array<i64: 288, 64>}, {pipeline_mode = #tpu.pipeline_mode<synchronous>, transform_indices = @transform_4, window_bounds = array<i64: 1, 64>}, {pipeline_mode = #tpu.pipeline_mode<synchronous>, transform_indices = @transform_5, window_bounds = array<i64: 1024, 64>}, {pipeline_mode = #tpu.pipeline_mode<synchronous>, transform_indices = @transform_6, window_bounds = array<i64: 1, 64>}, {pipeline_mode = #tpu.pipeline_mode<synchronous>, transform_indices = @transform_7, window_bounds = array<i64: 64, 2>}, {pipeline_mode = #tpu.pipeline_mode<synchronous>, transform_indices = @transform_8, window_bounds = array<i64: 1, 2>}, {transform_indices = @transform_9, window_bounds = array<i64: 8, 2>}]} {
    %c0 = arith.constant 0 : index
    %c0_0 = arith.constant 0 : index
    %c0_1 = arith.constant 0 : index
    %c0_2 = arith.constant 0 : index
    %0 = vector.load %arg1[%c0, %c0_0, %c0_1, %c0_2] : memref<8x8x8x16xf32, #tpu.memory_space<vmem>>, vector<8x8x8x16xf32>
    %1 = vector.shape_cast %0 : vector<8x8x8x16xf32> to vector<512x16xf32>
    %c0_3 = arith.constant 0 : index
    %c0_4 = arith.constant 0 : index
    %2 = vector.load %arg2[%c0_3, %c0_4] : memref<16x128xf32, #tpu.memory_space<vmem>>, vector<16x128xf32>
    %cst = arith.constant dense<0.000000e+00> : vector<512x128xf32>
    %3 = tpu.matmul %1, %2, %cst {dimension_numbers = #tpu.dot_dimension_numbers<[1], [0], [0], [1], [0, 0, 1, 1], [], []>} : vector<512x16xf32>, vector<16x128xf32>, vector<512x128xf32> -> vector<512x128xf32>
    %c0_5 = arith.constant 0 : index
    %c0_6 = arith.constant 0 : index
    %4 = vector.load %arg3[%c0_5, %c0_6] : memref<1x128xf32, #tpu.memory_space<vmem>>, vector<1x128xf32>
    %5 = vector.broadcast %4 : vector<1x128xf32> to vector<512x128xf32>
    %6 = arith.addf %3, %5 : vector<512x128xf32>
    %cst_7 = arith.constant 0.000000e+00 : f32
    %7 = vector.broadcast %cst_7 : f32 to vector<512x128xf32>
    %8 = arith.maximumf %6, %7 : vector<512x128xf32>
    %9 = vector.extract_strided_slice %8 {offsets = [0, 0], sizes = [512, 32], strides = [1, 1]} : vector<512x128xf32> to vector<512x32xf32>
    %10 = vector.extract_strided_slice %8 {offsets = [0, 32], sizes = [512, 32], strides = [1, 1]} : vector<512x128xf32> to vector<512x32xf32>
    %11 = arith.maximumf %9, %10 : vector<512x32xf32>
    %12 = vector.extract_strided_slice %8 {offsets = [0, 64], sizes = [512, 32], strides = [1, 1]} : vector<512x128xf32> to vector<512x32xf32>
    %13 = vector.extract_strided_slice %8 {offsets = [0, 96], sizes = [512, 32], strides = [1, 1]} : vector<512x128xf32> to vector<512x32xf32>
    %14 = arith.maximumf %12, %13 : vector<512x32xf32>
    %15 = arith.maximumf %11, %14 : vector<512x32xf32>
    %cst_8 = arith.constant 0.000000e+00 : f32
    %16 = vector.broadcast %cst_8 : f32 to vector<8x1x10x32xf32>
    %cst_9 = arith.constant 0.000000e+00 : f32
    %17 = vector.broadcast %cst_9 : f32 to vector<8x8x1x32xf32>
    %c0_10 = arith.constant 0 : index
    %c0_11 = arith.constant 0 : index
    %c0_12 = arith.constant 0 : index
    %c0_13 = arith.constant 0 : index
    %18 = vector.load %arg11[%c0_10, %c0_11, %c0_12, %c0_13] : memref<8x10x10x32xf32, #tpu.memory_space<vmem>>, vector<8x1x10x32xf32>
    tpu.vector_store %arg11[%c0_10, %c0_11, %c0_12, %c0_13], %16 {strides = array<i32>} : memref<8x10x10x32xf32, #tpu.memory_space<vmem>>, vector<8x1x10x32xf32>,
    %c0_14 = arith.constant 0 : index
    %c9 = arith.constant 9 : index
    %c0_15 = arith.constant 0 : index
    %c0_16 = arith.constant 0 : index
    %19 = vector.load %arg11[%c0_14, %c9, %c0_15, %c0_16] : memref<8x10x10x32xf32, #tpu.memory_space<vmem>>, vector<8x1x10x32xf32>
    tpu.vector_store %arg11[%c0_14, %c9, %c0_15, %c0_16], %16 {strides = array<i32>} : memref<8x10x10x32xf32, #tpu.memory_space<vmem>>, vector<8x1x10x32xf32>,
    %c0_17 = arith.constant 0 : index
    %c1 = arith.constant 1 : index
    %c0_18 = arith.constant 0 : index
    %c0_19 = arith.constant 0 : index
    %20 = vector.load %arg11[%c0_17, %c1, %c0_18, %c0_19] : memref<8x10x10x32xf32, #tpu.memory_space<vmem>>, vector<8x8x1x32xf32>
    tpu.vector_store %arg11[%c0_17, %c1, %c0_18, %c0_19], %17 {strides = array<i32>} : memref<8x10x10x32xf32, #tpu.memory_space<vmem>>, vector<8x8x1x32xf32>,
    %c0_20 = arith.constant 0 : index
    %c1_21 = arith.constant 1 : index
    %c9_22 = arith.constant 9 : index
    %c0_23 = arith.constant 0 : index
    %21 = vector.load %arg11[%c0_20, %c1_21, %c9_22, %c0_23] : memref<8x10x10x32xf32, #tpu.memory_space<vmem>>, vector<8x8x1x32xf32>
    tpu.vector_store %arg11[%c0_20, %c1_21, %c9_22, %c0_23], %17 {strides = array<i32>} : memref<8x10x10x32xf32, #tpu.memory_space<vmem>>, vector<8x8x1x32xf32>,
    %22 = vector.shape_cast %15 : vector<512x32xf32> to vector<8x8x8x32xf32>
    %c0_24 = arith.constant 0 : index
    %c1_25 = arith.constant 1 : index
    %c1_26 = arith.constant 1 : index
    %c0_27 = arith.constant 0 : index
    %23 = vector.load %arg11[%c0_24, %c1_25, %c1_26, %c0_27] : memref<8x10x10x32xf32, #tpu.memory_space<vmem>>, vector<8x8x8x32xf32>
    tpu.vector_store %arg11[%c0_24, %c1_25, %c1_26, %c0_27], %22 {strides = array<i32>} : memref<8x10x10x32xf32, #tpu.memory_space<vmem>>, vector<8x8x8x32xf32>,
    %c0_28 = arith.constant 0 : index
    %c0_29 = arith.constant 0 : index
    %c0_30 = arith.constant 0 : index
    %c0_31 = arith.constant 0 : index
    %24 = vector.load %arg11[%c0_28, %c0_29, %c0_30, %c0_31] : memref<8x10x10x32xf32, #tpu.memory_space<vmem>>, vector<8x8x8x32xf32>
    %25 = vector.shape_cast %24 : vector<8x8x8x32xf32> to vector<512x32xf32>
    %c0_32 = arith.constant 0 : index
    %c0_33 = arith.constant 0 : index
    %26 = vector.load %arg12[%c0_32, %c0_33] : memref<512x288xf32, #tpu.memory_space<vmem>>, vector<512x32xf32>
    tpu.vector_store %arg12[%c0_32, %c0_33], %25 {strides = array<i32>} : memref<512x288xf32, #tpu.memory_space<vmem>>, vector<512x32xf32>,
    %c0_34 = arith.constant 0 : index
    %c0_35 = arith.constant 0 : index
    %c1_36 = arith.constant 1 : index
    %c0_37 = arith.constant 0 : index
    %27 = vector.load %arg11[%c0_34, %c0_35, %c1_36, %c0_37] : memref<8x10x10x32xf32, #tpu.memory_space<vmem>>, vector<8x8x8x32xf32>
    %28 = vector.shape_cast %27 : vector<8x8x8x32xf32> to vector<512x32xf32>
    %c0_38 = arith.constant 0 : index
    %c32 = arith.constant 32 : index
    %29 = vector.load %arg12[%c0_38, %c32] : memref<512x288xf32, #tpu.memory_space<vmem>>, vector<512x32xf32>
    tpu.vector_store %arg12[%c0_38, %c32], %28 {strides = array<i32>} : memref<512x288xf32, #tpu.memory_space<vmem>>, vector<512x32xf32>,
    %c0_39 = arith.constant 0 : index
    %c0_40 = arith.constant 0 : index
    %c2 = arith.constant 2 : index
    %c0_41 = arith.constant 0 : index
    %30 = vector.load %arg11[%c0_39, %c0_40, %c2, %c0_41] : memref<8x10x10x32xf32, #tpu.memory_space<vmem>>, vector<8x8x8x32xf32>
    %31 = vector.shape_cast %30 : vector<8x8x8x32xf32> to vector<512x32xf32>
    %c0_42 = arith.constant 0 : index
    %c64 = arith.constant 64 : index
    %32 = vector.load %arg12[%c0_42, %c64] : memref<512x288xf32, #tpu.memory_space<vmem>>, vector<512x32xf32>
    tpu.vector_store %arg12[%c0_42, %c64], %31 {strides = array<i32>} : memref<512x288xf32, #tpu.memory_space<vmem>>, vector<512x32xf32>,
    %c0_43 = arith.constant 0 : index
    %c1_44 = arith.constant 1 : index
    %c0_45 = arith.constant 0 : index
    %c0_46 = arith.constant 0 : index
    %33 = vector.load %arg11[%c0_43, %c1_44, %c0_45, %c0_46] : memref<8x10x10x32xf32, #tpu.memory_space<vmem>>, vector<8x8x8x32xf32>
    %34 = vector.shape_cast %33 : vector<8x8x8x32xf32> to vector<512x32xf32>
    %c0_47 = arith.constant 0 : index
    %c96 = arith.constant 96 : index
    %35 = vector.load %arg12[%c0_47, %c96] : memref<512x288xf32, #tpu.memory_space<vmem>>, vector<512x32xf32>
    tpu.vector_store %arg12[%c0_47, %c96], %34 {strides = array<i32>} : memref<512x288xf32, #tpu.memory_space<vmem>>, vector<512x32xf32>,
    %c0_48 = arith.constant 0 : index
    %c1_49 = arith.constant 1 : index
    %c1_50 = arith.constant 1 : index
    %c0_51 = arith.constant 0 : index
    %36 = vector.load %arg11[%c0_48, %c1_49, %c1_50, %c0_51] : memref<8x10x10x32xf32, #tpu.memory_space<vmem>>, vector<8x8x8x32xf32>
    %37 = vector.shape_cast %36 : vector<8x8x8x32xf32> to vector<512x32xf32>
    %c0_52 = arith.constant 0 : index
    %c128 = arith.constant 128 : index
    %38 = vector.load %arg12[%c0_52, %c128] : memref<512x288xf32, #tpu.memory_space<vmem>>, vector<512x32xf32>
    tpu.vector_store %arg12[%c0_52, %c128], %37 {strides = array<i32>} : memref<512x288xf32, #tpu.memory_space<vmem>>, vector<512x32xf32>,
    %c0_53 = arith.constant 0 : index
    %c1_54 = arith.constant 1 : index
    %c2_55 = arith.constant 2 : index
    %c0_56 = arith.constant 0 : index
    %39 = vector.load %arg11[%c0_53, %c1_54, %c2_55, %c0_56] : memref<8x10x10x32xf32, #tpu.memory_space<vmem>>, vector<8x8x8x32xf32>
    %40 = vector.shape_cast %39 : vector<8x8x8x32xf32> to vector<512x32xf32>
    %c0_57 = arith.constant 0 : index
    %c160 = arith.constant 160 : index
    %41 = vector.load %arg12[%c0_57, %c160] : memref<512x288xf32, #tpu.memory_space<vmem>>, vector<512x32xf32>
    tpu.vector_store %arg12[%c0_57, %c160], %40 {strides = array<i32>} : memref<512x288xf32, #tpu.memory_space<vmem>>, vector<512x32xf32>,
    %c0_58 = arith.constant 0 : index
    %c2_59 = arith.constant 2 : index
    %c0_60 = arith.constant 0 : index
    %c0_61 = arith.constant 0 : index
    %42 = vector.load %arg11[%c0_58, %c2_59, %c0_60, %c0_61] : memref<8x10x10x32xf32, #tpu.memory_space<vmem>>, vector<8x8x8x32xf32>
    %43 = vector.shape_cast %42 : vector<8x8x8x32xf32> to vector<512x32xf32>
    %c0_62 = arith.constant 0 : index
    %c192 = arith.constant 192 : index
    %44 = vector.load %arg12[%c0_62, %c192] : memref<512x288xf32, #tpu.memory_space<vmem>>, vector<512x32xf32>
    tpu.vector_store %arg12[%c0_62, %c192], %43 {strides = array<i32>} : memref<512x288xf32, #tpu.memory_space<vmem>>, vector<512x32xf32>,
    %c0_63 = arith.constant 0 : index
    %c2_64 = arith.constant 2 : index
    %c1_65 = arith.constant 1 : index
    %c0_66 = arith.constant 0 : index
    %45 = vector.load %arg11[%c0_63, %c2_64, %c1_65, %c0_66] : memref<8x10x10x32xf32, #tpu.memory_space<vmem>>, vector<8x8x8x32xf32>
    %46 = vector.shape_cast %45 : vector<8x8x8x32xf32> to vector<512x32xf32>
    %c0_67 = arith.constant 0 : index
    %c224 = arith.constant 224 : index
    %47 = vector.load %arg12[%c0_67, %c224] : memref<512x288xf32, #tpu.memory_space<vmem>>, vector<512x32xf32>
    tpu.vector_store %arg12[%c0_67, %c224], %46 {strides = array<i32>} : memref<512x288xf32, #tpu.memory_space<vmem>>, vector<512x32xf32>,
    %c0_68 = arith.constant 0 : index
    %c2_69 = arith.constant 2 : index
    %c2_70 = arith.constant 2 : index
    %c0_71 = arith.constant 0 : index
    %48 = vector.load %arg11[%c0_68, %c2_69, %c2_70, %c0_71] : memref<8x10x10x32xf32, #tpu.memory_space<vmem>>, vector<8x8x8x32xf32>
    %49 = vector.shape_cast %48 : vector<8x8x8x32xf32> to vector<512x32xf32>
    %c0_72 = arith.constant 0 : index
    %c256 = arith.constant 256 : index
    %50 = vector.load %arg12[%c0_72, %c256] : memref<512x288xf32, #tpu.memory_space<vmem>>, vector<512x32xf32>
    tpu.vector_store %arg12[%c0_72, %c256], %49 {strides = array<i32>} : memref<512x288xf32, #tpu.memory_space<vmem>>, vector<512x32xf32>,
    %c0_73 = arith.constant 0 : index
    %c0_74 = arith.constant 0 : index
    %51 = vector.load %arg12[%c0_73, %c0_74] : memref<512x288xf32, #tpu.memory_space<vmem>>, vector<512x288xf32>
    %c0_75 = arith.constant 0 : index
    %c0_76 = arith.constant 0 : index
    %52 = vector.load %arg4[%c0_75, %c0_76] : memref<288x64xf32, #tpu.memory_space<vmem>>, vector<288x64xf32>
    %cst_77 = arith.constant dense<0.000000e+00> : vector<512x64xf32>
    %53 = tpu.matmul %51, %52, %cst_77 {dimension_numbers = #tpu.dot_dimension_numbers<[1], [0], [0], [1], [0, 0, 1, 1], [], []>} : vector<512x288xf32>, vector<288x64xf32>, vector<512x64xf32> -> vector<512x64xf32>
    %c0_78 = arith.constant 0 : index
    %c0_79 = arith.constant 0 : index
    %54 = vector.load %arg5[%c0_78, %c0_79] : memref<1x64xf32, #tpu.memory_space<vmem>>, vector<1x64xf32>
    %55 = vector.broadcast %54 : vector<1x64xf32> to vector<512x64xf32>
    %56 = arith.addf %53, %55 : vector<512x64xf32>
    %cst_80 = arith.constant 0.000000e+00 : f32
    %57 = vector.broadcast %cst_80 : f32 to vector<512x64xf32>
    %58 = arith.maximumf %56, %57 : vector<512x64xf32>
    %59 = vector.shape_cast %58 : vector<512x64xf32> to vector<8x8x8x64xf32>
    %c0_81 = arith.constant 0 : index
    %c0_82 = arith.constant 0 : index
    %c0_83 = arith.constant 0 : index
    %c0_84 = arith.constant 0 : index
    %60 = vector.load %arg13[%c0_81, %c0_82, %c0_83, %c0_84] : memref<8x8x8x64xf32, #tpu.memory_space<vmem>>, vector<8x8x8x64xf32>
    tpu.vector_store %arg13[%c0_81, %c0_82, %c0_83, %c0_84], %59 {strides = array<i32>} : memref<8x8x8x64xf32, #tpu.memory_space<vmem>>, vector<8x8x8x64xf32>,
    %c0_85 = arith.constant 0 : index
    %c0_86 = arith.constant 0 : index
    %c0_87 = arith.constant 0 : index
    %c0_88 = arith.constant 0 : index
    %61 = vector.load %arg13[%c0_85, %c0_86, %c0_87, %c0_88] : memref<8x8x8x64xf32, #tpu.memory_space<vmem>>, vector<8x1x1x64xf32>
    %62 = vector.shape_cast %61 : vector<8x1x1x64xf32> to vector<8x64xf32>
    %c0_89 = arith.constant 0 : index
    %c0_90 = arith.constant 0 : index
    %c1_91 = arith.constant 1 : index
    %c0_92 = arith.constant 0 : index
    %63 = vector.load %arg13[%c0_89, %c0_90, %c1_91, %c0_92] : memref<8x8x8x64xf32, #tpu.memory_space<vmem>>, vector<8x1x1x64xf32>
    %64 = vector.shape_cast %63 : vector<8x1x1x64xf32> to vector<8x64xf32>
    %c0_93 = arith.constant 0 : index
    %c1_94 = arith.constant 1 : index
    %c0_95 = arith.constant 0 : index
    %c0_96 = arith.constant 0 : index
    %65 = vector.load %arg13[%c0_93, %c1_94, %c0_95, %c0_96] : memref<8x8x8x64xf32, #tpu.memory_space<vmem>>, vector<8x1x1x64xf32>
    %66 = vector.shape_cast %65 : vector<8x1x1x64xf32> to vector<8x64xf32>
    %c0_97 = arith.constant 0 : index
    %c1_98 = arith.constant 1 : index
    %c1_99 = arith.constant 1 : index
    %c0_100 = arith.constant 0 : index
    %67 = vector.load %arg13[%c0_97, %c1_98, %c1_99, %c0_100] : memref<8x8x8x64xf32, #tpu.memory_space<vmem>>, vector<8x1x1x64xf32>
    %68 = vector.shape_cast %67 : vector<8x1x1x64xf32> to vector<8x64xf32>
    %69 = arith.maximumf %62, %64 : vector<8x64xf32>
    %70 = arith.maximumf %66, %68 : vector<8x64xf32>
    %71 = arith.maximumf %69, %70 : vector<8x64xf32>
    %c0_101 = arith.constant 0 : index
    %c0_102 = arith.constant 0 : index
    %c2_103 = arith.constant 2 : index
    %c0_104 = arith.constant 0 : index
    %72 = vector.load %arg13[%c0_101, %c0_102, %c2_103, %c0_104] : memref<8x8x8x64xf32, #tpu.memory_space<vmem>>, vector<8x1x1x64xf32>
    %73 = vector.shape_cast %72 : vector<8x1x1x64xf32> to vector<8x64xf32>
    %c0_105 = arith.constant 0 : index
    %c0_106 = arith.constant 0 : index
    %c3 = arith.constant 3 : index
    %c0_107 = arith.constant 0 : index
    %74 = vector.load %arg13[%c0_105, %c0_106, %c3, %c0_107] : memref<8x8x8x64xf32, #tpu.memory_space<vmem>>, vector<8x1x1x64xf32>
    %75 = vector.shape_cast %74 : vector<8x1x1x64xf32> to vector<8x64xf32>
    %c0_108 = arith.constant 0 : index
    %c1_109 = arith.constant 1 : index
    %c2_110 = arith.constant 2 : index
    %c0_111 = arith.constant 0 : index
    %76 = vector.load %arg13[%c0_108, %c1_109, %c2_110, %c0_111] : memref<8x8x8x64xf32, #tpu.memory_space<vmem>>, vector<8x1x1x64xf32>
    %77 = vector.shape_cast %76 : vector<8x1x1x64xf32> to vector<8x64xf32>
    %c0_112 = arith.constant 0 : index
    %c1_113 = arith.constant 1 : index
    %c3_114 = arith.constant 3 : index
    %c0_115 = arith.constant 0 : index
    %78 = vector.load %arg13[%c0_112, %c1_113, %c3_114, %c0_115] : memref<8x8x8x64xf32, #tpu.memory_space<vmem>>, vector<8x1x1x64xf32>
    %79 = vector.shape_cast %78 : vector<8x1x1x64xf32> to vector<8x64xf32>
    %80 = arith.maximumf %73, %75 : vector<8x64xf32>
    %81 = arith.maximumf %77, %79 : vector<8x64xf32>
    %82 = arith.maximumf %80, %81 : vector<8x64xf32>
    %c0_116 = arith.constant 0 : index
    %c0_117 = arith.constant 0 : index
    %c4 = arith.constant 4 : index
    %c0_118 = arith.constant 0 : index
    %83 = vector.load %arg13[%c0_116, %c0_117, %c4, %c0_118] : memref<8x8x8x64xf32, #tpu.memory_space<vmem>>, vector<8x1x1x64xf32>
    %84 = vector.shape_cast %83 : vector<8x1x1x64xf32> to vector<8x64xf32>
    %c0_119 = arith.constant 0 : index
    %c0_120 = arith.constant 0 : index
    %c5 = arith.constant 5 : index
    %c0_121 = arith.constant 0 : index
    %85 = vector.load %arg13[%c0_119, %c0_120, %c5, %c0_121] : memref<8x8x8x64xf32, #tpu.memory_space<vmem>>, vector<8x1x1x64xf32>
    %86 = vector.shape_cast %85 : vector<8x1x1x64xf32> to vector<8x64xf32>
    %c0_122 = arith.constant 0 : index
    %c1_123 = arith.constant 1 : index
    %c4_124 = arith.constant 4 : index
    %c0_125 = arith.constant 0 : index
    %87 = vector.load %arg13[%c0_122, %c1_123, %c4_124, %c0_125] : memref<8x8x8x64xf32, #tpu.memory_space<vmem>>, vector<8x1x1x64xf32>
    %88 = vector.shape_cast %87 : vector<8x1x1x64xf32> to vector<8x64xf32>
    %c0_126 = arith.constant 0 : index
    %c1_127 = arith.constant 1 : index
    %c5_128 = arith.constant 5 : index
    %c0_129 = arith.constant 0 : index
    %89 = vector.load %arg13[%c0_126, %c1_127, %c5_128, %c0_129] : memref<8x8x8x64xf32, #tpu.memory_space<vmem>>, vector<8x1x1x64xf32>
    %90 = vector.shape_cast %89 : vector<8x1x1x64xf32> to vector<8x64xf32>
    %91 = arith.maximumf %84, %86 : vector<8x64xf32>
    %92 = arith.maximumf %88, %90 : vector<8x64xf32>
    %93 = arith.maximumf %91, %92 : vector<8x64xf32>
    %c0_130 = arith.constant 0 : index
    %c0_131 = arith.constant 0 : index
    %c6 = arith.constant 6 : index
    %c0_132 = arith.constant 0 : index
    %94 = vector.load %arg13[%c0_130, %c0_131, %c6, %c0_132] : memref<8x8x8x64xf32, #tpu.memory_space<vmem>>, vector<8x1x1x64xf32>
    %95 = vector.shape_cast %94 : vector<8x1x1x64xf32> to vector<8x64xf32>
    %c0_133 = arith.constant 0 : index
    %c0_134 = arith.constant 0 : index
    %c7 = arith.constant 7 : index
    %c0_135 = arith.constant 0 : index
    %96 = vector.load %arg13[%c0_133, %c0_134, %c7, %c0_135] : memref<8x8x8x64xf32, #tpu.memory_space<vmem>>, vector<8x1x1x64xf32>
    %97 = vector.shape_cast %96 : vector<8x1x1x64xf32> to vector<8x64xf32>
    %c0_136 = arith.constant 0 : index
    %c1_137 = arith.constant 1 : index
    %c6_138 = arith.constant 6 : index
    %c0_139 = arith.constant 0 : index
    %98 = vector.load %arg13[%c0_136, %c1_137, %c6_138, %c0_139] : memref<8x8x8x64xf32, #tpu.memory_space<vmem>>, vector<8x1x1x64xf32>
    %99 = vector.shape_cast %98 : vector<8x1x1x64xf32> to vector<8x64xf32>
    %c0_140 = arith.constant 0 : index
    %c1_141 = arith.constant 1 : index
    %c7_142 = arith.constant 7 : index
    %c0_143 = arith.constant 0 : index
    %100 = vector.load %arg13[%c0_140, %c1_141, %c7_142, %c0_143] : memref<8x8x8x64xf32, #tpu.memory_space<vmem>>, vector<8x1x1x64xf32>
    %101 = vector.shape_cast %100 : vector<8x1x1x64xf32> to vector<8x64xf32>
    %102 = arith.maximumf %95, %97 : vector<8x64xf32>
    %103 = arith.maximumf %99, %101 : vector<8x64xf32>
    %104 = arith.maximumf %102, %103 : vector<8x64xf32>
    %c0_144 = arith.constant 0 : index
    %c2_145 = arith.constant 2 : index
    %c0_146 = arith.constant 0 : index
    %c0_147 = arith.constant 0 : index
    %105 = vector.load %arg13[%c0_144, %c2_145, %c0_146, %c0_147] : memref<8x8x8x64xf32, #tpu.memory_space<vmem>>, vector<8x1x1x64xf32>
    %106 = vector.shape_cast %105 : vector<8x1x1x64xf32> to vector<8x64xf32>
    %c0_148 = arith.constant 0 : index
    %c2_149 = arith.constant 2 : index
    %c1_150 = arith.constant 1 : index
    %c0_151 = arith.constant 0 : index
    %107 = vector.load %arg13[%c0_148, %c2_149, %c1_150, %c0_151] : memref<8x8x8x64xf32, #tpu.memory_space<vmem>>, vector<8x1x1x64xf32>
    %108 = vector.shape_cast %107 : vector<8x1x1x64xf32> to vector<8x64xf32>
    %c0_152 = arith.constant 0 : index
    %c3_153 = arith.constant 3 : index
    %c0_154 = arith.constant 0 : index
    %c0_155 = arith.constant 0 : index
    %109 = vector.load %arg13[%c0_152, %c3_153, %c0_154, %c0_155] : memref<8x8x8x64xf32, #tpu.memory_space<vmem>>, vector<8x1x1x64xf32>
    %110 = vector.shape_cast %109 : vector<8x1x1x64xf32> to vector<8x64xf32>
    %c0_156 = arith.constant 0 : index
    %c3_157 = arith.constant 3 : index
    %c1_158 = arith.constant 1 : index
    %c0_159 = arith.constant 0 : index
    %111 = vector.load %arg13[%c0_156, %c3_157, %c1_158, %c0_159] : memref<8x8x8x64xf32, #tpu.memory_space<vmem>>, vector<8x1x1x64xf32>
    %112 = vector.shape_cast %111 : vector<8x1x1x64xf32> to vector<8x64xf32>
    %113 = arith.maximumf %106, %108 : vector<8x64xf32>
    %114 = arith.maximumf %110, %112 : vector<8x64xf32>
    %115 = arith.maximumf %113, %114 : vector<8x64xf32>
    %c0_160 = arith.constant 0 : index
    %c2_161 = arith.constant 2 : index
    %c2_162 = arith.constant 2 : index
    %c0_163 = arith.constant 0 : index
    %116 = vector.load %arg13[%c0_160, %c2_161, %c2_162, %c0_163] : memref<8x8x8x64xf32, #tpu.memory_space<vmem>>, vector<8x1x1x64xf32>
    %117 = vector.shape_cast %116 : vector<8x1x1x64xf32> to vector<8x64xf32>
    %c0_164 = arith.constant 0 : index
    %c2_165 = arith.constant 2 : index
    %c3_166 = arith.constant 3 : index
    %c0_167 = arith.constant 0 : index
    %118 = vector.load %arg13[%c0_164, %c2_165, %c3_166, %c0_167] : memref<8x8x8x64xf32, #tpu.memory_space<vmem>>, vector<8x1x1x64xf32>
    %119 = vector.shape_cast %118 : vector<8x1x1x64xf32> to vector<8x64xf32>
    %c0_168 = arith.constant 0 : index
    %c3_169 = arith.constant 3 : index
    %c2_170 = arith.constant 2 : index
    %c0_171 = arith.constant 0 : index
    %120 = vector.load %arg13[%c0_168, %c3_169, %c2_170, %c0_171] : memref<8x8x8x64xf32, #tpu.memory_space<vmem>>, vector<8x1x1x64xf32>
    %121 = vector.shape_cast %120 : vector<8x1x1x64xf32> to vector<8x64xf32>
    %c0_172 = arith.constant 0 : index
    %c3_173 = arith.constant 3 : index
    %c3_174 = arith.constant 3 : index
    %c0_175 = arith.constant 0 : index
    %122 = vector.load %arg13[%c0_172, %c3_173, %c3_174, %c0_175] : memref<8x8x8x64xf32, #tpu.memory_space<vmem>>, vector<8x1x1x64xf32>
    %123 = vector.shape_cast %122 : vector<8x1x1x64xf32> to vector<8x64xf32>
    %124 = arith.maximumf %117, %119 : vector<8x64xf32>
    %125 = arith.maximumf %121, %123 : vector<8x64xf32>
    %126 = arith.maximumf %124, %125 : vector<8x64xf32>
    %c0_176 = arith.constant 0 : index
    %c2_177 = arith.constant 2 : index
    %c4_178 = arith.constant 4 : index
    %c0_179 = arith.constant 0 : index
    %127 = vector.load %arg13[%c0_176, %c2_177, %c4_178, %c0_179] : memref<8x8x8x64xf32, #tpu.memory_space<vmem>>, vector<8x1x1x64xf32>
    %128 = vector.shape_cast %127 : vector<8x1x1x64xf32> to vector<8x64xf32>
    %c0_180 = arith.constant 0 : index
    %c2_181 = arith.constant 2 : index
    %c5_182 = arith.constant 5 : index
    %c0_183 = arith.constant 0 : index
    %129 = vector.load %arg13[%c0_180, %c2_181, %c5_182, %c0_183] : memref<8x8x8x64xf32, #tpu.memory_space<vmem>>, vector<8x1x1x64xf32>
    %130 = vector.shape_cast %129 : vector<8x1x1x64xf32> to vector<8x64xf32>
    %c0_184 = arith.constant 0 : index
    %c3_185 = arith.constant 3 : index
    %c4_186 = arith.constant 4 : index
    %c0_187 = arith.constant 0 : index
    %131 = vector.load %arg13[%c0_184, %c3_185, %c4_186, %c0_187] : memref<8x8x8x64xf32, #tpu.memory_space<vmem>>, vector<8x1x1x64xf32>
    %132 = vector.shape_cast %131 : vector<8x1x1x64xf32> to vector<8x64xf32>
    %c0_188 = arith.constant 0 : index
    %c3_189 = arith.constant 3 : index
    %c5_190 = arith.constant 5 : index
    %c0_191 = arith.constant 0 : index
    %133 = vector.load %arg13[%c0_188, %c3_189, %c5_190, %c0_191] : memref<8x8x8x64xf32, #tpu.memory_space<vmem>>, vector<8x1x1x64xf32>
    %134 = vector.shape_cast %133 : vector<8x1x1x64xf32> to vector<8x64xf32>
    %135 = arith.maximumf %128, %130 : vector<8x64xf32>
    %136 = arith.maximumf %132, %134 : vector<8x64xf32>
    %137 = arith.maximumf %135, %136 : vector<8x64xf32>
    %c0_192 = arith.constant 0 : index
    %c2_193 = arith.constant 2 : index
    %c6_194 = arith.constant 6 : index
    %c0_195 = arith.constant 0 : index
    %138 = vector.load %arg13[%c0_192, %c2_193, %c6_194, %c0_195] : memref<8x8x8x64xf32, #tpu.memory_space<vmem>>, vector<8x1x1x64xf32>
    %139 = vector.shape_cast %138 : vector<8x1x1x64xf32> to vector<8x64xf32>
    %c0_196 = arith.constant 0 : index
    %c2_197 = arith.constant 2 : index
    %c7_198 = arith.constant 7 : index
    %c0_199 = arith.constant 0 : index
    %140 = vector.load %arg13[%c0_196, %c2_197, %c7_198, %c0_199] : memref<8x8x8x64xf32, #tpu.memory_space<vmem>>, vector<8x1x1x64xf32>
    %141 = vector.shape_cast %140 : vector<8x1x1x64xf32> to vector<8x64xf32>
    %c0_200 = arith.constant 0 : index
    %c3_201 = arith.constant 3 : index
    %c6_202 = arith.constant 6 : index
    %c0_203 = arith.constant 0 : index
    %142 = vector.load %arg13[%c0_200, %c3_201, %c6_202, %c0_203] : memref<8x8x8x64xf32, #tpu.memory_space<vmem>>, vector<8x1x1x64xf32>
    %143 = vector.shape_cast %142 : vector<8x1x1x64xf32> to vector<8x64xf32>
    %c0_204 = arith.constant 0 : index
    %c3_205 = arith.constant 3 : index
    %c7_206 = arith.constant 7 : index
    %c0_207 = arith.constant 0 : index
    %144 = vector.load %arg13[%c0_204, %c3_205, %c7_206, %c0_207] : memref<8x8x8x64xf32, #tpu.memory_space<vmem>>, vector<8x1x1x64xf32>
    %145 = vector.shape_cast %144 : vector<8x1x1x64xf32> to vector<8x64xf32>
    %146 = arith.maximumf %139, %141 : vector<8x64xf32>
    %147 = arith.maximumf %143, %145 : vector<8x64xf32>
    %148 = arith.maximumf %146, %147 : vector<8x64xf32>
    %c0_208 = arith.constant 0 : index
    %c4_209 = arith.constant 4 : index
    %c0_210 = arith.constant 0 : index
    %c0_211 = arith.constant 0 : index
    %149 = vector.load %arg13[%c0_208, %c4_209, %c0_210, %c0_211] : memref<8x8x8x64xf32, #tpu.memory_space<vmem>>, vector<8x1x1x64xf32>
    %150 = vector.shape_cast %149 : vector<8x1x1x64xf32> to vector<8x64xf32>
    %c0_212 = arith.constant 0 : index
    %c4_213 = arith.constant 4 : index
    %c1_214 = arith.constant 1 : index
    %c0_215 = arith.constant 0 : index
    %151 = vector.load %arg13[%c0_212, %c4_213, %c1_214, %c0_215] : memref<8x8x8x64xf32, #tpu.memory_space<vmem>>, vector<8x1x1x64xf32>
    %152 = vector.shape_cast %151 : vector<8x1x1x64xf32> to vector<8x64xf32>
    %c0_216 = arith.constant 0 : index
    %c5_217 = arith.constant 5 : index
    %c0_218 = arith.constant 0 : index
    %c0_219 = arith.constant 0 : index
    %153 = vector.load %arg13[%c0_216, %c5_217, %c0_218, %c0_219] : memref<8x8x8x64xf32, #tpu.memory_space<vmem>>, vector<8x1x1x64xf32>
    %154 = vector.shape_cast %153 : vector<8x1x1x64xf32> to vector<8x64xf32>
    %c0_220 = arith.constant 0 : index
    %c5_221 = arith.constant 5 : index
    %c1_222 = arith.constant 1 : index
    %c0_223 = arith.constant 0 : index
    %155 = vector.load %arg13[%c0_220, %c5_221, %c1_222, %c0_223] : memref<8x8x8x64xf32, #tpu.memory_space<vmem>>, vector<8x1x1x64xf32>
    %156 = vector.shape_cast %155 : vector<8x1x1x64xf32> to vector<8x64xf32>
    %157 = arith.maximumf %150, %152 : vector<8x64xf32>
    %158 = arith.maximumf %154, %156 : vector<8x64xf32>
    %159 = arith.maximumf %157, %158 : vector<8x64xf32>
    %c0_224 = arith.constant 0 : index
    %c4_225 = arith.constant 4 : index
    %c2_226 = arith.constant 2 : index
    %c0_227 = arith.constant 0 : index
    %160 = vector.load %arg13[%c0_224, %c4_225, %c2_226, %c0_227] : memref<8x8x8x64xf32, #tpu.memory_space<vmem>>, vector<8x1x1x64xf32>
    %161 = vector.shape_cast %160 : vector<8x1x1x64xf32> to vector<8x64xf32>
    %c0_228 = arith.constant 0 : index
    %c4_229 = arith.constant 4 : index
    %c3_230 = arith.constant 3 : index
    %c0_231 = arith.constant 0 : index
    %162 = vector.load %arg13[%c0_228, %c4_229, %c3_230, %c0_231] : memref<8x8x8x64xf32, #tpu.memory_space<vmem>>, vector<8x1x1x64xf32>
    %163 = vector.shape_cast %162 : vector<8x1x1x64xf32> to vector<8x64xf32>
    %c0_232 = arith.constant 0 : index
    %c5_233 = arith.constant 5 : index
    %c2_234 = arith.constant 2 : index
    %c0_235 = arith.constant 0 : index
    %164 = vector.load %arg13[%c0_232, %c5_233, %c2_234, %c0_235] : memref<8x8x8x64xf32, #tpu.memory_space<vmem>>, vector<8x1x1x64xf32>
    %165 = vector.shape_cast %164 : vector<8x1x1x64xf32> to vector<8x64xf32>
    %c0_236 = arith.constant 0 : index
    %c5_237 = arith.constant 5 : index
    %c3_238 = arith.constant 3 : index
    %c0_239 = arith.constant 0 : index
    %166 = vector.load %arg13[%c0_236, %c5_237, %c3_238, %c0_239] : memref<8x8x8x64xf32, #tpu.memory_space<vmem>>, vector<8x1x1x64xf32>
    %167 = vector.shape_cast %166 : vector<8x1x1x64xf32> to vector<8x64xf32>
    %168 = arith.maximumf %161, %163 : vector<8x64xf32>
    %169 = arith.maximumf %165, %167 : vector<8x64xf32>
    %170 = arith.maximumf %168, %169 : vector<8x64xf32>
    %c0_240 = arith.constant 0 : index
    %c4_241 = arith.constant 4 : index
    %c4_242 = arith.constant 4 : index
    %c0_243 = arith.constant 0 : index
    %171 = vector.load %arg13[%c0_240, %c4_241, %c4_242, %c0_243] : memref<8x8x8x64xf32, #tpu.memory_space<vmem>>, vector<8x1x1x64xf32>
    %172 = vector.shape_cast %171 : vector<8x1x1x64xf32> to vector<8x64xf32>
    %c0_244 = arith.constant 0 : index
    %c4_245 = arith.constant 4 : index
    %c5_246 = arith.constant 5 : index
    %c0_247 = arith.constant 0 : index
    %173 = vector.load %arg13[%c0_244, %c4_245, %c5_246, %c0_247] : memref<8x8x8x64xf32, #tpu.memory_space<vmem>>, vector<8x1x1x64xf32>
    %174 = vector.shape_cast %173 : vector<8x1x1x64xf32> to vector<8x64xf32>
    %c0_248 = arith.constant 0 : index
    %c5_249 = arith.constant 5 : index
    %c4_250 = arith.constant 4 : index
    %c0_251 = arith.constant 0 : index
    %175 = vector.load %arg13[%c0_248, %c5_249, %c4_250, %c0_251] : memref<8x8x8x64xf32, #tpu.memory_space<vmem>>, vector<8x1x1x64xf32>
    %176 = vector.shape_cast %175 : vector<8x1x1x64xf32> to vector<8x64xf32>
    %c0_252 = arith.constant 0 : index
    %c5_253 = arith.constant 5 : index
    %c5_254 = arith.constant 5 : index
    %c0_255 = arith.constant 0 : index
    %177 = vector.load %arg13[%c0_252, %c5_253, %c5_254, %c0_255] : memref<8x8x8x64xf32, #tpu.memory_space<vmem>>, vector<8x1x1x64xf32>
    %178 = vector.shape_cast %177 : vector<8x1x1x64xf32> to vector<8x64xf32>
    %179 = arith.maximumf %172, %174 : vector<8x64xf32>
    %180 = arith.maximumf %176, %178 : vector<8x64xf32>
    %181 = arith.maximumf %179, %180 : vector<8x64xf32>
    %c0_256 = arith.constant 0 : index
    %c4_257 = arith.constant 4 : index
    %c6_258 = arith.constant 6 : index
    %c0_259 = arith.constant 0 : index
    %182 = vector.load %arg13[%c0_256, %c4_257, %c6_258, %c0_259] : memref<8x8x8x64xf32, #tpu.memory_space<vmem>>, vector<8x1x1x64xf32>
    %183 = vector.shape_cast %182 : vector<8x1x1x64xf32> to vector<8x64xf32>
    %c0_260 = arith.constant 0 : index
    %c4_261 = arith.constant 4 : index
    %c7_262 = arith.constant 7 : index
    %c0_263 = arith.constant 0 : index
    %184 = vector.load %arg13[%c0_260, %c4_261, %c7_262, %c0_263] : memref<8x8x8x64xf32, #tpu.memory_space<vmem>>, vector<8x1x1x64xf32>
    %185 = vector.shape_cast %184 : vector<8x1x1x64xf32> to vector<8x64xf32>
    %c0_264 = arith.constant 0 : index
    %c5_265 = arith.constant 5 : index
    %c6_266 = arith.constant 6 : index
    %c0_267 = arith.constant 0 : index
    %186 = vector.load %arg13[%c0_264, %c5_265, %c6_266, %c0_267] : memref<8x8x8x64xf32, #tpu.memory_space<vmem>>, vector<8x1x1x64xf32>
    %187 = vector.shape_cast %186 : vector<8x1x1x64xf32> to vector<8x64xf32>
    %c0_268 = arith.constant 0 : index
    %c5_269 = arith.constant 5 : index
    %c7_270 = arith.constant 7 : index
    %c0_271 = arith.constant 0 : index
    %188 = vector.load %arg13[%c0_268, %c5_269, %c7_270, %c0_271] : memref<8x8x8x64xf32, #tpu.memory_space<vmem>>, vector<8x1x1x64xf32>
    %189 = vector.shape_cast %188 : vector<8x1x1x64xf32> to vector<8x64xf32>
    %190 = arith.maximumf %183, %185 : vector<8x64xf32>
    %191 = arith.maximumf %187, %189 : vector<8x64xf32>
    %192 = arith.maximumf %190, %191 : vector<8x64xf32>
    %c0_272 = arith.constant 0 : index
    %c6_273 = arith.constant 6 : index
    %c0_274 = arith.constant 0 : index
    %c0_275 = arith.constant 0 : index
    %193 = vector.load %arg13[%c0_272, %c6_273, %c0_274, %c0_275] : memref<8x8x8x64xf32, #tpu.memory_space<vmem>>, vector<8x1x1x64xf32>
    %194 = vector.shape_cast %193 : vector<8x1x1x64xf32> to vector<8x64xf32>
    %c0_276 = arith.constant 0 : index
    %c6_277 = arith.constant 6 : index
    %c1_278 = arith.constant 1 : index
    %c0_279 = arith.constant 0 : index
    %195 = vector.load %arg13[%c0_276, %c6_277, %c1_278, %c0_279] : memref<8x8x8x64xf32, #tpu.memory_space<vmem>>, vector<8x1x1x64xf32>
    %196 = vector.shape_cast %195 : vector<8x1x1x64xf32> to vector<8x64xf32>
    %c0_280 = arith.constant 0 : index
    %c7_281 = arith.constant 7 : index
    %c0_282 = arith.constant 0 : index
    %c0_283 = arith.constant 0 : index
    %197 = vector.load %arg13[%c0_280, %c7_281, %c0_282, %c0_283] : memref<8x8x8x64xf32, #tpu.memory_space<vmem>>, vector<8x1x1x64xf32>
    %198 = vector.shape_cast %197 : vector<8x1x1x64xf32> to vector<8x64xf32>
    %c0_284 = arith.constant 0 : index
    %c7_285 = arith.constant 7 : index
    %c1_286 = arith.constant 1 : index
    %c0_287 = arith.constant 0 : index
    %199 = vector.load %arg13[%c0_284, %c7_285, %c1_286, %c0_287] : memref<8x8x8x64xf32, #tpu.memory_space<vmem>>, vector<8x1x1x64xf32>
    %200 = vector.shape_cast %199 : vector<8x1x1x64xf32> to vector<8x64xf32>
    %201 = arith.maximumf %194, %196 : vector<8x64xf32>
    %202 = arith.maximumf %198, %200 : vector<8x64xf32>
    %203 = arith.maximumf %201, %202 : vector<8x64xf32>
    %c0_288 = arith.constant 0 : index
    %c6_289 = arith.constant 6 : index
    %c2_290 = arith.constant 2 : index
    %c0_291 = arith.constant 0 : index
    %204 = vector.load %arg13[%c0_288, %c6_289, %c2_290, %c0_291] : memref<8x8x8x64xf32, #tpu.memory_space<vmem>>, vector<8x1x1x64xf32>
    %205 = vector.shape_cast %204 : vector<8x1x1x64xf32> to vector<8x64xf32>
    %c0_292 = arith.constant 0 : index
    %c6_293 = arith.constant 6 : index
    %c3_294 = arith.constant 3 : index
    %c0_295 = arith.constant 0 : index
    %206 = vector.load %arg13[%c0_292, %c6_293, %c3_294, %c0_295] : memref<8x8x8x64xf32, #tpu.memory_space<vmem>>, vector<8x1x1x64xf32>
    %207 = vector.shape_cast %206 : vector<8x1x1x64xf32> to vector<8x64xf32>
    %c0_296 = arith.constant 0 : index
    %c7_297 = arith.constant 7 : index
    %c2_298 = arith.constant 2 : index
    %c0_299 = arith.constant 0 : index
    %208 = vector.load %arg13[%c0_296, %c7_297, %c2_298, %c0_299] : memref<8x8x8x64xf32, #tpu.memory_space<vmem>>, vector<8x1x1x64xf32>
    %209 = vector.shape_cast %208 : vector<8x1x1x64xf32> to vector<8x64xf32>
    %c0_300 = arith.constant 0 : index
    %c7_301 = arith.constant 7 : index
    %c3_302 = arith.constant 3 : index
    %c0_303 = arith.constant 0 : index
    %210 = vector.load %arg13[%c0_300, %c7_301, %c3_302, %c0_303] : memref<8x8x8x64xf32, #tpu.memory_space<vmem>>, vector<8x1x1x64xf32>
    %211 = vector.shape_cast %210 : vector<8x1x1x64xf32> to vector<8x64xf32>
    %212 = arith.maximumf %205, %207 : vector<8x64xf32>
    %213 = arith.maximumf %209, %211 : vector<8x64xf32>
    %214 = arith.maximumf %212, %213 : vector<8x64xf32>
    %c0_304 = arith.constant 0 : index
    %c6_305 = arith.constant 6 : index
    %c4_306 = arith.constant 4 : index
    %c0_307 = arith.constant 0 : index
    %215 = vector.load %arg13[%c0_304, %c6_305, %c4_306, %c0_307] : memref<8x8x8x64xf32, #tpu.memory_space<vmem>>, vector<8x1x1x64xf32>
    %216 = vector.shape_cast %215 : vector<8x1x1x64xf32> to vector<8x64xf32>
    %c0_308 = arith.constant 0 : index
    %c6_309 = arith.constant 6 : index
    %c5_310 = arith.constant 5 : index
    %c0_311 = arith.constant 0 : index
    %217 = vector.load %arg13[%c0_308, %c6_309, %c5_310, %c0_311] : memref<8x8x8x64xf32, #tpu.memory_space<vmem>>, vector<8x1x1x64xf32>
    %218 = vector.shape_cast %217 : vector<8x1x1x64xf32> to vector<8x64xf32>
    %c0_312 = arith.constant 0 : index
    %c7_313 = arith.constant 7 : index
    %c4_314 = arith.constant 4 : index
    %c0_315 = arith.constant 0 : index
    %219 = vector.load %arg13[%c0_312, %c7_313, %c4_314, %c0_315] : memref<8x8x8x64xf32, #tpu.memory_space<vmem>>, vector<8x1x1x64xf32>
    %220 = vector.shape_cast %219 : vector<8x1x1x64xf32> to vector<8x64xf32>
    %c0_316 = arith.constant 0 : index
    %c7_317 = arith.constant 7 : index
    %c5_318 = arith.constant 5 : index
    %c0_319 = arith.constant 0 : index
    %221 = vector.load %arg13[%c0_316, %c7_317, %c5_318, %c0_319] : memref<8x8x8x64xf32, #tpu.memory_space<vmem>>, vector<8x1x1x64xf32>
    %222 = vector.shape_cast %221 : vector<8x1x1x64xf32> to vector<8x64xf32>
    %223 = arith.maximumf %216, %218 : vector<8x64xf32>
    %224 = arith.maximumf %220, %222 : vector<8x64xf32>
    %225 = arith.maximumf %223, %224 : vector<8x64xf32>
    %c0_320 = arith.constant 0 : index
    %c6_321 = arith.constant 6 : index
    %c6_322 = arith.constant 6 : index
    %c0_323 = arith.constant 0 : index
    %226 = vector.load %arg13[%c0_320, %c6_321, %c6_322, %c0_323] : memref<8x8x8x64xf32, #tpu.memory_space<vmem>>, vector<8x1x1x64xf32>
    %227 = vector.shape_cast %226 : vector<8x1x1x64xf32> to vector<8x64xf32>
    %c0_324 = arith.constant 0 : index
    %c6_325 = arith.constant 6 : index
    %c7_326 = arith.constant 7 : index
    %c0_327 = arith.constant 0 : index
    %228 = vector.load %arg13[%c0_324, %c6_325, %c7_326, %c0_327] : memref<8x8x8x64xf32, #tpu.memory_space<vmem>>, vector<8x1x1x64xf32>
    %229 = vector.shape_cast %228 : vector<8x1x1x64xf32> to vector<8x64xf32>
    %c0_328 = arith.constant 0 : index
    %c7_329 = arith.constant 7 : index
    %c6_330 = arith.constant 6 : index
    %c0_331 = arith.constant 0 : index
    %230 = vector.load %arg13[%c0_328, %c7_329, %c6_330, %c0_331] : memref<8x8x8x64xf32, #tpu.memory_space<vmem>>, vector<8x1x1x64xf32>
    %231 = vector.shape_cast %230 : vector<8x1x1x64xf32> to vector<8x64xf32>
    %c0_332 = arith.constant 0 : index
    %c7_333 = arith.constant 7 : index
    %c7_334 = arith.constant 7 : index
    %c0_335 = arith.constant 0 : index
    %232 = vector.load %arg13[%c0_332, %c7_333, %c7_334, %c0_335] : memref<8x8x8x64xf32, #tpu.memory_space<vmem>>, vector<8x1x1x64xf32>
    %233 = vector.shape_cast %232 : vector<8x1x1x64xf32> to vector<8x64xf32>
    %234 = arith.maximumf %227, %229 : vector<8x64xf32>
    %235 = arith.maximumf %231, %233 : vector<8x64xf32>
    %236 = arith.maximumf %234, %235 : vector<8x64xf32>
    %237 = tpu.concatenate %71, %82, %93, %104, %115, %126, %137, %148, %159, %170, %181, %192, %203, %214, %225, %236 in 1 : vector<8x64xf32>, vector<8x64xf32>, vector<8x64xf32>, vector<8x64xf32>, vector<8x64xf32>, vector<8x64xf32>, vector<8x64xf32>, vector<8x64xf32>, vector<8x64xf32>, vector<8x64xf32>, vector<8x64xf32>, vector<8x64xf32>, vector<8x64xf32>, vector<8x64xf32>, vector<8x64xf32>, vector<8x64xf32> -> vector<8x1024xf32>
    %c0_336 = arith.constant 0 : index
    %c0_337 = arith.constant 0 : index
    %238 = vector.load %arg6[%c0_336, %c0_337] : memref<1024x64xf32, #tpu.memory_space<vmem>>, vector<1024x64xf32>
    %cst_338 = arith.constant dense<0.000000e+00> : vector<8x64xf32>
    %239 = tpu.matmul %237, %238, %cst_338 {dimension_numbers = #tpu.dot_dimension_numbers<[1], [0], [0], [1], [0, 0, 1, 1], [], []>} : vector<8x1024xf32>, vector<1024x64xf32>, vector<8x64xf32> -> vector<8x64xf32>
    %c0_339 = arith.constant 0 : index
    %c0_340 = arith.constant 0 : index
    %240 = vector.load %arg7[%c0_339, %c0_340] : memref<1x64xf32, #tpu.memory_space<vmem>>, vector<1x64xf32>
    %241 = vector.broadcast %240 : vector<1x64xf32> to vector<8x64xf32>
    %242 = arith.addf %239, %241 : vector<8x64xf32>
    %cst_341 = arith.constant 0.000000e+00 : f32
    %243 = vector.broadcast %cst_341 : f32 to vector<8x64xf32>
    %244 = arith.maximumf %242, %243 : vector<8x64xf32>
    %c0_342 = arith.constant 0 : index
    %c0_343 = arith.constant 0 : index
    %245 = vector.load %arg8[%c0_342, %c0_343] : memref<64x2xf32, #tpu.memory_space<vmem>>, vector<64x2xf32>
    %cst_344 = arith.constant dense<0.000000e+00> : vector<8x2xf32>
    %246 = tpu.matmul %244, %245, %cst_344 {dimension_numbers = #tpu.dot_dimension_numbers<[1], [0], [0], [1], [0, 0, 1, 1], [], []>} : vector<8x64xf32>, vector<64x2xf32>, vector<8x2xf32> -> vector<8x2xf32>
    %c0_345 = arith.constant 0 : index
    %c0_346 = arith.constant 0 : index
    %247 = vector.load %arg9[%c0_345, %c0_346] : memref<1x2xf32, #tpu.memory_space<vmem>>, vector<1x2xf32>
    %248 = vector.broadcast %247 : vector<1x2xf32> to vector<8x2xf32>
    %249 = arith.addf %246, %248 : vector<8x2xf32>
    %cst_347 = arith.constant dense<0xFF800000> : vector<8xf32>
    %250 = vector.multi_reduction <maximumf>, %249, %cst_347 [1] : vector<8x2xf32> to vector<8xf32>
    %251 = vector.shape_cast %250 : vector<8xf32> to vector<8x1xf32>
    %252 = vector.broadcast %251 : vector<8x1xf32> to vector<8x2xf32>
    %253 = arith.subf %249, %252 : vector<8x2xf32>
    %254 = math.exp %253 : vector<8x2xf32>
    %cst_348 = arith.constant dense<0.000000e+00> : vector<8xf32>
    %255 = vector.multi_reduction <add>, %254, %cst_348 [1] : vector<8x2xf32> to vector<8xf32>
    %256 = vector.shape_cast %255 : vector<8xf32> to vector<8x1xf32>
    %257 = vector.broadcast %256 : vector<8x1xf32> to vector<8x2xf32>
    %258 = arith.divf %254, %257 : vector<8x2xf32>
    %c0_349 = arith.constant 0 : index
    %c0_350 = arith.constant 0 : index
    %259 = vector.load %arg10[%c0_349, %c0_350] : memref<8x2xf32, #tpu.memory_space<vmem>>, vector<8x2xf32>
    tpu.vector_store %arg10[%c0_349, %c0_350], %258 {strides = array<i32>} : memref<8x2xf32, #tpu.memory_space<vmem>>, vector<8x2xf32>,
    return
  }
  func.func @transform_0(%arg0: i32) -> (i32, i32, i32, i32) {
    %c0_i32 = arith.constant 0 : i32
    %c0_i32_0 = arith.constant 0 : i32
    %c0_i32_1 = arith.constant 0 : i32
    %c0_i32_2 = arith.constant 0 : i32
    return %arg0, %c0_i32, %c0_i32_0, %c0_i32_1 : i32, i32, i32, i32
  }
  func.func @transform_1(%arg0: i32) -> (i32, i32) {
    %c0_i32 = arith.constant 0 : i32
    %c0_i32_0 = arith.constant 0 : i32
    %c0_i32_1 = arith.constant 0 : i32
    return %c0_i32, %c0_i32_0 : i32, i32
  }
  func.func @transform_2(%arg0: i32) -> (i32, i32) {
    %c0_i32 = arith.constant 0 : i32
    %c0_i32_0 = arith.constant 0 : i32
    %c0_i32_1 = arith.constant 0 : i32
    return %c0_i32, %c0_i32_0 : i32, i32
  }
  func.func @transform_3(%arg0: i32) -> (i32, i32) {
    %c0_i32 = arith.constant 0 : i32
    %c0_i32_0 = arith.constant 0 : i32
    %c0_i32_1 = arith.constant 0 : i32
    return %c0_i32, %c0_i32_0 : i32, i32
  }
  func.func @transform_4(%arg0: i32) -> (i32, i32) {
    %c0_i32 = arith.constant 0 : i32
    %c0_i32_0 = arith.constant 0 : i32
    %c0_i32_1 = arith.constant 0 : i32
    return %c0_i32, %c0_i32_0 : i32, i32
  }
  func.func @transform_5(%arg0: i32) -> (i32, i32) {
    %c0_i32 = arith.constant 0 : i32
    %c0_i32_0 = arith.constant 0 : i32
    %c0_i32_1 = arith.constant 0 : i32
    return %c0_i32, %c0_i32_0 : i32, i32
  }
  func.func @transform_6(%arg0: i32) -> (i32, i32) {
    %c0_i32 = arith.constant 0 : i32
    %c0_i32_0 = arith.constant 0 : i32
    %c0_i32_1 = arith.constant 0 : i32
    return %c0_i32, %c0_i32_0 : i32, i32
  }
  func.func @transform_7(%arg0: i32) -> (i32, i32) {
    %c0_i32 = arith.constant 0 : i32
    %c0_i32_0 = arith.constant 0 : i32
    %c0_i32_1 = arith.constant 0 : i32
    return %c0_i32, %c0_i32_0 : i32, i32
  }
  func.func @transform_8(%arg0: i32) -> (i32, i32) {
    %c0_i32 = arith.constant 0 : i32
    %c0_i32_0 = arith.constant 0 : i32
    %c0_i32_1 = arith.constant 0 : i32
    return %c0_i32, %c0_i32_0 : i32, i32
  }
  func.func @transform_9(%arg0: i32) -> (i32, i32) {
    %c0_i32 = arith.constant 0 : i32
    %c0_i32_0 = arith.constant 0 : i32
    return %arg0, %c0_i32 : i32, i32
  }
}

</mosaic_0001>

<llo_original>
// kernel: tile.8
$region0: #{tile.8}
  #allocation0 [shape = 's32[1]{0}', space=sflag, size = 0x4, scoped, tag = 'scoped memory for tile.8']
  %s0 = inlined_call_operand.vmem [shape: f32[32], index: 0, kind: input, shape index: {}]
  %s1 = inlined_call_operand.vmem [shape: f32[4,32], index: 1, kind: output, shape index: {}]
  // Predicated region
  $region2: #{tile.8} parent=0 // pred_check
    _
  $region3: #{tile.8} parent=0 // pred_check_branch
    %3 = sbr.rel (0) target = $region5
  $region4: #{tile.8} parent=0 // pred_region
    _
  $region5: #{tile.8} parent=0 // pred_fallthru
    _
  %v4 = vld [vmem:[%s0] ss:$0 sm:$0xff]
  %5 = vst [vmem:[%s1] sm:$0xf] %v4

// kernel: tile.9
$region0: #{tile.9}
  %s0 = inlined_call_operand.vmem [shape: f32[4,32], index: 0, kind: input, shape index: {}]
  %s1 = inlined_call_operand.vmem [shape: f32[1,128], index: 1, kind: output, shape index: {}]
  $region1: #{tile.9} parent=0
    #allocation0 [shape = 'u8[4096]{0}', space=vmem, size = 0x1000, scoped, tag = 'scoped mem for output reshape']
    #allocation1 [shape = 'u8[4096]{0}', space=vmem, size = 0x1000, scoped, tag = 'scoped mem for input reshape']
    %s3 = ssub.s32 16, 1
    %v4 = vld [vmem:[%s0] sm:%s3]
    %5 = vst [vmem:[#allocation1] sm:%s3] %v4
    %v6 = vld [vmem:[#allocation1] sm:$0x1]
    %vm7 = vcmask 261120
    %8 = vst.msk [vmem:[#allocation0] sm:$0x1] %vm7, %v6
    %s9 = scalar_lea.vmem [#allocation1], 3
    %v10 = vld [vmem:[%s9] sm:$0x1]
    %11 = vrot.lane.b32.xlu0 %v10, 96
    %v12 = vpop.permute.xlu0 %11
    %vm13 = vcmask 1048320
    %14 = vst.msk [vmem:[#allocation0] sm:$0x1] %vm13, %v12
    %s15 = scalar_lea.vmem [#allocation1], 2
    %v16 = vld [vmem:[%s15] sm:$0x1]
    %17 = vrot.lane.b32.xlu0 %v16, 64
    %v18 = vpop.permute.xlu0 %17
    %vm19 = vcmask 785920
    %20 = vst.msk [vmem:[#allocation0] sm:$0x1] %vm19, %v18
    %s21 = scalar_lea.vmem [#allocation1], 1
    %v22 = vld [vmem:[%s21] sm:$0x1]
    %23 = vrot.lane.b32.xlu0 %v22, 32
    %v24 = vpop.permute.xlu0 %23
    %vm25 = vcmask 523520
    %26 = vst.msk [vmem:[#allocation0] sm:$0x1] %vm25, %v24
    %s28 = ssub.s32 2, 1
    %v29 = vld [vmem:[#allocation0] sm:%s28]
    %s31 = ssub.s32 2, 1
    %32 = vst [vmem:[%s1] sm:%s31] %v29

// kernel: facemasknet_forward.1
$region0: #{facemasknet_forward.1}
  #allocation0 [shape = 'u32[]', space=smem, size = 0x4, offset = 0x4, fixed_abs, tag = 'smem constant byte address 0x4 - core index']
  #allocation1 [shape = 'u32[72,128]{1,0:T(1,128)}', space=vmem, size = 0x9000, scoped, tag = 'internal scratch']
  #allocation2 [shape = 'f32[8,10,10,32]{3,2,1,0:T(8,128)}', space=vmem, size = 0xa0000, scoped, tag = 'scratch operand']
  #allocation3 [shape = 'f32[512,288]{1,0:T(8,128)}', space=vmem, size = 0xc0000, scoped, tag = 'scratch operand']
  #allocation4 [shape = 'f32[8,8,8,64]{3,2,1,0:T(8,128)}', space=vmem, size = 0x40000, scoped, tag = 'scratch operand']
  %s0 = inlined_call_operand.vmem [shape: f32[8,8,8,16], index: 0, kind: input, shape index: {}]
  %s1 = inlined_call_operand.vmem [shape: f32[16,128], index: 1, kind: input, shape index: {}]
  %s2 = inlined_call_operand.vmem [shape: f32[1,128], index: 2, kind: input, shape index: {}]
  %s3 = inlined_call_operand.vmem [shape: f32[288,64], index: 3, kind: input, shape index: {}]
  %s4 = inlined_call_operand.vmem [shape: f32[1,64], index: 4, kind: input, shape index: {}]
  %s5 = inlined_call_operand.vmem [shape: f32[1024,64], index: 5, kind: input, shape index: {}]
  %s6 = inlined_call_operand.vmem [shape: f32[1,64], index: 6, kind: input, shape index: {}]
  %s7 = inlined_call_operand.vmem [shape: f32[64,2], index: 7, kind: input, shape index: {}]
  %s8 = inlined_call_operand.vmem [shape: f32[1,2], index: 8, kind: input, shape index: {}]
  %s9 = inlined_call_operand.vmem [shape: f32[8,2], index: 9, kind: output, shape index: {}]
  %s10 = sld [smem:[#allocation0]]
  $region46: #{facemasknet_forward.1} parent=0
    _
  %s12 = ssub.s32 1, %s10
  %s13 = scalar_select 0, %s12, %s10
  // Predicated region
  $region2: #{facemasknet_forward.1} parent=0 // pred_check
    _
  $region3: #{facemasknet_forward.1} parent=0 // pred_check_branch
    %15 = sbr.rel (0) target = $region5
  $region4: #{facemasknet_forward.1} parent=0 // pred_region
    _
  $region5: #{facemasknet_forward.1} parent=0 // pred_fallthru
    _
  // Predicated region
  $region6: #{facemasknet_forward.1} parent=0 // pred_check
    _
  $region7: #{facemasknet_forward.1} parent=0 // pred_check_branch
    %17 = sbr.rel (0) target = $region9
  $region8: #{facemasknet_forward.1} parent=0 // pred_region
    _
  $region9: #{facemasknet_forward.1} parent=0 // pred_fallthru
    _
  // Predicated region
  $region10: #{facemasknet_forward.1} parent=0 // pred_check
    _
  $region11: #{facemasknet_forward.1} parent=0 // pred_check_branch
    %19 = sbr.rel (0) target = $region13
  $region12: #{facemasknet_forward.1} parent=0 // pred_region
    _
  $region13: #{facemasknet_forward.1} parent=0 // pred_fallthru
    _
  // Predicated region
  $region14: #{facemasknet_forward.1} parent=0 // pred_check
    _
  $region15: #{facemasknet_forward.1} parent=0 // pred_check_branch
    %21 = sbr.rel (0) target = $region17
  $region16: #{facemasknet_forward.1} parent=0 // pred_region
    _
  $region17: #{facemasknet_forward.1} parent=0 // pred_fallthru
    _
  // Predicated region
  $region18: #{facemasknet_forward.1} parent=0 // pred_check
    _
  $region19: #{facemasknet_forward.1} parent=0 // pred_check_branch
    %23 = sbr.rel (0) target = $region21
  $region20: #{facemasknet_forward.1} parent=0 // pred_region
    _
  $region21: #{facemasknet_forward.1} parent=0 // pred_fallthru
    _
  // Predicated region
  $region22: #{facemasknet_forward.1} parent=0 // pred_check
    _
  $region23: #{facemasknet_forward.1} parent=0 // pred_check_branch
    %25 = sbr.rel (0) target = $region25
  $region24: #{facemasknet_forward.1} parent=0 // pred_region
    _
  $region25: #{facemasknet_forward.1} parent=0 // pred_fallthru
    _
  // Predicated region
  $region26: #{facemasknet_forward.1} parent=0 // pred_check
    _
  $region27: #{facemasknet_forward.1} parent=0 // pred_check_branch
    %27 = sbr.rel (0) target = $region29
  $region28: #{facemasknet_forward.1} parent=0 // pred_region
    _
  $region29: #{facemasknet_forward.1} parent=0 // pred_fallthru
    _
  // Predicated region
  $region30: #{facemasknet_forward.1} parent=0 // pred_check
    _
  $region31: #{facemasknet_forward.1} parent=0 // pred_check_branch
    %29 = sbr.rel (0) target = $region33
  $region32: #{facemasknet_forward.1} parent=0 // pred_region
    _
  $region33: #{facemasknet_forward.1} parent=0 // pred_fallthru
    _
  // Predicated region
  $region34: #{facemasknet_forward.1} parent=0 // pred_check
    _
  $region35: #{facemasknet_forward.1} parent=0 // pred_check_branch
    %31 = sbr.rel (0) target = $region37
  $region36: #{facemasknet_forward.1} parent=0 // pred_region
    _
  $region37: #{facemasknet_forward.1} parent=0 // pred_fallthru
    _
  %v32 = vld [vmem:[%s0] sm:$0xff]
  %v33 = vld [vmem:[%s0 + $0x8] sm:$0xff]
  %v34 = vld [vmem:[%s0 + $0x10] sm:$0xff]
  %v35 = vld [vmem:[%s0 + $0x18] sm:$0xff]
  %v36 = vld [vmem:[%s0 + $0x20] sm:$0xff]
  %v37 = vld [vmem:[%s0 + $0x28] sm:$0xff]
  %v38 = vld [vmem:[%s0 + $0x30] sm:$0xff]
  %v39 = vld [vmem:[%s0 + $0x38] sm:$0xff]
  %v40 = vld [vmem:[%s0 + $0x40] sm:$0xff]
  %v41 = vld [vmem:[%s0 + $0x48] sm:$0xff]
  %v42 = vld [vmem:[%s0 + $0x50] sm:$0xff]
  %v43 = vld [vmem:[%s0 + $0x58] sm:$0xff]
  %v44 = vld [vmem:[%s0 + $0x60] sm:$0xff]
  %v45 = vld [vmem:[%s0 + $0x68] sm:$0xff]
  %v46 = vld [vmem:[%s0 + $0x70] sm:$0xff]
  %v47 = vld [vmem:[%s0 + $0x78] sm:$0xff]
  %v48 = vld [vmem:[%s0 + $0x80] sm:$0xff]
  %v49 = vld [vmem:[%s0 + $0x88] sm:$0xff]
  %v50 = vld [vmem:[%s0 + $0x90] sm:$0xff]
  %v51 = vld [vmem:[%s0 + $0x98] sm:$0xff]
  %v52 = vld [vmem:[%s0 + $0xa0] sm:$0xff]
  %v53 = vld [vmem:[%s0 + $0xa8] sm:$0xff]
  %v54 = vld [vmem:[%s0 + $0xb0] sm:$0xff]
  %v55 = vld [vmem:[%s0 + $0xb8] sm:$0xff]
  %v56 = vld [vmem:[%s0 + $0xc0] sm:$0xff]
  %v57 = vld [vmem:[%s0 + $0xc8] sm:$0xff]
  %v58 = vld [vmem:[%s0 + $0xd0] sm:$0xff]
  %v59 = vld [vmem:[%s0 + $0xd8] sm:$0xff]
  %v60 = vld [vmem:[%s0 + $0xe0] sm:$0xff]
  %v61 = vld [vmem:[%s0 + $0xe8] sm:$0xff]
  %v62 = vld [vmem:[%s0 + $0xf0] sm:$0xff]
  %v63 = vld [vmem:[%s0 + $0xf8] sm:$0xff]
  %v64 = vld [vmem:[%s0 + $0x100] sm:$0xff]
  %v65 = vld [vmem:[%s0 + $0x108] sm:$0xff]
  %v66 = vld [vmem:[%s0 + $0x110] sm:$0xff]
  %v67 = vld [vmem:[%s0 + $0x118] sm:$0xff]
  %v68 = vld [vmem:[%s0 + $0x120] sm:$0xff]
  %v69 = vld [vmem:[%s0 + $0x128] sm:$0xff]
  %v70 = vld [vmem:[%s0 + $0x130] sm:$0xff]
  %v71 = vld [vmem:[%s0 + $0x138] sm:$0xff]
  %v72 = vld [vmem:[%s0 + $0x140] sm:$0xff]
  %v73 = vld [vmem:[%s0 + $0x148] sm:$0xff]
  %v74 = vld [vmem:[%s0 + $0x150] sm:$0xff]
  %v75 = vld [vmem:[%s0 + $0x158] sm:$0xff]
  %v76 = vld [vmem:[%s0 + $0x160] sm:$0xff]
  %v77 = vld [vmem:[%s0 + $0x168] sm:$0xff]
  %v78 = vld [vmem:[%s0 + $0x170] sm:$0xff]
  %v79 = vld [vmem:[%s0 + $0x178] sm:$0xff]
  %v80 = vld [vmem:[%s0 + $0x180] sm:$0xff]
  %v81 = vld [vmem:[%s0 + $0x188] sm:$0xff]
  %v82 = vld [vmem:[%s0 + $0x190] sm:$0xff]
  %v83 = vld [vmem:[%s0 + $0x198] sm:$0xff]
  %v84 = vld [vmem:[%s0 + $0x1a0] sm:$0xff]
  %v85 = vld [vmem:[%s0 + $0x1a8] sm:$0xff]
  %v86 = vld [vmem:[%s0 + $0x1b0] sm:$0xff]
  %v87 = vld [vmem:[%s0 + $0x1b8] sm:$0xff]
  %v88 = vld [vmem:[%s0 + $0x1c0] sm:$0xff]
  %v89 = vld [vmem:[%s0 + $0x1c8] sm:$0xff]
  %v90 = vld [vmem:[%s0 + $0x1d0] sm:$0xff]
  %v91 = vld [vmem:[%s0 + $0x1d8] sm:$0xff]
  %v92 = vld [vmem:[%s0 + $0x1e0] sm:$0xff]
  %v93 = vld [vmem:[%s0 + $0x1e8] sm:$0xff]
  %v94 = vld [vmem:[%s0 + $0x1f0] sm:$0xff]
  %v95 = vld [vmem:[%s0 + $0x1f8] sm:$0xff]
  %v96 = vld [vmem:[%s1] sm:$0xff]
  %v97 = vld [vmem:[%s1 + $0x8] sm:$0xff]
  %v98 = vld [vmem:[%s2] sm:$0x1]
  %v100 = vperm.slane %v98, 0
  %vm102 = vcmask 130048
  %v104 = vsel %vm102, %v32, 0
  %v107 = vsel %vm102, %v33, 0
  %v110 = vsel %vm102, %v34, 0
  %v113 = vsel %vm102, %v35, 0
  %v116 = vsel %vm102, %v36, 0
  %v119 = vsel %vm102, %v37, 0
  %v122 = vsel %vm102, %v38, 0
  %v125 = vsel %vm102, %v39, 0
  %v128 = vsel %vm102, %v40, 0
  %v131 = vsel %vm102, %v41, 0
  %v134 = vsel %vm102, %v42, 0
  %v137 = vsel %vm102, %v43, 0
  %v140 = vsel %vm102, %v44, 0
  %v143 = vsel %vm102, %v45, 0
  %v146 = vsel %vm102, %v46, 0
  %v149 = vsel %vm102, %v47, 0
  %v152 = vsel %vm102, %v48, 0
  %v155 = vsel %vm102, %v49, 0
  %v158 = vsel %vm102, %v50, 0
  %v161 = vsel %vm102, %v51, 0
  %v164 = vsel %vm102, %v52, 0
  %v167 = vsel %vm102, %v53, 0
  %v170 = vsel %vm102, %v54, 0
  %v173 = vsel %vm102, %v55, 0
  %v176 = vsel %vm102, %v56, 0
  %v179 = vsel %vm102, %v57, 0
  %v182 = vsel %vm102, %v58, 0
  %v185 = vsel %vm102, %v59, 0
  %v188 = vsel %vm102, %v60, 0
  %v191 = vsel %vm102, %v61, 0
  %v194 = vsel %vm102, %v62, 0
  %v197 = vsel %vm102, %v63, 0
  %v200 = vsel %vm102, %v64, 0
  %v203 = vsel %vm102, %v65, 0
  %v206 = vsel %vm102, %v66, 0
  %v209 = vsel %vm102, %v67, 0
  %v212 = vsel %vm102, %v68, 0
  %v215 = vsel %vm102, %v69, 0
  %v218 = vsel %vm102, %v70, 0
  %v221 = vsel %vm102, %v71, 0
  %v224 = vsel %vm102, %v72, 0
  %v227 = vsel %vm102, %v73, 0
  %v230 = vsel %vm102, %v74, 0
  %v233 = vsel %vm102, %v75, 0
  %v236 = vsel %vm102, %v76, 0
  %v239 = vsel %vm102, %v77, 0
  %v242 = vsel %vm102, %v78, 0
  %v245 = vsel %vm102, %v79, 0
  %v248 = vsel %vm102, %v80, 0
  %v251 = vsel %vm102, %v81, 0
  %v254 = vsel %vm102, %v82, 0
  %v257 = vsel %vm102, %v83, 0
  %v260 = vsel %vm102, %v84, 0
  %v263 = vsel %vm102, %v85, 0
  %v266 = vsel %vm102, %v86, 0
  %v269 = vsel %vm102, %v87, 0
  %v272 = vsel %vm102, %v88, 0
  %v275 = vsel %vm102, %v89, 0
  %v278 = vsel %vm102, %v90, 0
  %v281 = vsel %vm102, %v91, 0
  %v284 = vsel %vm102, %v92, 0
  %v287 = vsel %vm102, %v93, 0
  %v290 = vsel %vm102, %v94, 0
  %v293 = vsel %vm102, %v95, 0
  %295 = vmatpush.msra.mxu0 0.0
  %296 = vmatpush.msra.mxu0 0.0
  %297 = vmatpush.msra.mxu0 0.0
  %298 = vmatpush.msra.mxu0 0.0
  %299 = vmatpush.msra.mxu0 0.0
  %300 = vmatpush.msra.mxu0 0.0
  %301 = vmatpush.msra.mxu0 0.0
  %302 = vmatpush.msra.mxu0 0.0
  %303 = vmatpush.msra.mxu0 0.0
  %304 = vmatpush.msra.mxu0 0.0
  %305 = vmatpush.msra.mxu0 0.0
  %306 = vmatpush.msra.mxu0 0.0
  %307 = vmatpush.msra.mxu0 0.0
  %308 = vmatpush.msra.mxu0 0.0
  %309 = vmatpush.msra.mxu0 %v97
  %310 = vmatpush.msra.mxu0 %v96
  %311 = vmatmul.f32.gmra.mxu0 %v104
  %v312 = vpop.f32.mrf.mxu0
  %v313 = vadd.f32 %v100, %v312
  %314 = vmatmul.f32.gmra.mxu0 %v107
  %v315 = vpop.f32.mrf.mxu0
  %v316 = vadd.f32 %v100, %v315
  %317 = vmatmul.f32.gmra.mxu0 %v110
  %v318 = vpop.f32.mrf.mxu0
  %v319 = vadd.f32 %v100, %v318
  %320 = vmatmul.f32.gmra.mxu0 %v113
  %v321 = vpop.f32.mrf.mxu0
  %v322 = vadd.f32 %v100, %v321
  %323 = vmatmul.f32.gmra.mxu0 %v116
  %v324 = vpop.f32.mrf.mxu0
  %v325 = vadd.f32 %v100, %v324
  %326 = vmatmul.f32.gmra.mxu0 %v119
  %v327 = vpop.f32.mrf.mxu0
  %v328 = vadd.f32 %v100, %v327
  %329 = vmatmul.f32.gmra.mxu0 %v122
  %v330 = vpop.f32.mrf.mxu0
  %v331 = vadd.f32 %v100, %v330
  %332 = vmatmul.f32.gmra.mxu0 %v125
  %v333 = vpop.f32.mrf.mxu0
  %v334 = vadd.f32 %v100, %v333
  %335 = vmatmul.f32.gmra.mxu0 %v128
  %v336 = vpop.f32.mrf.mxu0
  %v337 = vadd.f32 %v100, %v336
  %338 = vmatmul.f32.gmra.mxu0 %v131
  %v339 = vpop.f32.mrf.mxu0
  %v340 = vadd.f32 %v100, %v339
  %341 = vmatmul.f32.gmra.mxu0 %v134
  %v342 = vpop.f32.mrf.mxu0
  %v343 = vadd.f32 %v100, %v342
  %344 = vmatmul.f32.gmra.mxu0 %v137
  %v345 = vpop.f32.mrf.mxu0
  %v346 = vadd.f32 %v100, %v345
  %347 = vmatmul.f32.gmra.mxu0 %v140
  %v348 = vpop.f32.mrf.mxu0
  %v349 = vadd.f32 %v100, %v348
  %350 = vmatmul.f32.gmra.mxu0 %v143
  %v351 = vpop.f32.mrf.mxu0
  %v352 = vadd.f32 %v100, %v351
  %353 = vmatmul.f32.gmra.mxu0 %v146
  %v354 = vpop.f32.mrf.mxu0
  %v355 = vadd.f32 %v100, %v354
  %356 = vmatmul.f32.gmra.mxu0 %v149
  %v357 = vpop.f32.mrf.mxu0
  %v358 = vadd.f32 %v100, %v357
  %359 = vmatmul.f32.gmra.mxu0 %v152
  %v360 = vpop.f32.mrf.mxu0
  %v361 = vadd.f32 %v100, %v360
  %362 = vmatmul.f32.gmra.mxu0 %v155
  %v363 = vpop.f32.mrf.mxu0
  %v364 = vadd.f32 %v100, %v363
  %365 = vmatmul.f32.gmra.mxu0 %v158
  %v366 = vpop.f32.mrf.mxu0
  %v367 = vadd.f32 %v100, %v366
  %368 = vmatmul.f32.gmra.mxu0 %v161
  %v369 = vpop.f32.mrf.mxu0
  %v370 = vadd.f32 %v100, %v369
  %371 = vmatmul.f32.gmra.mxu0 %v164
  %v372 = vpop.f32.mrf.mxu0
  %v373 = vadd.f32 %v100, %v372
  %374 = vmatmul.f32.gmra.mxu0 %v167
  %v375 = vpop.f32.mrf.mxu0
  %v376 = vadd.f32 %v100, %v375
  %377 = vmatmul.f32.gmra.mxu0 %v170
  %v378 = vpop.f32.mrf.mxu0
  %v379 = vadd.f32 %v100, %v378
  %380 = vmatmul.f32.gmra.mxu0 %v173
  %v381 = vpop.f32.mrf.mxu0
  %v382 = vadd.f32 %v100, %v381
  %383 = vmatmul.f32.gmra.mxu0 %v176
  %v384 = vpop.f32.mrf.mxu0
  %v385 = vadd.f32 %v100, %v384
  %386 = vmatmul.f32.gmra.mxu0 %v179
  %v387 = vpop.f32.mrf.mxu0
  %v388 = vadd.f32 %v100, %v387
  %389 = vmatmul.f32.gmra.mxu0 %v182
  %v390 = vpop.f32.mrf.mxu0
  %v391 = vadd.f32 %v100, %v390
  %392 = vmatmul.f32.gmra.mxu0 %v185
  %v393 = vpop.f32.mrf.mxu0
  %v394 = vadd.f32 %v100, %v393
  %395 = vmatmul.f32.gmra.mxu0 %v188
  %v396 = vpop.f32.mrf.mxu0
  %v397 = vadd.f32 %v100, %v396
  %398 = vmatmul.f32.gmra.mxu0 %v191
  %v399 = vpop.f32.mrf.mxu0
  %v400 = vadd.f32 %v100, %v399
  %401 = vmatmul.f32.gmra.mxu0 %v194
  %v402 = vpop.f32.mrf.mxu0
  %v403 = vadd.f32 %v100, %v402
  %404 = vmatmul.f32.gmra.mxu0 %v197
  %v405 = vpop.f32.mrf.mxu0
  %v406 = vadd.f32 %v100, %v405
  %407 = vmatmul.f32.gmra.mxu0 %v200
  %v408 = vpop.f32.mrf.mxu0
  %v409 = vadd.f32 %v100, %v408
  %410 = vmatmul.f32.gmra.mxu0 %v203
  %v411 = vpop.f32.mrf.mxu0
  %v412 = vadd.f32 %v100, %v411
  %413 = vmatmul.f32.gmra.mxu0 %v206
  %v414 = vpop.f32.mrf.mxu0
  %v415 = vadd.f32 %v100, %v414
  %416 = vmatmul.f32.gmra.mxu0 %v209
  %v417 = vpop.f32.mrf.mxu0
  %v418 = vadd.f32 %v100, %v417
  %419 = vmatmul.f32.gmra.mxu0 %v212
  %v420 = vpop.f32.mrf.mxu0
  %v421 = vadd.f32 %v100, %v420
  %422 = vmatmul.f32.gmra.mxu0 %v215
  %v423 = vpop.f32.mrf.mxu0
  %v424 = vadd.f32 %v100, %v423
  %425 = vmatmul.f32.gmra.mxu0 %v218
  %v426 = vpop.f32.mrf.mxu0
  %v427 = vadd.f32 %v100, %v426
  %428 = vmatmul.f32.gmra.mxu0 %v221
  %v429 = vpop.f32.mrf.mxu0
  %v430 = vadd.f32 %v100, %v429
  %431 = vmatmul.f32.gmra.mxu0 %v224
  %v432 = vpop.f32.mrf.mxu0
  %v433 = vadd.f32 %v100, %v432
  %434 = vmatmul.f32.gmra.mxu0 %v227
  %v435 = vpop.f32.mrf.mxu0
  %v436 = vadd.f32 %v100, %v435
  %437 = vmatmul.f32.gmra.mxu0 %v230
  %v438 = vpop.f32.mrf.mxu0
  %v439 = vadd.f32 %v100, %v438
  %440 = vmatmul.f32.gmra.mxu0 %v233
  %v441 = vpop.f32.mrf.mxu0
  %v442 = vadd.f32 %v100, %v441
  %443 = vmatmul.f32.gmra.mxu0 %v236
  %v444 = vpop.f32.mrf.mxu0
  %v445 = vadd.f32 %v100, %v444
  %446 = vmatmul.f32.gmra.mxu0 %v239
  %v447 = vpop.f32.mrf.mxu0
  %v448 = vadd.f32 %v100, %v447
  %449 = vmatmul.f32.gmra.mxu0 %v242
  %v450 = vpop.f32.mrf.mxu0
  %v451 = vadd.f32 %v100, %v450
  %452 = vmatmul.f32.gmra.mxu0 %v245
  %v453 = vpop.f32.mrf.mxu0
  %v454 = vadd.f32 %v100, %v453
  %455 = vmatmul.f32.gmra.mxu0 %v248
  %v456 = vpop.f32.mrf.mxu0
  %v457 = vadd.f32 %v100, %v456
  %458 = vmatmul.f32.gmra.mxu0 %v251
  %v459 = vpop.f32.mrf.mxu0
  %v460 = vadd.f32 %v100, %v459
  %461 = vmatmul.f32.gmra.mxu0 %v254
  %v462 = vpop.f32.mrf.mxu0
  %v463 = vadd.f32 %v100, %v462
  %464 = vmatmul.f32.gmra.mxu0 %v257
  %v465 = vpop.f32.mrf.mxu0
  %v466 = vadd.f32 %v100, %v465
  %467 = vmatmul.f32.gmra.mxu0 %v260
  %v468 = vpop.f32.mrf.mxu0
  %v469 = vadd.f32 %v100, %v468
  %470 = vmatmul.f32.gmra.mxu0 %v263
  %v471 = vpop.f32.mrf.mxu0
  %v472 = vadd.f32 %v100, %v471
  %473 = vmatmul.f32.gmra.mxu0 %v266
  %v474 = vpop.f32.mrf.mxu0
  %v475 = vadd.f32 %v100, %v474
  %476 = vmatmul.f32.gmra.mxu0 %v269
  %v477 = vpop.f32.mrf.mxu0
  %v478 = vadd.f32 %v100, %v477
  %479 = vmatmul.f32.gmra.mxu0 %v272
  %v480 = vpop.f32.mrf.mxu0
  %v481 = vadd.f32 %v100, %v480
  %482 = vmatmul.f32.gmra.mxu0 %v275
  %v483 = vpop.f32.mrf.mxu0
  %v484 = vadd.f32 %v100, %v483
  %485 = vmatmul.f32.gmra.mxu0 %v278
  %v486 = vpop.f32.mrf.mxu0
  %v487 = vadd.f32 %v100, %v486
  %488 = vmatmul.f32.gmra.mxu0 %v281
  %v489 = vpop.f32.mrf.mxu0
  %v490 = vadd.f32 %v100, %v489
  %491 = vmatmul.f32.gmra.mxu0 %v284
  %v492 = vpop.f32.mrf.mxu0
  %v493 = vadd.f32 %v100, %v492
  %494 = vmatmul.f32.gmra.mxu0 %v287
  %v495 = vpop.f32.mrf.mxu0
  %v496 = vadd.f32 %v100, %v495
  %497 = vmatmul.f32.gmra.mxu0 %v290
  %v498 = vpop.f32.mrf.mxu0
  %v499 = vadd.f32 %v100, %v498
  %500 = vmatmul.f32.gmra.mxu0 %v293
  %v501 = vpop.f32.mrf.mxu0
  %v502 = vadd.f32 %v100, %v501
  %503 = vdwg.mxu0
  %v504 = vmax.f32 %v313, 0.0
  %v505 = vmax.f32 %v316, 0.0
  %v506 = vmax.f32 %v319, 0.0
  %v507 = vmax.f32 %v322, 0.0
  %v508 = vmax.f32 %v325, 0.0
  %v509 = vmax.f32 %v328, 0.0
  %v510 = vmax.f32 %v331, 0.0
  %v511 = vmax.f32 %v334, 0.0
  %v512 = vmax.f32 %v337, 0.0
  %v513 = vmax.f32 %v340, 0.0
  %v514 = vmax.f32 %v343, 0.0
  %v515 = vmax.f32 %v346, 0.0
  %v516 = vmax.f32 %v349, 0.0
  %v517 = vmax.f32 %v352, 0.0
  %v518 = vmax.f32 %v355, 0.0
  %v519 = vmax.f32 %v358, 0.0
  %v520 = vmax.f32 %v361, 0.0
  %v521 = vmax.f32 %v364, 0.0
  %v522 = vmax.f32 %v367, 0.0
  %v523 = vmax.f32 %v370, 0.0
  %v524 = vmax.f32 %v373, 0.0
  %v525 = vmax.f32 %v376, 0.0
  %v526 = vmax.f32 %v379, 0.0
  %v527 = vmax.f32 %v382, 0.0
  %v528 = vmax.f32 %v385, 0.0
  %v529 = vmax.f32 %v388, 0.0
  %v530 = vmax.f32 %v391, 0.0
  %v531 = vmax.f32 %v394, 0.0
  %v532 = vmax.f32 %v397, 0.0
  %v533 = vmax.f32 %v400, 0.0
  %v534 = vmax.f32 %v403, 0.0
  %v535 = vmax.f32 %v406, 0.0
  %v536 = vmax.f32 %v409, 0.0
  %v537 = vmax.f32 %v412, 0.0
  %v538 = vmax.f32 %v415, 0.0
  %v539 = vmax.f32 %v418, 0.0
  %v540 = vmax.f32 %v421, 0.0
  %v541 = vmax.f32 %v424, 0.0
  %v542 = vmax.f32 %v427, 0.0
  %v543 = vmax.f32 %v430, 0.0
  %v544 = vmax.f32 %v433, 0.0
  %v545 = vmax.f32 %v436, 0.0
  %v546 = vmax.f32 %v439, 0.0
  %v547 = vmax.f32 %v442, 0.0
  %v548 = vmax.f32 %v445, 0.0
  %v549 = vmax.f32 %v448, 0.0
  %v550 = vmax.f32 %v451, 0.0
  %v551 = vmax.f32 %v454, 0.0
  %v552 = vmax.f32 %v457, 0.0
  %v553 = vmax.f32 %v460, 0.0
  %v554 = vmax.f32 %v463, 0.0
  %v555 = vmax.f32 %v466, 0.0
  %v556 = vmax.f32 %v469, 0.0
  %v557 = vmax.f32 %v472, 0.0
  %v558 = vmax.f32 %v475, 0.0
  %v559 = vmax.f32 %v478, 0.0
  %v560 = vmax.f32 %v481, 0.0
  %v561 = vmax.f32 %v484, 0.0
  %v562 = vmax.f32 %v487, 0.0
  %v563 = vmax.f32 %v490, 0.0
  %v564 = vmax.f32 %v493, 0.0
  %v565 = vmax.f32 %v496, 0.0
  %v566 = vmax.f32 %v499, 0.0
  %v567 = vmax.f32 %v502, 0.0
  %632 = vrot.lane.b32.xlu0 %v504, 96
  %v633 = vpop.permute.xlu0 %632
  %634 = vrot.lane.b32.xlu0 %v505, 96
  %v635 = vpop.permute.xlu0 %634
  %636 = vrot.lane.b32.xlu0 %v506, 96
  %v637 = vpop.permute.xlu0 %636
  %638 = vrot.lane.b32.xlu0 %v507, 96
  %v639 = vpop.permute.xlu0 %638
  %640 = vrot.lane.b32.xlu0 %v508, 96
  %v641 = vpop.permute.xlu0 %640
  %642 = vrot.lane.b32.xlu0 %v509, 96
  %v643 = vpop.permute.xlu0 %642
  %644 = vrot.lane.b32.xlu0 %v510, 96
  %v645 = vpop.permute.xlu0 %644
  %646 = vrot.lane.b32.xlu0 %v511, 96
  %v647 = vpop.permute.xlu0 %646
  %648 = vrot.lane.b32.xlu0 %v512, 96
  %v649 = vpop.permute.xlu0 %648
  %650 = vrot.lane.b32.xlu0 %v513, 96
  %v651 = vpop.permute.xlu0 %650
  %652 = vrot.lane.b32.xlu0 %v514, 96
  %v653 = vpop.permute.xlu0 %652
  %654 = vrot.lane.b32.xlu0 %v515, 96
  %v655 = vpop.permute.xlu0 %654
  %656 = vrot.lane.b32.xlu0 %v516, 96
  %v657 = vpop.permute.xlu0 %656
  %658 = vrot.lane.b32.xlu0 %v517, 96
  %v659 = vpop.permute.xlu0 %658
  %660 = vrot.lane.b32.xlu0 %v518, 96
  %v661 = vpop.permute.xlu0 %660
  %662 = vrot.lane.b32.xlu0 %v519, 96
  %v663 = vpop.permute.xlu0 %662
  %664 = vrot.lane.b32.xlu0 %v520, 96
  %v665 = vpop.permute.xlu0 %664
  %666 = vrot.lane.b32.xlu0 %v521, 96
  %v667 = vpop.permute.xlu0 %666
  %668 = vrot.lane.b32.xlu0 %v522, 96
  %v669 = vpop.permute.xlu0 %668
  %670 = vrot.lane.b32.xlu0 %v523, 96
  %v671 = vpop.permute.xlu0 %670
  %672 = vrot.lane.b32.xlu0 %v524, 96
  %v673 = vpop.permute.xlu0 %672
  %674 = vrot.lane.b32.xlu0 %v525, 96
  %v675 = vpop.permute.xlu0 %674
  %676 = vrot.lane.b32.xlu0 %v526, 96
  %v677 = vpop.permute.xlu0 %676
  %678 = vrot.lane.b32.xlu0 %v527, 96
  %v679 = vpop.permute.xlu0 %678
  %680 = vrot.lane.b32.xlu0 %v528, 96
  %v681 = vpop.permute.xlu0 %680
  %682 = vrot.lane.b32.xlu0 %v529, 96
  %v683 = vpop.permute.xlu0 %682
  %684 = vrot.lane.b32.xlu0 %v530, 96
  %v685 = vpop.permute.xlu0 %684
  %686 = vrot.lane.b32.xlu0 %v531, 96
  %v687 = vpop.permute.xlu0 %686
  %688 = vrot.lane.b32.xlu0 %v532, 96
  %v689 = vpop.permute.xlu0 %688
  %690 = vrot.lane.b32.xlu0 %v533, 96
  %v691 = vpop.permute.xlu0 %690
  %692 = vrot.lane.b32.xlu0 %v534, 96
  %v693 = vpop.permute.xlu0 %692
  %694 = vrot.lane.b32.xlu0 %v535, 96
  %v695 = vpop.permute.xlu0 %694
  %696 = vrot.lane.b32.xlu0 %v536, 96
  %v697 = vpop.permute.xlu0 %696
  %698 = vrot.lane.b32.xlu0 %v537, 96
  %v699 = vpop.permute.xlu0 %698
  %700 = vrot.lane.b32.xlu0 %v538, 96
  %v701 = vpop.permute.xlu0 %700
  %702 = vrot.lane.b32.xlu0 %v539, 96
  %v703 = vpop.permute.xlu0 %702
  %704 = vrot.lane.b32.xlu0 %v540, 96
  %v705 = vpop.permute.xlu0 %704
  %706 = vrot.lane.b32.xlu0 %v541, 96
  %v707 = vpop.permute.xlu0 %706
  %708 = vrot.lane.b32.xlu0 %v542, 96
  %v709 = vpop.permute.xlu0 %708
  %710 = vrot.lane.b32.xlu0 %v543, 96
  %v711 = vpop.permute.xlu0 %710
  %712 = vrot.lane.b32.xlu0 %v544, 96
  %v713 = vpop.permute.xlu0 %712
  %714 = vrot.lane.b32.xlu0 %v545, 96
  %v715 = vpop.permute.xlu0 %714
  %716 = vrot.lane.b32.xlu0 %v546, 96
  %v717 = vpop.permute.xlu0 %716
  %718 = vrot.lane.b32.xlu0 %v547, 96
  %v719 = vpop.permute.xlu0 %718
  %720 = vrot.lane.b32.xlu0 %v548, 96
  %v721 = vpop.permute.xlu0 %720
  %722 = vrot.lane.b32.xlu0 %v549, 96
  %v723 = vpop.permute.xlu0 %722
  %724 = vrot.lane.b32.xlu0 %v550, 96
  %v725 = vpop.permute.xlu0 %724
  %726 = vrot.lane.b32.xlu0 %v551, 96
  %v727 = vpop.permute.xlu0 %726
  %728 = vrot.lane.b32.xlu0 %v552, 96
  %v729 = vpop.permute.xlu0 %728
  %730 = vrot.lane.b32.xlu0 %v553, 96
  %v731 = vpop.permute.xlu0 %730
  %732 = vrot.lane.b32.xlu0 %v554, 96
  %v733 = vpop.permute.xlu0 %732
  %734 = vrot.lane.b32.xlu0 %v555, 96
  %v735 = vpop.permute.xlu0 %734
  %736 = vrot.lane.b32.xlu0 %v556, 96
  %v737 = vpop.permute.xlu0 %736
  %738 = vrot.lane.b32.xlu0 %v557, 96
  %v739 = vpop.permute.xlu0 %738
  %740 = vrot.lane.b32.xlu0 %v558, 96
  %v741 = vpop.permute.xlu0 %740
  %742 = vrot.lane.b32.xlu0 %v559, 96
  %v743 = vpop.permute.xlu0 %742
  %744 = vrot.lane.b32.xlu0 %v560, 96
  %v745 = vpop.permute.xlu0 %744
  %746 = vrot.lane.b32.xlu0 %v561, 96
  %v747 = vpop.permute.xlu0 %746
  %748 = vrot.lane.b32.xlu0 %v562, 96
  %v749 = vpop.permute.xlu0 %748
  %750 = vrot.lane.b32.xlu0 %v563, 96
  %v751 = vpop.permute.xlu0 %750
  %752 = vrot.lane.b32.xlu0 %v564, 96
  %v753 = vpop.permute.xlu0 %752
  %754 = vrot.lane.b32.xlu0 %v565, 96
  %v755 = vpop.permute.xlu0 %754
  %756 = vrot.lane.b32.xlu0 %v566, 96
  %v757 = vpop.permute.xlu0 %756
  %758 = vrot.lane.b32.xlu0 %v567, 96
  %v759 = vpop.permute.xlu0 %758
  %v824 = vmax.f32 %v504, %v633
  %v825 = vmax.f32 %v505, %v635
  %v826 = vmax.f32 %v506, %v637
  %v827 = vmax.f32 %v507, %v639
  %v828 = vmax.f32 %v508, %v641
  %v829 = vmax.f32 %v509, %v643
  %v830 = vmax.f32 %v510, %v645
  %v831 = vmax.f32 %v511, %v647
  %v832 = vmax.f32 %v512, %v649
  %v833 = vmax.f32 %v513, %v651
  %v834 = vmax.f32 %v514, %v653
  %v835 = vmax.f32 %v515, %v655
  %v836 = vmax.f32 %v516, %v657
  %v837 = vmax.f32 %v517, %v659
  %v838 = vmax.f32 %v518, %v661
  %v839 = vmax.f32 %v519, %v663
  %v840 = vmax.f32 %v520, %v665
  %v841 = vmax.f32 %v521, %v667
  %v842 = vmax.f32 %v522, %v669
  %v843 = vmax.f32 %v523, %v671
  %v844 = vmax.f32 %v524, %v673
  %v845 = vmax.f32 %v525, %v675
  %v846 = vmax.f32 %v526, %v677
  %v847 = vmax.f32 %v527, %v679
  %v848 = vmax.f32 %v528, %v681
  %v849 = vmax.f32 %v529, %v683
  %v850 = vmax.f32 %v530, %v685
  %v851 = vmax.f32 %v531, %v687
  %v852 = vmax.f32 %v532, %v689
  %v853 = vmax.f32 %v533, %v691
  %v854 = vmax.f32 %v534, %v693
  %v855 = vmax.f32 %v535, %v695
  %v856 = vmax.f32 %v536, %v697
  %v857 = vmax.f32 %v537, %v699
  %v858 = vmax.f32 %v538, %v701
  %v859 = vmax.f32 %v539, %v703
  %v860 = vmax.f32 %v540, %v705
  %v861 = vmax.f32 %v541, %v707
  %v862 = vmax.f32 %v542, %v709
  %v863 = vmax.f32 %v543, %v711
  %v864 = vmax.f32 %v544, %v713
  %v865 = vmax.f32 %v545, %v715
  %v866 = vmax.f32 %v546, %v717
  %v867 = vmax.f32 %v547, %v719
  %v868 = vmax.f32 %v548, %v721
  %v869 = vmax.f32 %v549, %v723
  %v870 = vmax.f32 %v550, %v725
  %v871 = vmax.f32 %v551, %v727
  %v872 = vmax.f32 %v552, %v729
  %v873 = vmax.f32 %v553, %v731
  %v874 = vmax.f32 %v554, %v733
  %v875 = vmax.f32 %v555, %v735
  %v876 = vmax.f32 %v556, %v737
  %v877 = vmax.f32 %v557, %v739
  %v878 = vmax.f32 %v558, %v741
  %v879 = vmax.f32 %v559, %v743
  %v880 = vmax.f32 %v560, %v745
  %v881 = vmax.f32 %v561, %v747
  %v882 = vmax.f32 %v562, %v749
  %v883 = vmax.f32 %v563, %v751
  %v884 = vmax.f32 %v564, %v753
  %v885 = vmax.f32 %v565, %v755
  %v886 = vmax.f32 %v566, %v757
  %v887 = vmax.f32 %v567, %v759
  %952 = vrot.lane.b32.xlu0 %v824, 64
  %v953 = vpop.permute.xlu0 %952
  %954 = vrot.lane.b32.xlu0 %v825, 64
  %v955 = vpop.permute.xlu0 %954
  %956 = vrot.lane.b32.xlu0 %v826, 64
  %v957 = vpop.permute.xlu0 %956
  %958 = vrot.lane.b32.xlu0 %v827, 64
  %v959 = vpop.permute.xlu0 %958
  %960 = vrot.lane.b32.xlu0 %v828, 64
  %v961 = vpop.permute.xlu0 %960
  %962 = vrot.lane.b32.xlu0 %v829, 64
  %v963 = vpop.permute.xlu0 %962
  %964 = vrot.lane.b32.xlu0 %v830, 64
  %v965 = vpop.permute.xlu0 %964
  %966 = vrot.lane.b32.xlu0 %v831, 64
  %v967 = vpop.permute.xlu0 %966
  %968 = vrot.lane.b32.xlu0 %v832, 64
  %v969 = vpop.permute.xlu0 %968
  %970 = vrot.lane.b32.xlu0 %v833, 64
  %v971 = vpop.permute.xlu0 %970
  %972 = vrot.lane.b32.xlu0 %v834, 64
  %v973 = vpop.permute.xlu0 %972
  %974 = vrot.lane.b32.xlu0 %v835, 64
  %v975 = vpop.permute.xlu0 %974
  %976 = vrot.lane.b32.xlu0 %v836, 64
  %v977 = vpop.permute.xlu0 %976
  %978 = vrot.lane.b32.xlu0 %v837, 64
  %v979 = vpop.permute.xlu0 %978
  %980 = vrot.lane.b32.xlu0 %v838, 64
  %v981 = vpop.permute.xlu0 %980
  %982 = vrot.lane.b32.xlu0 %v839, 64
  %v983 = vpop.permute.xlu0 %982
  %984 = vrot.lane.b32.xlu0 %v840, 64
  %v985 = vpop.permute.xlu0 %984
  %986 = vrot.lane.b32.xlu0 %v841, 64
  %v987 = vpop.permute.xlu0 %986
  %988 = vrot.lane.b32.xlu0 %v842, 64
  %v989 = vpop.permute.xlu0 %988
  %990 = vrot.lane.b32.xlu0 %v843, 64
  %v991 = vpop.permute.xlu0 %990
  %992 = vrot.lane.b32.xlu0 %v844, 64
  %v993 = vpop.permute.xlu0 %992
  %994 = vrot.lane.b32.xlu0 %v845, 64
  %v995 = vpop.permute.xlu0 %994
  %996 = vrot.lane.b32.xlu0 %v846, 64
  %v997 = vpop.permute.xlu0 %996
  %998 = vrot.lane.b32.xlu0 %v847, 64
  %v999 = vpop.permute.xlu0 %998
  %1000 = vrot.lane.b32.xlu0 %v848, 64
  %v1001 = vpop.permute.xlu0 %1000
  %1002 = vrot.lane.b32.xlu0 %v849, 64
  %v1003 = vpop.permute.xlu0 %1002
  %1004 = vrot.lane.b32.xlu0 %v850, 64
  %v1005 = vpop.permute.xlu0 %1004
  %1006 = vrot.lane.b32.xlu0 %v851, 64
  %v1007 = vpop.permute.xlu0 %1006
  %1008 = vrot.lane.b32.xlu0 %v852, 64
  %v1009 = vpop.permute.xlu0 %1008
  %1010 = vrot.lane.b32.xlu0 %v853, 64
  %v1011 = vpop.permute.xlu0 %1010
  %1012 = vrot.lane.b32.xlu0 %v854, 64
  %v1013 = vpop.permute.xlu0 %1012
  %1014 = vrot.lane.b32.xlu0 %v855, 64
  %v1015 = vpop.permute.xlu0 %1014
  %1016 = vrot.lane.b32.xlu0 %v856, 64
  %v1017 = vpop.permute.xlu0 %1016
  %1018 = vrot.lane.b32.xlu0 %v857, 64
  %v1019 = vpop.permute.xlu0 %1018
  %1020 = vrot.lane.b32.xlu0 %v858, 64
  %v1021 = vpop.permute.xlu0 %1020
  %1022 = vrot.lane.b32.xlu0 %v859, 64
  %v1023 = vpop.permute.xlu0 %1022
  %1024 = vrot.lane.b32.xlu0 %v860, 64
  %v1025 = vpop.permute.xlu0 %1024
  %1026 = vrot.lane.b32.xlu0 %v861, 64
  %v1027 = vpop.permute.xlu0 %1026
  %1028 = vrot.lane.b32.xlu0 %v862, 64
  %v1029 = vpop.permute.xlu0 %1028
  %1030 = vrot.lane.b32.xlu0 %v863, 64
  %v1031 = vpop.permute.xlu0 %1030
  %1032 = vrot.lane.b32.xlu0 %v864, 64
  %v1033 = vpop.permute.xlu0 %1032
  %1034 = vrot.lane.b32.xlu0 %v865, 64
  %v1035 = vpop.permute.xlu0 %1034
  %1036 = vrot.lane.b32.xlu0 %v866, 64
  %v1037 = vpop.permute.xlu0 %1036
  %1038 = vrot.lane.b32.xlu0 %v867, 64
  %v1039 = vpop.permute.xlu0 %1038
  %1040 = vrot.lane.b32.xlu0 %v868, 64
  %v1041 = vpop.permute.xlu0 %1040
  %1042 = vrot.lane.b32.xlu0 %v869, 64
  %v1043 = vpop.permute.xlu0 %1042
  %1044 = vrot.lane.b32.xlu0 %v870, 64
  %v1045 = vpop.permute.xlu0 %1044
  %1046 = vrot.lane.b32.xlu0 %v871, 64
  %v1047 = vpop.permute.xlu0 %1046
  %1048 = vrot.lane.b32.xlu0 %v872, 64
  %v1049 = vpop.permute.xlu0 %1048
  %1050 = vrot.lane.b32.xlu0 %v873, 64
  %v1051 = vpop.permute.xlu0 %1050
  %1052 = vrot.lane.b32.xlu0 %v874, 64
  %v1053 = vpop.permute.xlu0 %1052
  %1054 = vrot.lane.b32.xlu0 %v875, 64
  %v1055 = vpop.permute.xlu0 %1054
  %1056 = vrot.lane.b32.xlu0 %v876, 64
  %v1057 = vpop.permute.xlu0 %1056
  %1058 = vrot.lane.b32.xlu0 %v877, 64
  %v1059 = vpop.permute.xlu0 %1058
  %1060 = vrot.lane.b32.xlu0 %v878, 64
  %v1061 = vpop.permute.xlu0 %1060
  %1062 = vrot.lane.b32.xlu0 %v879, 64
  %v1063 = vpop.permute.xlu0 %1062
  %1064 = vrot.lane.b32.xlu0 %v880, 64
  %v1065 = vpop.permute.xlu0 %1064
  %1066 = vrot.lane.b32.xlu0 %v881, 64
  %v1067 = vpop.permute.xlu0 %1066
  %1068 = vrot.lane.b32.xlu0 %v882, 64
  %v1069 = vpop.permute.xlu0 %1068
  %1070 = vrot.lane.b32.xlu0 %v883, 64
  %v1071 = vpop.permute.xlu0 %1070
  %1072 = vrot.lane.b32.xlu0 %v884, 64
  %v1073 = vpop.permute.xlu0 %1072
  %1074 = vrot.lane.b32.xlu0 %v885, 64
  %v1075 = vpop.permute.xlu0 %1074
  %1076 = vrot.lane.b32.xlu0 %v886, 64
  %v1077 = vpop.permute.xlu0 %1076
  %1078 = vrot.lane.b32.xlu0 %v887, 64
  %v1079 = vpop.permute.xlu0 %1078
  %v1144 = vmax.f32 %v824, %v953
  %v1145 = vmax.f32 %v825, %v955
  %v1146 = vmax.f32 %v826, %v957
  %v1147 = vmax.f32 %v827, %v959
  %v1148 = vmax.f32 %v828, %v961
  %v1149 = vmax.f32 %v829, %v963
  %v1150 = vmax.f32 %v830, %v965
  %v1151 = vmax.f32 %v831, %v967
  %v1152 = vmax.f32 %v832, %v969
  %v1153 = vmax.f32 %v833, %v971
  %v1154 = vmax.f32 %v834, %v973
  %v1155 = vmax.f32 %v835, %v975
  %v1156 = vmax.f32 %v836, %v977
  %v1157 = vmax.f32 %v837, %v979
  %v1158 = vmax.f32 %v838, %v981
  %v1159 = vmax.f32 %v839, %v983
  %v1160 = vmax.f32 %v840, %v985
  %v1161 = vmax.f32 %v841, %v987
  %v1162 = vmax.f32 %v842, %v989
  %v1163 = vmax.f32 %v843, %v991
  %v1164 = vmax.f32 %v844, %v993
  %v1165 = vmax.f32 %v845, %v995
  %v1166 = vmax.f32 %v846, %v997
  %v1167 = vmax.f32 %v847, %v999
  %v1168 = vmax.f32 %v848, %v1001
  %v1169 = vmax.f32 %v849, %v1003
  %v1170 = vmax.f32 %v850, %v1005
  %v1171 = vmax.f32 %v851, %v1007
  %v1172 = vmax.f32 %v852, %v1009
  %v1173 = vmax.f32 %v853, %v1011
  %v1174 = vmax.f32 %v854, %v1013
  %v1175 = vmax.f32 %v855, %v1015
  %v1176 = vmax.f32 %v856, %v1017
  %v1177 = vmax.f32 %v857, %v1019
  %v1178 = vmax.f32 %v858, %v1021
  %v1179 = vmax.f32 %v859, %v1023
  %v1180 = vmax.f32 %v860, %v1025
  %v1181 = vmax.f32 %v861, %v1027
  %v1182 = vmax.f32 %v862, %v1029
  %v1183 = vmax.f32 %v863, %v1031
  %v1184 = vmax.f32 %v864, %v1033
  %v1185 = vmax.f32 %v865, %v1035
  %v1186 = vmax.f32 %v866, %v1037
  %v1187 = vmax.f32 %v867, %v1039
  %v1188 = vmax.f32 %v868, %v1041
  %v1189 = vmax.f32 %v869, %v1043
  %v1190 = vmax.f32 %v870, %v1045
  %v1191 = vmax.f32 %v871, %v1047
  %v1192 = vmax.f32 %v872, %v1049
  %v1193 = vmax.f32 %v873, %v1051
  %v1194 = vmax.f32 %v874, %v1053
  %v1195 = vmax.f32 %v875, %v1055
  %v1196 = vmax.f32 %v876, %v1057
  %v1197 = vmax.f32 %v877, %v1059
  %v1198 = vmax.f32 %v878, %v1061
  %v1199 = vmax.f32 %v879, %v1063
  %v1200 = vmax.f32 %v880, %v1065
  %v1201 = vmax.f32 %v881, %v1067
  %v1202 = vmax.f32 %v882, %v1069
  %v1203 = vmax.f32 %v883, %v1071
  %v1204 = vmax.f32 %v884, %v1073
  %v1205 = vmax.f32 %v885, %v1075
  %v1206 = vmax.f32 %v886, %v1077
  %v1207 = vmax.f32 %v887, %v1079
  %vm1208 = vcmask 261120
  %1209 = vst.msk [vmem:[#allocation2] sm:$0xff] %vm1208, 0.0
  %vm1210 = vcmask 254976
  %1211 = vst.msk [vmem:[#allocation2 + $0x8] sm:$0x3] %vm1210, 0.0
  %1212 = vst.msk [vmem:[#allocation2 + $0xa0] sm:$0xff] %vm1208, 0.0
  %1213 = vst.msk [vmem:[#allocation2 + $0xa8] sm:$0x3] %vm1210, 0.0
  %1214 = vst.msk [vmem:[#allocation2 + $0x140] sm:$0xff] %vm1208, 0.0
  %1215 = vst.msk [vmem:[#allocation2 + $0x148] sm:$0x3] %vm1210, 0.0
  %1216 = vst.msk [vmem:[#allocation2 + $0x1e0] sm:$0xff] %vm1208, 0.0
  %1217 = vst.msk [vmem:[#allocation2 + $0x1e8] sm:$0x3] %vm1210, 0.0
  %1218 = vst.msk [vmem:[#allocation2 + $0x280] sm:$0xff] %vm1208, 0.0
  %1219 = vst.msk [vmem:[#allocation2 + $0x288] sm:$0x3] %vm1210, 0.0
  %1220 = vst.msk [vmem:[#allocation2 + $0x320] sm:$0xff] %vm1208, 0.0
  %1221 = vst.msk [vmem:[#allocation2 + $0x328] sm:$0x3] %vm1210, 0.0
  %1222 = vst.msk [vmem:[#allocation2 + $0x3c0] sm:$0xff] %vm1208, 0.0
  %1223 = vst.msk [vmem:[#allocation2 + $0x3c8] sm:$0x3] %vm1210, 0.0
  %1224 = vst.msk [vmem:[#allocation2 + $0x460] sm:$0xff] %vm1208, 0.0
  %1225 = vst.msk [vmem:[#allocation2 + $0x468] sm:$0x3] %vm1210, 0.0
  %s1226 = scalar_lea.vmem [#allocation2], 144
  %1227 = vst.msk [vmem:[%s1226] sm:$0xff] %vm1208, 0.0
  %1228 = vst.msk [vmem:[%s1226 + $0x8] sm:$0x3] %vm1210, 0.0
  %1229 = vst.msk [vmem:[%s1226 + $0xa0] sm:$0xff] %vm1208, 0.0
  %1230 = vst.msk [vmem:[%s1226 + $0xa8] sm:$0x3] %vm1210, 0.0
  %1231 = vst.msk [vmem:[%s1226 + $0x140] sm:$0xff] %vm1208, 0.0
  %1232 = vst.msk [vmem:[%s1226 + $0x148] sm:$0x3] %vm1210, 0.0
  %1233 = vst.msk [vmem:[%s1226 + $0x1e0] sm:$0xff] %vm1208, 0.0
  %1234 = vst.msk [vmem:[%s1226 + $0x1e8] sm:$0x3] %vm1210, 0.0
  %1235 = vst.msk [vmem:[%s1226 + $0x280] sm:$0xff] %vm1208, 0.0
  %1236 = vst.msk [vmem:[%s1226 + $0x288] sm:$0x3] %vm1210, 0.0
  %1237 = vst.msk [vmem:[%s1226 + $0x320] sm:$0xff] %vm1208, 0.0
  %1238 = vst.msk [vmem:[%s1226 + $0x328] sm:$0x3] %vm1210, 0.0
  %1239 = vst.msk [vmem:[%s1226 + $0x3c0] sm:$0xff] %vm1208, 0.0
  %1240 = vst.msk [vmem:[%s1226 + $0x3c8] sm:$0x3] %vm1210, 0.0
  %1241 = vst.msk [vmem:[%s1226 + $0x460] sm:$0xff] %vm1208, 0.0
  %1242 = vst.msk [vmem:[%s1226 + $0x468] sm:$0x3] %vm1210, 0.0
  %s1243 = scalar_lea.vmem [#allocation2], 16
  %vm1244 = vcmask 253952
  %1245 = vst.msk [vmem:[%s1243] sm:$0x1] %vm1244, 0.0
  %1246 = vst.msk [vmem:[%s1243 + $0x10] sm:$0x1] %vm1244, 0.0
  %1247 = vst.msk [vmem:[%s1243 + $0x20] sm:$0x1] %vm1244, 0.0
  %1248 = vst.msk [vmem:[%s1243 + $0x30] sm:$0x1] %vm1244, 0.0
  %1249 = vst.msk [vmem:[%s1243 + $0x40] sm:$0x1] %vm1244, 0.0
  %1250 = vst.msk [vmem:[%s1243 + $0x50] sm:$0x1] %vm1244, 0.0
  %1251 = vst.msk [vmem:[%s1243 + $0x60] sm:$0x1] %vm1244, 0.0
  %1252 = vst.msk [vmem:[%s1243 + $0x70] sm:$0x1] %vm1244, 0.0
  %1253 = vst.msk [vmem:[%s1243 + $0xa0] sm:$0x1] %vm1244, 0.0
  %1254 = vst.msk [vmem:[%s1243 + $0xb0] sm:$0x1] %vm1244, 0.0
  %1255 = vst.msk [vmem:[%s1243 + $0xc0] sm:$0x1] %vm1244, 0.0
  %1256 = vst.msk [vmem:[%s1243 + $0xd0] sm:$0x1] %vm1244, 0.0
  %1257 = vst.msk [vmem:[%s1243 + $0xe0] sm:$0x1] %vm1244, 0.0
  %1258 = vst.msk [vmem:[%s1243 + $0xf0] sm:$0x1] %vm1244, 0.0
  %1259 = vst.msk [vmem:[%s1243 + $0x100] sm:$0x1] %vm1244, 0.0
  %1260 = vst.msk [vmem:[%s1243 + $0x110] sm:$0x1] %vm1244, 0.0
  %1261 = vst.msk [vmem:[%s1243 + $0x140] sm:$0x1] %vm1244, 0.0
  %1262 = vst.msk [vmem:[%s1243 + $0x150] sm:$0x1] %vm1244, 0.0
  %1263 = vst.msk [vmem:[%s1243 + $0x160] sm:$0x1] %vm1244, 0.0
  %1264 = vst.msk [vmem:[%s1243 + $0x170] sm:$0x1] %vm1244, 0.0
  %1265 = vst.msk [vmem:[%s1243 + $0x180] sm:$0x1] %vm1244, 0.0
  %1266 = vst.msk [vmem:[%s1243 + $0x190] sm:$0x1] %vm1244, 0.0
  %1267 = vst.msk [vmem:[%s1243 + $0x1a0] sm:$0x1] %vm1244, 0.0
  %1268 = vst.msk [vmem:[%s1243 + $0x1b0] sm:$0x1] %vm1244, 0.0
  %1269 = vst.msk [vmem:[%s1243 + $0x1e0] sm:$0x1] %vm1244, 0.0
  %1270 = vst.msk [vmem:[%s1243 + $0x1f0] sm:$0x1] %vm1244, 0.0
  %1271 = vst.msk [vmem:[%s1243 + $0x200] sm:$0x1] %vm1244, 0.0
  %1272 = vst.msk [vmem:[%s1243 + $0x210] sm:$0x1] %vm1244, 0.0
  %1273 = vst.msk [vmem:[%s1243 + $0x220] sm:$0x1] %vm1244, 0.0
  %1274 = vst.msk [vmem:[%s1243 + $0x230] sm:$0x1] %vm1244, 0.0
  %1275 = vst.msk [vmem:[%s1243 + $0x240] sm:$0x1] %vm1244, 0.0
  %1276 = vst.msk [vmem:[%s1243 + $0x250] sm:$0x1] %vm1244, 0.0
  %1277 = vst.msk [vmem:[%s1243 + $0x280] sm:$0x1] %vm1244, 0.0
  %1278 = vst.msk [vmem:[%s1243 + $0x290] sm:$0x1] %vm1244, 0.0
  %1279 = vst.msk [vmem:[%s1243 + $0x2a0] sm:$0x1] %vm1244, 0.0
  %1280 = vst.msk [vmem:[%s1243 + $0x2b0] sm:$0x1] %vm1244, 0.0
  %1281 = vst.msk [vmem:[%s1243 + $0x2c0] sm:$0x1] %vm1244, 0.0
  %1282 = vst.msk [vmem:[%s1243 + $0x2d0] sm:$0x1] %vm1244, 0.0
  %1283 = vst.msk [vmem:[%s1243 + $0x2e0] sm:$0x1] %vm1244, 0.0
  %1284 = vst.msk [vmem:[%s1243 + $0x2f0] sm:$0x1] %vm1244, 0.0
  %1285 = vst.msk [vmem:[%s1243 + $0x320] sm:$0x1] %vm1244, 0.0
  %1286 = vst.msk [vmem:[%s1243 + $0x330] sm:$0x1] %vm1244, 0.0
  %1287 = vst.msk [vmem:[%s1243 + $0x340] sm:$0x1] %vm1244, 0.0
  %1288 = vst.msk [vmem:[%s1243 + $0x350] sm:$0x1] %vm1244, 0.0
  %1289 = vst.msk [vmem:[%s1243 + $0x360] sm:$0x1] %vm1244, 0.0
  %1290 = vst.msk [vmem:[%s1243 + $0x370] sm:$0x1] %vm1244, 0.0
  %1291 = vst.msk [vmem:[%s1243 + $0x380] sm:$0x1] %vm1244, 0.0
  %1292 = vst.msk [vmem:[%s1243 + $0x390] sm:$0x1] %vm1244, 0.0
  %1293 = vst.msk [vmem:[%s1243 + $0x3c0] sm:$0x1] %vm1244, 0.0
  %1294 = vst.msk [vmem:[%s1243 + $0x3d0] sm:$0x1] %vm1244, 0.0
  %1295 = vst.msk [vmem:[%s1243 + $0x3e0] sm:$0x1] %vm1244, 0.0
  %1296 = vst.msk [vmem:[%s1243 + $0x3f0] sm:$0x1] %vm1244, 0.0
  %1297 = vst.msk [vmem:[%s1243 + $0x400] sm:$0x1] %vm1244, 0.0
  %1298 = vst.msk [vmem:[%s1243 + $0x410] sm:$0x1] %vm1244, 0.0
  %1299 = vst.msk [vmem:[%s1243 + $0x420] sm:$0x1] %vm1244, 0.0
  %1300 = vst.msk [vmem:[%s1243 + $0x430] sm:$0x1] %vm1244, 0.0
  %1301 = vst.msk [vmem:[%s1243 + $0x460] sm:$0x1] %vm1244, 0.0
  %1302 = vst.msk [vmem:[%s1243 + $0x470] sm:$0x1] %vm1244, 0.0
  %1303 = vst.msk [vmem:[%s1243 + $0x480] sm:$0x1] %vm1244, 0.0
  %1304 = vst.msk [vmem:[%s1243 + $0x490] sm:$0x1] %vm1244, 0.0
  %1305 = vst.msk [vmem:[%s1243 + $0x4a0] sm:$0x1] %vm1244, 0.0
  %1306 = vst.msk [vmem:[%s1243 + $0x4b0] sm:$0x1] %vm1244, 0.0
  %1307 = vst.msk [vmem:[%s1243 + $0x4c0] sm:$0x1] %vm1244, 0.0
  %1308 = vst.msk [vmem:[%s1243 + $0x4d0] sm:$0x1] %vm1244, 0.0
  %1309 = vst.msk [vmem:[%s1243 + $0x9] sm:$0x1] %vm1244, 0.0
  %1310 = vst.msk [vmem:[%s1243 + $0x19] sm:$0x1] %vm1244, 0.0
  %1311 = vst.msk [vmem:[%s1243 + $0x29] sm:$0x1] %vm1244, 0.0
  %1312 = vst.msk [vmem:[%s1243 + $0x39] sm:$0x1] %vm1244, 0.0
  %1313 = vst.msk [vmem:[%s1243 + $0x49] sm:$0x1] %vm1244, 0.0
  %1314 = vst.msk [vmem:[%s1243 + $0x59] sm:$0x1] %vm1244, 0.0
  %1315 = vst.msk [vmem:[%s1243 + $0x69] sm:$0x1] %vm1244, 0.0
  %1316 = vst.msk [vmem:[%s1243 + $0x79] sm:$0x1] %vm1244, 0.0
  %1317 = vst.msk [vmem:[%s1243 + $0xa9] sm:$0x1] %vm1244, 0.0
  %1318 = vst.msk [vmem:[%s1243 + $0xb9] sm:$0x1] %vm1244, 0.0
  %1319 = vst.msk [vmem:[%s1243 + $0xc9] sm:$0x1] %vm1244, 0.0
  %1320 = vst.msk [vmem:[%s1243 + $0xd9] sm:$0x1] %vm1244, 0.0
  %1321 = vst.msk [vmem:[%s1243 + $0xe9] sm:$0x1] %vm1244, 0.0
  %1322 = vst.msk [vmem:[%s1243 + $0xf9] sm:$0x1] %vm1244, 0.0
  %1323 = vst.msk [vmem:[%s1243 + $0x109] sm:$0x1] %vm1244, 0.0
  %1324 = vst.msk [vmem:[%s1243 + $0x119] sm:$0x1] %vm1244, 0.0
  %1325 = vst.msk [vmem:[%s1243 + $0x149] sm:$0x1] %vm1244, 0.0
  %1326 = vst.msk [vmem:[%s1243 + $0x159] sm:$0x1] %vm1244, 0.0
  %1327 = vst.msk [vmem:[%s1243 + $0x169] sm:$0x1] %vm1244, 0.0
  %1328 = vst.msk [vmem:[%s1243 + $0x179] sm:$0x1] %vm1244, 0.0
  %1329 = vst.msk [vmem:[%s1243 + $0x189] sm:$0x1] %vm1244, 0.0
  %1330 = vst.msk [vmem:[%s1243 + $0x199] sm:$0x1] %vm1244, 0.0
  %1331 = vst.msk [vmem:[%s1243 + $0x1a9] sm:$0x1] %vm1244, 0.0
  %1332 = vst.msk [vmem:[%s1243 + $0x1b9] sm:$0x1] %vm1244, 0.0
  %1333 = vst.msk [vmem:[%s1243 + $0x1e9] sm:$0x1] %vm1244, 0.0
  %1334 = vst.msk [vmem:[%s1243 + $0x1f9] sm:$0x1] %vm1244, 0.0
  %1335 = vst.msk [vmem:[%s1243 + $0x209] sm:$0x1] %vm1244, 0.0
  %1336 = vst.msk [vmem:[%s1243 + $0x219] sm:$0x1] %vm1244, 0.0
  %1337 = vst.msk [vmem:[%s1243 + $0x229] sm:$0x1] %vm1244, 0.0
  %1338 = vst.msk [vmem:[%s1243 + $0x239] sm:$0x1] %vm1244, 0.0
  %1339 = vst.msk [vmem:[%s1243 + $0x249] sm:$0x1] %vm1244, 0.0
  %1340 = vst.msk [vmem:[%s1243 + $0x259] sm:$0x1] %vm1244, 0.0
  %1341 = vst.msk [vmem:[%s1243 + $0x289] sm:$0x1] %vm1244, 0.0
  %1342 = vst.msk [vmem:[%s1243 + $0x299] sm:$0x1] %vm1244, 0.0
  %1343 = vst.msk [vmem:[%s1243 + $0x2a9] sm:$0x1] %vm1244, 0.0
  %1344 = vst.msk [vmem:[%s1243 + $0x2b9] sm:$0x1] %vm1244, 0.0
  %1345 = vst.msk [vmem:[%s1243 + $0x2c9] sm:$0x1] %vm1244, 0.0
  %1346 = vst.msk [vmem:[%s1243 + $0x2d9] sm:$0x1] %vm1244, 0.0
  %1347 = vst.msk [vmem:[%s1243 + $0x2e9] sm:$0x1] %vm1244, 0.0
  %1348 = vst.msk [vmem:[%s1243 + $0x2f9] sm:$0x1] %vm1244, 0.0
  %1349 = vst.msk [vmem:[%s1243 + $0x329] sm:$0x1] %vm1244, 0.0
  %1350 = vst.msk [vmem:[%s1243 + $0x339] sm:$0x1] %vm1244, 0.0
  %1351 = vst.msk [vmem:[%s1243 + $0x349] sm:$0x1] %vm1244, 0.0
  %1352 = vst.msk [vmem:[%s1243 + $0x359] sm:$0x1] %vm1244, 0.0
  %1353 = vst.msk [vmem:[%s1243 + $0x369] sm:$0x1] %vm1244, 0.0
  %1354 = vst.msk [vmem:[%s1243 + $0x379] sm:$0x1] %vm1244, 0.0
  %1355 = vst.msk [vmem:[%s1243 + $0x389] sm:$0x1] %vm1244, 0.0
  %1356 = vst.msk [vmem:[%s1243 + $0x399] sm:$0x1] %vm1244, 0.0
  %1357 = vst.msk [vmem:[%s1243 + $0x3c9] sm:$0x1] %vm1244, 0.0
  %1358 = vst.msk [vmem:[%s1243 + $0x3d9] sm:$0x1] %vm1244, 0.0
  %1359 = vst.msk [vmem:[%s1243 + $0x3e9] sm:$0x1] %vm1244, 0.0
  %1360 = vst.msk [vmem:[%s1243 + $0x3f9] sm:$0x1] %vm1244, 0.0
  %1361 = vst.msk [vmem:[%s1243 + $0x409] sm:$0x1] %vm1244, 0.0
  %1362 = vst.msk [vmem:[%s1243 + $0x419] sm:$0x1] %vm1244, 0.0
  %1363 = vst.msk [vmem:[%s1243 + $0x429] sm:$0x1] %vm1244, 0.0
  %1364 = vst.msk [vmem:[%s1243 + $0x439] sm:$0x1] %vm1244, 0.0
  %1365 = vst.msk [vmem:[%s1243 + $0x469] sm:$0x1] %vm1244, 0.0
  %1366 = vst.msk [vmem:[%s1243 + $0x479] sm:$0x1] %vm1244, 0.0
  %1367 = vst.msk [vmem:[%s1243 + $0x489] sm:$0x1] %vm1244, 0.0
  %1368 = vst.msk [vmem:[%s1243 + $0x499] sm:$0x1] %vm1244, 0.0
  %1369 = vst.msk [vmem:[%s1243 + $0x4a9] sm:$0x1] %vm1244, 0.0
  %1370 = vst.msk [vmem:[%s1243 + $0x4b9] sm:$0x1] %vm1244, 0.0
  %1371 = vst.msk [vmem:[%s1243 + $0x4c9] sm:$0x1] %vm1244, 0.0
  %1372 = vst.msk [vmem:[%s1243 + $0x4d9] sm:$0x1] %vm1244, 0.0
  %1373 = vst.msk [vmem:[%s1243 + $0x1] sm:$0xff] %vm1208, %v1144
  %1374 = vst.msk [vmem:[%s1243 + $0x11] sm:$0xff] %vm1208, %v1145
  %1375 = vst.msk [vmem:[%s1243 + $0x21] sm:$0xff] %vm1208, %v1146
  %1376 = vst.msk [vmem:[%s1243 + $0x31] sm:$0xff] %vm1208, %v1147
  %1377 = vst.msk [vmem:[%s1243 + $0x41] sm:$0xff] %vm1208, %v1148
  %1378 = vst.msk [vmem:[%s1243 + $0x51] sm:$0xff] %vm1208, %v1149
  %1379 = vst.msk [vmem:[%s1243 + $0x61] sm:$0xff] %vm1208, %v1150
  %1380 = vst.msk [vmem:[%s1243 + $0x71] sm:$0xff] %vm1208, %v1151
  %1381 = vst.msk [vmem:[%s1243 + $0xa1] sm:$0xff] %vm1208, %v1152
  %1382 = vst.msk [vmem:[%s1243 + $0xb1] sm:$0xff] %vm1208, %v1153
  %1383 = vst.msk [vmem:[%s1243 + $0xc1] sm:$0xff] %vm1208, %v1154
  %1384 = vst.msk [vmem:[%s1243 + $0xd1] sm:$0xff] %vm1208, %v1155
  %1385 = vst.msk [vmem:[%s1243 + $0xe1] sm:$0xff] %vm1208, %v1156
  %1386 = vst.msk [vmem:[%s1243 + $0xf1] sm:$0xff] %vm1208, %v1157
  %1387 = vst.msk [vmem:[%s1243 + $0x101] sm:$0xff] %vm1208, %v1158
  %1388 = vst.msk [vmem:[%s1243 + $0x111] sm:$0xff] %vm1208, %v1159
  %1389 = vst.msk [vmem:[%s1243 + $0x141] sm:$0xff] %vm1208, %v1160
  %1390 = vst.msk [vmem:[%s1243 + $0x151] sm:$0xff] %vm1208, %v1161
  %1391 = vst.msk [vmem:[%s1243 + $0x161] sm:$0xff] %vm1208, %v1162
  %1392 = vst.msk [vmem:[%s1243 + $0x171] sm:$0xff] %vm1208, %v1163
  %1393 = vst.msk [vmem:[%s1243 + $0x181] sm:$0xff] %vm1208, %v1164
  %1394 = vst.msk [vmem:[%s1243 + $0x191] sm:$0xff] %vm1208, %v1165
  %1395 = vst.msk [vmem:[%s1243 + $0x1a1] sm:$0xff] %vm1208, %v1166
  %1396 = vst.msk [vmem:[%s1243 + $0x1b1] sm:$0xff] %vm1208, %v1167
  %1397 = vst.msk [vmem:[%s1243 + $0x1e1] sm:$0xff] %vm1208, %v1168
  %1398 = vst.msk [vmem:[%s1243 + $0x1f1] sm:$0xff] %vm1208, %v1169
  %1399 = vst.msk [vmem:[%s1243 + $0x201] sm:$0xff] %vm1208, %v1170
  %1400 = vst.msk [vmem:[%s1243 + $0x211] sm:$0xff] %vm1208, %v1171
  %1401 = vst.msk [vmem:[%s1243 + $0x221] sm:$0xff] %vm1208, %v1172
  %1402 = vst.msk [vmem:[%s1243 + $0x231] sm:$0xff] %vm1208, %v1173
  %1403 = vst.msk [vmem:[%s1243 + $0x241] sm:$0xff] %vm1208, %v1174
  %1404 = vst.msk [vmem:[%s1243 + $0x251] sm:$0xff] %vm1208, %v1175
  %1405 = vst.msk [vmem:[%s1243 + $0x281] sm:$0xff] %vm1208, %v1176
  %1406 = vst.msk [vmem:[%s1243 + $0x291] sm:$0xff] %vm1208, %v1177
  %1407 = vst.msk [vmem:[%s1243 + $0x2a1] sm:$0xff] %vm1208, %v1178
  %1408 = vst.msk [vmem:[%s1243 + $0x2b1] sm:$0xff] %vm1208, %v1179
  %1409 = vst.msk [vmem:[%s1243 + $0x2c1] sm:$0xff] %vm1208, %v1180
  %1410 = vst.msk [vmem:[%s1243 + $0x2d1] sm:$0xff] %vm1208, %v1181
  %1411 = vst.msk [vmem:[%s1243 + $0x2e1] sm:$0xff] %vm1208, %v1182
  %1412 = vst.msk [vmem:[%s1243 + $0x2f1] sm:$0xff] %vm1208, %v1183
  %1413 = vst.msk [vmem:[%s1243 + $0x321] sm:$0xff] %vm1208, %v1184
  %1414 = vst.msk [vmem:[%s1243 + $0x331] sm:$0xff] %vm1208, %v1185
  %1415 = vst.msk [vmem:[%s1243 + $0x341] sm:$0xff] %vm1208, %v1186
  %1416 = vst.msk [vmem:[%s1243 + $0x351] sm:$0xff] %vm1208, %v1187
  %1417 = vst.msk [vmem:[%s1243 + $0x361] sm:$0xff] %vm1208, %v1188
  %1418 = vst.msk [vmem:[%s1243 + $0x371] sm:$0xff] %vm1208, %v1189
  %1419 = vst.msk [vmem:[%s1243 + $0x381] sm:$0xff] %vm1208, %v1190
  %1420 = vst.msk [vmem:[%s1243 + $0x391] sm:$0xff] %vm1208, %v1191
  %1421 = vst.msk [vmem:[%s1243 + $0x3c1] sm:$0xff] %vm1208, %v1192
  %1422 = vst.msk [vmem:[%s1243 + $0x3d1] sm:$0xff] %vm1208, %v1193
  %1423 = vst.msk [vmem:[%s1243 + $0x3e1] sm:$0xff] %vm1208, %v1194
  %1424 = vst.msk [vmem:[%s1243 + $0x3f1] sm:$0xff] %vm1208, %v1195
  %1425 = vst.msk [vmem:[%s1243 + $0x401] sm:$0xff] %vm1208, %v1196
  %1426 = vst.msk [vmem:[%s1243 + $0x411] sm:$0xff] %vm1208, %v1197
  %1427 = vst.msk [vmem:[%s1243 + $0x421] sm:$0xff] %vm1208, %v1198
  %1428 = vst.msk [vmem:[%s1243 + $0x431] sm:$0xff] %vm1208, %v1199
  %1429 = vst.msk [vmem:[%s1243 + $0x461] sm:$0xff] %vm1208, %v1200
  %1430 = vst.msk [vmem:[%s1243 + $0x471] sm:$0xff] %vm1208, %v1201
  %1431 = vst.msk [vmem:[%s1243 + $0x481] sm:$0xff] %vm1208, %v1202
  %1432 = vst.msk [vmem:[%s1243 + $0x491] sm:$0xff] %vm1208, %v1203
  %1433 = vst.msk [vmem:[%s1243 + $0x4a1] sm:$0xff] %vm1208, %v1204
  %1434 = vst.msk [vmem:[%s1243 + $0x4b1] sm:$0xff] %vm1208, %v1205
  %1435 = vst.msk [vmem:[%s1243 + $0x4c1] sm:$0xff] %vm1208, %v1206
  %1436 = vst.msk [vmem:[%s1243 + $0x4d1] sm:$0xff] %vm1208, %v1207
  %v1437 = vld [vmem:[#allocation2] sm:$0xff]
  %v1438 = vld [vmem:[#allocation2 + $0x10] sm:$0xff]
  %v1439 = vld [vmem:[#allocation2 + $0x20] sm:$0xff]
  %v1440 = vld [vmem:[#allocation2 + $0x30] sm:$0xff]
  %v1441 = vld [vmem:[#allocation2 + $0x40] sm:$0xff]
  %v1442 = vld [vmem:[#allocation2 + $0x50] sm:$0xff]
  %v1443 = vld [vmem:[#allocation2 + $0x60] sm:$0xff]
  %v1444 = vld [vmem:[#allocation2 + $0x70] sm:$0xff]
  %v1445 = vld [vmem:[#allocation2 + $0xa0] sm:$0xff]
  %v1446 = vld [vmem:[#allocation2 + $0xb0] sm:$0xff]
  %v1447 = vld [vmem:[#allocation2 + $0xc0] sm:$0xff]
  %v1448 = vld [vmem:[#allocation2 + $0xd0] sm:$0xff]
  %v1449 = vld [vmem:[#allocation2 + $0xe0] sm:$0xff]
  %v1450 = vld [vmem:[#allocation2 + $0xf0] sm:$0xff]
  %v1451 = vld [vmem:[#allocation2 + $0x100] sm:$0xff]
  %v1452 = vld [vmem:[#allocation2 + $0x110] sm:$0xff]
  %v1453 = vld [vmem:[#allocation2 + $0x140] sm:$0xff]
  %v1454 = vld [vmem:[#allocation2 + $0x150] sm:$0xff]
  %v1455 = vld [vmem:[#allocation2 + $0x160] sm:$0xff]
  %v1456 = vld [vmem:[#allocation2 + $0x170] sm:$0xff]
  %v1457 = vld [vmem:[#allocation2 + $0x180] sm:$0xff]
  %v1458 = vld [vmem:[#allocation2 + $0x190] sm:$0xff]
  %v1459 = vld [vmem:[#allocation2 + $0x1a0] sm:$0xff]
  %v1460 = vld [vmem:[#allocation2 + $0x1b0] sm:$0xff]
  %v1461 = vld [vmem:[#allocation2 + $0x1e0] sm:$0xff]
  %v1462 = vld [vmem:[#allocation2 + $0x1f0] sm:$0xff]
  %v1463 = vld [vmem:[#allocation2 + $0x200] sm:$0xff]
  %v1464 = vld [vmem:[#allocation2 + $0x210] sm:$0xff]
  %v1465 = vld [vmem:[#allocation2 + $0x220] sm:$0xff]
  %v1466 = vld [vmem:[#allocation2 + $0x230] sm:$0xff]
  %v1467 = vld [vmem:[#allocation2 + $0x240] sm:$0xff]
  %v1468 = vld [vmem:[#allocation2 + $0x250] sm:$0xff]
  %v1469 = vld [vmem:[#allocation2 + $0x280] sm:$0xff]
  %v1470 = vld [vmem:[#allocation2 + $0x290] sm:$0xff]
  %v1471 = vld [vmem:[#allocation2 + $0x2a0] sm:$0xff]
  %v1472 = vld [vmem:[#allocation2 + $0x2b0] sm:$0xff]
  %v1473 = vld [vmem:[#allocation2 + $0x2c0] sm:$0xff]
  %v1474 = vld [vmem:[#allocation2 + $0x2d0] sm:$0xff]
  %v1475 = vld [vmem:[#allocation2 + $0x2e0] sm:$0xff]
  %v1476 = vld [vmem:[#allocation2 + $0x2f0] sm:$0xff]
  %v1477 = vld [vmem:[#allocation2 + $0x320] sm:$0xff]
  %v1478 = vld [vmem:[#allocation2 + $0x330] sm:$0xff]
  %v1479 = vld [vmem:[#allocation2 + $0x340] sm:$0xff]
  %v1480 = vld [vmem:[#allocation2 + $0x350] sm:$0xff]
  %v1481 = vld [vmem:[#allocation2 + $0x360] sm:$0xff]
  %v1482 = vld [vmem:[#allocation2 + $0x370] sm:$0xff]
  %v1483 = vld [vmem:[#allocation2 + $0x380] sm:$0xff]
  %v1484 = vld [vmem:[#allocation2 + $0x390] sm:$0xff]
  %v1485 = vld [vmem:[#allocation2 + $0x3c0] sm:$0xff]
  %v1486 = vld [vmem:[#allocation2 + $0x3d0] sm:$0xff]
  %v1487 = vld [vmem:[#allocation2 + $0x3e0] sm:$0xff]
  %v1488 = vld [vmem:[#allocation2 + $0x3f0] sm:$0xff]
  %v1489 = vld [vmem:[#allocation2 + $0x400] sm:$0xff]
  %v1490 = vld [vmem:[#allocation2 + $0x410] sm:$0xff]
  %v1491 = vld [vmem:[#allocation2 + $0x420] sm:$0xff]
  %v1492 = vld [vmem:[#allocation2 + $0x430] sm:$0xff]
  %v1493 = vld [vmem:[#allocation2 + $0x460] sm:$0xff]
  %v1494 = vld [vmem:[#allocation2 + $0x470] sm:$0xff]
  %v1495 = vld [vmem:[#allocation2 + $0x480] sm:$0xff]
  %v1496 = vld [vmem:[#allocation2 + $0x490] sm:$0xff]
  %v1497 = vld [vmem:[#allocation2 + $0x4a0] sm:$0xff]
  %v1498 = vld [vmem:[#allocation2 + $0x4b0] sm:$0xff]
  %v1499 = vld [vmem:[#allocation2 + $0x4c0] sm:$0xff]
  %v1500 = vld [vmem:[#allocation2 + $0x4d0] sm:$0xff]
  %1501 = vst.msk [vmem:[#allocation3] sm:$0xff] %vm1208, %v1437
  %1502 = vst.msk [vmem:[#allocation3 + $0x18] sm:$0xff] %vm1208, %v1438
  %1503 = vst.msk [vmem:[#allocation3 + $0x30] sm:$0xff] %vm1208, %v1439
  %1504 = vst.msk [vmem:[#allocation3 + $0x48] sm:$0xff] %vm1208, %v1440
  %1505 = vst.msk [vmem:[#allocation3 + $0x60] sm:$0xff] %vm1208, %v1441
  %1506 = vst.msk [vmem:[#allocation3 + $0x78] sm:$0xff] %vm1208, %v1442
  %1507 = vst.msk [vmem:[#allocation3 + $0x90] sm:$0xff] %vm1208, %v1443
  %1508 = vst.msk [vmem:[#allocation3 + $0xa8] sm:$0xff] %vm1208, %v1444
  %1509 = vst.msk [vmem:[#allocation3 + $0xc0] sm:$0xff] %vm1208, %v1445
  %1510 = vst.msk [vmem:[#allocation3 + $0xd8] sm:$0xff] %vm1208, %v1446
  %1511 = vst.msk [vmem:[#allocation3 + $0xf0] sm:$0xff] %vm1208, %v1447
  %1512 = vst.msk [vmem:[#allocation3 + $0x108] sm:$0xff] %vm1208, %v1448
  %1513 = vst.msk [vmem:[#allocation3 + $0x120] sm:$0xff] %vm1208, %v1449
  %1514 = vst.msk [vmem:[#allocation3 + $0x138] sm:$0xff] %vm1208, %v1450
  %1515 = vst.msk [vmem:[#allocation3 + $0x150] sm:$0xff] %vm1208, %v1451
  %1516 = vst.msk [vmem:[#allocation3 + $0x168] sm:$0xff] %vm1208, %v1452
  %1517 = vst.msk [vmem:[#allocation3 + $0x180] sm:$0xff] %vm1208, %v1453
  %1518 = vst.msk [vmem:[#allocation3 + $0x198] sm:$0xff] %vm1208, %v1454
  %1519 = vst.msk [vmem:[#allocation3 + $0x1b0] sm:$0xff] %vm1208, %v1455
  %1520 = vst.msk [vmem:[#allocation3 + $0x1c8] sm:$0xff] %vm1208, %v1456
  %1521 = vst.msk [vmem:[#allocation3 + $0x1e0] sm:$0xff] %vm1208, %v1457
  %1522 = vst.msk [vmem:[#allocation3 + $0x1f8] sm:$0xff] %vm1208, %v1458
  %1523 = vst.msk [vmem:[#allocation3 + $0x210] sm:$0xff] %vm1208, %v1459
  %1524 = vst.msk [vmem:[#allocation3 + $0x228] sm:$0xff] %vm1208, %v1460
  %1525 = vst.msk [vmem:[#allocation3 + $0x240] sm:$0xff] %vm1208, %v1461
  %1526 = vst.msk [vmem:[#allocation3 + $0x258] sm:$0xff] %vm1208, %v1462
  %1527 = vst.msk [vmem:[#allocation3 + $0x270] sm:$0xff] %vm1208, %v1463
  %1528 = vst.msk [vmem:[#allocation3 + $0x288] sm:$0xff] %vm1208, %v1464
  %1529 = vst.msk [vmem:[#allocation3 + $0x2a0] sm:$0xff] %vm1208, %v1465
  %1530 = vst.msk [vmem:[#allocation3 + $0x2b8] sm:$0xff] %vm1208, %v1466
  %1531 = vst.msk [vmem:[#allocation3 + $0x2d0] sm:$0xff] %vm1208, %v1467
  %1532 = vst.msk [vmem:[#allocation3 + $0x2e8] sm:$0xff] %vm1208, %v1468
  %1533 = vst.msk [vmem:[#allocation3 + $0x300] sm:$0xff] %vm1208, %v1469
  %1534 = vst.msk [vmem:[#allocation3 + $0x318] sm:$0xff] %vm1208, %v1470
  %1535 = vst.msk [vmem:[#allocation3 + $0x330] sm:$0xff] %vm1208, %v1471
  %1536 = vst.msk [vmem:[#allocation3 + $0x348] sm:$0xff] %vm1208, %v1472
  %1537 = vst.msk [vmem:[#allocation3 + $0x360] sm:$0xff] %vm1208, %v1473
  %1538 = vst.msk [vmem:[#allocation3 + $0x378] sm:$0xff] %vm1208, %v1474
  %1539 = vst.msk [vmem:[#allocation3 + $0x390] sm:$0xff] %vm1208, %v1475
  %1540 = vst.msk [vmem:[#allocation3 + $0x3a8] sm:$0xff] %vm1208, %v1476
  %1541 = vst.msk [vmem:[#allocation3 + $0x3c0] sm:$0xff] %vm1208, %v1477
  %1542 = vst.msk [vmem:[#allocation3 + $0x3d8] sm:$0xff] %vm1208, %v1478
  %1543 = vst.msk [vmem:[#allocation3 + $0x3f0] sm:$0xff] %vm1208, %v1479
  %1544 = vst.msk [vmem:[#allocation3 + $0x408] sm:$0xff] %vm1208, %v1480
  %1545 = vst.msk [vmem:[#allocation3 + $0x420] sm:$0xff] %vm1208, %v1481
  %1546 = vst.msk [vmem:[#allocation3 + $0x438] sm:$0xff] %vm1208, %v1482
  %1547 = vst.msk [vmem:[#allocation3 + $0x450] sm:$0xff] %vm1208, %v1483
  %1548 = vst.msk [vmem:[#allocation3 + $0x468] sm:$0xff] %vm1208, %v1484
  %1549 = vst.msk [vmem:[#allocation3 + $0x480] sm:$0xff] %vm1208, %v1485
  %1550 = vst.msk [vmem:[#allocation3 + $0x498] sm:$0xff] %vm1208, %v1486
  %1551 = vst.msk [vmem:[#allocation3 + $0x4b0] sm:$0xff] %vm1208, %v1487
  %1552 = vst.msk [vmem:[#allocation3 + $0x4c8] sm:$0xff] %vm1208, %v1488
  %1553 = vst.msk [vmem:[#allocation3 + $0x4e0] sm:$0xff] %vm1208, %v1489
  %1554 = vst.msk [vmem:[#allocation3 + $0x4f8] sm:$0xff] %vm1208, %v1490
  %1555 = vst.msk [vmem:[#allocation3 + $0x510] sm:$0xff] %vm1208, %v1491
  %1556 = vst.msk [vmem:[#allocation3 + $0x528] sm:$0xff] %vm1208, %v1492
  %1557 = vst.msk [vmem:[#allocation3 + $0x540] sm:$0xff] %vm1208, %v1493
  %1558 = vst.msk [vmem:[#allocation3 + $0x558] sm:$0xff] %vm1208, %v1494
  %1559 = vst.msk [vmem:[#allocation3 + $0x570] sm:$0xff] %vm1208, %v1495
  %1560 = vst.msk [vmem:[#allocation3 + $0x588] sm:$0xff] %vm1208, %v1496
  %1561 = vst.msk [vmem:[#allocation3 + $0x5a0] sm:$0xff] %vm1208, %v1497
  %1562 = vst.msk [vmem:[#allocation3 + $0x5b8] sm:$0xff] %vm1208, %v1498
  %1563 = vst.msk [vmem:[#allocation3 + $0x5d0] sm:$0xff] %vm1208, %v1499
  %1564 = vst.msk [vmem:[#allocation3 + $0x5e8] sm:$0xff] %vm1208, %v1500
  %v1565 = vld [vmem:[#allocation2 + $0x1] sm:$0xff]
  %v1566 = vld [vmem:[#allocation2 + $0x11] sm:$0xff]
  %v1567 = vld [vmem:[#allocation2 + $0x21] sm:$0xff]
  %v1568 = vld [vmem:[#allocation2 + $0x31] sm:$0xff]
  %v1569 = vld [vmem:[#allocation2 + $0x41] sm:$0xff]
  %v1570 = vld [vmem:[#allocation2 + $0x51] sm:$0xff]
  %v1571 = vld [vmem:[#allocation2 + $0x61] sm:$0xff]
  %v1572 = vld [vmem:[#allocation2 + $0x71] sm:$0xff]
  %v1573 = vld [vmem:[#allocation2 + $0xa1] sm:$0xff]
  %v1574 = vld [vmem:[#allocation2 + $0xb1] sm:$0xff]
  %v1575 = vld [vmem:[#allocation2 + $0xc1] sm:$0xff]
  %v1576 = vld [vmem:[#allocation2 + $0xd1] sm:$0xff]
  %v1577 = vld [vmem:[#allocation2 + $0xe1] sm:$0xff]
  %v1578 = vld [vmem:[#allocation2 + $0xf1] sm:$0xff]
  %v1579 = vld [vmem:[#allocation2 + $0x101] sm:$0xff]
  %v1580 = vld [vmem:[#allocation2 + $0x111] sm:$0xff]
  %v1581 = vld [vmem:[#allocation2 + $0x141] sm:$0xff]
  %v1582 = vld [vmem:[#allocation2 + $0x151] sm:$0xff]
  %v1583 = vld [vmem:[#allocation2 + $0x161] sm:$0xff]
  %v1584 = vld [vmem:[#allocation2 + $0x171] sm:$0xff]
  %v1585 = vld [vmem:[#allocation2 + $0x181] sm:$0xff]
  %v1586 = vld [vmem:[#allocation2 + $0x191] sm:$0xff]
  %v1587 = vld [vmem:[#allocation2 + $0x1a1] sm:$0xff]
  %v1588 = vld [vmem:[#allocation2 + $0x1b1] sm:$0xff]
  %v1589 = vld [vmem:[#allocation2 + $0x1e1] sm:$0xff]
  %v1590 = vld [vmem:[#allocation2 + $0x1f1] sm:$0xff]
  %v1591 = vld [vmem:[#allocation2 + $0x201] sm:$0xff]
  %v1592 = vld [vmem:[#allocation2 + $0x211] sm:$0xff]
  %v1593 = vld [vmem:[#allocation2 + $0x221] sm:$0xff]
  %v1594 = vld [vmem:[#allocation2 + $0x231] sm:$0xff]
  %v1595 = vld [vmem:[#allocation2 + $0x241] sm:$0xff]
  %v1596 = vld [vmem:[#allocation2 + $0x251] sm:$0xff]
  %v1597 = vld [vmem:[#allocation2 + $0x281] sm:$0xff]
  %v1598 = vld [vmem:[#allocation2 + $0x291] sm:$0xff]
  %v1599 = vld [vmem:[#allocation2 + $0x2a1] sm:$0xff]
  %v1600 = vld [vmem:[#allocation2 + $0x2b1] sm:$0xff]
  %v1601 = vld [vmem:[#allocation2 + $0x2c1] sm:$0xff]
  %v1602 = vld [vmem:[#allocation2 + $0x2d1] sm:$0xff]
  %v1603 = vld [vmem:[#allocation2 + $0x2e1] sm:$0xff]
  %v1604 = vld [vmem:[#allocation2 + $0x2f1] sm:$0xff]
  %v1605 = vld [vmem:[#allocation2 + $0x321] sm:$0xff]
  %v1606 = vld [vmem:[#allocation2 + $0x331] sm:$0xff]
  %v1607 = vld [vmem:[#allocation2 + $0x341] sm:$0xff]
  %v1608 = vld [vmem:[#allocation2 + $0x351] sm:$0xff]
  %v1609 = vld [vmem:[#allocation2 + $0x361] sm:$0xff]
  %v1610 = vld [vmem:[#allocation2 + $0x371] sm:$0xff]
  %v1611 = vld [vmem:[#allocation2 + $0x381] sm:$0xff]
  %v1612 = vld [vmem:[#allocation2 + $0x391] sm:$0xff]
  %v1613 = vld [vmem:[#allocation2 + $0x3c1] sm:$0xff]
  %v1614 = vld [vmem:[#allocation2 + $0x3d1] sm:$0xff]
  %v1615 = vld [vmem:[#allocation2 + $0x3e1] sm:$0xff]
  %v1616 = vld [vmem:[#allocation2 + $0x3f1] sm:$0xff]
  %v1617 = vld [vmem:[#allocation2 + $0x401] sm:$0xff]
  %v1618 = vld [vmem:[#allocation2 + $0x411] sm:$0xff]
  %v1619 = vld [vmem:[#allocation2 + $0x421] sm:$0xff]
  %v1620 = vld [vmem:[#allocation2 + $0x431] sm:$0xff]
  %v1621 = vld [vmem:[#allocation2 + $0x461] sm:$0xff]
  %v1622 = vld [vmem:[#allocation2 + $0x471] sm:$0xff]
  %v1623 = vld [vmem:[#allocation2 + $0x481] sm:$0xff]
  %v1624 = vld [vmem:[#allocation2 + $0x491] sm:$0xff]
  %v1625 = vld [vmem:[#allocation2 + $0x4a1] sm:$0xff]
  %v1626 = vld [vmem:[#allocation2 + $0x4b1] sm:$0xff]
  %v1627 = vld [vmem:[#allocation2 + $0x4c1] sm:$0xff]
  %v1628 = vld [vmem:[#allocation2 + $0x4d1] sm:$0xff]
  %1693 = vrot.lane.b32.xlu0 %v1565, 32
  %v1694 = vpop.permute.xlu0 %1693
  %1695 = vrot.lane.b32.xlu0 %v1566, 32
  %v1696 = vpop.permute.xlu0 %1695
  %1697 = vrot.lane.b32.xlu0 %v1567, 32
  %v1698 = vpop.permute.xlu0 %1697
  %1699 = vrot.lane.b32.xlu0 %v1568, 32
  %v1700 = vpop.permute.xlu0 %1699
  %1701 = vrot.lane.b32.xlu0 %v1569, 32
  %v1702 = vpop.permute.xlu0 %1701
  %1703 = vrot.lane.b32.xlu0 %v1570, 32
  %v1704 = vpop.permute.xlu0 %1703
  %1705 = vrot.lane.b32.xlu0 %v1571, 32
  %v1706 = vpop.permute.xlu0 %1705
  %1707 = vrot.lane.b32.xlu0 %v1572, 32
  %v1708 = vpop.permute.xlu0 %1707
  %1709 = vrot.lane.b32.xlu0 %v1573, 32
  %v1710 = vpop.permute.xlu0 %1709
  %1711 = vrot.lane.b32.xlu0 %v1574, 32
  %v1712 = vpop.permute.xlu0 %1711
  %1713 = vrot.lane.b32.xlu0 %v1575, 32
  %v1714 = vpop.permute.xlu0 %1713
  %1715 = vrot.lane.b32.xlu0 %v1576, 32
  %v1716 = vpop.permute.xlu0 %1715
  %1717 = vrot.lane.b32.xlu0 %v1577, 32
  %v1718 = vpop.permute.xlu0 %1717
  %1719 = vrot.lane.b32.xlu0 %v1578, 32
  %v1720 = vpop.permute.xlu0 %1719
  %1721 = vrot.lane.b32.xlu0 %v1579, 32
  %v1722 = vpop.permute.xlu0 %1721
  %1723 = vrot.lane.b32.xlu0 %v1580, 32
  %v1724 = vpop.permute.xlu0 %1723
  %1725 = vrot.lane.b32.xlu0 %v1581, 32
  %v1726 = vpop.permute.xlu0 %1725
  %1727 = vrot.lane.b32.xlu0 %v1582, 32
  %v1728 = vpop.permute.xlu0 %1727
  %1729 = vrot.lane.b32.xlu0 %v1583, 32
  %v1730 = vpop.permute.xlu0 %1729
  %1731 = vrot.lane.b32.xlu0 %v1584, 32
  %v1732 = vpop.permute.xlu0 %1731
  %1733 = vrot.lane.b32.xlu0 %v1585, 32
  %v1734 = vpop.permute.xlu0 %1733
  %1735 = vrot.lane.b32.xlu0 %v1586, 32
  %v1736 = vpop.permute.xlu0 %1735
  %1737 = vrot.lane.b32.xlu0 %v1587, 32
  %v1738 = vpop.permute.xlu0 %1737
  %1739 = vrot.lane.b32.xlu0 %v1588, 32
  %v1740 = vpop.permute.xlu0 %1739
  %1741 = vrot.lane.b32.xlu0 %v1589, 32
  %v1742 = vpop.permute.xlu0 %1741
  %1743 = vrot.lane.b32.xlu0 %v1590, 32
  %v1744 = vpop.permute.xlu0 %1743
  %1745 = vrot.lane.b32.xlu0 %v1591, 32
  %v1746 = vpop.permute.xlu0 %1745
  %1747 = vrot.lane.b32.xlu0 %v1592, 32
  %v1748 = vpop.permute.xlu0 %1747
  %1749 = vrot.lane.b32.xlu0 %v1593, 32
  %v1750 = vpop.permute.xlu0 %1749
  %1751 = vrot.lane.b32.xlu0 %v1594, 32
  %v1752 = vpop.permute.xlu0 %1751
  %1753 = vrot.lane.b32.xlu0 %v1595, 32
  %v1754 = vpop.permute.xlu0 %1753
  %1755 = vrot.lane.b32.xlu0 %v1596, 32
  %v1756 = vpop.permute.xlu0 %1755
  %1757 = vrot.lane.b32.xlu0 %v1597, 32
  %v1758 = vpop.permute.xlu0 %1757
  %1759 = vrot.lane.b32.xlu0 %v1598, 32
  %v1760 = vpop.permute.xlu0 %1759
  %1761 = vrot.lane.b32.xlu0 %v1599, 32
  %v1762 = vpop.permute.xlu0 %1761
  %1763 = vrot.lane.b32.xlu0 %v1600, 32
  %v1764 = vpop.permute.xlu0 %1763
  %1765 = vrot.lane.b32.xlu0 %v1601, 32
  %v1766 = vpop.permute.xlu0 %1765
  %1767 = vrot.lane.b32.xlu0 %v1602, 32
  %v1768 = vpop.permute.xlu0 %1767
  %1769 = vrot.lane.b32.xlu0 %v1603, 32
  %v1770 = vpop.permute.xlu0 %1769
  %1771 = vrot.lane.b32.xlu0 %v1604, 32
  %v1772 = vpop.permute.xlu0 %1771
  %1773 = vrot.lane.b32.xlu0 %v1605, 32
  %v1774 = vpop.permute.xlu0 %1773
  %1775 = vrot.lane.b32.xlu0 %v1606, 32
  %v1776 = vpop.permute.xlu0 %1775
  %1777 = vrot.lane.b32.xlu0 %v1607, 32
  %v1778 = vpop.permute.xlu0 %1777
  %1779 = vrot.lane.b32.xlu0 %v1608, 32
  %v1780 = vpop.permute.xlu0 %1779
  %1781 = vrot.lane.b32.xlu0 %v1609, 32
  %v1782 = vpop.permute.xlu0 %1781
  %1783 = vrot.lane.b32.xlu0 %v1610, 32
  %v1784 = vpop.permute.xlu0 %1783
  %1785 = vrot.lane.b32.xlu0 %v1611, 32
  %v1786 = vpop.permute.xlu0 %1785
  %1787 = vrot.lane.b32.xlu0 %v1612, 32
  %v1788 = vpop.permute.xlu0 %1787
  %1789 = vrot.lane.b32.xlu0 %v1613, 32
  %v1790 = vpop.permute.xlu0 %1789
  %1791 = vrot.lane.b32.xlu0 %v1614, 32
  %v1792 = vpop.permute.xlu0 %1791
  %1793 = vrot.lane.b32.xlu0 %v1615, 32
  %v1794 = vpop.permute.xlu0 %1793
  %1795 = vrot.lane.b32.xlu0 %v1616, 32
  %v1796 = vpop.permute.xlu0 %1795
  %1797 = vrot.lane.b32.xlu0 %v1617, 32
  %v1798 = vpop.permute.xlu0 %1797
  %1799 = vrot.lane.b32.xlu0 %v1618, 32
  %v1800 = vpop.permute.xlu0 %1799
  %1801 = vrot.lane.b32.xlu0 %v1619, 32
  %v1802 = vpop.permute.xlu0 %1801
  %1803 = vrot.lane.b32.xlu0 %v1620, 32
  %v1804 = vpop.permute.xlu0 %1803
  %1805 = vrot.lane.b32.xlu0 %v1621, 32
  %v1806 = vpop.permute.xlu0 %1805
  %1807 = vrot.lane.b32.xlu0 %v1622, 32
  %v1808 = vpop.permute.xlu0 %1807
  %1809 = vrot.lane.b32.xlu0 %v1623, 32
  %v1810 = vpop.permute.xlu0 %1809
  %1811 = vrot.lane.b32.xlu0 %v1624, 32
  %v1812 = vpop.permute.xlu0 %1811
  %1813 = vrot.lane.b32.xlu0 %v1625, 32
  %v1814 = vpop.permute.xlu0 %1813
  %1815 = vrot.lane.b32.xlu0 %v1626, 32
  %v1816 = vpop.permute.xlu0 %1815
  %1817 = vrot.lane.b32.xlu0 %v1627, 32
  %v1818 = vpop.permute.xlu0 %1817
  %1819 = vrot.lane.b32.xlu0 %v1628, 32
  %v1820 = vpop.permute.xlu0 %1819
  %vm1885 = vcmask 523520
  %1886 = vst.msk [vmem:[#allocation3] sm:$0xff] %vm1885, %v1694
  %1887 = vst.msk [vmem:[#allocation3 + $0x18] sm:$0xff] %vm1885, %v1696
  %1888 = vst.msk [vmem:[#allocation3 + $0x30] sm:$0xff] %vm1885, %v1698
  %1889 = vst.msk [vmem:[#allocation3 + $0x48] sm:$0xff] %vm1885, %v1700
  %1890 = vst.msk [vmem:[#allocation3 + $0x60] sm:$0xff] %vm1885, %v1702
  %1891 = vst.msk [vmem:[#allocation3 + $0x78] sm:$0xff] %vm1885, %v1704
  %1892 = vst.msk [vmem:[#allocation3 + $0x90] sm:$0xff] %vm1885, %v1706
  %1893 = vst.msk [vmem:[#allocation3 + $0xa8] sm:$0xff] %vm1885, %v1708
  %1894 = vst.msk [vmem:[#allocation3 + $0xc0] sm:$0xff] %vm1885, %v1710
  %1895 = vst.msk [vmem:[#allocation3 + $0xd8] sm:$0xff] %vm1885, %v1712
  %1896 = vst.msk [vmem:[#allocation3 + $0xf0] sm:$0xff] %vm1885, %v1714
  %1897 = vst.msk [vmem:[#allocation3 + $0x108] sm:$0xff] %vm1885, %v1716
  %1898 = vst.msk [vmem:[#allocation3 + $0x120] sm:$0xff] %vm1885, %v1718
  %1899 = vst.msk [vmem:[#allocation3 + $0x138] sm:$0xff] %vm1885, %v1720
  %1900 = vst.msk [vmem:[#allocation3 + $0x150] sm:$0xff] %vm1885, %v1722
  %1901 = vst.msk [vmem:[#allocation3 + $0x168] sm:$0xff] %vm1885, %v1724
  %1902 = vst.msk [vmem:[#allocation3 + $0x180] sm:$0xff] %vm1885, %v1726
  %1903 = vst.msk [vmem:[#allocation3 + $0x198] sm:$0xff] %vm1885, %v1728
  %1904 = vst.msk [vmem:[#allocation3 + $0x1b0] sm:$0xff] %vm1885, %v1730
  %1905 = vst.msk [vmem:[#allocation3 + $0x1c8] sm:$0xff] %vm1885, %v1732
  %1906 = vst.msk [vmem:[#allocation3 + $0x1e0] sm:$0xff] %vm1885, %v1734
  %1907 = vst.msk [vmem:[#allocation3 + $0x1f8] sm:$0xff] %vm1885, %v1736
  %1908 = vst.msk [vmem:[#allocation3 + $0x210] sm:$0xff] %vm1885, %v1738
  %1909 = vst.msk [vmem:[#allocation3 + $0x228] sm:$0xff] %vm1885, %v1740
  %1910 = vst.msk [vmem:[#allocation3 + $0x240] sm:$0xff] %vm1885, %v1742
  %1911 = vst.msk [vmem:[#allocation3 + $0x258] sm:$0xff] %vm1885, %v1744
  %1912 = vst.msk [vmem:[#allocation3 + $0x270] sm:$0xff] %vm1885, %v1746
  %1913 = vst.msk [vmem:[#allocation3 + $0x288] sm:$0xff] %vm1885, %v1748
  %1914 = vst.msk [vmem:[#allocation3 + $0x2a0] sm:$0xff] %vm1885, %v1750
  %1915 = vst.msk [vmem:[#allocation3 + $0x2b8] sm:$0xff] %vm1885, %v1752
  %1916 = vst.msk [vmem:[#allocation3 + $0x2d0] sm:$0xff] %vm1885, %v1754
  %1917 = vst.msk [vmem:[#allocation3 + $0x2e8] sm:$0xff] %vm1885, %v1756
  %1918 = vst.msk [vmem:[#allocation3 + $0x300] sm:$0xff] %vm1885, %v1758
  %1919 = vst.msk [vmem:[#allocation3 + $0x318] sm:$0xff] %vm1885, %v1760
  %1920 = vst.msk [vmem:[#allocation3 + $0x330] sm:$0xff] %vm1885, %v1762
  %1921 = vst.msk [vmem:[#allocation3 + $0x348] sm:$0xff] %vm1885, %v1764
  %1922 = vst.msk [vmem:[#allocation3 + $0x360] sm:$0xff] %vm1885, %v1766
  %1923 = vst.msk [vmem:[#allocation3 + $0x378] sm:$0xff] %vm1885, %v1768
  %1924 = vst.msk [vmem:[#allocation3 + $0x390] sm:$0xff] %vm1885, %v1770
  %1925 = vst.msk [vmem:[#allocation3 + $0x3a8] sm:$0xff] %vm1885, %v1772
  %1926 = vst.msk [vmem:[#allocation3 + $0x3c0] sm:$0xff] %vm1885, %v1774
  %1927 = vst.msk [vmem:[#allocation3 + $0x3d8] sm:$0xff] %vm1885, %v1776
  %1928 = vst.msk [vmem:[#allocation3 + $0x3f0] sm:$0xff] %vm1885, %v1778
  %1929 = vst.msk [vmem:[#allocation3 + $0x408] sm:$0xff] %vm1885, %v1780
  %1930 = vst.msk [vmem:[#allocation3 + $0x420] sm:$0xff] %vm1885, %v1782
  %1931 = vst.msk [vmem:[#allocation3 + $0x438] sm:$0xff] %vm1885, %v1784
  %1932 = vst.msk [vmem:[#allocation3 + $0x450] sm:$0xff] %vm1885, %v1786
  %1933 = vst.msk [vmem:[#allocation3 + $0x468] sm:$0xff] %vm1885, %v1788
  %1934 = vst.msk [vmem:[#allocation3 + $0x480] sm:$0xff] %vm1885, %v1790
  %1935 = vst.msk [vmem:[#allocation3 + $0x498] sm:$0xff] %vm1885, %v1792
  %1936 = vst.msk [vmem:[#allocation3 + $0x4b0] sm:$0xff] %vm1885, %v1794
  %1937 = vst.msk [vmem:[#allocation3 + $0x4c8] sm:$0xff] %vm1885, %v1796
  %1938 = vst.msk [vmem:[#allocation3 + $0x4e0] sm:$0xff] %vm1885, %v1798
  %1939 = vst.msk [vmem:[#allocation3 + $0x4f8] sm:$0xff] %vm1885, %v1800
  %1940 = vst.msk [vmem:[#allocation3 + $0x510] sm:$0xff] %vm1885, %v1802
  %1941 = vst.msk [vmem:[#allocation3 + $0x528] sm:$0xff] %vm1885, %v1804
  %1942 = vst.msk [vmem:[#allocation3 + $0x540] sm:$0xff] %vm1885, %v1806
  %1943 = vst.msk [vmem:[#allocation3 + $0x558] sm:$0xff] %vm1885, %v1808
  %1944 = vst.msk [vmem:[#allocation3 + $0x570] sm:$0xff] %vm1885, %v1810
  %1945 = vst.msk [vmem:[#allocation3 + $0x588] sm:$0xff] %vm1885, %v1812
  %1946 = vst.msk [vmem:[#allocation3 + $0x5a0] sm:$0xff] %vm1885, %v1814
  %1947 = vst.msk [vmem:[#allocation3 + $0x5b8] sm:$0xff] %vm1885, %v1816
  %1948 = vst.msk [vmem:[#allocation3 + $0x5d0] sm:$0xff] %vm1885, %v1818
  %1949 = vst.msk [vmem:[#allocation3 + $0x5e8] sm:$0xff] %vm1885, %v1820
  %v1950 = vld [vmem:[#allocation2 + $0x2] sm:$0xff]
  %v1951 = vld [vmem:[#allocation2 + $0x12] sm:$0xff]
  %v1952 = vld [vmem:[#allocation2 + $0x22] sm:$0xff]
  %v1953 = vld [vmem:[#allocation2 + $0x32] sm:$0xff]
  %v1954 = vld [vmem:[#allocation2 + $0x42] sm:$0xff]
  %v1955 = vld [vmem:[#allocation2 + $0x52] sm:$0xff]
  %v1956 = vld [vmem:[#allocation2 + $0x62] sm:$0xff]
  %v1957 = vld [vmem:[#allocation2 + $0x72] sm:$0xff]
  %v1958 = vld [vmem:[#allocation2 + $0xa2] sm:$0xff]
  %v1959 = vld [vmem:[#allocation2 + $0xb2] sm:$0xff]
  %v1960 = vld [vmem:[#allocation2 + $0xc2] sm:$0xff]
  %v1961 = vld [vmem:[#allocation2 + $0xd2] sm:$0xff]
  %v1962 = vld [vmem:[#allocation2 + $0xe2] sm:$0xff]
  %v1963 = vld [vmem:[#allocation2 + $0xf2] sm:$0xff]
  %v1964 = vld [vmem:[#allocation2 + $0x102] sm:$0xff]
  %v1965 = vld [vmem:[#allocation2 + $0x112] sm:$0xff]
  %v1966 = vld [vmem:[#allocation2 + $0x142] sm:$0xff]
  %v1967 = vld [vmem:[#allocation2 + $0x152] sm:$0xff]
  %v1968 = vld [vmem:[#allocation2 + $0x162] sm:$0xff]
  %v1969 = vld [vmem:[#allocation2 + $0x172] sm:$0xff]
  %v1970 = vld [vmem:[#allocation2 + $0x182] sm:$0xff]
  %v1971 = vld [vmem:[#allocation2 + $0x192] sm:$0xff]
  %v1972 = vld [vmem:[#allocation2 + $0x1a2] sm:$0xff]
  %v1973 = vld [vmem:[#allocation2 + $0x1b2] sm:$0xff]
  %v1974 = vld [vmem:[#allocation2 + $0x1e2] sm:$0xff]
  %v1975 = vld [vmem:[#allocation2 + $0x1f2] sm:$0xff]
  %v1976 = vld [vmem:[#allocation2 + $0x202] sm:$0xff]
  %v1977 = vld [vmem:[#allocation2 + $0x212] sm:$0xff]
  %v1978 = vld [vmem:[#allocation2 + $0x222] sm:$0xff]
  %v1979 = vld [vmem:[#allocation2 + $0x232] sm:$0xff]
  %v1980 = vld [vmem:[#allocation2 + $0x242] sm:$0xff]
  %v1981 = vld [vmem:[#allocation2 + $0x252] sm:$0xff]
  %v1982 = vld [vmem:[#allocation2 + $0x282] sm:$0xff]
  %v1983 = vld [vmem:[#allocation2 + $0x292] sm:$0xff]
  %v1984 = vld [vmem:[#allocation2 + $0x2a2] sm:$0xff]
  %v1985 = vld [vmem:[#allocation2 + $0x2b2] sm:$0xff]
  %v1986 = vld [vmem:[#allocation2 + $0x2c2] sm:$0xff]
  %v1987 = vld [vmem:[#allocation2 + $0x2d2] sm:$0xff]
  %v1988 = vld [vmem:[#allocation2 + $0x2e2] sm:$0xff]
  %v1989 = vld [vmem:[#allocation2 + $0x2f2] sm:$0xff]
  %v1990 = vld [vmem:[#allocation2 + $0x322] sm:$0xff]
  %v1991 = vld [vmem:[#allocation2 + $0x332] sm:$0xff]
  %v1992 = vld [vmem:[#allocation2 + $0x342] sm:$0xff]
  %v1993 = vld [vmem:[#allocation2 + $0x352] sm:$0xff]
  %v1994 = vld [vmem:[#allocation2 + $0x362] sm:$0xff]
  %v1995 = vld [vmem:[#allocation2 + $0x372] sm:$0xff]
  %v1996 = vld [vmem:[#allocation2 + $0x382] sm:$0xff]
  %v1997 = vld [vmem:[#allocation2 + $0x392] sm:$0xff]
  %v1998 = vld [vmem:[#allocation2 + $0x3c2] sm:$0xff]
  %v1999 = vld [vmem:[#allocation2 + $0x3d2] sm:$0xff]
  %v2000 = vld [vmem:[#allocation2 + $0x3e2] sm:$0xff]
  %v2001 = vld [vmem:[#allocation2 + $0x3f2] sm:$0xff]
  %v2002 = vld [vmem:[#allocation2 + $0x402] sm:$0xff]
  %v2003 = vld [vmem:[#allocation2 + $0x412] sm:$0xff]
  %v2004 = vld [vmem:[#allocation2 + $0x422] sm:$0xff]
  %v2005 = vld [vmem:[#allocation2 + $0x432] sm:$0xff]
  %v2006 = vld [vmem:[#allocation2 + $0x462] sm:$0xff]
  %v2007 = vld [vmem:[#allocation2 + $0x472] sm:$0xff]
  %v2008 = vld [vmem:[#allocation2 + $0x482] sm:$0xff]
  %v2009 = vld [vmem:[#allocation2 + $0x492] sm:$0xff]
  %v2010 = vld [vmem:[#allocation2 + $0x4a2] sm:$0xff]
  %v2011 = vld [vmem:[#allocation2 + $0x4b2] sm:$0xff]
  %v2012 = vld [vmem:[#allocation2 + $0x4c2] sm:$0xff]
  %v2013 = vld [vmem:[#allocation2 + $0x4d2] sm:$0xff]
  %2078 = vrot.lane.b32.xlu0 %v1950, 64
  %v2079 = vpop.permute.xlu0 %2078
  %2080 = vrot.lane.b32.xlu0 %v1951, 64
  %v2081 = vpop.permute.xlu0 %2080
  %2082 = vrot.lane.b32.xlu0 %v1952, 64
  %v2083 = vpop.permute.xlu0 %2082
  %2084 = vrot.lane.b32.xlu0 %v1953, 64
  %v2085 = vpop.permute.xlu0 %2084
  %2086 = vrot.lane.b32.xlu0 %v1954, 64
  %v2087 = vpop.permute.xlu0 %2086
  %2088 = vrot.lane.b32.xlu0 %v1955, 64
  %v2089 = vpop.permute.xlu0 %2088
  %2090 = vrot.lane.b32.xlu0 %v1956, 64
  %v2091 = vpop.permute.xlu0 %2090
  %2092 = vrot.lane.b32.xlu0 %v1957, 64
  %v2093 = vpop.permute.xlu0 %2092
  %2094 = vrot.lane.b32.xlu0 %v1958, 64
  %v2095 = vpop.permute.xlu0 %2094
  %2096 = vrot.lane.b32.xlu0 %v1959, 64
  %v2097 = vpop.permute.xlu0 %2096
  %2098 = vrot.lane.b32.xlu0 %v1960, 64
  %v2099 = vpop.permute.xlu0 %2098
  %2100 = vrot.lane.b32.xlu0 %v1961, 64
  %v2101 = vpop.permute.xlu0 %2100
  %2102 = vrot.lane.b32.xlu0 %v1962, 64
  %v2103 = vpop.permute.xlu0 %2102
  %2104 = vrot.lane.b32.xlu0 %v1963, 64
  %v2105 = vpop.permute.xlu0 %2104
  %2106 = vrot.lane.b32.xlu0 %v1964, 64
  %v2107 = vpop.permute.xlu0 %2106
  %2108 = vrot.lane.b32.xlu0 %v1965, 64
  %v2109 = vpop.permute.xlu0 %2108
  %2110 = vrot.lane.b32.xlu0 %v1966, 64
  %v2111 = vpop.permute.xlu0 %2110
  %2112 = vrot.lane.b32.xlu0 %v1967, 64
  %v2113 = vpop.permute.xlu0 %2112
  %2114 = vrot.lane.b32.xlu0 %v1968, 64
  %v2115 = vpop.permute.xlu0 %2114
  %2116 = vrot.lane.b32.xlu0 %v1969, 64
  %v2117 = vpop.permute.xlu0 %2116
  %2118 = vrot.lane.b32.xlu0 %v1970, 64
  %v2119 = vpop.permute.xlu0 %2118
  %2120 = vrot.lane.b32.xlu0 %v1971, 64
  %v2121 = vpop.permute.xlu0 %2120
  %2122 = vrot.lane.b32.xlu0 %v1972, 64
  %v2123 = vpop.permute.xlu0 %2122
  %2124 = vrot.lane.b32.xlu0 %v1973, 64
  %v2125 = vpop.permute.xlu0 %2124
  %2126 = vrot.lane.b32.xlu0 %v1974, 64
  %v2127 = vpop.permute.xlu0 %2126
  %2128 = vrot.lane.b32.xlu0 %v1975, 64
  %v2129 = vpop.permute.xlu0 %2128
  %2130 = vrot.lane.b32.xlu0 %v1976, 64
  %v2131 = vpop.permute.xlu0 %2130
  %2132 = vrot.lane.b32.xlu0 %v1977, 64
  %v2133 = vpop.permute.xlu0 %2132
  %2134 = vrot.lane.b32.xlu0 %v1978, 64
  %v2135 = vpop.permute.xlu0 %2134
  %2136 = vrot.lane.b32.xlu0 %v1979, 64
  %v2137 = vpop.permute.xlu0 %2136
  %2138 = vrot.lane.b32.xlu0 %v1980, 64
  %v2139 = vpop.permute.xlu0 %2138
  %2140 = vrot.lane.b32.xlu0 %v1981, 64
  %v2141 = vpop.permute.xlu0 %2140
  %2142 = vrot.lane.b32.xlu0 %v1982, 64
  %v2143 = vpop.permute.xlu0 %2142
  %2144 = vrot.lane.b32.xlu0 %v1983, 64
  %v2145 = vpop.permute.xlu0 %2144
  %2146 = vrot.lane.b32.xlu0 %v1984, 64
  %v2147 = vpop.permute.xlu0 %2146
  %2148 = vrot.lane.b32.xlu0 %v1985, 64
  %v2149 = vpop.permute.xlu0 %2148
  %2150 = vrot.lane.b32.xlu0 %v1986, 64
  %v2151 = vpop.permute.xlu0 %2150
  %2152 = vrot.lane.b32.xlu0 %v1987, 64
  %v2153 = vpop.permute.xlu0 %2152
  %2154 = vrot.lane.b32.xlu0 %v1988, 64
  %v2155 = vpop.permute.xlu0 %2154
  %2156 = vrot.lane.b32.xlu0 %v1989, 64
  %v2157 = vpop.permute.xlu0 %2156
  %2158 = vrot.lane.b32.xlu0 %v1990, 64
  %v2159 = vpop.permute.xlu0 %2158
  %2160 = vrot.lane.b32.xlu0 %v1991, 64
  %v2161 = vpop.permute.xlu0 %2160
  %2162 = vrot.lane.b32.xlu0 %v1992, 64
  %v2163 = vpop.permute.xlu0 %2162
  %2164 = vrot.lane.b32.xlu0 %v1993, 64
  %v2165 = vpop.permute.xlu0 %2164
  %2166 = vrot.lane.b32.xlu0 %v1994, 64
  %v2167 = vpop.permute.xlu0 %2166
  %2168 = vrot.lane.b32.xlu0 %v1995, 64
  %v2169 = vpop.permute.xlu0 %2168
  %2170 = vrot.lane.b32.xlu0 %v1996, 64
  %v2171 = vpop.permute.xlu0 %2170
  %2172 = vrot.lane.b32.xlu0 %v1997, 64
  %v2173 = vpop.permute.xlu0 %2172
  %2174 = vrot.lane.b32.xlu0 %v1998, 64
  %v2175 = vpop.permute.xlu0 %2174
  %2176 = vrot.lane.b32.xlu0 %v1999, 64
  %v2177 = vpop.permute.xlu0 %2176
  %2178 = vrot.lane.b32.xlu0 %v2000, 64
  %v2179 = vpop.permute.xlu0 %2178
  %2180 = vrot.lane.b32.xlu0 %v2001, 64
  %v2181 = vpop.permute.xlu0 %2180
  %2182 = vrot.lane.b32.xlu0 %v2002, 64
  %v2183 = vpop.permute.xlu0 %2182
  %2184 = vrot.lane.b32.xlu0 %v2003, 64
  %v2185 = vpop.permute.xlu0 %2184
  %2186 = vrot.lane.b32.xlu0 %v2004, 64
  %v2187 = vpop.permute.xlu0 %2186
  %2188 = vrot.lane.b32.xlu0 %v2005, 64
  %v2189 = vpop.permute.xlu0 %2188
  %2190 = vrot.lane.b32.xlu0 %v2006, 64
  %v2191 = vpop.permute.xlu0 %2190
  %2192 = vrot.lane.b32.xlu0 %v2007, 64
  %v2193 = vpop.permute.xlu0 %2192
  %2194 = vrot.lane.b32.xlu0 %v2008, 64
  %v2195 = vpop.permute.xlu0 %2194
  %2196 = vrot.lane.b32.xlu0 %v2009, 64
  %v2197 = vpop.permute.xlu0 %2196
  %2198 = vrot.lane.b32.xlu0 %v2010, 64
  %v2199 = vpop.permute.xlu0 %2198
  %2200 = vrot.lane.b32.xlu0 %v2011, 64
  %v2201 = vpop.permute.xlu0 %2200
  %2202 = vrot.lane.b32.xlu0 %v2012, 64
  %v2203 = vpop.permute.xlu0 %2202
  %2204 = vrot.lane.b32.xlu0 %v2013, 64
  %v2205 = vpop.permute.xlu0 %2204
  %vm2270 = vcmask 785920
  %2271 = vst.msk [vmem:[#allocation3] sm:$0xff] %vm2270, %v2079
  %2272 = vst.msk [vmem:[#allocation3 + $0x18] sm:$0xff] %vm2270, %v2081
  %2273 = vst.msk [vmem:[#allocation3 + $0x30] sm:$0xff] %vm2270, %v2083
  %2274 = vst.msk [vmem:[#allocation3 + $0x48] sm:$0xff] %vm2270, %v2085
  %2275 = vst.msk [vmem:[#allocation3 + $0x60] sm:$0xff] %vm2270, %v2087
  %2276 = vst.msk [vmem:[#allocation3 + $0x78] sm:$0xff] %vm2270, %v2089
  %2277 = vst.msk [vmem:[#allocation3 + $0x90] sm:$0xff] %vm2270, %v2091
  %2278 = vst.msk [vmem:[#allocation3 + $0xa8] sm:$0xff] %vm2270, %v2093
  %2279 = vst.msk [vmem:[#allocation3 + $0xc0] sm:$0xff] %vm2270, %v2095
  %2280 = vst.msk [vmem:[#allocation3 + $0xd8] sm:$0xff] %vm2270, %v2097
  %2281 = vst.msk [vmem:[#allocation3 + $0xf0] sm:$0xff] %vm2270, %v2099
  %2282 = vst.msk [vmem:[#allocation3 + $0x108] sm:$0xff] %vm2270, %v2101
  %2283 = vst.msk [vmem:[#allocation3 + $0x120] sm:$0xff] %vm2270, %v2103
  %2284 = vst.msk [vmem:[#allocation3 + $0x138] sm:$0xff] %vm2270, %v2105
  %2285 = vst.msk [vmem:[#allocation3 + $0x150] sm:$0xff] %vm2270, %v2107
  %2286 = vst.msk [vmem:[#allocation3 + $0x168] sm:$0xff] %vm2270, %v2109
  %2287 = vst.msk [vmem:[#allocation3 + $0x180] sm:$0xff] %vm2270, %v2111
  %2288 = vst.msk [vmem:[#allocation3 + $0x198] sm:$0xff] %vm2270, %v2113
  %2289 = vst.msk [vmem:[#allocation3 + $0x1b0] sm:$0xff] %vm2270, %v2115
  %2290 = vst.msk [vmem:[#allocation3 + $0x1c8] sm:$0xff] %vm2270, %v2117
  %2291 = vst.msk [vmem:[#allocation3 + $0x1e0] sm:$0xff] %vm2270, %v2119
  %2292 = vst.msk [vmem:[#allocation3 + $0x1f8] sm:$0xff] %vm2270, %v2121
  %2293 = vst.msk [vmem:[#allocation3 + $0x210] sm:$0xff] %vm2270, %v2123
  %2294 = vst.msk [vmem:[#allocation3 + $0x228] sm:$0xff] %vm2270, %v2125
  %2295 = vst.msk [vmem:[#allocation3 + $0x240] sm:$0xff] %vm2270, %v2127
  %2296 = vst.msk [vmem:[#allocation3 + $0x258] sm:$0xff] %vm2270, %v2129
  %2297 = vst.msk [vmem:[#allocation3 + $0x270] sm:$0xff] %vm2270, %v2131
  %2298 = vst.msk [vmem:[#allocation3 + $0x288] sm:$0xff] %vm2270, %v2133
  %2299 = vst.msk [vmem:[#allocation3 + $0x2a0] sm:$0xff] %vm2270, %v2135
  %2300 = vst.msk [vmem:[#allocation3 + $0x2b8] sm:$0xff] %vm2270, %v2137
  %2301 = vst.msk [vmem:[#allocation3 + $0x2d0] sm:$0xff] %vm2270, %v2139
  %2302 = vst.msk [vmem:[#allocation3 + $0x2e8] sm:$0xff] %vm2270, %v2141
  %2303 = vst.msk [vmem:[#allocation3 + $0x300] sm:$0xff] %vm2270, %v2143
  %2304 = vst.msk [vmem:[#allocation3 + $0x318] sm:$0xff] %vm2270, %v2145
  %2305 = vst.msk [vmem:[#allocation3 + $0x330] sm:$0xff] %vm2270, %v2147
  %2306 = vst.msk [vmem:[#allocation3 + $0x348] sm:$0xff] %vm2270, %v2149
  %2307 = vst.msk [vmem:[#allocation3 + $0x360] sm:$0xff] %vm2270, %v2151
  %2308 = vst.msk [vmem:[#allocation3 + $0x378] sm:$0xff] %vm2270, %v2153
  %2309 = vst.msk [vmem:[#allocation3 + $0x390] sm:$0xff] %vm2270, %v2155
  %2310 = vst.msk [vmem:[#allocation3 + $0x3a8] sm:$0xff] %vm2270, %v2157
  %2311 = vst.msk [vmem:[#allocation3 + $0x3c0] sm:$0xff] %vm2270, %v2159
  %2312 = vst.msk [vmem:[#allocation3 + $0x3d8] sm:$0xff] %vm2270, %v2161
  %2313 = vst.msk [vmem:[#allocation3 + $0x3f0] sm:$0xff] %vm2270, %v2163
  %2314 = vst.msk [vmem:[#allocation3 + $0x408] sm:$0xff] %vm2270, %v2165
  %2315 = vst.msk [vmem:[#allocation3 + $0x420] sm:$0xff] %vm2270, %v2167
  %2316 = vst.msk [vmem:[#allocation3 + $0x438] sm:$0xff] %vm2270, %v2169
  %2317 = vst.msk [vmem:[#allocation3 + $0x450] sm:$0xff] %vm2270, %v2171
  %2318 = vst.msk [vmem:[#allocation3 + $0x468] sm:$0xff] %vm2270, %v2173
  %2319 = vst.msk [vmem:[#allocation3 + $0x480] sm:$0xff] %vm2270, %v2175
  %2320 = vst.msk [vmem:[#allocation3 + $0x498] sm:$0xff] %vm2270, %v2177
  %2321 = vst.msk [vmem:[#allocation3 + $0x4b0] sm:$0xff] %vm2270, %v2179
  %2322 = vst.msk [vmem:[#allocation3 + $0x4c8] sm:$0xff] %vm2270, %v2181
  %2323 = vst.msk [vmem:[#allocation3 + $0x4e0] sm:$0xff] %vm2270, %v2183
  %2324 = vst.msk [vmem:[#allocation3 + $0x4f8] sm:$0xff] %vm2270, %v2185
  %2325 = vst.msk [vmem:[#allocation3 + $0x510] sm:$0xff] %vm2270, %v2187
  %2326 = vst.msk [vmem:[#allocation3 + $0x528] sm:$0xff] %vm2270, %v2189
  %2327 = vst.msk [vmem:[#allocation3 + $0x540] sm:$0xff] %vm2270, %v2191
  %2328 = vst.msk [vmem:[#allocation3 + $0x558] sm:$0xff] %vm2270, %v2193
  %2329 = vst.msk [vmem:[#allocation3 + $0x570] sm:$0xff] %vm2270, %v2195
  %2330 = vst.msk [vmem:[#allocation3 + $0x588] sm:$0xff] %vm2270, %v2197
  %2331 = vst.msk [vmem:[#allocation3 + $0x5a0] sm:$0xff] %vm2270, %v2199
  %2332 = vst.msk [vmem:[#allocation3 + $0x5b8] sm:$0xff] %vm2270, %v2201
  %2333 = vst.msk [vmem:[#allocation3 + $0x5d0] sm:$0xff] %vm2270, %v2203
  %2334 = vst.msk [vmem:[#allocation3 + $0x5e8] sm:$0xff] %vm2270, %v2205
  %v2335 = vld [vmem:[%s1243] sm:$0xff]
  %v2336 = vld [vmem:[%s1243 + $0x10] sm:$0xff]
  %v2337 = vld [vmem:[%s1243 + $0x20] sm:$0xff]
  %v2338 = vld [vmem:[%s1243 + $0x30] sm:$0xff]
  %v2339 = vld [vmem:[%s1243 + $0x40] sm:$0xff]
  %v2340 = vld [vmem:[%s1243 + $0x50] sm:$0xff]
  %v2341 = vld [vmem:[%s1243 + $0x60] sm:$0xff]
  %v2342 = vld [vmem:[%s1243 + $0x70] sm:$0xff]
  %v2343 = vld [vmem:[%s1243 + $0xa0] sm:$0xff]
  %v2344 = vld [vmem:[%s1243 + $0xb0] sm:$0xff]
  %v2345 = vld [vmem:[%s1243 + $0xc0] sm:$0xff]
  %v2346 = vld [vmem:[%s1243 + $0xd0] sm:$0xff]
  %v2347 = vld [vmem:[%s1243 + $0xe0] sm:$0xff]
  %v2348 = vld [vmem:[%s1243 + $0xf0] sm:$0xff]
  %v2349 = vld [vmem:[%s1243 + $0x100] sm:$0xff]
  %v2350 = vld [vmem:[%s1243 + $0x110] sm:$0xff]
  %v2351 = vld [vmem:[%s1243 + $0x140] sm:$0xff]
  %v2352 = vld [vmem:[%s1243 + $0x150] sm:$0xff]
  %v2353 = vld [vmem:[%s1243 + $0x160] sm:$0xff]
  %v2354 = vld [vmem:[%s1243 + $0x170] sm:$0xff]
  %v2355 = vld [vmem:[%s1243 + $0x180] sm:$0xff]
  %v2356 = vld [vmem:[%s1243 + $0x190] sm:$0xff]
  %v2357 = vld [vmem:[%s1243 + $0x1a0] sm:$0xff]
  %v2358 = vld [vmem:[%s1243 + $0x1b0] sm:$0xff]
  %v2359 = vld [vmem:[%s1243 + $0x1e0] sm:$0xff]
  %v2360 = vld [vmem:[%s1243 + $0x1f0] sm:$0xff]
  %v2361 = vld [vmem:[%s1243 + $0x200] sm:$0xff]
  %v2362 = vld [vmem:[%s1243 + $0x210] sm:$0xff]
  %v2363 = vld [vmem:[%s1243 + $0x220] sm:$0xff]
  %v2364 = vld [vmem:[%s1243 + $0x230] sm:$0xff]
  %v2365 = vld [vmem:[%s1243 + $0x240] sm:$0xff]
  %v2366 = vld [vmem:[%s1243 + $0x250] sm:$0xff]
  %v2367 = vld [vmem:[%s1243 + $0x280] sm:$0xff]
  %v2368 = vld [vmem:[%s1243 + $0x290] sm:$0xff]
  %v2369 = vld [vmem:[%s1243 + $0x2a0] sm:$0xff]
  %v2370 = vld [vmem:[%s1243 + $0x2b0] sm:$0xff]
  %v2371 = vld [vmem:[%s1243 + $0x2c0] sm:$0xff]
  %v2372 = vld [vmem:[%s1243 + $0x2d0] sm:$0xff]
  %v2373 = vld [vmem:[%s1243 + $0x2e0] sm:$0xff]
  %v2374 = vld [vmem:[%s1243 + $0x2f0] sm:$0xff]
  %v2375 = vld [vmem:[%s1243 + $0x320] sm:$0xff]
  %v2376 = vld [vmem:[%s1243 + $0x330] sm:$0xff]
  %v2377 = vld [vmem:[%s1243 + $0x340] sm:$0xff]
  %v2378 = vld [vmem:[%s1243 + $0x350] sm:$0xff]
  %v2379 = vld [vmem:[%s1243 + $0x360] sm:$0xff]
  %v2380 = vld [vmem:[%s1243 + $0x370] sm:$0xff]
  %v2381 = vld [vmem:[%s1243 + $0x380] sm:$0xff]
  %v2382 = vld [vmem:[%s1243 + $0x390] sm:$0xff]
  %v2383 = vld [vmem:[%s1243 + $0x3c0] sm:$0xff]
  %v2384 = vld [vmem:[%s1243 + $0x3d0] sm:$0xff]
  %v2385 = vld [vmem:[%s1243 + $0x3e0] sm:$0xff]
  %v2386 = vld [vmem:[%s1243 + $0x3f0] sm:$0xff]
  %v2387 = vld [vmem:[%s1243 + $0x400] sm:$0xff]
  %v2388 = vld [vmem:[%s1243 + $0x410] sm:$0xff]
  %v2389 = vld [vmem:[%s1243 + $0x420] sm:$0xff]
  %v2390 = vld [vmem:[%s1243 + $0x430] sm:$0xff]
  %v2391 = vld [vmem:[%s1243 + $0x460] sm:$0xff]
  %v2392 = vld [vmem:[%s1243 + $0x470] sm:$0xff]
  %v2393 = vld [vmem:[%s1243 + $0x480] sm:$0xff]
  %v2394 = vld [vmem:[%s1243 + $0x490] sm:$0xff]
  %v2395 = vld [vmem:[%s1243 + $0x4a0] sm:$0xff]
  %v2396 = vld [vmem:[%s1243 + $0x4b0] sm:$0xff]
  %v2397 = vld [vmem:[%s1243 + $0x4c0] sm:$0xff]
  %v2398 = vld [vmem:[%s1243 + $0x4d0] sm:$0xff]
  %2463 = vrot.lane.b32.xlu0 %v2335, 96
  %v2464 = vpop.permute.xlu0 %2463
  %2465 = vrot.lane.b32.xlu0 %v2336, 96
  %v2466 = vpop.permute.xlu0 %2465
  %2467 = vrot.lane.b32.xlu0 %v2337, 96
  %v2468 = vpop.permute.xlu0 %2467
  %2469 = vrot.lane.b32.xlu0 %v2338, 96
  %v2470 = vpop.permute.xlu0 %2469
  %2471 = vrot.lane.b32.xlu0 %v2339, 96
  %v2472 = vpop.permute.xlu0 %2471
  %2473 = vrot.lane.b32.xlu0 %v2340, 96
  %v2474 = vpop.permute.xlu0 %2473
  %2475 = vrot.lane.b32.xlu0 %v2341, 96
  %v2476 = vpop.permute.xlu0 %2475
  %2477 = vrot.lane.b32.xlu0 %v2342, 96
  %v2478 = vpop.permute.xlu0 %2477
  %2479 = vrot.lane.b32.xlu0 %v2343, 96
  %v2480 = vpop.permute.xlu0 %2479
  %2481 = vrot.lane.b32.xlu0 %v2344, 96
  %v2482 = vpop.permute.xlu0 %2481
  %2483 = vrot.lane.b32.xlu0 %v2345, 96
  %v2484 = vpop.permute.xlu0 %2483
  %2485 = vrot.lane.b32.xlu0 %v2346, 96
  %v2486 = vpop.permute.xlu0 %2485
  %2487 = vrot.lane.b32.xlu0 %v2347, 96
  %v2488 = vpop.permute.xlu0 %2487
  %2489 = vrot.lane.b32.xlu0 %v2348, 96
  %v2490 = vpop.permute.xlu0 %2489
  %2491 = vrot.lane.b32.xlu0 %v2349, 96
  %v2492 = vpop.permute.xlu0 %2491
  %2493 = vrot.lane.b32.xlu0 %v2350, 96
  %v2494 = vpop.permute.xlu0 %2493
  %2495 = vrot.lane.b32.xlu0 %v2351, 96
  %v2496 = vpop.permute.xlu0 %2495
  %2497 = vrot.lane.b32.xlu0 %v2352, 96
  %v2498 = vpop.permute.xlu0 %2497
  %2499 = vrot.lane.b32.xlu0 %v2353, 96
  %v2500 = vpop.permute.xlu0 %2499
  %2501 = vrot.lane.b32.xlu0 %v2354, 96
  %v2502 = vpop.permute.xlu0 %2501
  %2503 = vrot.lane.b32.xlu0 %v2355, 96
  %v2504 = vpop.permute.xlu0 %2503
  %2505 = vrot.lane.b32.xlu0 %v2356, 96
  %v2506 = vpop.permute.xlu0 %2505
  %2507 = vrot.lane.b32.xlu0 %v2357, 96
  %v2508 = vpop.permute.xlu0 %2507
  %2509 = vrot.lane.b32.xlu0 %v2358, 96
  %v2510 = vpop.permute.xlu0 %2509
  %2511 = vrot.lane.b32.xlu0 %v2359, 96
  %v2512 = vpop.permute.xlu0 %2511
  %2513 = vrot.lane.b32.xlu0 %v2360, 96
  %v2514 = vpop.permute.xlu0 %2513
  %2515 = vrot.lane.b32.xlu0 %v2361, 96
  %v2516 = vpop.permute.xlu0 %2515
  %2517 = vrot.lane.b32.xlu0 %v2362, 96
  %v2518 = vpop.permute.xlu0 %2517
  %2519 = vrot.lane.b32.xlu0 %v2363, 96
  %v2520 = vpop.permute.xlu0 %2519
  %2521 = vrot.lane.b32.xlu0 %v2364, 96
  %v2522 = vpop.permute.xlu0 %2521
  %2523 = vrot.lane.b32.xlu0 %v2365, 96
  %v2524 = vpop.permute.xlu0 %2523
  %2525 = vrot.lane.b32.xlu0 %v2366, 96
  %v2526 = vpop.permute.xlu0 %2525
  %2527 = vrot.lane.b32.xlu0 %v2367, 96
  %v2528 = vpop.permute.xlu0 %2527
  %2529 = vrot.lane.b32.xlu0 %v2368, 96
  %v2530 = vpop.permute.xlu0 %2529
  %2531 = vrot.lane.b32.xlu0 %v2369, 96
  %v2532 = vpop.permute.xlu0 %2531
  %2533 = vrot.lane.b32.xlu0 %v2370, 96
  %v2534 = vpop.permute.xlu0 %2533
  %2535 = vrot.lane.b32.xlu0 %v2371, 96
  %v2536 = vpop.permute.xlu0 %2535
  %2537 = vrot.lane.b32.xlu0 %v2372, 96
  %v2538 = vpop.permute.xlu0 %2537
  %2539 = vrot.lane.b32.xlu0 %v2373, 96
  %v2540 = vpop.permute.xlu0 %2539
  %2541 = vrot.lane.b32.xlu0 %v2374, 96
  %v2542 = vpop.permute.xlu0 %2541
  %2543 = vrot.lane.b32.xlu0 %v2375, 96
  %v2544 = vpop.permute.xlu0 %2543
  %2545 = vrot.lane.b32.xlu0 %v2376, 96
  %v2546 = vpop.permute.xlu0 %2545
  %2547 = vrot.lane.b32.xlu0 %v2377, 96
  %v2548 = vpop.permute.xlu0 %2547
  %2549 = vrot.lane.b32.xlu0 %v2378, 96
  %v2550 = vpop.permute.xlu0 %2549
  %2551 = vrot.lane.b32.xlu0 %v2379, 96
  %v2552 = vpop.permute.xlu0 %2551
  %2553 = vrot.lane.b32.xlu0 %v2380, 96
  %v2554 = vpop.permute.xlu0 %2553
  %2555 = vrot.lane.b32.xlu0 %v2381, 96
  %v2556 = vpop.permute.xlu0 %2555
  %2557 = vrot.lane.b32.xlu0 %v2382, 96
  %v2558 = vpop.permute.xlu0 %2557
  %2559 = vrot.lane.b32.xlu0 %v2383, 96
  %v2560 = vpop.permute.xlu0 %2559
  %2561 = vrot.lane.b32.xlu0 %v2384, 96
  %v2562 = vpop.permute.xlu0 %2561
  %2563 = vrot.lane.b32.xlu0 %v2385, 96
  %v2564 = vpop.permute.xlu0 %2563
  %2565 = vrot.lane.b32.xlu0 %v2386, 96
  %v2566 = vpop.permute.xlu0 %2565
  %2567 = vrot.lane.b32.xlu0 %v2387, 96
  %v2568 = vpop.permute.xlu0 %2567
  %2569 = vrot.lane.b32.xlu0 %v2388, 96
  %v2570 = vpop.permute.xlu0 %2569
  %2571 = vrot.lane.b32.xlu0 %v2389, 96
  %v2572 = vpop.permute.xlu0 %2571
  %2573 = vrot.lane.b32.xlu0 %v2390, 96
  %v2574 = vpop.permute.xlu0 %2573
  %2575 = vrot.lane.b32.xlu0 %v2391, 96
  %v2576 = vpop.permute.xlu0 %2575
  %2577 = vrot.lane.b32.xlu0 %v2392, 96
  %v2578 = vpop.permute.xlu0 %2577
  %2579 = vrot.lane.b32.xlu0 %v2393, 96
  %v2580 = vpop.permute.xlu0 %2579
  %2581 = vrot.lane.b32.xlu0 %v2394, 96
  %v2582 = vpop.permute.xlu0 %2581
  %2583 = vrot.lane.b32.xlu0 %v2395, 96
  %v2584 = vpop.permute.xlu0 %2583
  %2585 = vrot.lane.b32.xlu0 %v2396, 96
  %v2586 = vpop.permute.xlu0 %2585
  %2587 = vrot.lane.b32.xlu0 %v2397, 96
  %v2588 = vpop.permute.xlu0 %2587
  %2589 = vrot.lane.b32.xlu0 %v2398, 96
  %v2590 = vpop.permute.xlu0 %2589
  %vm2655 = vcmask 1048320
  %2656 = vst.msk [vmem:[#allocation3] sm:$0xff] %vm2655, %v2464
  %2657 = vst.msk [vmem:[#allocation3 + $0x18] sm:$0xff] %vm2655, %v2466
  %2658 = vst.msk [vmem:[#allocation3 + $0x30] sm:$0xff] %vm2655, %v2468
  %2659 = vst.msk [vmem:[#allocation3 + $0x48] sm:$0xff] %vm2655, %v2470
  %2660 = vst.msk [vmem:[#allocation3 + $0x60] sm:$0xff] %vm2655, %v2472
  %2661 = vst.msk [vmem:[#allocation3 + $0x78] sm:$0xff] %vm2655, %v2474
  %2662 = vst.msk [vmem:[#allocation3 + $0x90] sm:$0xff] %vm2655, %v2476
  %2663 = vst.msk [vmem:[#allocation3 + $0xa8] sm:$0xff] %vm2655, %v2478
  %2664 = vst.msk [vmem:[#allocation3 + $0xc0] sm:$0xff] %vm2655, %v2480
  %2665 = vst.msk [vmem:[#allocation3 + $0xd8] sm:$0xff] %vm2655, %v2482
  %2666 = vst.msk [vmem:[#allocation3 + $0xf0] sm:$0xff] %vm2655, %v2484
  %2667 = vst.msk [vmem:[#allocation3 + $0x108] sm:$0xff] %vm2655, %v2486
  %2668 = vst.msk [vmem:[#allocation3 + $0x120] sm:$0xff] %vm2655, %v2488
  %2669 = vst.msk [vmem:[#allocation3 + $0x138] sm:$0xff] %vm2655, %v2490
  %2670 = vst.msk [vmem:[#allocation3 + $0x150] sm:$0xff] %vm2655, %v2492
  %2671 = vst.msk [vmem:[#allocation3 + $0x168] sm:$0xff] %vm2655, %v2494
  %2672 = vst.msk [vmem:[#allocation3 + $0x180] sm:$0xff] %vm2655, %v2496
  %2673 = vst.msk [vmem:[#allocation3 + $0x198] sm:$0xff] %vm2655, %v2498
  %2674 = vst.msk [vmem:[#allocation3 + $0x1b0] sm:$0xff] %vm2655, %v2500
  %2675 = vst.msk [vmem:[#allocation3 + $0x1c8] sm:$0xff] %vm2655, %v2502
  %2676 = vst.msk [vmem:[#allocation3 + $0x1e0] sm:$0xff] %vm2655, %v2504
  %2677 = vst.msk [vmem:[#allocation3 + $0x1f8] sm:$0xff] %vm2655, %v2506
  %2678 = vst.msk [vmem:[#allocation3 + $0x210] sm:$0xff] %vm2655, %v2508
  %2679 = vst.msk [vmem:[#allocation3 + $0x228] sm:$0xff] %vm2655, %v2510
  %2680 = vst.msk [vmem:[#allocation3 + $0x240] sm:$0xff] %vm2655, %v2512
  %2681 = vst.msk [vmem:[#allocation3 + $0x258] sm:$0xff] %vm2655, %v2514
  %2682 = vst.msk [vmem:[#allocation3 + $0x270] sm:$0xff] %vm2655, %v2516
  %2683 = vst.msk [vmem:[#allocation3 + $0x288] sm:$0xff] %vm2655, %v2518
  %2684 = vst.msk [vmem:[#allocation3 + $0x2a0] sm:$0xff] %vm2655, %v2520
  %2685 = vst.msk [vmem:[#allocation3 + $0x2b8] sm:$0xff] %vm2655, %v2522
  %2686 = vst.msk [vmem:[#allocation3 + $0x2d0] sm:$0xff] %vm2655, %v2524
  %2687 = vst.msk [vmem:[#allocation3 + $0x2e8] sm:$0xff] %vm2655, %v2526
  %2688 = vst.msk [vmem:[#allocation3 + $0x300] sm:$0xff] %vm2655, %v2528
  %2689 = vst.msk [vmem:[#allocation3 + $0x318] sm:$0xff] %vm2655, %v2530
  %2690 = vst.msk [vmem:[#allocation3 + $0x330] sm:$0xff] %vm2655, %v2532
  %2691 = vst.msk [vmem:[#allocation3 + $0x348] sm:$0xff] %vm2655, %v2534
  %2692 = vst.msk [vmem:[#allocation3 + $0x360] sm:$0xff] %vm2655, %v2536
  %2693 = vst.msk [vmem:[#allocation3 + $0x378] sm:$0xff] %vm2655, %v2538
  %2694 = vst.msk [vmem:[#allocation3 + $0x390] sm:$0xff] %vm2655, %v2540
  %2695 = vst.msk [vmem:[#allocation3 + $0x3a8] sm:$0xff] %vm2655, %v2542
  %2696 = vst.msk [vmem:[#allocation3 + $0x3c0] sm:$0xff] %vm2655, %v2544
  %2697 = vst.msk [vmem:[#allocation3 + $0x3d8] sm:$0xff] %vm2655, %v2546
  %2698 = vst.msk [vmem:[#allocation3 + $0x3f0] sm:$0xff] %vm2655, %v2548
  %2699 = vst.msk [vmem:[#allocation3 + $0x408] sm:$0xff] %vm2655, %v2550
  %2700 = vst.msk [vmem:[#allocation3 + $0x420] sm:$0xff] %vm2655, %v2552
  %2701 = vst.msk [vmem:[#allocation3 + $0x438] sm:$0xff] %vm2655, %v2554
  %2702 = vst.msk [vmem:[#allocation3 + $0x450] sm:$0xff] %vm2655, %v2556
  %2703 = vst.msk [vmem:[#allocation3 + $0x468] sm:$0xff] %vm2655, %v2558
  %2704 = vst.msk [vmem:[#allocation3 + $0x480] sm:$0xff] %vm2655, %v2560
  %2705 = vst.msk [vmem:[#allocation3 + $0x498] sm:$0xff] %vm2655, %v2562
  %2706 = vst.msk [vmem:[#allocation3 + $0x4b0] sm:$0xff] %vm2655, %v2564
  %2707 = vst.msk [vmem:[#allocation3 + $0x4c8] sm:$0xff] %vm2655, %v2566
  %2708 = vst.msk [vmem:[#allocation3 + $0x4e0] sm:$0xff] %vm2655, %v2568
  %2709 = vst.msk [vmem:[#allocation3 + $0x4f8] sm:$0xff] %vm2655, %v2570
  %2710 = vst.msk [vmem:[#allocation3 + $0x510] sm:$0xff] %vm2655, %v2572
  %2711 = vst.msk [vmem:[#allocation3 + $0x528] sm:$0xff] %vm2655, %v2574
  %2712 = vst.msk [vmem:[#allocation3 + $0x540] sm:$0xff] %vm2655, %v2576
  %2713 = vst.msk [vmem:[#allocation3 + $0x558] sm:$0xff] %vm2655, %v2578
  %2714 = vst.msk [vmem:[#allocation3 + $0x570] sm:$0xff] %vm2655, %v2580
  %2715 = vst.msk [vmem:[#allocation3 + $0x588] sm:$0xff] %vm2655, %v2582
  %2716 = vst.msk [vmem:[#allocation3 + $0x5a0] sm:$0xff] %vm2655, %v2584
  %2717 = vst.msk [vmem:[#allocation3 + $0x5b8] sm:$0xff] %vm2655, %v2586
  %2718 = vst.msk [vmem:[#allocation3 + $0x5d0] sm:$0xff] %vm2655, %v2588
  %2719 = vst.msk [vmem:[#allocation3 + $0x5e8] sm:$0xff] %vm2655, %v2590
  %v2720 = vld [vmem:[%s1243 + $0x1] sm:$0xff]
  %v2721 = vld [vmem:[%s1243 + $0x11] sm:$0xff]
  %v2722 = vld [vmem:[%s1243 + $0x21] sm:$0xff]
  %v2723 = vld [vmem:[%s1243 + $0x31] sm:$0xff]
  %v2724 = vld [vmem:[%s1243 + $0x41] sm:$0xff]
  %v2725 = vld [vmem:[%s1243 + $0x51] sm:$0xff]
  %v2726 = vld [vmem:[%s1243 + $0x61] sm:$0xff]
  %v2727 = vld [vmem:[%s1243 + $0x71] sm:$0xff]
  %v2728 = vld [vmem:[%s1243 + $0xa1] sm:$0xff]
  %v2729 = vld [vmem:[%s1243 + $0xb1] sm:$0xff]
  %v2730 = vld [vmem:[%s1243 + $0xc1] sm:$0xff]
  %v2731 = vld [vmem:[%s1243 + $0xd1] sm:$0xff]
  %v2732 = vld [vmem:[%s1243 + $0xe1] sm:$0xff]
  %v2733 = vld [vmem:[%s1243 + $0xf1] sm:$0xff]
  %v2734 = vld [vmem:[%s1243 + $0x101] sm:$0xff]
  %v2735 = vld [vmem:[%s1243 + $0x111] sm:$0xff]
  %v2736 = vld [vmem:[%s1243 + $0x141] sm:$0xff]
  %v2737 = vld [vmem:[%s1243 + $0x151] sm:$0xff]
  %v2738 = vld [vmem:[%s1243 + $0x161] sm:$0xff]
  %v2739 = vld [vmem:[%s1243 + $0x171] sm:$0xff]
  %v2740 = vld [vmem:[%s1243 + $0x181] sm:$0xff]
  %v2741 = vld [vmem:[%s1243 + $0x191] sm:$0xff]
  %v2742 = vld [vmem:[%s1243 + $0x1a1] sm:$0xff]
  %v2743 = vld [vmem:[%s1243 + $0x1b1] sm:$0xff]
  %v2744 = vld [vmem:[%s1243 + $0x1e1] sm:$0xff]
  %v2745 = vld [vmem:[%s1243 + $0x1f1] sm:$0xff]
  %v2746 = vld [vmem:[%s1243 + $0x201] sm:$0xff]
  %v2747 = vld [vmem:[%s1243 + $0x211] sm:$0xff]
  %v2748 = vld [vmem:[%s1243 + $0x221] sm:$0xff]
  %v2749 = vld [vmem:[%s1243 + $0x231] sm:$0xff]
  %v2750 = vld [vmem:[%s1243 + $0x241] sm:$0xff]
  %v2751 = vld [vmem:[%s1243 + $0x251] sm:$0xff]
  %v2752 = vld [vmem:[%s1243 + $0x281] sm:$0xff]
  %v2753 = vld [vmem:[%s1243 + $0x291] sm:$0xff]
  %v2754 = vld [vmem:[%s1243 + $0x2a1] sm:$0xff]
  %v2755 = vld [vmem:[%s1243 + $0x2b1] sm:$0xff]
  %v2756 = vld [vmem:[%s1243 + $0x2c1] sm:$0xff]
  %v2757 = vld [vmem:[%s1243 + $0x2d1] sm:$0xff]
  %v2758 = vld [vmem:[%s1243 + $0x2e1] sm:$0xff]
  %v2759 = vld [vmem:[%s1243 + $0x2f1] sm:$0xff]
  %v2760 = vld [vmem:[%s1243 + $0x321] sm:$0xff]
  %v2761 = vld [vmem:[%s1243 + $0x331] sm:$0xff]
  %v2762 = vld [vmem:[%s1243 + $0x341] sm:$0xff]
  %v2763 = vld [vmem:[%s1243 + $0x351] sm:$0xff]
  %v2764 = vld [vmem:[%s1243 + $0x361] sm:$0xff]
  %v2765 = vld [vmem:[%s1243 + $0x371] sm:$0xff]
  %v2766 = vld [vmem:[%s1243 + $0x381] sm:$0xff]
  %v2767 = vld [vmem:[%s1243 + $0x391] sm:$0xff]
  %v2768 = vld [vmem:[%s1243 + $0x3c1] sm:$0xff]
  %v2769 = vld [vmem:[%s1243 + $0x3d1] sm:$0xff]
  %v2770 = vld [vmem:[%s1243 + $0x3e1] sm:$0xff]
  %v2771 = vld [vmem:[%s1243 + $0x3f1] sm:$0xff]
  %v2772 = vld [vmem:[%s1243 + $0x401] sm:$0xff]
  %v2773 = vld [vmem:[%s1243 + $0x411] sm:$0xff]
  %v2774 = vld [vmem:[%s1243 + $0x421] sm:$0xff]
  %v2775 = vld [vmem:[%s1243 + $0x431] sm:$0xff]
  %v2776 = vld [vmem:[%s1243 + $0x461] sm:$0xff]
  %v2777 = vld [vmem:[%s1243 + $0x471] sm:$0xff]
  %v2778 = vld [vmem:[%s1243 + $0x481] sm:$0xff]
  %v2779 = vld [vmem:[%s1243 + $0x491] sm:$0xff]
  %v2780 = vld [vmem:[%s1243 + $0x4a1] sm:$0xff]
  %v2781 = vld [vmem:[%s1243 + $0x4b1] sm:$0xff]
  %v2782 = vld [vmem:[%s1243 + $0x4c1] sm:$0xff]
  %v2783 = vld [vmem:[%s1243 + $0x4d1] sm:$0xff]
  %2784 = vst.msk [vmem:[#allocation3 + $0x8] sm:$0xff] %vm1208, %v2720
  %2785 = vst.msk [vmem:[#allocation3 + $0x20] sm:$0xff] %vm1208, %v2721
  %2786 = vst.msk [vmem:[#allocation3 + $0x38] sm:$0xff] %vm1208, %v2722
  %2787 = vst.msk [vmem:[#allocation3 + $0x50] sm:$0xff] %vm1208, %v2723
  %2788 = vst.msk [vmem:[#allocation3 + $0x68] sm:$0xff] %vm1208, %v2724
  %2789 = vst.msk [vmem:[#allocation3 + $0x80] sm:$0xff] %vm1208, %v2725
  %2790 = vst.msk [vmem:[#allocation3 + $0x98] sm:$0xff] %vm1208, %v2726
  %2791 = vst.msk [vmem:[#allocation3 + $0xb0] sm:$0xff] %vm1208, %v2727
  %2792 = vst.msk [vmem:[#allocation3 + $0xc8] sm:$0xff] %vm1208, %v2728
  %2793 = vst.msk [vmem:[#allocation3 + $0xe0] sm:$0xff] %vm1208, %v2729
  %2794 = vst.msk [vmem:[#allocation3 + $0xf8] sm:$0xff] %vm1208, %v2730
  %2795 = vst.msk [vmem:[#allocation3 + $0x110] sm:$0xff] %vm1208, %v2731
  %2796 = vst.msk [vmem:[#allocation3 + $0x128] sm:$0xff] %vm1208, %v2732
  %2797 = vst.msk [vmem:[#allocation3 + $0x140] sm:$0xff] %vm1208, %v2733
  %2798 = vst.msk [vmem:[#allocation3 + $0x158] sm:$0xff] %vm1208, %v2734
  %2799 = vst.msk [vmem:[#allocation3 + $0x170] sm:$0xff] %vm1208, %v2735
  %2800 = vst.msk [vmem:[#allocation3 + $0x188] sm:$0xff] %vm1208, %v2736
  %2801 = vst.msk [vmem:[#allocation3 + $0x1a0] sm:$0xff] %vm1208, %v2737
  %2802 = vst.msk [vmem:[#allocation3 + $0x1b8] sm:$0xff] %vm1208, %v2738
  %2803 = vst.msk [vmem:[#allocation3 + $0x1d0] sm:$0xff] %vm1208, %v2739
  %2804 = vst.msk [vmem:[#allocation3 + $0x1e8] sm:$0xff] %vm1208, %v2740
  %2805 = vst.msk [vmem:[#allocation3 + $0x200] sm:$0xff] %vm1208, %v2741
  %2806 = vst.msk [vmem:[#allocation3 + $0x218] sm:$0xff] %vm1208, %v2742
  %2807 = vst.msk [vmem:[#allocation3 + $0x230] sm:$0xff] %vm1208, %v2743
  %2808 = vst.msk [vmem:[#allocation3 + $0x248] sm:$0xff] %vm1208, %v2744
  %2809 = vst.msk [vmem:[#allocation3 + $0x260] sm:$0xff] %vm1208, %v2745
  %2810 = vst.msk [vmem:[#allocation3 + $0x278] sm:$0xff] %vm1208, %v2746
  %2811 = vst.msk [vmem:[#allocation3 + $0x290] sm:$0xff] %vm1208, %v2747
  %2812 = vst.msk [vmem:[#allocation3 + $0x2a8] sm:$0xff] %vm1208, %v2748
  %2813 = vst.msk [vmem:[#allocation3 + $0x2c0] sm:$0xff] %vm1208, %v2749
  %2814 = vst.msk [vmem:[#allocation3 + $0x2d8] sm:$0xff] %vm1208, %v2750
  %2815 = vst.msk [vmem:[#allocation3 + $0x2f0] sm:$0xff] %vm1208, %v2751
  %2816 = vst.msk [vmem:[#allocation3 + $0x308] sm:$0xff] %vm1208, %v2752
  %2817 = vst.msk [vmem:[#allocation3 + $0x320] sm:$0xff] %vm1208, %v2753
  %2818 = vst.msk [vmem:[#allocation3 + $0x338] sm:$0xff] %vm1208, %v2754
  %2819 = vst.msk [vmem:[#allocation3 + $0x350] sm:$0xff] %vm1208, %v2755
  %2820 = vst.msk [vmem:[#allocation3 + $0x368] sm:$0xff] %vm1208, %v2756
  %2821 = vst.msk [vmem:[#allocation3 + $0x380] sm:$0xff] %vm1208, %v2757
  %2822 = vst.msk [vmem:[#allocation3 + $0x398] sm:$0xff] %vm1208, %v2758
  %2823 = vst.msk [vmem:[#allocation3 + $0x3b0] sm:$0xff] %vm1208, %v2759
  %2824 = vst.msk [vmem:[#allocation3 + $0x3c8] sm:$0xff] %vm1208, %v2760
  %2825 = vst.msk [vmem:[#allocation3 + $0x3e0] sm:$0xff] %vm1208, %v2761
  %2826 = vst.msk [vmem:[#allocation3 + $0x3f8] sm:$0xff] %vm1208, %v2762
  %2827 = vst.msk [vmem:[#allocation3 + $0x410] sm:$0xff] %vm1208, %v2763
  %2828 = vst.msk [vmem:[#allocation3 + $0x428] sm:$0xff] %vm1208, %v2764
  %2829 = vst.msk [vmem:[#allocation3 + $0x440] sm:$0xff] %vm1208, %v2765
  %2830 = vst.msk [vmem:[#allocation3 + $0x458] sm:$0xff] %vm1208, %v2766
  %2831 = vst.msk [vmem:[#allocation3 + $0x470] sm:$0xff] %vm1208, %v2767
  %2832 = vst.msk [vmem:[#allocation3 + $0x488] sm:$0xff] %vm1208, %v2768
  %2833 = vst.msk [vmem:[#allocation3 + $0x4a0] sm:$0xff] %vm1208, %v2769
  %2834 = vst.msk [vmem:[#allocation3 + $0x4b8] sm:$0xff] %vm1208, %v2770
  %2835 = vst.msk [vmem:[#allocation3 + $0x4d0] sm:$0xff] %vm1208, %v2771
  %2836 = vst.msk [vmem:[#allocation3 + $0x4e8] sm:$0xff] %vm1208, %v2772
  %2837 = vst.msk [vmem:[#allocation3 + $0x500] sm:$0xff] %vm1208, %v2773
  %2838 = vst.msk [vmem:[#allocation3 + $0x518] sm:$0xff] %vm1208, %v2774
  %2839 = vst.msk [vmem:[#allocation3 + $0x530] sm:$0xff] %vm1208, %v2775
  %2840 = vst.msk [vmem:[#allocation3 + $0x548] sm:$0xff] %vm1208, %v2776
  %2841 = vst.msk [vmem:[#allocation3 + $0x560] sm:$0xff] %vm1208, %v2777
  %2842 = vst.msk [vmem:[#allocation3 + $0x578] sm:$0xff] %vm1208, %v2778
  %2843 = vst.msk [vmem:[#allocation3 + $0x590] sm:$0xff] %vm1208, %v2779
  %2844 = vst.msk [vmem:[#allocation3 + $0x5a8] sm:$0xff] %vm1208, %v2780
  %2845 = vst.msk [vmem:[#allocation3 + $0x5c0] sm:$0xff] %vm1208, %v2781
  %2846 = vst.msk [vmem:[#allocation3 + $0x5d8] sm:$0xff] %vm1208, %v2782
  %2847 = vst.msk [vmem:[#allocation3 + $0x5f0] sm:$0xff] %vm1208, %v2783
  %v2848 = vld [vmem:[%s1243 + $0x2] sm:$0xff]
  %v2849 = vld [vmem:[%s1243 + $0x12] sm:$0xff]
  %v2850 = vld [vmem:[%s1243 + $0x22] sm:$0xff]
  %v2851 = vld [vmem:[%s1243 + $0x32] sm:$0xff]
  %v2852 = vld [vmem:[%s1243 + $0x42] sm:$0xff]
  %v2853 = vld [vmem:[%s1243 + $0x52] sm:$0xff]
  %v2854 = vld [vmem:[%s1243 + $0x62] sm:$0xff]
  %v2855 = vld [vmem:[%s1243 + $0x72] sm:$0xff]
  %v2856 = vld [vmem:[%s1243 + $0xa2] sm:$0xff]
  %v2857 = vld [vmem:[%s1243 + $0xb2] sm:$0xff]
  %v2858 = vld [vmem:[%s1243 + $0xc2] sm:$0xff]
  %v2859 = vld [vmem:[%s1243 + $0xd2] sm:$0xff]
  %v2860 = vld [vmem:[%s1243 + $0xe2] sm:$0xff]
  %v2861 = vld [vmem:[%s1243 + $0xf2] sm:$0xff]
  %v2862 = vld [vmem:[%s1243 + $0x102] sm:$0xff]
  %v2863 = vld [vmem:[%s1243 + $0x112] sm:$0xff]
  %v2864 = vld [vmem:[%s1243 + $0x142] sm:$0xff]
  %v2865 = vld [vmem:[%s1243 + $0x152] sm:$0xff]
  %v2866 = vld [vmem:[%s1243 + $0x162] sm:$0xff]
  %v2867 = vld [vmem:[%s1243 + $0x172] sm:$0xff]
  %v2868 = vld [vmem:[%s1243 + $0x182] sm:$0xff]
  %v2869 = vld [vmem:[%s1243 + $0x192] sm:$0xff]
  %v2870 = vld [vmem:[%s1243 + $0x1a2] sm:$0xff]
  %v2871 = vld [vmem:[%s1243 + $0x1b2] sm:$0xff]
  %v2872 = vld [vmem:[%s1243 + $0x1e2] sm:$0xff]
  %v2873 = vld [vmem:[%s1243 + $0x1f2] sm:$0xff]
  %v2874 = vld [vmem:[%s1243 + $0x202] sm:$0xff]
  %v2875 = vld [vmem:[%s1243 + $0x212] sm:$0xff]
  %v2876 = vld [vmem:[%s1243 + $0x222] sm:$0xff]
  %v2877 = vld [vmem:[%s1243 + $0x232] sm:$0xff]
  %v2878 = vld [vmem:[%s1243 + $0x242] sm:$0xff]
  %v2879 = vld [vmem:[%s1243 + $0x252] sm:$0xff]
  %v2880 = vld [vmem:[%s1243 + $0x282] sm:$0xff]
  %v2881 = vld [vmem:[%s1243 + $0x292] sm:$0xff]
  %v2882 = vld [vmem:[%s1243 + $0x2a2] sm:$0xff]
  %v2883 = vld [vmem:[%s1243 + $0x2b2] sm:$0xff]
  %v2884 = vld [vmem:[%s1243 + $0x2c2] sm:$0xff]
  %v2885 = vld [vmem:[%s1243 + $0x2d2] sm:$0xff]
  %v2886 = vld [vmem:[%s1243 + $0x2e2] sm:$0xff]
  %v2887 = vld [vmem:[%s1243 + $0x2f2] sm:$0xff]
  %v2888 = vld [vmem:[%s1243 + $0x322] sm:$0xff]
  %v2889 = vld [vmem:[%s1243 + $0x332] sm:$0xff]
  %v2890 = vld [vmem:[%s1243 + $0x342] sm:$0xff]
  %v2891 = vld [vmem:[%s1243 + $0x352] sm:$0xff]
  %v2892 = vld [vmem:[%s1243 + $0x362] sm:$0xff]
  %v2893 = vld [vmem:[%s1243 + $0x372] sm:$0xff]
  %v2894 = vld [vmem:[%s1243 + $0x382] sm:$0xff]
  %v2895 = vld [vmem:[%s1243 + $0x392] sm:$0xff]
  %v2896 = vld [vmem:[%s1243 + $0x3c2] sm:$0xff]
  %v2897 = vld [vmem:[%s1243 + $0x3d2] sm:$0xff]
  %v2898 = vld [vmem:[%s1243 + $0x3e2] sm:$0xff]
  %v2899 = vld [vmem:[%s1243 + $0x3f2] sm:$0xff]
  %v2900 = vld [vmem:[%s1243 + $0x402] sm:$0xff]
  %v2901 = vld [vmem:[%s1243 + $0x412] sm:$0xff]
  %v2902 = vld [vmem:[%s1243 + $0x422] sm:$0xff]
  %v2903 = vld [vmem:[%s1243 + $0x432] sm:$0xff]
  %v2904 = vld [vmem:[%s1243 + $0x462] sm:$0xff]
  %v2905 = vld [vmem:[%s1243 + $0x472] sm:$0xff]
  %v2906 = vld [vmem:[%s1243 + $0x482] sm:$0xff]
  %v2907 = vld [vmem:[%s1243 + $0x492] sm:$0xff]
  %v2908 = vld [vmem:[%s1243 + $0x4a2] sm:$0xff]
  %v2909 = vld [vmem:[%s1243 + $0x4b2] sm:$0xff]
  %v2910 = vld [vmem:[%s1243 + $0x4c2] sm:$0xff]
  %v2911 = vld [vmem:[%s1243 + $0x4d2] sm:$0xff]
  %2976 = vrot.lane.b32.xlu0 %v2848, 32
  %v2977 = vpop.permute.xlu0 %2976
  %2978 = vrot.lane.b32.xlu0 %v2849, 32
  %v2979 = vpop.permute.xlu0 %2978
  %2980 = vrot.lane.b32.xlu0 %v2850, 32
  %v2981 = vpop.permute.xlu0 %2980
  %2982 = vrot.lane.b32.xlu0 %v2851, 32
  %v2983 = vpop.permute.xlu0 %2982
  %2984 = vrot.lane.b32.xlu0 %v2852, 32
  %v2985 = vpop.permute.xlu0 %2984
  %2986 = vrot.lane.b32.xlu0 %v2853, 32
  %v2987 = vpop.permute.xlu0 %2986
  %2988 = vrot.lane.b32.xlu0 %v2854, 32
  %v2989 = vpop.permute.xlu0 %2988
  %2990 = vrot.lane.b32.xlu0 %v2855, 32
  %v2991 = vpop.permute.xlu0 %2990
  %2992 = vrot.lane.b32.xlu0 %v2856, 32
  %v2993 = vpop.permute.xlu0 %2992
  %2994 = vrot.lane.b32.xlu0 %v2857, 32
  %v2995 = vpop.permute.xlu0 %2994
  %2996 = vrot.lane.b32.xlu0 %v2858, 32
  %v2997 = vpop.permute.xlu0 %2996
  %2998 = vrot.lane.b32.xlu0 %v2859, 32
  %v2999 = vpop.permute.xlu0 %2998
  %3000 = vrot.lane.b32.xlu0 %v2860, 32
  %v3001 = vpop.permute.xlu0 %3000
  %3002 = vrot.lane.b32.xlu0 %v2861, 32
  %v3003 = vpop.permute.xlu0 %3002
  %3004 = vrot.lane.b32.xlu0 %v2862, 32
  %v3005 = vpop.permute.xlu0 %3004
  %3006 = vrot.lane.b32.xlu0 %v2863, 32
  %v3007 = vpop.permute.xlu0 %3006
  %3008 = vrot.lane.b32.xlu0 %v2864, 32
  %v3009 = vpop.permute.xlu0 %3008
  %3010 = vrot.lane.b32.xlu0 %v2865, 32
  %v3011 = vpop.permute.xlu0 %3010
  %3012 = vrot.lane.b32.xlu0 %v2866, 32
  %v3013 = vpop.permute.xlu0 %3012
  %3014 = vrot.lane.b32.xlu0 %v2867, 32
  %v3015 = vpop.permute.xlu0 %3014
  %3016 = vrot.lane.b32.xlu0 %v2868, 32
  %v3017 = vpop.permute.xlu0 %3016
  %3018 = vrot.lane.b32.xlu0 %v2869, 32
  %v3019 = vpop.permute.xlu0 %3018
  %3020 = vrot.lane.b32.xlu0 %v2870, 32
  %v3021 = vpop.permute.xlu0 %3020
  %3022 = vrot.lane.b32.xlu0 %v2871, 32
  %v3023 = vpop.permute.xlu0 %3022
  %3024 = vrot.lane.b32.xlu0 %v2872, 32
  %v3025 = vpop.permute.xlu0 %3024
  %3026 = vrot.lane.b32.xlu0 %v2873, 32
  %v3027 = vpop.permute.xlu0 %3026
  %3028 = vrot.lane.b32.xlu0 %v2874, 32
  %v3029 = vpop.permute.xlu0 %3028
  %3030 = vrot.lane.b32.xlu0 %v2875, 32
  %v3031 = vpop.permute.xlu0 %3030
  %3032 = vrot.lane.b32.xlu0 %v2876, 32
  %v3033 = vpop.permute.xlu0 %3032
  %3034 = vrot.lane.b32.xlu0 %v2877, 32
  %v3035 = vpop.permute.xlu0 %3034
  %3036 = vrot.lane.b32.xlu0 %v2878, 32
  %v3037 = vpop.permute.xlu0 %3036
  %3038 = vrot.lane.b32.xlu0 %v2879, 32
  %v3039 = vpop.permute.xlu0 %3038
  %3040 = vrot.lane.b32.xlu0 %v2880, 32
  %v3041 = vpop.permute.xlu0 %3040
  %3042 = vrot.lane.b32.xlu0 %v2881, 32
  %v3043 = vpop.permute.xlu0 %3042
  %3044 = vrot.lane.b32.xlu0 %v2882, 32
  %v3045 = vpop.permute.xlu0 %3044
  %3046 = vrot.lane.b32.xlu0 %v2883, 32
  %v3047 = vpop.permute.xlu0 %3046
  %3048 = vrot.lane.b32.xlu0 %v2884, 32
  %v3049 = vpop.permute.xlu0 %3048
  %3050 = vrot.lane.b32.xlu0 %v2885, 32
  %v3051 = vpop.permute.xlu0 %3050
  %3052 = vrot.lane.b32.xlu0 %v2886, 32
  %v3053 = vpop.permute.xlu0 %3052
  %3054 = vrot.lane.b32.xlu0 %v2887, 32
  %v3055 = vpop.permute.xlu0 %3054
  %3056 = vrot.lane.b32.xlu0 %v2888, 32
  %v3057 = vpop.permute.xlu0 %3056
  %3058 = vrot.lane.b32.xlu0 %v2889, 32
  %v3059 = vpop.permute.xlu0 %3058
  %3060 = vrot.lane.b32.xlu0 %v2890, 32
  %v3061 = vpop.permute.xlu0 %3060
  %3062 = vrot.lane.b32.xlu0 %v2891, 32
  %v3063 = vpop.permute.xlu0 %3062
  %3064 = vrot.lane.b32.xlu0 %v2892, 32
  %v3065 = vpop.permute.xlu0 %3064
  %3066 = vrot.lane.b32.xlu0 %v2893, 32
  %v3067 = vpop.permute.xlu0 %3066
  %3068 = vrot.lane.b32.xlu0 %v2894, 32
  %v3069 = vpop.permute.xlu0 %3068
  %3070 = vrot.lane.b32.xlu0 %v2895, 32
  %v3071 = vpop.permute.xlu0 %3070
  %3072 = vrot.lane.b32.xlu0 %v2896, 32
  %v3073 = vpop.permute.xlu0 %3072
  %3074 = vrot.lane.b32.xlu0 %v2897, 32
  %v3075 = vpop.permute.xlu0 %3074
  %3076 = vrot.lane.b32.xlu0 %v2898, 32
  %v3077 = vpop.permute.xlu0 %3076
  %3078 = vrot.lane.b32.xlu0 %v2899, 32
  %v3079 = vpop.permute.xlu0 %3078
  %3080 = vrot.lane.b32.xlu0 %v2900, 32
  %v3081 = vpop.permute.xlu0 %3080
  %3082 = vrot.lane.b32.xlu0 %v2901, 32
  %v3083 = vpop.permute.xlu0 %3082
  %3084 = vrot.lane.b32.xlu0 %v2902, 32
  %v3085 = vpop.permute.xlu0 %3084
  %3086 = vrot.lane.b32.xlu0 %v2903, 32
  %v3087 = vpop.permute.xlu0 %3086
  %3088 = vrot.lane.b32.xlu0 %v2904, 32
  %v3089 = vpop.permute.xlu0 %3088
  %3090 = vrot.lane.b32.xlu0 %v2905, 32
  %v3091 = vpop.permute.xlu0 %3090
  %3092 = vrot.lane.b32.xlu0 %v2906, 32
  %v3093 = vpop.permute.xlu0 %3092
  %3094 = vrot.lane.b32.xlu0 %v2907, 32
  %v3095 = vpop.permute.xlu0 %3094
  %3096 = vrot.lane.b32.xlu0 %v2908, 32
  %v3097 = vpop.permute.xlu0 %3096
  %3098 = vrot.lane.b32.xlu0 %v2909, 32
  %v3099 = vpop.permute.xlu0 %3098
  %3100 = vrot.lane.b32.xlu0 %v2910, 32
  %v3101 = vpop.permute.xlu0 %3100
  %3102 = vrot.lane.b32.xlu0 %v2911, 32
  %v3103 = vpop.permute.xlu0 %3102
  %3168 = vst.msk [vmem:[#allocation3 + $0x8] sm:$0xff] %vm1885, %v2977
  %3169 = vst.msk [vmem:[#allocation3 + $0x20] sm:$0xff] %vm1885, %v2979
  %3170 = vst.msk [vmem:[#allocation3 + $0x38] sm:$0xff] %vm1885, %v2981
  %3171 = vst.msk [vmem:[#allocation3 + $0x50] sm:$0xff] %vm1885, %v2983
  %3172 = vst.msk [vmem:[#allocation3 + $0x68] sm:$0xff] %vm1885, %v2985
  %3173 = vst.msk [vmem:[#allocation3 + $0x80] sm:$0xff] %vm1885, %v2987
  %3174 = vst.msk [vmem:[#allocation3 + $0x98] sm:$0xff] %vm1885, %v2989
  %3175 = vst.msk [vmem:[#allocation3 + $0xb0] sm:$0xff] %vm1885, %v2991
  %3176 = vst.msk [vmem:[#allocation3 + $0xc8] sm:$0xff] %vm1885, %v2993
  %3177 = vst.msk [vmem:[#allocation3 + $0xe0] sm:$0xff] %vm1885, %v2995
  %3178 = vst.msk [vmem:[#allocation3 + $0xf8] sm:$0xff] %vm1885, %v2997
  %3179 = vst.msk [vmem:[#allocation3 + $0x110] sm:$0xff] %vm1885, %v2999
  %3180 = vst.msk [vmem:[#allocation3 + $0x128] sm:$0xff] %vm1885, %v3001
  %3181 = vst.msk [vmem:[#allocation3 + $0x140] sm:$0xff] %vm1885, %v3003
  %3182 = vst.msk [vmem:[#allocation3 + $0x158] sm:$0xff] %vm1885, %v3005
  %3183 = vst.msk [vmem:[#allocation3 + $0x170] sm:$0xff] %vm1885, %v3007
  %3184 = vst.msk [vmem:[#allocation3 + $0x188] sm:$0xff] %vm1885, %v3009
  %3185 = vst.msk [vmem:[#allocation3 + $0x1a0] sm:$0xff] %vm1885, %v3011
  %3186 = vst.msk [vmem:[#allocation3 + $0x1b8] sm:$0xff] %vm1885, %v3013
  %3187 = vst.msk [vmem:[#allocation3 + $0x1d0] sm:$0xff] %vm1885, %v3015
  %3188 = vst.msk [vmem:[#allocation3 + $0x1e8] sm:$0xff] %vm1885, %v3017
  %3189 = vst.msk [vmem:[#allocation3 + $0x200] sm:$0xff] %vm1885, %v3019
  %3190 = vst.msk [vmem:[#allocation3 + $0x218] sm:$0xff] %vm1885, %v3021
  %3191 = vst.msk [vmem:[#allocation3 + $0x230] sm:$0xff] %vm1885, %v3023
  %3192 = vst.msk [vmem:[#allocation3 + $0x248] sm:$0xff] %vm1885, %v3025
  %3193 = vst.msk [vmem:[#allocation3 + $0x260] sm:$0xff] %vm1885, %v3027
  %3194 = vst.msk [vmem:[#allocation3 + $0x278] sm:$0xff] %vm1885, %v3029
  %3195 = vst.msk [vmem:[#allocation3 + $0x290] sm:$0xff] %vm1885, %v3031
  %3196 = vst.msk [vmem:[#allocation3 + $0x2a8] sm:$0xff] %vm1885, %v3033
  %3197 = vst.msk [vmem:[#allocation3 + $0x2c0] sm:$0xff] %vm1885, %v3035
  %3198 = vst.msk [vmem:[#allocation3 + $0x2d8] sm:$0xff] %vm1885, %v3037
  %3199 = vst.msk [vmem:[#allocation3 + $0x2f0] sm:$0xff] %vm1885, %v3039
  %3200 = vst.msk [vmem:[#allocation3 + $0x308] sm:$0xff] %vm1885, %v3041
  %3201 = vst.msk [vmem:[#allocation3 + $0x320] sm:$0xff] %vm1885, %v3043
  %3202 = vst.msk [vmem:[#allocation3 + $0x338] sm:$0xff] %vm1885, %v3045
  %3203 = vst.msk [vmem:[#allocation3 + $0x350] sm:$0xff] %vm1885, %v3047
  %3204 = vst.msk [vmem:[#allocation3 + $0x368] sm:$0xff] %vm1885, %v3049
  %3205 = vst.msk [vmem:[#allocation3 + $0x380] sm:$0xff] %vm1885, %v3051
  %3206 = vst.msk [vmem:[#allocation3 + $0x398] sm:$0xff] %vm1885, %v3053
  %3207 = vst.msk [vmem:[#allocation3 + $0x3b0] sm:$0xff] %vm1885, %v3055
  %3208 = vst.msk [vmem:[#allocation3 + $0x3c8] sm:$0xff] %vm1885, %v3057
  %3209 = vst.msk [vmem:[#allocation3 + $0x3e0] sm:$0xff] %vm1885, %v3059
  %3210 = vst.msk [vmem:[#allocation3 + $0x3f8] sm:$0xff] %vm1885, %v3061
  %3211 = vst.msk [vmem:[#allocation3 + $0x410] sm:$0xff] %vm1885, %v3063
  %3212 = vst.msk [vmem:[#allocation3 + $0x428] sm:$0xff] %vm1885, %v3065
  %3213 = vst.msk [vmem:[#allocation3 + $0x440] sm:$0xff] %vm1885, %v3067
  %3214 = vst.msk [vmem:[#allocation3 + $0x458] sm:$0xff] %vm1885, %v3069
  %3215 = vst.msk [vmem:[#allocation3 + $0x470] sm:$0xff] %vm1885, %v3071
  %3216 = vst.msk [vmem:[#allocation3 + $0x488] sm:$0xff] %vm1885, %v3073
  %3217 = vst.msk [vmem:[#allocation3 + $0x4a0] sm:$0xff] %vm1885, %v3075
  %3218 = vst.msk [vmem:[#allocation3 + $0x4b8] sm:$0xff] %vm1885, %v3077
  %3219 = vst.msk [vmem:[#allocation3 + $0x4d0] sm:$0xff] %vm1885, %v3079
  %3220 = vst.msk [vmem:[#allocation3 + $0x4e8] sm:$0xff] %vm1885, %v3081
  %3221 = vst.msk [vmem:[#allocation3 + $0x500] sm:$0xff] %vm1885, %v3083
  %3222 = vst.msk [vmem:[#allocation3 + $0x518] sm:$0xff] %vm1885, %v3085
  %3223 = vst.msk [vmem:[#allocation3 + $0x530] sm:$0xff] %vm1885, %v3087
  %3224 = vst.msk [vmem:[#allocation3 + $0x548] sm:$0xff] %vm1885, %v3089
  %3225 = vst.msk [vmem:[#allocation3 + $0x560] sm:$0xff] %vm1885, %v3091
  %3226 = vst.msk [vmem:[#allocation3 + $0x578] sm:$0xff] %vm1885, %v3093
  %3227 = vst.msk [vmem:[#allocation3 + $0x590] sm:$0xff] %vm1885, %v3095
  %3228 = vst.msk [vmem:[#allocation3 + $0x5a8] sm:$0xff] %vm1885, %v3097
  %3229 = vst.msk [vmem:[#allocation3 + $0x5c0] sm:$0xff] %vm1885, %v3099
  %3230 = vst.msk [vmem:[#allocation3 + $0x5d8] sm:$0xff] %vm1885, %v3101
  %3231 = vst.msk [vmem:[#allocation3 + $0x5f0] sm:$0xff] %vm1885, %v3103
  %s3232 = scalar_lea.vmem [#allocation2], 32
  %v3233 = vld [vmem:[%s3232] sm:$0xff]
  %v3234 = vld [vmem:[%s3232 + $0x10] sm:$0xff]
  %v3235 = vld [vmem:[%s3232 + $0x20] sm:$0xff]
  %v3236 = vld [vmem:[%s3232 + $0x30] sm:$0xff]
  %v3237 = vld [vmem:[%s3232 + $0x40] sm:$0xff]
  %v3238 = vld [vmem:[%s3232 + $0x50] sm:$0xff]
  %v3239 = vld [vmem:[%s3232 + $0x60] sm:$0xff]
  %v3240 = vld [vmem:[%s3232 + $0x70] sm:$0xff]
  %v3241 = vld [vmem:[%s3232 + $0xa0] sm:$0xff]
  %v3242 = vld [vmem:[%s3232 + $0xb0] sm:$0xff]
  %v3243 = vld [vmem:[%s3232 + $0xc0] sm:$0xff]
  %v3244 = vld [vmem:[%s3232 + $0xd0] sm:$0xff]
  %v3245 = vld [vmem:[%s3232 + $0xe0] sm:$0xff]
  %v3246 = vld [vmem:[%s3232 + $0xf0] sm:$0xff]
  %v3247 = vld [vmem:[%s3232 + $0x100] sm:$0xff]
  %v3248 = vld [vmem:[%s3232 + $0x110] sm:$0xff]
  %v3249 = vld [vmem:[%s3232 + $0x140] sm:$0xff]
  %v3250 = vld [vmem:[%s3232 + $0x150] sm:$0xff]
  %v3251 = vld [vmem:[%s3232 + $0x160] sm:$0xff]
  %v3252 = vld [vmem:[%s3232 + $0x170] sm:$0xff]
  %v3253 = vld [vmem:[%s3232 + $0x180] sm:$0xff]
  %v3254 = vld [vmem:[%s3232 + $0x190] sm:$0xff]
  %v3255 = vld [vmem:[%s3232 + $0x1a0] sm:$0xff]
  %v3256 = vld [vmem:[%s3232 + $0x1b0] sm:$0xff]
  %v3257 = vld [vmem:[%s3232 + $0x1e0] sm:$0xff]
  %v3258 = vld [vmem:[%s3232 + $0x1f0] sm:$0xff]
  %v3259 = vld [vmem:[%s3232 + $0x200] sm:$0xff]
  %v3260 = vld [vmem:[%s3232 + $0x210] sm:$0xff]
  %v3261 = vld [vmem:[%s3232 + $0x220] sm:$0xff]
  %v3262 = vld [vmem:[%s3232 + $0x230] sm:$0xff]
  %v3263 = vld [vmem:[%s3232 + $0x240] sm:$0xff]
  %v3264 = vld [vmem:[%s3232 + $0x250] sm:$0xff]
  %v3265 = vld [vmem:[%s3232 + $0x280] sm:$0xff]
  %v3266 = vld [vmem:[%s3232 + $0x290] sm:$0xff]
  %v3267 = vld [vmem:[%s3232 + $0x2a0] sm:$0xff]
  %v3268 = vld [vmem:[%s3232 + $0x2b0] sm:$0xff]
  %v3269 = vld [vmem:[%s3232 + $0x2c0] sm:$0xff]
  %v3270 = vld [vmem:[%s3232 + $0x2d0] sm:$0xff]
  %v3271 = vld [vmem:[%s3232 + $0x2e0] sm:$0xff]
  %v3272 = vld [vmem:[%s3232 + $0x2f0] sm:$0xff]
  %v3273 = vld [vmem:[%s3232 + $0x320] sm:$0xff]
  %v3274 = vld [vmem:[%s3232 + $0x330] sm:$0xff]
  %v3275 = vld [vmem:[%s3232 + $0x340] sm:$0xff]
  %v3276 = vld [vmem:[%s3232 + $0x350] sm:$0xff]
  %v3277 = vld [vmem:[%s3232 + $0x360] sm:$0xff]
  %v3278 = vld [vmem:[%s3232 + $0x370] sm:$0xff]
  %v3279 = vld [vmem:[%s3232 + $0x380] sm:$0xff]
  %v3280 = vld [vmem:[%s3232 + $0x390] sm:$0xff]
  %v3281 = vld [vmem:[%s3232 + $0x3c0] sm:$0xff]
  %v3282 = vld [vmem:[%s3232 + $0x3d0] sm:$0xff]
  %v3283 = vld [vmem:[%s3232 + $0x3e0] sm:$0xff]
  %v3284 = vld [vmem:[%s3232 + $0x3f0] sm:$0xff]
  %v3285 = vld [vmem:[%s3232 + $0x400] sm:$0xff]
  %v3286 = vld [vmem:[%s3232 + $0x410] sm:$0xff]
  %v3287 = vld [vmem:[%s3232 + $0x420] sm:$0xff]
  %v3288 = vld [vmem:[%s3232 + $0x430] sm:$0xff]
  %v3289 = vld [vmem:[%s3232 + $0x460] sm:$0xff]
  %v3290 = vld [vmem:[%s3232 + $0x470] sm:$0xff]
  %v3291 = vld [vmem:[%s3232 + $0x480] sm:$0xff]
  %v3292 = vld [vmem:[%s3232 + $0x490] sm:$0xff]
  %v3293 = vld [vmem:[%s3232 + $0x4a0] sm:$0xff]
  %v3294 = vld [vmem:[%s3232 + $0x4b0] sm:$0xff]
  %v3295 = vld [vmem:[%s3232 + $0x4c0] sm:$0xff]
  %v3296 = vld [vmem:[%s3232 + $0x4d0] sm:$0xff]
  %3361 = vrot.lane.b32.xlu0 %v3233, 64
  %v3362 = vpop.permute.xlu0 %3361
  %3363 = vrot.lane.b32.xlu0 %v3234, 64
  %v3364 = vpop.permute.xlu0 %3363
  %3365 = vrot.lane.b32.xlu0 %v3235, 64
  %v3366 = vpop.permute.xlu0 %3365
  %3367 = vrot.lane.b32.xlu0 %v3236, 64
  %v3368 = vpop.permute.xlu0 %3367
  %3369 = vrot.lane.b32.xlu0 %v3237, 64
  %v3370 = vpop.permute.xlu0 %3369
  %3371 = vrot.lane.b32.xlu0 %v3238, 64
  %v3372 = vpop.permute.xlu0 %3371
  %3373 = vrot.lane.b32.xlu0 %v3239, 64
  %v3374 = vpop.permute.xlu0 %3373
  %3375 = vrot.lane.b32.xlu0 %v3240, 64
  %v3376 = vpop.permute.xlu0 %3375
  %3377 = vrot.lane.b32.xlu0 %v3241, 64
  %v3378 = vpop.permute.xlu0 %3377
  %3379 = vrot.lane.b32.xlu0 %v3242, 64
  %v3380 = vpop.permute.xlu0 %3379
  %3381 = vrot.lane.b32.xlu0 %v3243, 64
  %v3382 = vpop.permute.xlu0 %3381
  %3383 = vrot.lane.b32.xlu0 %v3244, 64
  %v3384 = vpop.permute.xlu0 %3383
  %3385 = vrot.lane.b32.xlu0 %v3245, 64
  %v3386 = vpop.permute.xlu0 %3385
  %3387 = vrot.lane.b32.xlu0 %v3246, 64
  %v3388 = vpop.permute.xlu0 %3387
  %3389 = vrot.lane.b32.xlu0 %v3247, 64
  %v3390 = vpop.permute.xlu0 %3389
  %3391 = vrot.lane.b32.xlu0 %v3248, 64
  %v3392 = vpop.permute.xlu0 %3391
  %3393 = vrot.lane.b32.xlu0 %v3249, 64
  %v3394 = vpop.permute.xlu0 %3393
  %3395 = vrot.lane.b32.xlu0 %v3250, 64
  %v3396 = vpop.permute.xlu0 %3395
  %3397 = vrot.lane.b32.xlu0 %v3251, 64
  %v3398 = vpop.permute.xlu0 %3397
  %3399 = vrot.lane.b32.xlu0 %v3252, 64
  %v3400 = vpop.permute.xlu0 %3399
  %3401 = vrot.lane.b32.xlu0 %v3253, 64
  %v3402 = vpop.permute.xlu0 %3401
  %3403 = vrot.lane.b32.xlu0 %v3254, 64
  %v3404 = vpop.permute.xlu0 %3403
  %3405 = vrot.lane.b32.xlu0 %v3255, 64
  %v3406 = vpop.permute.xlu0 %3405
  %3407 = vrot.lane.b32.xlu0 %v3256, 64
  %v3408 = vpop.permute.xlu0 %3407
  %3409 = vrot.lane.b32.xlu0 %v3257, 64
  %v3410 = vpop.permute.xlu0 %3409
  %3411 = vrot.lane.b32.xlu0 %v3258, 64
  %v3412 = vpop.permute.xlu0 %3411
  %3413 = vrot.lane.b32.xlu0 %v3259, 64
  %v3414 = vpop.permute.xlu0 %3413
  %3415 = vrot.lane.b32.xlu0 %v3260, 64
  %v3416 = vpop.permute.xlu0 %3415
  %3417 = vrot.lane.b32.xlu0 %v3261, 64
  %v3418 = vpop.permute.xlu0 %3417
  %3419 = vrot.lane.b32.xlu0 %v3262, 64
  %v3420 = vpop.permute.xlu0 %3419
  %3421 = vrot.lane.b32.xlu0 %v3263, 64
  %v3422 = vpop.permute.xlu0 %3421
  %3423 = vrot.lane.b32.xlu0 %v3264, 64
  %v3424 = vpop.permute.xlu0 %3423
  %3425 = vrot.lane.b32.xlu0 %v3265, 64
  %v3426 = vpop.permute.xlu0 %3425
  %3427 = vrot.lane.b32.xlu0 %v3266, 64
  %v3428 = vpop.permute.xlu0 %3427
  %3429 = vrot.lane.b32.xlu0 %v3267, 64
  %v3430 = vpop.permute.xlu0 %3429
  %3431 = vrot.lane.b32.xlu0 %v3268, 64
  %v3432 = vpop.permute.xlu0 %3431
  %3433 = vrot.lane.b32.xlu0 %v3269, 64
  %v3434 = vpop.permute.xlu0 %3433
  %3435 = vrot.lane.b32.xlu0 %v3270, 64
  %v3436 = vpop.permute.xlu0 %3435
  %3437 = vrot.lane.b32.xlu0 %v3271, 64
  %v3438 = vpop.permute.xlu0 %3437
  %3439 = vrot.lane.b32.xlu0 %v3272, 64
  %v3440 = vpop.permute.xlu0 %3439
  %3441 = vrot.lane.b32.xlu0 %v3273, 64
  %v3442 = vpop.permute.xlu0 %3441
  %3443 = vrot.lane.b32.xlu0 %v3274, 64
  %v3444 = vpop.permute.xlu0 %3443
  %3445 = vrot.lane.b32.xlu0 %v3275, 64
  %v3446 = vpop.permute.xlu0 %3445
  %3447 = vrot.lane.b32.xlu0 %v3276, 64
  %v3448 = vpop.permute.xlu0 %3447
  %3449 = vrot.lane.b32.xlu0 %v3277, 64
  %v3450 = vpop.permute.xlu0 %3449
  %3451 = vrot.lane.b32.xlu0 %v3278, 64
  %v3452 = vpop.permute.xlu0 %3451
  %3453 = vrot.lane.b32.xlu0 %v3279, 64
  %v3454 = vpop.permute.xlu0 %3453
  %3455 = vrot.lane.b32.xlu0 %v3280, 64
  %v3456 = vpop.permute.xlu0 %3455
  %3457 = vrot.lane.b32.xlu0 %v3281, 64
  %v3458 = vpop.permute.xlu0 %3457
  %3459 = vrot.lane.b32.xlu0 %v3282, 64
  %v3460 = vpop.permute.xlu0 %3459
  %3461 = vrot.lane.b32.xlu0 %v3283, 64
  %v3462 = vpop.permute.xlu0 %3461
  %3463 = vrot.lane.b32.xlu0 %v3284, 64
  %v3464 = vpop.permute.xlu0 %3463
  %3465 = vrot.lane.b32.xlu0 %v3285, 64
  %v3466 = vpop.permute.xlu0 %3465
  %3467 = vrot.lane.b32.xlu0 %v3286, 64
  %v3468 = vpop.permute.xlu0 %3467
  %3469 = vrot.lane.b32.xlu0 %v3287, 64
  %v3470 = vpop.permute.xlu0 %3469
  %3471 = vrot.lane.b32.xlu0 %v3288, 64
  %v3472 = vpop.permute.xlu0 %3471
  %3473 = vrot.lane.b32.xlu0 %v3289, 64
  %v3474 = vpop.permute.xlu0 %3473
  %3475 = vrot.lane.b32.xlu0 %v3290, 64
  %v3476 = vpop.permute.xlu0 %3475
  %3477 = vrot.lane.b32.xlu0 %v3291, 64
  %v3478 = vpop.permute.xlu0 %3477
  %3479 = vrot.lane.b32.xlu0 %v3292, 64
  %v3480 = vpop.permute.xlu0 %3479
  %3481 = vrot.lane.b32.xlu0 %v3293, 64
  %v3482 = vpop.permute.xlu0 %3481
  %3483 = vrot.lane.b32.xlu0 %v3294, 64
  %v3484 = vpop.permute.xlu0 %3483
  %3485 = vrot.lane.b32.xlu0 %v3295, 64
  %v3486 = vpop.permute.xlu0 %3485
  %3487 = vrot.lane.b32.xlu0 %v3296, 64
  %v3488 = vpop.permute.xlu0 %3487
  %3553 = vst.msk [vmem:[#allocation3 + $0x8] sm:$0xff] %vm2270, %v3362
  %3554 = vst.msk [vmem:[#allocation3 + $0x20] sm:$0xff] %vm2270, %v3364
  %3555 = vst.msk [vmem:[#allocation3 + $0x38] sm:$0xff] %vm2270, %v3366
  %3556 = vst.msk [vmem:[#allocation3 + $0x50] sm:$0xff] %vm2270, %v3368
  %3557 = vst.msk [vmem:[#allocation3 + $0x68] sm:$0xff] %vm2270, %v3370
  %3558 = vst.msk [vmem:[#allocation3 + $0x80] sm:$0xff] %vm2270, %v3372
  %3559 = vst.msk [vmem:[#allocation3 + $0x98] sm:$0xff] %vm2270, %v3374
  %3560 = vst.msk [vmem:[#allocation3 + $0xb0] sm:$0xff] %vm2270, %v3376
  %3561 = vst.msk [vmem:[#allocation3 + $0xc8] sm:$0xff] %vm2270, %v3378
  %3562 = vst.msk [vmem:[#allocation3 + $0xe0] sm:$0xff] %vm2270, %v3380
  %3563 = vst.msk [vmem:[#allocation3 + $0xf8] sm:$0xff] %vm2270, %v3382
  %3564 = vst.msk [vmem:[#allocation3 + $0x110] sm:$0xff] %vm2270, %v3384
  %3565 = vst.msk [vmem:[#allocation3 + $0x128] sm:$0xff] %vm2270, %v3386
  %3566 = vst.msk [vmem:[#allocation3 + $0x140] sm:$0xff] %vm2270, %v3388
  %3567 = vst.msk [vmem:[#allocation3 + $0x158] sm:$0xff] %vm2270, %v3390
  %3568 = vst.msk [vmem:[#allocation3 + $0x170] sm:$0xff] %vm2270, %v3392
  %3569 = vst.msk [vmem:[#allocation3 + $0x188] sm:$0xff] %vm2270, %v3394
  %3570 = vst.msk [vmem:[#allocation3 + $0x1a0] sm:$0xff] %vm2270, %v3396
  %3571 = vst.msk [vmem:[#allocation3 + $0x1b8] sm:$0xff] %vm2270, %v3398
  %3572 = vst.msk [vmem:[#allocation3 + $0x1d0] sm:$0xff] %vm2270, %v3400
  %3573 = vst.msk [vmem:[#allocation3 + $0x1e8] sm:$0xff] %vm2270, %v3402
  %3574 = vst.msk [vmem:[#allocation3 + $0x200] sm:$0xff] %vm2270, %v3404
  %3575 = vst.msk [vmem:[#allocation3 + $0x218] sm:$0xff] %vm2270, %v3406
  %3576 = vst.msk [vmem:[#allocation3 + $0x230] sm:$0xff] %vm2270, %v3408
  %3577 = vst.msk [vmem:[#allocation3 + $0x248] sm:$0xff] %vm2270, %v3410
  %3578 = vst.msk [vmem:[#allocation3 + $0x260] sm:$0xff] %vm2270, %v3412
  %3579 = vst.msk [vmem:[#allocation3 + $0x278] sm:$0xff] %vm2270, %v3414
  %3580 = vst.msk [vmem:[#allocation3 + $0x290] sm:$0xff] %vm2270, %v3416
  %3581 = vst.msk [vmem:[#allocation3 + $0x2a8] sm:$0xff] %vm2270, %v3418
  %3582 = vst.msk [vmem:[#allocation3 + $0x2c0] sm:$0xff] %vm2270, %v3420
  %3583 = vst.msk [vmem:[#allocation3 + $0x2d8] sm:$0xff] %vm2270, %v3422
  %3584 = vst.msk [vmem:[#allocation3 + $0x2f0] sm:$0xff] %vm2270, %v3424
  %3585 = vst.msk [vmem:[#allocation3 + $0x308] sm:$0xff] %vm2270, %v3426
  %3586 = vst.msk [vmem:[#allocation3 + $0x320] sm:$0xff] %vm2270, %v3428
  %3587 = vst.msk [vmem:[#allocation3 + $0x338] sm:$0xff] %vm2270, %v3430
  %3588 = vst.msk [vmem:[#allocation3 + $0x350] sm:$0xff] %vm2270, %v3432
  %3589 = vst.msk [vmem:[#allocation3 + $0x368] sm:$0xff] %vm2270, %v3434
  %3590 = vst.msk [vmem:[#allocation3 + $0x380] sm:$0xff] %vm2270, %v3436
  %3591 = vst.msk [vmem:[#allocation3 + $0x398] sm:$0xff] %vm2270, %v3438
  %3592 = vst.msk [vmem:[#allocation3 + $0x3b0] sm:$0xff] %vm2270, %v3440
  %3593 = vst.msk [vmem:[#allocation3 + $0x3c8] sm:$0xff] %vm2270, %v3442
  %3594 = vst.msk [vmem:[#allocation3 + $0x3e0] sm:$0xff] %vm2270, %v3444
  %3595 = vst.msk [vmem:[#allocation3 + $0x3f8] sm:$0xff] %vm2270, %v3446
  %3596 = vst.msk [vmem:[#allocation3 + $0x410] sm:$0xff] %vm2270, %v3448
  %3597 = vst.msk [vmem:[#allocation3 + $0x428] sm:$0xff] %vm2270, %v3450
  %3598 = vst.msk [vmem:[#allocation3 + $0x440] sm:$0xff] %vm2270, %v3452
  %3599 = vst.msk [vmem:[#allocation3 + $0x458] sm:$0xff] %vm2270, %v3454
  %3600 = vst.msk [vmem:[#allocation3 + $0x470] sm:$0xff] %vm2270, %v3456
  %3601 = vst.msk [vmem:[#allocation3 + $0x488] sm:$0xff] %vm2270, %v3458
  %3602 = vst.msk [vmem:[#allocation3 + $0x4a0] sm:$0xff] %vm2270, %v3460
  %3603 = vst.msk [vmem:[#allocation3 + $0x4b8] sm:$0xff] %vm2270, %v3462
  %3604 = vst.msk [vmem:[#allocation3 + $0x4d0] sm:$0xff] %vm2270, %v3464
  %3605 = vst.msk [vmem:[#allocation3 + $0x4e8] sm:$0xff] %vm2270, %v3466
  %3606 = vst.msk [vmem:[#allocation3 + $0x500] sm:$0xff] %vm2270, %v3468
  %3607 = vst.msk [vmem:[#allocation3 + $0x518] sm:$0xff] %vm2270, %v3470
  %3608 = vst.msk [vmem:[#allocation3 + $0x530] sm:$0xff] %vm2270, %v3472
  %3609 = vst.msk [vmem:[#allocation3 + $0x548] sm:$0xff] %vm2270, %v3474
  %3610 = vst.msk [vmem:[#allocation3 + $0x560] sm:$0xff] %vm2270, %v3476
  %3611 = vst.msk [vmem:[#allocation3 + $0x578] sm:$0xff] %vm2270, %v3478
  %3612 = vst.msk [vmem:[#allocation3 + $0x590] sm:$0xff] %vm2270, %v3480
  %3613 = vst.msk [vmem:[#allocation3 + $0x5a8] sm:$0xff] %vm2270, %v3482
  %3614 = vst.msk [vmem:[#allocation3 + $0x5c0] sm:$0xff] %vm2270, %v3484
  %3615 = vst.msk [vmem:[#allocation3 + $0x5d8] sm:$0xff] %vm2270, %v3486
  %3616 = vst.msk [vmem:[#allocation3 + $0x5f0] sm:$0xff] %vm2270, %v3488
  %v3617 = vld [vmem:[%s3232 + $0x1] sm:$0xff]
  %v3618 = vld [vmem:[%s3232 + $0x11] sm:$0xff]
  %v3619 = vld [vmem:[%s3232 + $0x21] sm:$0xff]
  %v3620 = vld [vmem:[%s3232 + $0x31] sm:$0xff]
  %v3621 = vld [vmem:[%s3232 + $0x41] sm:$0xff]
  %v3622 = vld [vmem:[%s3232 + $0x51] sm:$0xff]
  %v3623 = vld [vmem:[%s3232 + $0x61] sm:$0xff]
  %v3624 = vld [vmem:[%s3232 + $0x71] sm:$0xff]
  %v3625 = vld [vmem:[%s3232 + $0xa1] sm:$0xff]
  %v3626 = vld [vmem:[%s3232 + $0xb1] sm:$0xff]
  %v3627 = vld [vmem:[%s3232 + $0xc1] sm:$0xff]
  %v3628 = vld [vmem:[%s3232 + $0xd1] sm:$0xff]
  %v3629 = vld [vmem:[%s3232 + $0xe1] sm:$0xff]
  %v3630 = vld [vmem:[%s3232 + $0xf1] sm:$0xff]
  %v3631 = vld [vmem:[%s3232 + $0x101] sm:$0xff]
  %v3632 = vld [vmem:[%s3232 + $0x111] sm:$0xff]
  %v3633 = vld [vmem:[%s3232 + $0x141] sm:$0xff]
  %v3634 = vld [vmem:[%s3232 + $0x151] sm:$0xff]
  %v3635 = vld [vmem:[%s3232 + $0x161] sm:$0xff]
  %v3636 = vld [vmem:[%s3232 + $0x171] sm:$0xff]
  %v3637 = vld [vmem:[%s3232 + $0x181] sm:$0xff]
  %v3638 = vld [vmem:[%s3232 + $0x191] sm:$0xff]
  %v3639 = vld [vmem:[%s3232 + $0x1a1] sm:$0xff]
  %v3640 = vld [vmem:[%s3232 + $0x1b1] sm:$0xff]
  %v3641 = vld [vmem:[%s3232 + $0x1e1] sm:$0xff]
  %v3642 = vld [vmem:[%s3232 + $0x1f1] sm:$0xff]
  %v3643 = vld [vmem:[%s3232 + $0x201] sm:$0xff]
  %v3644 = vld [vmem:[%s3232 + $0x211] sm:$0xff]
  %v3645 = vld [vmem:[%s3232 + $0x221] sm:$0xff]
  %v3646 = vld [vmem:[%s3232 + $0x231] sm:$0xff]
  %v3647 = vld [vmem:[%s3232 + $0x241] sm:$0xff]
  %v3648 = vld [vmem:[%s3232 + $0x251] sm:$0xff]
  %v3649 = vld [vmem:[%s3232 + $0x281] sm:$0xff]
  %v3650 = vld [vmem:[%s3232 + $0x291] sm:$0xff]
  %v3651 = vld [vmem:[%s3232 + $0x2a1] sm:$0xff]
  %v3652 = vld [vmem:[%s3232 + $0x2b1] sm:$0xff]
  %v3653 = vld [vmem:[%s3232 + $0x2c1] sm:$0xff]
  %v3654 = vld [vmem:[%s3232 + $0x2d1] sm:$0xff]
  %v3655 = vld [vmem:[%s3232 + $0x2e1] sm:$0xff]
  %v3656 = vld [vmem:[%s3232 + $0x2f1] sm:$0xff]
  %v3657 = vld [vmem:[%s3232 + $0x321] sm:$0xff]
  %v3658 = vld [vmem:[%s3232 + $0x331] sm:$0xff]
  %v3659 = vld [vmem:[%s3232 + $0x341] sm:$0xff]
  %v3660 = vld [vmem:[%s3232 + $0x351] sm:$0xff]
  %v3661 = vld [vmem:[%s3232 + $0x361] sm:$0xff]
  %v3662 = vld [vmem:[%s3232 + $0x371] sm:$0xff]
  %v3663 = vld [vmem:[%s3232 + $0x381] sm:$0xff]
  %v3664 = vld [vmem:[%s3232 + $0x391] sm:$0xff]
  %v3665 = vld [vmem:[%s3232 + $0x3c1] sm:$0xff]
  %v3666 = vld [vmem:[%s3232 + $0x3d1] sm:$0xff]
  %v3667 = vld [vmem:[%s3232 + $0x3e1] sm:$0xff]
  %v3668 = vld [vmem:[%s3232 + $0x3f1] sm:$0xff]
  %v3669 = vld [vmem:[%s3232 + $0x401] sm:$0xff]
  %v3670 = vld [vmem:[%s3232 + $0x411] sm:$0xff]
  %v3671 = vld [vmem:[%s3232 + $0x421] sm:$0xff]
  %v3672 = vld [vmem:[%s3232 + $0x431] sm:$0xff]
  %v3673 = vld [vmem:[%s3232 + $0x461] sm:$0xff]
  %v3674 = vld [vmem:[%s3232 + $0x471] sm:$0xff]
  %v3675 = vld [vmem:[%s3232 + $0x481] sm:$0xff]
  %v3676 = vld [vmem:[%s3232 + $0x491] sm:$0xff]
  %v3677 = vld [vmem:[%s3232 + $0x4a1] sm:$0xff]
  %v3678 = vld [vmem:[%s3232 + $0x4b1] sm:$0xff]
  %v3679 = vld [vmem:[%s3232 + $0x4c1] sm:$0xff]
  %v3680 = vld [vmem:[%s3232 + $0x4d1] sm:$0xff]
  %3745 = vrot.lane.b32.xlu0 %v3617, 96
  %v3746 = vpop.permute.xlu0 %3745
  %3747 = vrot.lane.b32.xlu0 %v3618, 96
  %v3748 = vpop.permute.xlu0 %3747
  %3749 = vrot.lane.b32.xlu0 %v3619, 96
  %v3750 = vpop.permute.xlu0 %3749
  %3751 = vrot.lane.b32.xlu0 %v3620, 96
  %v3752 = vpop.permute.xlu0 %3751
  %3753 = vrot.lane.b32.xlu0 %v3621, 96
  %v3754 = vpop.permute.xlu0 %3753
  %3755 = vrot.lane.b32.xlu0 %v3622, 96
  %v3756 = vpop.permute.xlu0 %3755
  %3757 = vrot.lane.b32.xlu0 %v3623, 96
  %v3758 = vpop.permute.xlu0 %3757
  %3759 = vrot.lane.b32.xlu0 %v3624, 96
  %v3760 = vpop.permute.xlu0 %3759
  %3761 = vrot.lane.b32.xlu0 %v3625, 96
  %v3762 = vpop.permute.xlu0 %3761
  %3763 = vrot.lane.b32.xlu0 %v3626, 96
  %v3764 = vpop.permute.xlu0 %3763
  %3765 = vrot.lane.b32.xlu0 %v3627, 96
  %v3766 = vpop.permute.xlu0 %3765
  %3767 = vrot.lane.b32.xlu0 %v3628, 96
  %v3768 = vpop.permute.xlu0 %3767
  %3769 = vrot.lane.b32.xlu0 %v3629, 96
  %v3770 = vpop.permute.xlu0 %3769
  %3771 = vrot.lane.b32.xlu0 %v3630, 96
  %v3772 = vpop.permute.xlu0 %3771
  %3773 = vrot.lane.b32.xlu0 %v3631, 96
  %v3774 = vpop.permute.xlu0 %3773
  %3775 = vrot.lane.b32.xlu0 %v3632, 96
  %v3776 = vpop.permute.xlu0 %3775
  %3777 = vrot.lane.b32.xlu0 %v3633, 96
  %v3778 = vpop.permute.xlu0 %3777
  %3779 = vrot.lane.b32.xlu0 %v3634, 96
  %v3780 = vpop.permute.xlu0 %3779
  %3781 = vrot.lane.b32.xlu0 %v3635, 96
  %v3782 = vpop.permute.xlu0 %3781
  %3783 = vrot.lane.b32.xlu0 %v3636, 96
  %v3784 = vpop.permute.xlu0 %3783
  %3785 = vrot.lane.b32.xlu0 %v3637, 96
  %v3786 = vpop.permute.xlu0 %3785
  %3787 = vrot.lane.b32.xlu0 %v3638, 96
  %v3788 = vpop.permute.xlu0 %3787
  %3789 = vrot.lane.b32.xlu0 %v3639, 96
  %v3790 = vpop.permute.xlu0 %3789
  %3791 = vrot.lane.b32.xlu0 %v3640, 96
  %v3792 = vpop.permute.xlu0 %3791
  %3793 = vrot.lane.b32.xlu0 %v3641, 96
  %v3794 = vpop.permute.xlu0 %3793
  %3795 = vrot.lane.b32.xlu0 %v3642, 96
  %v3796 = vpop.permute.xlu0 %3795
  %3797 = vrot.lane.b32.xlu0 %v3643, 96
  %v3798 = vpop.permute.xlu0 %3797
  %3799 = vrot.lane.b32.xlu0 %v3644, 96
  %v3800 = vpop.permute.xlu0 %3799
  %3801 = vrot.lane.b32.xlu0 %v3645, 96
  %v3802 = vpop.permute.xlu0 %3801
  %3803 = vrot.lane.b32.xlu0 %v3646, 96
  %v3804 = vpop.permute.xlu0 %3803
  %3805 = vrot.lane.b32.xlu0 %v3647, 96
  %v3806 = vpop.permute.xlu0 %3805
  %3807 = vrot.lane.b32.xlu0 %v3648, 96
  %v3808 = vpop.permute.xlu0 %3807
  %3809 = vrot.lane.b32.xlu0 %v3649, 96
  %v3810 = vpop.permute.xlu0 %3809
  %3811 = vrot.lane.b32.xlu0 %v3650, 96
  %v3812 = vpop.permute.xlu0 %3811
  %3813 = vrot.lane.b32.xlu0 %v3651, 96
  %v3814 = vpop.permute.xlu0 %3813
  %3815 = vrot.lane.b32.xlu0 %v3652, 96
  %v3816 = vpop.permute.xlu0 %3815
  %3817 = vrot.lane.b32.xlu0 %v3653, 96
  %v3818 = vpop.permute.xlu0 %3817
  %3819 = vrot.lane.b32.xlu0 %v3654, 96
  %v3820 = vpop.permute.xlu0 %3819
  %3821 = vrot.lane.b32.xlu0 %v3655, 96
  %v3822 = vpop.permute.xlu0 %3821
  %3823 = vrot.lane.b32.xlu0 %v3656, 96
  %v3824 = vpop.permute.xlu0 %3823
  %3825 = vrot.lane.b32.xlu0 %v3657, 96
  %v3826 = vpop.permute.xlu0 %3825
  %3827 = vrot.lane.b32.xlu0 %v3658, 96
  %v3828 = vpop.permute.xlu0 %3827
  %3829 = vrot.lane.b32.xlu0 %v3659, 96
  %v3830 = vpop.permute.xlu0 %3829
  %3831 = vrot.lane.b32.xlu0 %v3660, 96
  %v3832 = vpop.permute.xlu0 %3831
  %3833 = vrot.lane.b32.xlu0 %v3661, 96
  %v3834 = vpop.permute.xlu0 %3833
  %3835 = vrot.lane.b32.xlu0 %v3662, 96
  %v3836 = vpop.permute.xlu0 %3835
  %3837 = vrot.lane.b32.xlu0 %v3663, 96
  %v3838 = vpop.permute.xlu0 %3837
  %3839 = vrot.lane.b32.xlu0 %v3664, 96
  %v3840 = vpop.permute.xlu0 %3839
  %3841 = vrot.lane.b32.xlu0 %v3665, 96
  %v3842 = vpop.permute.xlu0 %3841
  %3843 = vrot.lane.b32.xlu0 %v3666, 96
  %v3844 = vpop.permute.xlu0 %3843
  %3845 = vrot.lane.b32.xlu0 %v3667, 96
  %v3846 = vpop.permute.xlu0 %3845
  %3847 = vrot.lane.b32.xlu0 %v3668, 96
  %v3848 = vpop.permute.xlu0 %3847
  %3849 = vrot.lane.b32.xlu0 %v3669, 96
  %v3850 = vpop.permute.xlu0 %3849
  %3851 = vrot.lane.b32.xlu0 %v3670, 96
  %v3852 = vpop.permute.xlu0 %3851
  %3853 = vrot.lane.b32.xlu0 %v3671, 96
  %v3854 = vpop.permute.xlu0 %3853
  %3855 = vrot.lane.b32.xlu0 %v3672, 96
  %v3856 = vpop.permute.xlu0 %3855
  %3857 = vrot.lane.b32.xlu0 %v3673, 96
  %v3858 = vpop.permute.xlu0 %3857
  %3859 = vrot.lane.b32.xlu0 %v3674, 96
  %v3860 = vpop.permute.xlu0 %3859
  %3861 = vrot.lane.b32.xlu0 %v3675, 96
  %v3862 = vpop.permute.xlu0 %3861
  %3863 = vrot.lane.b32.xlu0 %v3676, 96
  %v3864 = vpop.permute.xlu0 %3863
  %3865 = vrot.lane.b32.xlu0 %v3677, 96
  %v3866 = vpop.permute.xlu0 %3865
  %3867 = vrot.lane.b32.xlu0 %v3678, 96
  %v3868 = vpop.permute.xlu0 %3867
  %3869 = vrot.lane.b32.xlu0 %v3679, 96
  %v3870 = vpop.permute.xlu0 %3869
  %3871 = vrot.lane.b32.xlu0 %v3680, 96
  %v3872 = vpop.permute.xlu0 %3871
  %3937 = vst.msk [vmem:[#allocation3 + $0x8] sm:$0xff] %vm2655, %v3746
  %3938 = vst.msk [vmem:[#allocation3 + $0x20] sm:$0xff] %vm2655, %v3748
  %3939 = vst.msk [vmem:[#allocation3 + $0x38] sm:$0xff] %vm2655, %v3750
  %3940 = vst.msk [vmem:[#allocation3 + $0x50] sm:$0xff] %vm2655, %v3752
  %3941 = vst.msk [vmem:[#allocation3 + $0x68] sm:$0xff] %vm2655, %v3754
  %3942 = vst.msk [vmem:[#allocation3 + $0x80] sm:$0xff] %vm2655, %v3756
  %3943 = vst.msk [vmem:[#allocation3 + $0x98] sm:$0xff] %vm2655, %v3758
  %3944 = vst.msk [vmem:[#allocation3 + $0xb0] sm:$0xff] %vm2655, %v3760
  %3945 = vst.msk [vmem:[#allocation3 + $0xc8] sm:$0xff] %vm2655, %v3762
  %3946 = vst.msk [vmem:[#allocation3 + $0xe0] sm:$0xff] %vm2655, %v3764
  %3947 = vst.msk [vmem:[#allocation3 + $0xf8] sm:$0xff] %vm2655, %v3766
  %3948 = vst.msk [vmem:[#allocation3 + $0x110] sm:$0xff] %vm2655, %v3768
  %3949 = vst.msk [vmem:[#allocation3 + $0x128] sm:$0xff] %vm2655, %v3770
  %3950 = vst.msk [vmem:[#allocation3 + $0x140] sm:$0xff] %vm2655, %v3772
  %3951 = vst.msk [vmem:[#allocation3 + $0x158] sm:$0xff] %vm2655, %v3774
  %3952 = vst.msk [vmem:[#allocation3 + $0x170] sm:$0xff] %vm2655, %v3776
  %3953 = vst.msk [vmem:[#allocation3 + $0x188] sm:$0xff] %vm2655, %v3778
  %3954 = vst.msk [vmem:[#allocation3 + $0x1a0] sm:$0xff] %vm2655, %v3780
  %3955 = vst.msk [vmem:[#allocation3 + $0x1b8] sm:$0xff] %vm2655, %v3782
  %3956 = vst.msk [vmem:[#allocation3 + $0x1d0] sm:$0xff] %vm2655, %v3784
  %3957 = vst.msk [vmem:[#allocation3 + $0x1e8] sm:$0xff] %vm2655, %v3786
  %3958 = vst.msk [vmem:[#allocation3 + $0x200] sm:$0xff] %vm2655, %v3788
  %3959 = vst.msk [vmem:[#allocation3 + $0x218] sm:$0xff] %vm2655, %v3790
  %3960 = vst.msk [vmem:[#allocation3 + $0x230] sm:$0xff] %vm2655, %v3792
  %3961 = vst.msk [vmem:[#allocation3 + $0x248] sm:$0xff] %vm2655, %v3794
  %3962 = vst.msk [vmem:[#allocation3 + $0x260] sm:$0xff] %vm2655, %v3796
  %3963 = vst.msk [vmem:[#allocation3 + $0x278] sm:$0xff] %vm2655, %v3798
  %3964 = vst.msk [vmem:[#allocation3 + $0x290] sm:$0xff] %vm2655, %v3800
  %3965 = vst.msk [vmem:[#allocation3 + $0x2a8] sm:$0xff] %vm2655, %v3802
  %3966 = vst.msk [vmem:[#allocation3 + $0x2c0] sm:$0xff] %vm2655, %v3804
  %3967 = vst.msk [vmem:[#allocation3 + $0x2d8] sm:$0xff] %vm2655, %v3806
  %3968 = vst.msk [vmem:[#allocation3 + $0x2f0] sm:$0xff] %vm2655, %v3808
  %3969 = vst.msk [vmem:[#allocation3 + $0x308] sm:$0xff] %vm2655, %v3810
  %3970 = vst.msk [vmem:[#allocation3 + $0x320] sm:$0xff] %vm2655, %v3812
  %3971 = vst.msk [vmem:[#allocation3 + $0x338] sm:$0xff] %vm2655, %v3814
  %3972 = vst.msk [vmem:[#allocation3 + $0x350] sm:$0xff] %vm2655, %v3816
  %3973 = vst.msk [vmem:[#allocation3 + $0x368] sm:$0xff] %vm2655, %v3818
  %3974 = vst.msk [vmem:[#allocation3 + $0x380] sm:$0xff] %vm2655, %v3820
  %3975 = vst.msk [vmem:[#allocation3 + $0x398] sm:$0xff] %vm2655, %v3822
  %3976 = vst.msk [vmem:[#allocation3 + $0x3b0] sm:$0xff] %vm2655, %v3824
  %3977 = vst.msk [vmem:[#allocation3 + $0x3c8] sm:$0xff] %vm2655, %v3826
  %3978 = vst.msk [vmem:[#allocation3 + $0x3e0] sm:$0xff] %vm2655, %v3828
  %3979 = vst.msk [vmem:[#allocation3 + $0x3f8] sm:$0xff] %vm2655, %v3830
  %3980 = vst.msk [vmem:[#allocation3 + $0x410] sm:$0xff] %vm2655, %v3832
  %3981 = vst.msk [vmem:[#allocation3 + $0x428] sm:$0xff] %vm2655, %v3834
  %3982 = vst.msk [vmem:[#allocation3 + $0x440] sm:$0xff] %vm2655, %v3836
  %3983 = vst.msk [vmem:[#allocation3 + $0x458] sm:$0xff] %vm2655, %v3838
  %3984 = vst.msk [vmem:[#allocation3 + $0x470] sm:$0xff] %vm2655, %v3840
  %3985 = vst.msk [vmem:[#allocation3 + $0x488] sm:$0xff] %vm2655, %v3842
  %3986 = vst.msk [vmem:[#allocation3 + $0x4a0] sm:$0xff] %vm2655, %v3844
  %3987 = vst.msk [vmem:[#allocation3 + $0x4b8] sm:$0xff] %vm2655, %v3846
  %3988 = vst.msk [vmem:[#allocation3 + $0x4d0] sm:$0xff] %vm2655, %v3848
  %3989 = vst.msk [vmem:[#allocation3 + $0x4e8] sm:$0xff] %vm2655, %v3850
  %3990 = vst.msk [vmem:[#allocation3 + $0x500] sm:$0xff] %vm2655, %v3852
  %3991 = vst.msk [vmem:[#allocation3 + $0x518] sm:$0xff] %vm2655, %v3854
  %3992 = vst.msk [vmem:[#allocation3 + $0x530] sm:$0xff] %vm2655, %v3856
  %3993 = vst.msk [vmem:[#allocation3 + $0x548] sm:$0xff] %vm2655, %v3858
  %3994 = vst.msk [vmem:[#allocation3 + $0x560] sm:$0xff] %vm2655, %v3860
  %3995 = vst.msk [vmem:[#allocation3 + $0x578] sm:$0xff] %vm2655, %v3862
  %3996 = vst.msk [vmem:[#allocation3 + $0x590] sm:$0xff] %vm2655, %v3864
  %3997 = vst.msk [vmem:[#allocation3 + $0x5a8] sm:$0xff] %vm2655, %v3866
  %3998 = vst.msk [vmem:[#allocation3 + $0x5c0] sm:$0xff] %vm2655, %v3868
  %3999 = vst.msk [vmem:[#allocation3 + $0x5d8] sm:$0xff] %vm2655, %v3870
  %4000 = vst.msk [vmem:[#allocation3 + $0x5f0] sm:$0xff] %vm2655, %v3872
  %v4001 = vld [vmem:[%s3232 + $0x2] sm:$0xff]
  %v4002 = vld [vmem:[%s3232 + $0x12] sm:$0xff]
  %v4003 = vld [vmem:[%s3232 + $0x22] sm:$0xff]
  %v4004 = vld [vmem:[%s3232 + $0x32] sm:$0xff]
  %v4005 = vld [vmem:[%s3232 + $0x42] sm:$0xff]
  %v4006 = vld [vmem:[%s3232 + $0x52] sm:$0xff]
  %v4007 = vld [vmem:[%s3232 + $0x62] sm:$0xff]
  %v4008 = vld [vmem:[%s3232 + $0x72] sm:$0xff]
  %v4009 = vld [vmem:[%s3232 + $0xa2] sm:$0xff]
  %v4010 = vld [vmem:[%s3232 + $0xb2] sm:$0xff]
  %v4011 = vld [vmem:[%s3232 + $0xc2] sm:$0xff]
  %v4012 = vld [vmem:[%s3232 + $0xd2] sm:$0xff]
  %v4013 = vld [vmem:[%s3232 + $0xe2] sm:$0xff]
  %v4014 = vld [vmem:[%s3232 + $0xf2] sm:$0xff]
  %v4015 = vld [vmem:[%s3232 + $0x102] sm:$0xff]
  %v4016 = vld [vmem:[%s3232 + $0x112] sm:$0xff]
  %v4017 = vld [vmem:[%s3232 + $0x142] sm:$0xff]
  %v4018 = vld [vmem:[%s3232 + $0x152] sm:$0xff]
  %v4019 = vld [vmem:[%s3232 + $0x162] sm:$0xff]
  %v4020 = vld [vmem:[%s3232 + $0x172] sm:$0xff]
  %v4021 = vld [vmem:[%s3232 + $0x182] sm:$0xff]
  %v4022 = vld [vmem:[%s3232 + $0x192] sm:$0xff]
  %v4023 = vld [vmem:[%s3232 + $0x1a2] sm:$0xff]
  %v4024 = vld [vmem:[%s3232 + $0x1b2] sm:$0xff]
  %v4025 = vld [vmem:[%s3232 + $0x1e2] sm:$0xff]
  %v4026 = vld [vmem:[%s3232 + $0x1f2] sm:$0xff]
  %v4027 = vld [vmem:[%s3232 + $0x202] sm:$0xff]
  %v4028 = vld [vmem:[%s3232 + $0x212] sm:$0xff]
  %v4029 = vld [vmem:[%s3232 + $0x222] sm:$0xff]
  %v4030 = vld [vmem:[%s3232 + $0x232] sm:$0xff]
  %v4031 = vld [vmem:[%s3232 + $0x242] sm:$0xff]
  %v4032 = vld [vmem:[%s3232 + $0x252] sm:$0xff]
  %v4033 = vld [vmem:[%s3232 + $0x282] sm:$0xff]
  %v4034 = vld [vmem:[%s3232 + $0x292] sm:$0xff]
  %v4035 = vld [vmem:[%s3232 + $0x2a2] sm:$0xff]
  %v4036 = vld [vmem:[%s3232 + $0x2b2] sm:$0xff]
  %v4037 = vld [vmem:[%s3232 + $0x2c2] sm:$0xff]
  %v4038 = vld [vmem:[%s3232 + $0x2d2] sm:$0xff]
  %v4039 = vld [vmem:[%s3232 + $0x2e2] sm:$0xff]
  %v4040 = vld [vmem:[%s3232 + $0x2f2] sm:$0xff]
  %v4041 = vld [vmem:[%s3232 + $0x322] sm:$0xff]
  %v4042 = vld [vmem:[%s3232 + $0x332] sm:$0xff]
  %v4043 = vld [vmem:[%s3232 + $0x342] sm:$0xff]
  %v4044 = vld [vmem:[%s3232 + $0x352] sm:$0xff]
  %v4045 = vld [vmem:[%s3232 + $0x362] sm:$0xff]
  %v4046 = vld [vmem:[%s3232 + $0x372] sm:$0xff]
  %v4047 = vld [vmem:[%s3232 + $0x382] sm:$0xff]
  %v4048 = vld [vmem:[%s3232 + $0x392] sm:$0xff]
  %v4049 = vld [vmem:[%s3232 + $0x3c2] sm:$0xff]
  %v4050 = vld [vmem:[%s3232 + $0x3d2] sm:$0xff]
  %v4051 = vld [vmem:[%s3232 + $0x3e2] sm:$0xff]
  %v4052 = vld [vmem:[%s3232 + $0x3f2] sm:$0xff]
  %v4053 = vld [vmem:[%s3232 + $0x402] sm:$0xff]
  %v4054 = vld [vmem:[%s3232 + $0x412] sm:$0xff]
  %v4055 = vld [vmem:[%s3232 + $0x422] sm:$0xff]
  %v4056 = vld [vmem:[%s3232 + $0x432] sm:$0xff]
  %v4057 = vld [vmem:[%s3232 + $0x462] sm:$0xff]
  %v4058 = vld [vmem:[%s3232 + $0x472] sm:$0xff]
  %v4059 = vld [vmem:[%s3232 + $0x482] sm:$0xff]
  %v4060 = vld [vmem:[%s3232 + $0x492] sm:$0xff]
  %v4061 = vld [vmem:[%s3232 + $0x4a2] sm:$0xff]
  %v4062 = vld [vmem:[%s3232 + $0x4b2] sm:$0xff]
  %v4063 = vld [vmem:[%s3232 + $0x4c2] sm:$0xff]
  %v4064 = vld [vmem:[%s3232 + $0x4d2] sm:$0xff]
  %4065 = vst.msk [vmem:[#allocation3 + $0x10] sm:$0xff] %vm1208, %v4001
  %4066 = vst.msk [vmem:[#allocation3 + $0x28] sm:$0xff] %vm1208, %v4002
  %4067 = vst.msk [vmem:[#allocation3 + $0x40] sm:$0xff] %vm1208, %v4003
  %4068 = vst.msk [vmem:[#allocation3 + $0x58] sm:$0xff] %vm1208, %v4004
  %4069 = vst.msk [vmem:[#allocation3 + $0x70] sm:$0xff] %vm1208, %v4005
  %4070 = vst.msk [vmem:[#allocation3 + $0x88] sm:$0xff] %vm1208, %v4006
  %4071 = vst.msk [vmem:[#allocation3 + $0xa0] sm:$0xff] %vm1208, %v4007
  %4072 = vst.msk [vmem:[#allocation3 + $0xb8] sm:$0xff] %vm1208, %v4008
  %4073 = vst.msk [vmem:[#allocation3 + $0xd0] sm:$0xff] %vm1208, %v4009
  %4074 = vst.msk [vmem:[#allocation3 + $0xe8] sm:$0xff] %vm1208, %v4010
  %4075 = vst.msk [vmem:[#allocation3 + $0x100] sm:$0xff] %vm1208, %v4011
  %4076 = vst.msk [vmem:[#allocation3 + $0x118] sm:$0xff] %vm1208, %v4012
  %4077 = vst.msk [vmem:[#allocation3 + $0x130] sm:$0xff] %vm1208, %v4013
  %4078 = vst.msk [vmem:[#allocation3 + $0x148] sm:$0xff] %vm1208, %v4014
  %4079 = vst.msk [vmem:[#allocation3 + $0x160] sm:$0xff] %vm1208, %v4015
  %4080 = vst.msk [vmem:[#allocation3 + $0x178] sm:$0xff] %vm1208, %v4016
  %4081 = vst.msk [vmem:[#allocation3 + $0x190] sm:$0xff] %vm1208, %v4017
  %4082 = vst.msk [vmem:[#allocation3 + $0x1a8] sm:$0xff] %vm1208, %v4018
  %4083 = vst.msk [vmem:[#allocation3 + $0x1c0] sm:$0xff] %vm1208, %v4019
  %4084 = vst.msk [vmem:[#allocation3 + $0x1d8] sm:$0xff] %vm1208, %v4020
  %4085 = vst.msk [vmem:[#allocation3 + $0x1f0] sm:$0xff] %vm1208, %v4021
  %4086 = vst.msk [vmem:[#allocation3 + $0x208] sm:$0xff] %vm1208, %v4022
  %4087 = vst.msk [vmem:[#allocation3 + $0x220] sm:$0xff] %vm1208, %v4023
  %4088 = vst.msk [vmem:[#allocation3 + $0x238] sm:$0xff] %vm1208, %v4024
  %4089 = vst.msk [vmem:[#allocation3 + $0x250] sm:$0xff] %vm1208, %v4025
  %4090 = vst.msk [vmem:[#allocation3 + $0x268] sm:$0xff] %vm1208, %v4026
  %4091 = vst.msk [vmem:[#allocation3 + $0x280] sm:$0xff] %vm1208, %v4027
  %4092 = vst.msk [vmem:[#allocation3 + $0x298] sm:$0xff] %vm1208, %v4028
  %4093 = vst.msk [vmem:[#allocation3 + $0x2b0] sm:$0xff] %vm1208, %v4029
  %4094 = vst.msk [vmem:[#allocation3 + $0x2c8] sm:$0xff] %vm1208, %v4030
  %4095 = vst.msk [vmem:[#allocation3 + $0x2e0] sm:$0xff] %vm1208, %v4031
  %4096 = vst.msk [vmem:[#allocation3 + $0x2f8] sm:$0xff] %vm1208, %v4032
  %4097 = vst.msk [vmem:[#allocation3 + $0x310] sm:$0xff] %vm1208, %v4033
  %4098 = vst.msk [vmem:[#allocation3 + $0x328] sm:$0xff] %vm1208, %v4034
  %4099 = vst.msk [vmem:[#allocation3 + $0x340] sm:$0xff] %vm1208, %v4035
  %4100 = vst.msk [vmem:[#allocation3 + $0x358] sm:$0xff] %vm1208, %v4036
  %4101 = vst.msk [vmem:[#allocation3 + $0x370] sm:$0xff] %vm1208, %v4037
  %4102 = vst.msk [vmem:[#allocation3 + $0x388] sm:$0xff] %vm1208, %v4038
  %4103 = vst.msk [vmem:[#allocation3 + $0x3a0] sm:$0xff] %vm1208, %v4039
  %4104 = vst.msk [vmem:[#allocation3 + $0x3b8] sm:$0xff] %vm1208, %v4040
  %4105 = vst.msk [vmem:[#allocation3 + $0x3d0] sm:$0xff] %vm1208, %v4041
  %4106 = vst.msk [vmem:[#allocation3 + $0x3e8] sm:$0xff] %vm1208, %v4042
  %4107 = vst.msk [vmem:[#allocation3 + $0x400] sm:$0xff] %vm1208, %v4043
  %4108 = vst.msk [vmem:[#allocation3 + $0x418] sm:$0xff] %vm1208, %v4044
  %4109 = vst.msk [vmem:[#allocation3 + $0x430] sm:$0xff] %vm1208, %v4045
  %4110 = vst.msk [vmem:[#allocation3 + $0x448] sm:$0xff] %vm1208, %v4046
  %4111 = vst.msk [vmem:[#allocation3 + $0x460] sm:$0xff] %vm1208, %v4047
  %4112 = vst.msk [vmem:[#allocation3 + $0x478] sm:$0xff] %vm1208, %v4048
  %4113 = vst.msk [vmem:[#allocation3 + $0x490] sm:$0xff] %vm1208, %v4049
  %4114 = vst.msk [vmem:[#allocation3 + $0x4a8] sm:$0xff] %vm1208, %v4050
  %4115 = vst.msk [vmem:[#allocation3 + $0x4c0] sm:$0xff] %vm1208, %v4051
  %4116 = vst.msk [vmem:[#allocation3 + $0x4d8] sm:$0xff] %vm1208, %v4052
  %4117 = vst.msk [vmem:[#allocation3 + $0x4f0] sm:$0xff] %vm1208, %v4053
  %4118 = vst.msk [vmem:[#allocation3 + $0x508] sm:$0xff] %vm1208, %v4054
  %4119 = vst.msk [vmem:[#allocation3 + $0x520] sm:$0xff] %vm1208, %v4055
  %4120 = vst.msk [vmem:[#allocation3 + $0x538] sm:$0xff] %vm1208, %v4056
  %4121 = vst.msk [vmem:[#allocation3 + $0x550] sm:$0xff] %vm1208, %v4057
  %4122 = vst.msk [vmem:[#allocation3 + $0x568] sm:$0xff] %vm1208, %v4058
  %4123 = vst.msk [vmem:[#allocation3 + $0x580] sm:$0xff] %vm1208, %v4059
  %4124 = vst.msk [vmem:[#allocation3 + $0x598] sm:$0xff] %vm1208, %v4060
  %4125 = vst.msk [vmem:[#allocation3 + $0x5b0] sm:$0xff] %vm1208, %v4061
  %4126 = vst.msk [vmem:[#allocation3 + $0x5c8] sm:$0xff] %vm1208, %v4062
  %4127 = vst.msk [vmem:[#allocation3 + $0x5e0] sm:$0xff] %vm1208, %v4063
  %4128 = vst.msk [vmem:[#allocation3 + $0x5f8] sm:$0xff] %vm1208, %v4064
  %v4129 = vld [vmem:[#allocation3] sm:$0xff]
  %v4130 = vld [vmem:[#allocation3 + $0x8] sm:$0xff]
  %v4131 = vld [vmem:[#allocation3 + $0x10] sm:$0xff]
  %v4132 = vld [vmem:[#allocation3 + $0x18] sm:$0xff]
  %v4133 = vld [vmem:[#allocation3 + $0x20] sm:$0xff]
  %v4134 = vld [vmem:[#allocation3 + $0x28] sm:$0xff]
  %v4135 = vld [vmem:[#allocation3 + $0x30] sm:$0xff]
  %v4136 = vld [vmem:[#allocation3 + $0x38] sm:$0xff]
  %v4137 = vld [vmem:[#allocation3 + $0x40] sm:$0xff]
  %v4138 = vld [vmem:[#allocation3 + $0x48] sm:$0xff]
  %v4139 = vld [vmem:[#allocation3 + $0x50] sm:$0xff]
  %v4140 = vld [vmem:[#allocation3 + $0x58] sm:$0xff]
  %v4141 = vld [vmem:[#allocation3 + $0x60] sm:$0xff]
  %v4142 = vld [vmem:[#allocation3 + $0x68] sm:$0xff]
  %v4143 = vld [vmem:[#allocation3 + $0x70] sm:$0xff]
  %v4144 = vld [vmem:[#allocation3 + $0x78] sm:$0xff]
  %v4145 = vld [vmem:[#allocation3 + $0x80] sm:$0xff]
  %v4146 = vld [vmem:[#allocation3 + $0x88] sm:$0xff]
  %v4147 = vld [vmem:[#allocation3 + $0x90] sm:$0xff]
  %v4148 = vld [vmem:[#allocation3 + $0x98] sm:$0xff]
  %v4149 = vld [vmem:[#allocation3 + $0xa0] sm:$0xff]
  %v4150 = vld [vmem:[#allocation3 + $0xa8] sm:$0xff]
  %v4151 = vld [vmem:[#allocation3 + $0xb0] sm:$0xff]
  %v4152 = vld [vmem:[#allocation3 + $0xb8] sm:$0xff]
  %v4153 = vld [vmem:[#allocation3 + $0xc0] sm:$0xff]
  %v4154 = vld [vmem:[#allocation3 + $0xc8] sm:$0xff]
  %v4155 = vld [vmem:[#allocation3 + $0xd0] sm:$0xff]
  %v4156 = vld [vmem:[#allocation3 + $0xd8] sm:$0xff]
  %v4157 = vld [vmem:[#allocation3 + $0xe0] sm:$0xff]
  %v4158 = vld [vmem:[#allocation3 + $0xe8] sm:$0xff]
  %v4159 = vld [vmem:[#allocation3 + $0xf0] sm:$0xff]
  %v4160 = vld [vmem:[#allocation3 + $0xf8] sm:$0xff]
  %v4161 = vld [vmem:[#allocation3 + $0x100] sm:$0xff]
  %v4162 = vld [vmem:[#allocation3 + $0x108] sm:$0xff]
  %v4163 = vld [vmem:[#allocation3 + $0x110] sm:$0xff]
  %v4164 = vld [vmem:[#allocation3 + $0x118] sm:$0xff]
  %v4165 = vld [vmem:[#allocation3 + $0x120] sm:$0xff]
  %v4166 = vld [vmem:[#allocation3 + $0x128] sm:$0xff]
  %v4167 = vld [vmem:[#allocation3 + $0x130] sm:$0xff]
  %v4168 = vld [vmem:[#allocation3 + $0x138] sm:$0xff]
  %v4169 = vld [vmem:[#allocation3 + $0x140] sm:$0xff]
  %v4170 = vld [vmem:[#allocation3 + $0x148] sm:$0xff]
  %v4171 = vld [vmem:[#allocation3 + $0x150] sm:$0xff]
  %v4172 = vld [vmem:[#allocation3 + $0x158] sm:$0xff]
  %v4173 = vld [vmem:[#allocation3 + $0x160] sm:$0xff]
  %v4174 = vld [vmem:[#allocation3 + $0x168] sm:$0xff]
  %v4175 = vld [vmem:[#allocation3 + $0x170] sm:$0xff]
  %v4176 = vld [vmem:[#allocation3 + $0x178] sm:$0xff]
  %v4177 = vld [vmem:[#allocation3 + $0x180] sm:$0xff]
  %v4178 = vld [vmem:[#allocation3 + $0x188] sm:$0xff]
  %v4179 = vld [vmem:[#allocation3 + $0x190] sm:$0xff]
  %v4180 = vld [vmem:[#allocation3 + $0x198] sm:$0xff]
  %v4181 = vld [vmem:[#allocation3 + $0x1a0] sm:$0xff]
  %v4182 = vld [vmem:[#allocation3 + $0x1a8] sm:$0xff]
  %v4183 = vld [vmem:[#allocation3 + $0x1b0] sm:$0xff]
  %v4184 = vld [vmem:[#allocation3 + $0x1b8] sm:$0xff]
  %v4185 = vld [vmem:[#allocation3 + $0x1c0] sm:$0xff]
  %v4186 = vld [vmem:[#allocation3 + $0x1c8] sm:$0xff]
  %v4187 = vld [vmem:[#allocation3 + $0x1d0] sm:$0xff]
  %v4188 = vld [vmem:[#allocation3 + $0x1d8] sm:$0xff]
  %v4189 = vld [vmem:[#allocation3 + $0x1e0] sm:$0xff]
  %v4190 = vld [vmem:[#allocation3 + $0x1e8] sm:$0xff]
  %v4191 = vld [vmem:[#allocation3 + $0x1f0] sm:$0xff]
  %v4192 = vld [vmem:[#allocation3 + $0x1f8] sm:$0xff]
  %v4193 = vld [vmem:[#allocation3 + $0x200] sm:$0xff]
  %v4194 = vld [vmem:[#allocation3 + $0x208] sm:$0xff]
  %v4195 = vld [vmem:[#allocation3 + $0x210] sm:$0xff]
  %v4196 = vld [vmem:[#allocation3 + $0x218] sm:$0xff]
  %v4197 = vld [vmem:[#allocation3 + $0x220] sm:$0xff]
  %v4198 = vld [vmem:[#allocation3 + $0x228] sm:$0xff]
  %v4199 = vld [vmem:[#allocation3 + $0x230] sm:$0xff]
  %v4200 = vld [vmem:[#allocation3 + $0x238] sm:$0xff]
  %v4201 = vld [vmem:[#allocation3 + $0x240] sm:$0xff]
  %v4202 = vld [vmem:[#allocation3 + $0x248] sm:$0xff]
  %v4203 = vld [vmem:[#allocation3 + $0x250] sm:$0xff]
  %v4204 = vld [vmem:[#allocation3 + $0x258] sm:$0xff]
  %v4205 = vld [vmem:[#allocation3 + $0x260] sm:$0xff]
  %v4206 = vld [vmem:[#allocation3 + $0x268] sm:$0xff]
  %v4207 = vld [vmem:[#allocation3 + $0x270] sm:$0xff]
  %v4208 = vld [vmem:[#allocation3 + $0x278] sm:$0xff]
  %v4209 = vld [vmem:[#allocation3 + $0x280] sm:$0xff]
  %v4210 = vld [vmem:[#allocation3 + $0x288] sm:$0xff]
  %v4211 = vld [vmem:[#allocation3 + $0x290] sm:$0xff]
  %v4212 = vld [vmem:[#allocation3 + $0x298] sm:$0xff]
  %v4213 = vld [vmem:[#allocation3 + $0x2a0] sm:$0xff]
  %v4214 = vld [vmem:[#allocation3 + $0x2a8] sm:$0xff]
  %v4215 = vld [vmem:[#allocation3 + $0x2b0] sm:$0xff]
  %v4216 = vld [vmem:[#allocation3 + $0x2b8] sm:$0xff]
  %v4217 = vld [vmem:[#allocation3 + $0x2c0] sm:$0xff]
  %v4218 = vld [vmem:[#allocation3 + $0x2c8] sm:$0xff]
  %v4219 = vld [vmem:[#allocation3 + $0x2d0] sm:$0xff]
  %v4220 = vld [vmem:[#allocation3 + $0x2d8] sm:$0xff]
  %v4221 = vld [vmem:[#allocation3 + $0x2e0] sm:$0xff]
  %v4222 = vld [vmem:[#allocation3 + $0x2e8] sm:$0xff]
  %v4223 = vld [vmem:[#allocation3 + $0x2f0] sm:$0xff]
  %v4224 = vld [vmem:[#allocation3 + $0x2f8] sm:$0xff]
  %v4225 = vld [vmem:[#allocation3 + $0x300] sm:$0xff]
  %v4226 = vld [vmem:[#allocation3 + $0x308] sm:$0xff]
  %v4227 = vld [vmem:[#allocation3 + $0x310] sm:$0xff]
  %v4228 = vld [vmem:[#allocation3 + $0x318] sm:$0xff]
  %v4229 = vld [vmem:[#allocation3 + $0x320] sm:$0xff]
  %v4230 = vld [vmem:[#allocation3 + $0x328] sm:$0xff]
  %v4231 = vld [vmem:[#allocation3 + $0x330] sm:$0xff]
  %v4232 = vld [vmem:[#allocation3 + $0x338] sm:$0xff]
  %v4233 = vld [vmem:[#allocation3 + $0x340] sm:$0xff]
  %v4234 = vld [vmem:[#allocation3 + $0x348] sm:$0xff]
  %v4235 = vld [vmem:[#allocation3 + $0x350] sm:$0xff]
  %v4236 = vld [vmem:[#allocation3 + $0x358] sm:$0xff]
  %v4237 = vld [vmem:[#allocation3 + $0x360] sm:$0xff]
  %v4238 = vld [vmem:[#allocation3 + $0x368] sm:$0xff]
  %v4239 = vld [vmem:[#allocation3 + $0x370] sm:$0xff]
  %v4240 = vld [vmem:[#allocation3 + $0x378] sm:$0xff]
  %v4241 = vld [vmem:[#allocation3 + $0x380] sm:$0xff]
  %v4242 = vld [vmem:[#allocation3 + $0x388] sm:$0xff]
  %v4243 = vld [vmem:[#allocation3 + $0x390] sm:$0xff]
  %v4244 = vld [vmem:[#allocation3 + $0x398] sm:$0xff]
  %v4245 = vld [vmem:[#allocation3 + $0x3a0] sm:$0xff]
  %v4246 = vld [vmem:[#allocation3 + $0x3a8] sm:$0xff]
  %v4247 = vld [vmem:[#allocation3 + $0x3b0] sm:$0xff]
  %v4248 = vld [vmem:[#allocation3 + $0x3b8] sm:$0xff]
  %v4249 = vld [vmem:[#allocation3 + $0x3c0] sm:$0xff]
  %v4250 = vld [vmem:[#allocation3 + $0x3c8] sm:$0xff]
  %v4251 = vld [vmem:[#allocation3 + $0x3d0] sm:$0xff]
  %v4252 = vld [vmem:[#allocation3 + $0x3d8] sm:$0xff]
  %v4253 = vld [vmem:[#allocation3 + $0x3e0] sm:$0xff]
  %v4254 = vld [vmem:[#allocation3 + $0x3e8] sm:$0xff]
  %v4255 = vld [vmem:[#allocation3 + $0x3f0] sm:$0xff]
  %v4256 = vld [vmem:[#allocation3 + $0x3f8] sm:$0xff]
  %v4257 = vld [vmem:[#allocation3 + $0x400] sm:$0xff]
  %v4258 = vld [vmem:[#allocation3 + $0x408] sm:$0xff]
  %v4259 = vld [vmem:[#allocation3 + $0x410] sm:$0xff]
  %v4260 = vld [vmem:[#allocation3 + $0x418] sm:$0xff]
  %v4261 = vld [vmem:[#allocation3 + $0x420] sm:$0xff]
  %v4262 = vld [vmem:[#allocation3 + $0x428] sm:$0xff]
  %v4263 = vld [vmem:[#allocation3 + $0x430] sm:$0xff]
  %v4264 = vld [vmem:[#allocation3 + $0x438] sm:$0xff]
  %v4265 = vld [vmem:[#allocation3 + $0x440] sm:$0xff]
  %v4266 = vld [vmem:[#allocation3 + $0x448] sm:$0xff]
  %v4267 = vld [vmem:[#allocation3 + $0x450] sm:$0xff]
  %v4268 = vld [vmem:[#allocation3 + $0x458] sm:$0xff]
  %v4269 = vld [vmem:[#allocation3 + $0x460] sm:$0xff]
  %v4270 = vld [vmem:[#allocation3 + $0x468] sm:$0xff]
  %v4271 = vld [vmem:[#allocation3 + $0x470] sm:$0xff]
  %v4272 = vld [vmem:[#allocation3 + $0x478] sm:$0xff]
  %v4273 = vld [vmem:[#allocation3 + $0x480] sm:$0xff]
  %v4274 = vld [vmem:[#allocation3 + $0x488] sm:$0xff]
  %v4275 = vld [vmem:[#allocation3 + $0x490] sm:$0xff]
  %v4276 = vld [vmem:[#allocation3 + $0x498] sm:$0xff]
  %v4277 = vld [vmem:[#allocation3 + $0x4a0] sm:$0xff]
  %v4278 = vld [vmem:[#allocation3 + $0x4a8] sm:$0xff]
  %v4279 = vld [vmem:[#allocation3 + $0x4b0] sm:$0xff]
  %v4280 = vld [vmem:[#allocation3 + $0x4b8] sm:$0xff]
  %v4281 = vld [vmem:[#allocation3 + $0x4c0] sm:$0xff]
  %v4282 = vld [vmem:[#allocation3 + $0x4c8] sm:$0xff]
  %v4283 = vld [vmem:[#allocation3 + $0x4d0] sm:$0xff]
  %v4284 = vld [vmem:[#allocation3 + $0x4d8] sm:$0xff]
  %v4285 = vld [vmem:[#allocation3 + $0x4e0] sm:$0xff]
  %v4286 = vld [vmem:[#allocation3 + $0x4e8] sm:$0xff]
  %v4287 = vld [vmem:[#allocation3 + $0x4f0] sm:$0xff]
  %v4288 = vld [vmem:[#allocation3 + $0x4f8] sm:$0xff]
  %v4289 = vld [vmem:[#allocation3 + $0x500] sm:$0xff]
  %v4290 = vld [vmem:[#allocation3 + $0x508] sm:$0xff]
  %v4291 = vld [vmem:[#allocation3 + $0x510] sm:$0xff]
  %v4292 = vld [vmem:[#allocation3 + $0x518] sm:$0xff]
  %v4293 = vld [vmem:[#allocation3 + $0x520] sm:$0xff]
  %v4294 = vld [vmem:[#allocation3 + $0x528] sm:$0xff]
  %v4295 = vld [vmem:[#allocation3 + $0x530] sm:$0xff]
  %v4296 = vld [vmem:[#allocation3 + $0x538] sm:$0xff]
  %v4297 = vld [vmem:[#allocation3 + $0x540] sm:$0xff]
  %v4298 = vld [vmem:[#allocation3 + $0x548] sm:$0xff]
  %v4299 = vld [vmem:[#allocation3 + $0x550] sm:$0xff]
  %v4300 = vld [vmem:[#allocation3 + $0x558] sm:$0xff]
  %v4301 = vld [vmem:[#allocation3 + $0x560] sm:$0xff]
  %v4302 = vld [vmem:[#allocation3 + $0x568] sm:$0xff]
  %v4303 = vld [vmem:[#allocation3 + $0x570] sm:$0xff]
  %v4304 = vld [vmem:[#allocation3 + $0x578] sm:$0xff]
  %v4305 = vld [vmem:[#allocation3 + $0x580] sm:$0xff]
  %v4306 = vld [vmem:[#allocation3 + $0x588] sm:$0xff]
  %v4307 = vld [vmem:[#allocation3 + $0x590] sm:$0xff]
  %v4308 = vld [vmem:[#allocation3 + $0x598] sm:$0xff]
  %v4309 = vld [vmem:[#allocation3 + $0x5a0] sm:$0xff]
  %v4310 = vld [vmem:[#allocation3 + $0x5a8] sm:$0xff]
  %v4311 = vld [vmem:[#allocation3 + $0x5b0] sm:$0xff]
  %v4312 = vld [vmem:[#allocation3 + $0x5b8] sm:$0xff]
  %v4313 = vld [vmem:[#allocation3 + $0x5c0] sm:$0xff]
  %v4314 = vld [vmem:[#allocation3 + $0x5c8] sm:$0xff]
  %v4315 = vld [vmem:[#allocation3 + $0x5d0] sm:$0xff]
  %v4316 = vld [vmem:[#allocation3 + $0x5d8] sm:$0xff]
  %v4317 = vld [vmem:[#allocation3 + $0x5e0] sm:$0xff]
  %v4318 = vld [vmem:[#allocation3 + $0x5e8] sm:$0xff]
  %v4319 = vld [vmem:[#allocation3 + $0x5f0] sm:$0xff]
  %v4320 = vld [vmem:[#allocation3 + $0x5f8] sm:$0xff]
  %v4321 = vld [vmem:[%s3] sm:$0xff]
  %v4322 = vld [vmem:[%s3 + $0x8] sm:$0xff]
  %v4323 = vld [vmem:[%s3 + $0x10] sm:$0xff]
  %v4324 = vld [vmem:[%s3 + $0x18] sm:$0xff]
  %v4325 = vld [vmem:[%s3 + $0x20] sm:$0xff]
  %v4326 = vld [vmem:[%s3 + $0x28] sm:$0xff]
  %v4327 = vld [vmem:[%s3 + $0x30] sm:$0xff]
  %v4328 = vld [vmem:[%s3 + $0x38] sm:$0xff]
  %v4329 = vld [vmem:[%s3 + $0x40] sm:$0xff]
  %v4330 = vld [vmem:[%s3 + $0x48] sm:$0xff]
  %v4331 = vld [vmem:[%s3 + $0x50] sm:$0xff]
  %v4332 = vld [vmem:[%s3 + $0x58] sm:$0xff]
  %v4333 = vld [vmem:[%s3 + $0x60] sm:$0xff]
  %v4334 = vld [vmem:[%s3 + $0x68] sm:$0xff]
  %v4335 = vld [vmem:[%s3 + $0x70] sm:$0xff]
  %v4336 = vld [vmem:[%s3 + $0x78] sm:$0xff]
  %v4337 = vld [vmem:[%s3 + $0x80] sm:$0xff]
  %v4338 = vld [vmem:[%s3 + $0x88] sm:$0xff]
  %v4339 = vld [vmem:[%s3 + $0x90] sm:$0xff]
  %v4340 = vld [vmem:[%s3 + $0x98] sm:$0xff]
  %v4341 = vld [vmem:[%s3 + $0xa0] sm:$0xff]
  %v4342 = vld [vmem:[%s3 + $0xa8] sm:$0xff]
  %v4343 = vld [vmem:[%s3 + $0xb0] sm:$0xff]
  %v4344 = vld [vmem:[%s3 + $0xb8] sm:$0xff]
  %v4345 = vld [vmem:[%s3 + $0xc0] sm:$0xff]
  %v4346 = vld [vmem:[%s3 + $0xc8] sm:$0xff]
  %v4347 = vld [vmem:[%s3 + $0xd0] sm:$0xff]
  %v4348 = vld [vmem:[%s3 + $0xd8] sm:$0xff]
  %v4349 = vld [vmem:[%s3 + $0xe0] sm:$0xff]
  %v4350 = vld [vmem:[%s3 + $0xe8] sm:$0xff]
  %v4351 = vld [vmem:[%s3 + $0xf0] sm:$0xff]
  %v4352 = vld [vmem:[%s3 + $0xf8] sm:$0xff]
  %v4353 = vld [vmem:[%s3 + $0x100] sm:$0xff]
  %v4354 = vld [vmem:[%s3 + $0x108] sm:$0xff]
  %v4355 = vld [vmem:[%s3 + $0x110] sm:$0xff]
  %v4356 = vld [vmem:[%s3 + $0x118] sm:$0xff]
  %v4357 = vld [vmem:[%s4] sm:$0x1]
  %v4359 = vperm.slane %v4357, 0
  %v4362 = vsel %vm1208, %v4131, 0
  %v4365 = vsel %vm1208, %v4134, 0
  %v4368 = vsel %vm1208, %v4137, 0
  %v4371 = vsel %vm1208, %v4140, 0
  %v4374 = vsel %vm1208, %v4143, 0
  %v4377 = vsel %vm1208, %v4146, 0
  %v4380 = vsel %vm1208, %v4149, 0
  %v4383 = vsel %vm1208, %v4152, 0
  %v4386 = vsel %vm1208, %v4155, 0
  %v4389 = vsel %vm1208, %v4158, 0
  %v4392 = vsel %vm1208, %v4161, 0
  %v4395 = vsel %vm1208, %v4164, 0
  %v4398 = vsel %vm1208, %v4167, 0
  %v4401 = vsel %vm1208, %v4170, 0
  %v4404 = vsel %vm1208, %v4173, 0
  %v4407 = vsel %vm1208, %v4176, 0
  %v4410 = vsel %vm1208, %v4179, 0
  %v4413 = vsel %vm1208, %v4182, 0
  %v4416 = vsel %vm1208, %v4185, 0
  %v4419 = vsel %vm1208, %v4188, 0
  %v4422 = vsel %vm1208, %v4191, 0
  %v4425 = vsel %vm1208, %v4194, 0
  %v4428 = vsel %vm1208, %v4197, 0
  %v4431 = vsel %vm1208, %v4200, 0
  %v4434 = vsel %vm1208, %v4203, 0
  %v4437 = vsel %vm1208, %v4206, 0
  %v4440 = vsel %vm1208, %v4209, 0
  %v4443 = vsel %vm1208, %v4212, 0
  %v4446 = vsel %vm1208, %v4215, 0
  %v4449 = vsel %vm1208, %v4218, 0
  %v4452 = vsel %vm1208, %v4221, 0
  %v4455 = vsel %vm1208, %v4224, 0
  %v4458 = vsel %vm1208, %v4227, 0
  %v4461 = vsel %vm1208, %v4230, 0
  %v4464 = vsel %vm1208, %v4233, 0
  %v4467 = vsel %vm1208, %v4236, 0
  %v4470 = vsel %vm1208, %v4239, 0
  %v4473 = vsel %vm1208, %v4242, 0
  %v4476 = vsel %vm1208, %v4245, 0
  %v4479 = vsel %vm1208, %v4248, 0
  %v4482 = vsel %vm1208, %v4251, 0
  %v4485 = vsel %vm1208, %v4254, 0
  %v4488 = vsel %vm1208, %v4257, 0
  %v4491 = vsel %vm1208, %v4260, 0
  %v4494 = vsel %vm1208, %v4263, 0
  %v4497 = vsel %vm1208, %v4266, 0
  %v4500 = vsel %vm1208, %v4269, 0
  %v4503 = vsel %vm1208, %v4272, 0
  %v4506 = vsel %vm1208, %v4275, 0
  %v4509 = vsel %vm1208, %v4278, 0
  %v4512 = vsel %vm1208, %v4281, 0
  %v4515 = vsel %vm1208, %v4284, 0
  %v4518 = vsel %vm1208, %v4287, 0
  %v4521 = vsel %vm1208, %v4290, 0
  %v4524 = vsel %vm1208, %v4293, 0
  %v4527 = vsel %vm1208, %v4296, 0
  %v4530 = vsel %vm1208, %v4299, 0
  %v4533 = vsel %vm1208, %v4302, 0
  %v4536 = vsel %vm1208, %v4305, 0
  %v4539 = vsel %vm1208, %v4308, 0
  %v4542 = vsel %vm1208, %v4311, 0
  %v4545 = vsel %vm1208, %v4314, 0
  %v4548 = vsel %vm1208, %v4317, 0
  %v4551 = vsel %vm1208, %v4320, 0
  %4553 = vmatpush.msra.mxu0 %v4336
  %4554 = vmatpush.msra.mxu0 %v4335
  %4555 = vmatpush.msra.mxu0 %v4334
  %4556 = vmatpush.msra.mxu0 %v4333
  %4557 = vmatpush.msra.mxu0 %v4332
  %4558 = vmatpush.msra.mxu0 %v4331
  %4559 = vmatpush.msra.mxu0 %v4330
  %4560 = vmatpush.msra.mxu0 %v4329
  %4561 = vmatpush.msra.mxu0 %v4328
  %4562 = vmatpush.msra.mxu0 %v4327
  %4563 = vmatpush.msra.mxu0 %v4326
  %4564 = vmatpush.msra.mxu0 %v4325
  %4565 = vmatpush.msra.mxu0 %v4324
  %4566 = vmatpush.msra.mxu0 %v4323
  %4567 = vmatpush.msra.mxu0 %v4322
  %4568 = vmatpush.msra.mxu0 %v4321
  %4569 = vmatmul.f32.gmra.mxu0 %v4129
  %v4570 = vpop.f32.mrf.mxu0
  %v4571 = vadd.f32 %v4359, %v4570
  %4572 = vmatmul.f32.gmra.mxu0 %v4132
  %v4573 = vpop.f32.mrf.mxu0
  %v4574 = vadd.f32 %v4359, %v4573
  %4575 = vmatmul.f32.gmra.mxu0 %v4135
  %v4576 = vpop.f32.mrf.mxu0
  %v4577 = vadd.f32 %v4359, %v4576
  %4578 = vmatmul.f32.gmra.mxu0 %v4138
  %v4579 = vpop.f32.mrf.mxu0
  %v4580 = vadd.f32 %v4359, %v4579
  %4581 = vmatmul.f32.gmra.mxu0 %v4141
  %v4582 = vpop.f32.mrf.mxu0
  %v4583 = vadd.f32 %v4359, %v4582
  %4584 = vmatmul.f32.gmra.mxu0 %v4144
  %v4585 = vpop.f32.mrf.mxu0
  %v4586 = vadd.f32 %v4359, %v4585
  %4587 = vmatmul.f32.gmra.mxu0 %v4147
  %v4588 = vpop.f32.mrf.mxu0
  %v4589 = vadd.f32 %v4359, %v4588
  %4590 = vmatmul.f32.gmra.mxu0 %v4150
  %v4591 = vpop.f32.mrf.mxu0
  %v4592 = vadd.f32 %v4359, %v4591
  %4593 = vmatmul.f32.gmra.mxu0 %v4153
  %v4594 = vpop.f32.mrf.mxu0
  %v4595 = vadd.f32 %v4359, %v4594
  %4596 = vmatmul.f32.gmra.mxu0 %v4156
  %v4597 = vpop.f32.mrf.mxu0
  %v4598 = vadd.f32 %v4359, %v4597
  %4599 = vmatmul.f32.gmra.mxu0 %v4159
  %v4600 = vpop.f32.mrf.mxu0
  %v4601 = vadd.f32 %v4359, %v4600
  %4602 = vmatmul.f32.gmra.mxu0 %v4162
  %v4603 = vpop.f32.mrf.mxu0
  %v4604 = vadd.f32 %v4359, %v4603
  %4605 = vmatmul.f32.gmra.mxu0 %v4165
  %v4606 = vpop.f32.mrf.mxu0
  %v4607 = vadd.f32 %v4359, %v4606
  %4608 = vmatmul.f32.gmra.mxu0 %v4168
  %v4609 = vpop.f32.mrf.mxu0
  %v4610 = vadd.f32 %v4359, %v4609
  %4611 = vmatmul.f32.gmra.mxu0 %v4171
  %v4612 = vpop.f32.mrf.mxu0
  %v4613 = vadd.f32 %v4359, %v4612
  %4614 = vmatmul.f32.gmra.mxu0 %v4174
  %v4615 = vpop.f32.mrf.mxu0
  %v4616 = vadd.f32 %v4359, %v4615
  %4617 = vmatmul.f32.gmra.mxu0 %v4177
  %v4618 = vpop.f32.mrf.mxu0
  %v4619 = vadd.f32 %v4359, %v4618
  %4620 = vmatmul.f32.gmra.mxu0 %v4180
  %v4621 = vpop.f32.mrf.mxu0
  %v4622 = vadd.f32 %v4359, %v4621
  %4623 = vmatmul.f32.gmra.mxu0 %v4183
  %v4624 = vpop.f32.mrf.mxu0
  %v4625 = vadd.f32 %v4359, %v4624
  %4626 = vmatmul.f32.gmra.mxu0 %v4186
  %v4627 = vpop.f32.mrf.mxu0
  %v4628 = vadd.f32 %v4359, %v4627
  %4629 = vmatmul.f32.gmra.mxu0 %v4189
  %v4630 = vpop.f32.mrf.mxu0
  %v4631 = vadd.f32 %v4359, %v4630
  %4632 = vmatmul.f32.gmra.mxu0 %v4192
  %v4633 = vpop.f32.mrf.mxu0
  %v4634 = vadd.f32 %v4359, %v4633
  %4635 = vmatmul.f32.gmra.mxu0 %v4195
  %v4636 = vpop.f32.mrf.mxu0
  %v4637 = vadd.f32 %v4359, %v4636
  %4638 = vmatmul.f32.gmra.mxu0 %v4198
  %v4639 = vpop.f32.mrf.mxu0
  %v4640 = vadd.f32 %v4359, %v4639
  %4641 = vmatmul.f32.gmra.mxu0 %v4201
  %v4642 = vpop.f32.mrf.mxu0
  %v4643 = vadd.f32 %v4359, %v4642
  %4644 = vmatmul.f32.gmra.mxu0 %v4204
  %v4645 = vpop.f32.mrf.mxu0
  %v4646 = vadd.f32 %v4359, %v4645
  %4647 = vmatmul.f32.gmra.mxu0 %v4207
  %v4648 = vpop.f32.mrf.mxu0
  %v4649 = vadd.f32 %v4359, %v4648
  %4650 = vmatmul.f32.gmra.mxu0 %v4210
  %v4651 = vpop.f32.mrf.mxu0
  %v4652 = vadd.f32 %v4359, %v4651
  %4653 = vmatmul.f32.gmra.mxu0 %v4213
  %v4654 = vpop.f32.mrf.mxu0
  %v4655 = vadd.f32 %v4359, %v4654
  %4656 = vmatmul.f32.gmra.mxu0 %v4216
  %v4657 = vpop.f32.mrf.mxu0
  %v4658 = vadd.f32 %v4359, %v4657
  %4659 = vmatmul.f32.gmra.mxu0 %v4219
  %v4660 = vpop.f32.mrf.mxu0
  %v4661 = vadd.f32 %v4359, %v4660
  %4662 = vmatmul.f32.gmra.mxu0 %v4222
  %v4663 = vpop.f32.mrf.mxu0
  %v4664 = vadd.f32 %v4359, %v4663
  %4665 = vmatmul.f32.gmra.mxu0 %v4225
  %v4666 = vpop.f32.mrf.mxu0
  %v4667 = vadd.f32 %v4359, %v4666
  %4668 = vmatmul.f32.gmra.mxu0 %v4228
  %v4669 = vpop.f32.mrf.mxu0
  %v4670 = vadd.f32 %v4359, %v4669
  %4671 = vmatmul.f32.gmra.mxu0 %v4231
  %v4672 = vpop.f32.mrf.mxu0
  %v4673 = vadd.f32 %v4359, %v4672
  %4674 = vmatmul.f32.gmra.mxu0 %v4234
  %v4675 = vpop.f32.mrf.mxu0
  %v4676 = vadd.f32 %v4359, %v4675
  %4677 = vmatmul.f32.gmra.mxu0 %v4237
  %v4678 = vpop.f32.mrf.mxu0
  %v4679 = vadd.f32 %v4359, %v4678
  %4680 = vmatmul.f32.gmra.mxu0 %v4240
  %v4681 = vpop.f32.mrf.mxu0
  %v4682 = vadd.f32 %v4359, %v4681
  %4683 = vmatmul.f32.gmra.mxu0 %v4243
  %v4684 = vpop.f32.mrf.mxu0
  %v4685 = vadd.f32 %v4359, %v4684
  %4686 = vmatmul.f32.gmra.mxu0 %v4246
  %v4687 = vpop.f32.mrf.mxu0
  %v4688 = vadd.f32 %v4359, %v4687
  %4689 = vmatmul.f32.gmra.mxu0 %v4249
  %v4690 = vpop.f32.mrf.mxu0
  %v4691 = vadd.f32 %v4359, %v4690
  %4692 = vmatmul.f32.gmra.mxu0 %v4252
  %v4693 = vpop.f32.mrf.mxu0
  %v4694 = vadd.f32 %v4359, %v4693
  %4695 = vmatmul.f32.gmra.mxu0 %v4255
  %v4696 = vpop.f32.mrf.mxu0
  %v4697 = vadd.f32 %v4359, %v4696
  %4698 = vmatmul.f32.gmra.mxu0 %v4258
  %v4699 = vpop.f32.mrf.mxu0
  %v4700 = vadd.f32 %v4359, %v4699
  %4701 = vmatmul.f32.gmra.mxu0 %v4261
  %v4702 = vpop.f32.mrf.mxu0
  %v4703 = vadd.f32 %v4359, %v4702
  %4704 = vmatmul.f32.gmra.mxu0 %v4264
  %v4705 = vpop.f32.mrf.mxu0
  %v4706 = vadd.f32 %v4359, %v4705
  %4707 = vmatmul.f32.gmra.mxu0 %v4267
  %v4708 = vpop.f32.mrf.mxu0
  %v4709 = vadd.f32 %v4359, %v4708
  %4710 = vmatmul.f32.gmra.mxu0 %v4270
  %v4711 = vpop.f32.mrf.mxu0
  %v4712 = vadd.f32 %v4359, %v4711
  %4713 = vmatmul.f32.gmra.mxu0 %v4273
  %v4714 = vpop.f32.mrf.mxu0
  %v4715 = vadd.f32 %v4359, %v4714
  %4716 = vmatmul.f32.gmra.mxu0 %v4276
  %v4717 = vpop.f32.mrf.mxu0
  %v4718 = vadd.f32 %v4359, %v4717
  %4719 = vmatmul.f32.gmra.mxu0 %v4279
  %v4720 = vpop.f32.mrf.mxu0
  %v4721 = vadd.f32 %v4359, %v4720
  %4722 = vmatmul.f32.gmra.mxu0 %v4282
  %v4723 = vpop.f32.mrf.mxu0
  %v4724 = vadd.f32 %v4359, %v4723
  %4725 = vmatmul.f32.gmra.mxu0 %v4285
  %v4726 = vpop.f32.mrf.mxu0
  %v4727 = vadd.f32 %v4359, %v4726
  %4728 = vmatmul.f32.gmra.mxu0 %v4288
  %v4729 = vpop.f32.mrf.mxu0
  %v4730 = vadd.f32 %v4359, %v4729
  %4731 = vmatmul.f32.gmra.mxu0 %v4291
  %v4732 = vpop.f32.mrf.mxu0
  %v4733 = vadd.f32 %v4359, %v4732
  %4734 = vmatmul.f32.gmra.mxu0 %v4294
  %v4735 = vpop.f32.mrf.mxu0
  %v4736 = vadd.f32 %v4359, %v4735
  %4737 = vmatmul.f32.gmra.mxu0 %v4297
  %v4738 = vpop.f32.mrf.mxu0
  %v4739 = vadd.f32 %v4359, %v4738
  %4740 = vmatmul.f32.gmra.mxu0 %v4300
  %v4741 = vpop.f32.mrf.mxu0
  %v4742 = vadd.f32 %v4359, %v4741
  %4743 = vmatmul.f32.gmra.mxu0 %v4303
  %v4744 = vpop.f32.mrf.mxu0
  %v4745 = vadd.f32 %v4359, %v4744
  %4746 = vmatmul.f32.gmra.mxu0 %v4306
  %v4747 = vpop.f32.mrf.mxu0
  %v4748 = vadd.f32 %v4359, %v4747
  %4749 = vmatmul.f32.gmra.mxu0 %v4309
  %v4750 = vpop.f32.mrf.mxu0
  %v4751 = vadd.f32 %v4359, %v4750
  %4752 = vmatmul.f32.gmra.mxu0 %v4312
  %v4753 = vpop.f32.mrf.mxu0
  %v4754 = vadd.f32 %v4359, %v4753
  %4755 = vmatmul.f32.gmra.mxu0 %v4315
  %v4756 = vpop.f32.mrf.mxu0
  %v4757 = vadd.f32 %v4359, %v4756
  %4758 = vmatmul.f32.gmra.mxu0 %v4318
  %v4759 = vpop.f32.mrf.mxu0
  %v4760 = vadd.f32 %v4359, %v4759
  %4761 = vdwg.mxu0
  %4762 = vmatpush.msra.mxu0 %v4352
  %4763 = vmatpush.msra.mxu0 %v4351
  %4764 = vmatpush.msra.mxu0 %v4350
  %4765 = vmatpush.msra.mxu0 %v4349
  %4766 = vmatpush.msra.mxu0 %v4348
  %4767 = vmatpush.msra.mxu0 %v4347
  %4768 = vmatpush.msra.mxu0 %v4346
  %4769 = vmatpush.msra.mxu0 %v4345
  %4770 = vmatpush.msra.mxu0 %v4344
  %4771 = vmatpush.msra.mxu0 %v4343
  %4772 = vmatpush.msra.mxu0 %v4342
  %4773 = vmatpush.msra.mxu0 %v4341
  %4774 = vmatpush.msra.mxu0 %v4340
  %4775 = vmatpush.msra.mxu0 %v4339
  %4776 = vmatpush.msra.mxu0 %v4338
  %4777 = vmatpush.msra.mxu0 %v4337
  %4778 = vmatmul.f32.gmra.mxu0 %v4130
  %v4779 = vpop.f32.mrf.mxu0
  %v4780 = vadd.f32 %v4571, %v4779
  %4781 = vmatmul.f32.gmra.mxu0 %v4133
  %v4782 = vpop.f32.mrf.mxu0
  %v4783 = vadd.f32 %v4574, %v4782
  %4784 = vmatmul.f32.gmra.mxu0 %v4136
  %v4785 = vpop.f32.mrf.mxu0
  %v4786 = vadd.f32 %v4577, %v4785
  %4787 = vmatmul.f32.gmra.mxu0 %v4139
  %v4788 = vpop.f32.mrf.mxu0
  %v4789 = vadd.f32 %v4580, %v4788
  %4790 = vmatmul.f32.gmra.mxu0 %v4142
  %v4791 = vpop.f32.mrf.mxu0
  %v4792 = vadd.f32 %v4583, %v4791
  %4793 = vmatmul.f32.gmra.mxu0 %v4145
  %v4794 = vpop.f32.mrf.mxu0
  %v4795 = vadd.f32 %v4586, %v4794
  %4796 = vmatmul.f32.gmra.mxu0 %v4148
  %v4797 = vpop.f32.mrf.mxu0
  %v4798 = vadd.f32 %v4589, %v4797
  %4799 = vmatmul.f32.gmra.mxu0 %v4151
  %v4800 = vpop.f32.mrf.mxu0
  %v4801 = vadd.f32 %v4592, %v4800
  %4802 = vmatmul.f32.gmra.mxu0 %v4154
  %v4803 = vpop.f32.mrf.mxu0
  %v4804 = vadd.f32 %v4595, %v4803
  %4805 = vmatmul.f32.gmra.mxu0 %v4157
  %v4806 = vpop.f32.mrf.mxu0
  %v4807 = vadd.f32 %v4598, %v4806
  %4808 = vmatmul.f32.gmra.mxu0 %v4160
  %v4809 = vpop.f32.mrf.mxu0
  %v4810 = vadd.f32 %v4601, %v4809
  %4811 = vmatmul.f32.gmra.mxu0 %v4163
  %v4812 = vpop.f32.mrf.mxu0
  %v4813 = vadd.f32 %v4604, %v4812
  %4814 = vmatmul.f32.gmra.mxu0 %v4166
  %v4815 = vpop.f32.mrf.mxu0
  %v4816 = vadd.f32 %v4607, %v4815
  %4817 = vmatmul.f32.gmra.mxu0 %v4169
  %v4818 = vpop.f32.mrf.mxu0
  %v4819 = vadd.f32 %v4610, %v4818
  %4820 = vmatmul.f32.gmra.mxu0 %v4172
  %v4821 = vpop.f32.mrf.mxu0
  %v4822 = vadd.f32 %v4613, %v4821
  %4823 = vmatmul.f32.gmra.mxu0 %v4175
  %v4824 = vpop.f32.mrf.mxu0
  %v4825 = vadd.f32 %v4616, %v4824
  %4826 = vmatmul.f32.gmra.mxu0 %v4178
  %v4827 = vpop.f32.mrf.mxu0
  %v4828 = vadd.f32 %v4619, %v4827
  %4829 = vmatmul.f32.gmra.mxu0 %v4181
  %v4830 = vpop.f32.mrf.mxu0
  %v4831 = vadd.f32 %v4622, %v4830
  %4832 = vmatmul.f32.gmra.mxu0 %v4184
  %v4833 = vpop.f32.mrf.mxu0
  %v4834 = vadd.f32 %v4625, %v4833
  %4835 = vmatmul.f32.gmra.mxu0 %v4187
  %v4836 = vpop.f32.mrf.mxu0
  %v4837 = vadd.f32 %v4628, %v4836
  %4838 = vmatmul.f32.gmra.mxu0 %v4190
  %v4839 = vpop.f32.mrf.mxu0
  %v4840 = vadd.f32 %v4631, %v4839
  %4841 = vmatmul.f32.gmra.mxu0 %v4193
  %v4842 = vpop.f32.mrf.mxu0
  %v4843 = vadd.f32 %v4634, %v4842
  %4844 = vmatmul.f32.gmra.mxu0 %v4196
  %v4845 = vpop.f32.mrf.mxu0
  %v4846 = vadd.f32 %v4637, %v4845
  %4847 = vmatmul.f32.gmra.mxu0 %v4199
  %v4848 = vpop.f32.mrf.mxu0
  %v4849 = vadd.f32 %v4640, %v4848
  %4850 = vmatmul.f32.gmra.mxu0 %v4202
  %v4851 = vpop.f32.mrf.mxu0
  %v4852 = vadd.f32 %v4643, %v4851
  %4853 = vmatmul.f32.gmra.mxu0 %v4205
  %v4854 = vpop.f32.mrf.mxu0
  %v4855 = vadd.f32 %v4646, %v4854
  %4856 = vmatmul.f32.gmra.mxu0 %v4208
  %v4857 = vpop.f32.mrf.mxu0
  %v4858 = vadd.f32 %v4649, %v4857
  %4859 = vmatmul.f32.gmra.mxu0 %v4211
  %v4860 = vpop.f32.mrf.mxu0
  %v4861 = vadd.f32 %v4652, %v4860
  %4862 = vmatmul.f32.gmra.mxu0 %v4214
  %v4863 = vpop.f32.mrf.mxu0
  %v4864 = vadd.f32 %v4655, %v4863
  %4865 = vmatmul.f32.gmra.mxu0 %v4217
  %v4866 = vpop.f32.mrf.mxu0
  %v4867 = vadd.f32 %v4658, %v4866
  %4868 = vmatmul.f32.gmra.mxu0 %v4220
  %v4869 = vpop.f32.mrf.mxu0
  %v4870 = vadd.f32 %v4661, %v4869
  %4871 = vmatmul.f32.gmra.mxu0 %v4223
  %v4872 = vpop.f32.mrf.mxu0
  %v4873 = vadd.f32 %v4664, %v4872
  %4874 = vmatmul.f32.gmra.mxu0 %v4226
  %v4875 = vpop.f32.mrf.mxu0
  %v4876 = vadd.f32 %v4667, %v4875
  %4877 = vmatmul.f32.gmra.mxu0 %v4229
  %v4878 = vpop.f32.mrf.mxu0
  %v4879 = vadd.f32 %v4670, %v4878
  %4880 = vmatmul.f32.gmra.mxu0 %v4232
  %v4881 = vpop.f32.mrf.mxu0
  %v4882 = vadd.f32 %v4673, %v4881
  %4883 = vmatmul.f32.gmra.mxu0 %v4235
  %v4884 = vpop.f32.mrf.mxu0
  %v4885 = vadd.f32 %v4676, %v4884
  %4886 = vmatmul.f32.gmra.mxu0 %v4238
  %v4887 = vpop.f32.mrf.mxu0
  %v4888 = vadd.f32 %v4679, %v4887
  %4889 = vmatmul.f32.gmra.mxu0 %v4241
  %v4890 = vpop.f32.mrf.mxu0
  %v4891 = vadd.f32 %v4682, %v4890
  %4892 = vmatmul.f32.gmra.mxu0 %v4244
  %v4893 = vpop.f32.mrf.mxu0
  %v4894 = vadd.f32 %v4685, %v4893
  %4895 = vmatmul.f32.gmra.mxu0 %v4247
  %v4896 = vpop.f32.mrf.mxu0
  %v4897 = vadd.f32 %v4688, %v4896
  %4898 = vmatmul.f32.gmra.mxu0 %v4250
  %v4899 = vpop.f32.mrf.mxu0
  %v4900 = vadd.f32 %v4691, %v4899
  %4901 = vmatmul.f32.gmra.mxu0 %v4253
  %v4902 = vpop.f32.mrf.mxu0
  %v4903 = vadd.f32 %v4694, %v4902
  %4904 = vmatmul.f32.gmra.mxu0 %v4256
  %v4905 = vpop.f32.mrf.mxu0
  %v4906 = vadd.f32 %v4697, %v4905
  %4907 = vmatmul.f32.gmra.mxu0 %v4259
  %v4908 = vpop.f32.mrf.mxu0
  %v4909 = vadd.f32 %v4700, %v4908
  %4910 = vmatmul.f32.gmra.mxu0 %v4262
  %v4911 = vpop.f32.mrf.mxu0
  %v4912 = vadd.f32 %v4703, %v4911
  %4913 = vmatmul.f32.gmra.mxu0 %v4265
  %v4914 = vpop.f32.mrf.mxu0
  %v4915 = vadd.f32 %v4706, %v4914
  %4916 = vmatmul.f32.gmra.mxu0 %v4268
  %v4917 = vpop.f32.mrf.mxu0
  %v4918 = vadd.f32 %v4709, %v4917
  %4919 = vmatmul.f32.gmra.mxu0 %v4271
  %v4920 = vpop.f32.mrf.mxu0
  %v4921 = vadd.f32 %v4712, %v4920
  %4922 = vmatmul.f32.gmra.mxu0 %v4274
  %v4923 = vpop.f32.mrf.mxu0
  %v4924 = vadd.f32 %v4715, %v4923
  %4925 = vmatmul.f32.gmra.mxu0 %v4277
  %v4926 = vpop.f32.mrf.mxu0
  %v4927 = vadd.f32 %v4718, %v4926
  %4928 = vmatmul.f32.gmra.mxu0 %v4280
  %v4929 = vpop.f32.mrf.mxu0
  %v4930 = vadd.f32 %v4721, %v4929
  %4931 = vmatmul.f32.gmra.mxu0 %v4283
  %v4932 = vpop.f32.mrf.mxu0
  %v4933 = vadd.f32 %v4724, %v4932
  %4934 = vmatmul.f32.gmra.mxu0 %v4286
  %v4935 = vpop.f32.mrf.mxu0
  %v4936 = vadd.f32 %v4727, %v4935
  %4937 = vmatmul.f32.gmra.mxu0 %v4289
  %v4938 = vpop.f32.mrf.mxu0
  %v4939 = vadd.f32 %v4730, %v4938
  %4940 = vmatmul.f32.gmra.mxu0 %v4292
  %v4941 = vpop.f32.mrf.mxu0
  %v4942 = vadd.f32 %v4733, %v4941
  %4943 = vmatmul.f32.gmra.mxu0 %v4295
  %v4944 = vpop.f32.mrf.mxu0
  %v4945 = vadd.f32 %v4736, %v4944
  %4946 = vmatmul.f32.gmra.mxu0 %v4298
  %v4947 = vpop.f32.mrf.mxu0
  %v4948 = vadd.f32 %v4739, %v4947
  %4949 = vmatmul.f32.gmra.mxu0 %v4301
  %v4950 = vpop.f32.mrf.mxu0
  %v4951 = vadd.f32 %v4742, %v4950
  %4952 = vmatmul.f32.gmra.mxu0 %v4304
  %v4953 = vpop.f32.mrf.mxu0
  %v4954 = vadd.f32 %v4745, %v4953
  %4955 = vmatmul.f32.gmra.mxu0 %v4307
  %v4956 = vpop.f32.mrf.mxu0
  %v4957 = vadd.f32 %v4748, %v4956
  %4958 = vmatmul.f32.gmra.mxu0 %v4310
  %v4959 = vpop.f32.mrf.mxu0
  %v4960 = vadd.f32 %v4751, %v4959
  %4961 = vmatmul.f32.gmra.mxu0 %v4313
  %v4962 = vpop.f32.mrf.mxu0
  %v4963 = vadd.f32 %v4754, %v4962
  %4964 = vmatmul.f32.gmra.mxu0 %v4316
  %v4965 = vpop.f32.mrf.mxu0
  %v4966 = vadd.f32 %v4757, %v4965
  %4967 = vmatmul.f32.gmra.mxu0 %v4319
  %v4968 = vpop.f32.mrf.mxu0
  %v4969 = vadd.f32 %v4760, %v4968
  %4970 = vdwg.mxu0
  %4971 = vmatpush.msra.mxu0 0.0
  %4972 = vmatpush.msra.mxu0 0.0
  %4973 = vmatpush.msra.mxu0 0.0
  %4974 = vmatpush.msra.mxu0 0.0
  %4975 = vmatpush.msra.mxu0 0.0
  %4976 = vmatpush.msra.mxu0 0.0
  %4977 = vmatpush.msra.mxu0 0.0
  %4978 = vmatpush.msra.mxu0 0.0
  %4979 = vmatpush.msra.mxu0 0.0
  %4980 = vmatpush.msra.mxu0 0.0
  %4981 = vmatpush.msra.mxu0 0.0
  %4982 = vmatpush.msra.mxu0 0.0
  %4983 = vmatpush.msra.mxu0 %v4356
  %4984 = vmatpush.msra.mxu0 %v4355
  %4985 = vmatpush.msra.mxu0 %v4354
  %4986 = vmatpush.msra.mxu0 %v4353
  %4987 = vmatmul.f32.gmra.mxu0 %v4362
  %v4988 = vpop.f32.mrf.mxu0
  %v4989 = vadd.f32 %v4780, %v4988
  %4990 = vmatmul.f32.gmra.mxu0 %v4365
  %v4991 = vpop.f32.mrf.mxu0
  %v4992 = vadd.f32 %v4783, %v4991
  %4993 = vmatmul.f32.gmra.mxu0 %v4368
  %v4994 = vpop.f32.mrf.mxu0
  %v4995 = vadd.f32 %v4786, %v4994
  %4996 = vmatmul.f32.gmra.mxu0 %v4371
  %v4997 = vpop.f32.mrf.mxu0
  %v4998 = vadd.f32 %v4789, %v4997
  %4999 = vmatmul.f32.gmra.mxu0 %v4374
  %v5000 = vpop.f32.mrf.mxu0
  %v5001 = vadd.f32 %v4792, %v5000
  %5002 = vmatmul.f32.gmra.mxu0 %v4377
  %v5003 = vpop.f32.mrf.mxu0
  %v5004 = vadd.f32 %v4795, %v5003
  %5005 = vmatmul.f32.gmra.mxu0 %v4380
  %v5006 = vpop.f32.mrf.mxu0
  %v5007 = vadd.f32 %v4798, %v5006
  %5008 = vmatmul.f32.gmra.mxu0 %v4383
  %v5009 = vpop.f32.mrf.mxu0
  %v5010 = vadd.f32 %v4801, %v5009
  %5011 = vmatmul.f32.gmra.mxu0 %v4386
  %v5012 = vpop.f32.mrf.mxu0
  %v5013 = vadd.f32 %v4804, %v5012
  %5014 = vmatmul.f32.gmra.mxu0 %v4389
  %v5015 = vpop.f32.mrf.mxu0
  %v5016 = vadd.f32 %v4807, %v5015
  %5017 = vmatmul.f32.gmra.mxu0 %v4392
  %v5018 = vpop.f32.mrf.mxu0
  %v5019 = vadd.f32 %v4810, %v5018
  %5020 = vmatmul.f32.gmra.mxu0 %v4395
  %v5021 = vpop.f32.mrf.mxu0
  %v5022 = vadd.f32 %v4813, %v5021
  %5023 = vmatmul.f32.gmra.mxu0 %v4398
  %v5024 = vpop.f32.mrf.mxu0
  %v5025 = vadd.f32 %v4816, %v5024
  %5026 = vmatmul.f32.gmra.mxu0 %v4401
  %v5027 = vpop.f32.mrf.mxu0
  %v5028 = vadd.f32 %v4819, %v5027
  %5029 = vmatmul.f32.gmra.mxu0 %v4404
  %v5030 = vpop.f32.mrf.mxu0
  %v5031 = vadd.f32 %v4822, %v5030
  %5032 = vmatmul.f32.gmra.mxu0 %v4407
  %v5033 = vpop.f32.mrf.mxu0
  %v5034 = vadd.f32 %v4825, %v5033
  %5035 = vmatmul.f32.gmra.mxu0 %v4410
  %v5036 = vpop.f32.mrf.mxu0
  %v5037 = vadd.f32 %v4828, %v5036
  %5038 = vmatmul.f32.gmra.mxu0 %v4413
  %v5039 = vpop.f32.mrf.mxu0
  %v5040 = vadd.f32 %v4831, %v5039
  %5041 = vmatmul.f32.gmra.mxu0 %v4416
  %v5042 = vpop.f32.mrf.mxu0
  %v5043 = vadd.f32 %v4834, %v5042
  %5044 = vmatmul.f32.gmra.mxu0 %v4419
  %v5045 = vpop.f32.mrf.mxu0
  %v5046 = vadd.f32 %v4837, %v5045
  %5047 = vmatmul.f32.gmra.mxu0 %v4422
  %v5048 = vpop.f32.mrf.mxu0
  %v5049 = vadd.f32 %v4840, %v5048
  %5050 = vmatmul.f32.gmra.mxu0 %v4425
  %v5051 = vpop.f32.mrf.mxu0
  %v5052 = vadd.f32 %v4843, %v5051
  %5053 = vmatmul.f32.gmra.mxu0 %v4428
  %v5054 = vpop.f32.mrf.mxu0
  %v5055 = vadd.f32 %v4846, %v5054
  %5056 = vmatmul.f32.gmra.mxu0 %v4431
  %v5057 = vpop.f32.mrf.mxu0
  %v5058 = vadd.f32 %v4849, %v5057
  %5059 = vmatmul.f32.gmra.mxu0 %v4434
  %v5060 = vpop.f32.mrf.mxu0
  %v5061 = vadd.f32 %v4852, %v5060
  %5062 = vmatmul.f32.gmra.mxu0 %v4437
  %v5063 = vpop.f32.mrf.mxu0
  %v5064 = vadd.f32 %v4855, %v5063
  %5065 = vmatmul.f32.gmra.mxu0 %v4440
  %v5066 = vpop.f32.mrf.mxu0
  %v5067 = vadd.f32 %v4858, %v5066
  %5068 = vmatmul.f32.gmra.mxu0 %v4443
  %v5069 = vpop.f32.mrf.mxu0
  %v5070 = vadd.f32 %v4861, %v5069
  %5071 = vmatmul.f32.gmra.mxu0 %v4446
  %v5072 = vpop.f32.mrf.mxu0
  %v5073 = vadd.f32 %v4864, %v5072
  %5074 = vmatmul.f32.gmra.mxu0 %v4449
  %v5075 = vpop.f32.mrf.mxu0
  %v5076 = vadd.f32 %v4867, %v5075
  %5077 = vmatmul.f32.gmra.mxu0 %v4452
  %v5078 = vpop.f32.mrf.mxu0
  %v5079 = vadd.f32 %v4870, %v5078
  %5080 = vmatmul.f32.gmra.mxu0 %v4455
  %v5081 = vpop.f32.mrf.mxu0
  %v5082 = vadd.f32 %v4873, %v5081
  %5083 = vmatmul.f32.gmra.mxu0 %v4458
  %v5084 = vpop.f32.mrf.mxu0
  %v5085 = vadd.f32 %v4876, %v5084
  %5086 = vmatmul.f32.gmra.mxu0 %v4461
  %v5087 = vpop.f32.mrf.mxu0
  %v5088 = vadd.f32 %v4879, %v5087
  %5089 = vmatmul.f32.gmra.mxu0 %v4464
  %v5090 = vpop.f32.mrf.mxu0
  %v5091 = vadd.f32 %v4882, %v5090
  %5092 = vmatmul.f32.gmra.mxu0 %v4467
  %v5093 = vpop.f32.mrf.mxu0
  %v5094 = vadd.f32 %v4885, %v5093
  %5095 = vmatmul.f32.gmra.mxu0 %v4470
  %v5096 = vpop.f32.mrf.mxu0
  %v5097 = vadd.f32 %v4888, %v5096
  %5098 = vmatmul.f32.gmra.mxu0 %v4473
  %v5099 = vpop.f32.mrf.mxu0
  %v5100 = vadd.f32 %v4891, %v5099
  %5101 = vmatmul.f32.gmra.mxu0 %v4476
  %v5102 = vpop.f32.mrf.mxu0
  %v5103 = vadd.f32 %v4894, %v5102
  %5104 = vmatmul.f32.gmra.mxu0 %v4479
  %v5105 = vpop.f32.mrf.mxu0
  %v5106 = vadd.f32 %v4897, %v5105
  %5107 = vmatmul.f32.gmra.mxu0 %v4482
  %v5108 = vpop.f32.mrf.mxu0
  %v5109 = vadd.f32 %v4900, %v5108
  %5110 = vmatmul.f32.gmra.mxu0 %v4485
  %v5111 = vpop.f32.mrf.mxu0
  %v5112 = vadd.f32 %v4903, %v5111
  %5113 = vmatmul.f32.gmra.mxu0 %v4488
  %v5114 = vpop.f32.mrf.mxu0
  %v5115 = vadd.f32 %v4906, %v5114
  %5116 = vmatmul.f32.gmra.mxu0 %v4491
  %v5117 = vpop.f32.mrf.mxu0
  %v5118 = vadd.f32 %v4909, %v5117
  %5119 = vmatmul.f32.gmra.mxu0 %v4494
  %v5120 = vpop.f32.mrf.mxu0
  %v5121 = vadd.f32 %v4912, %v5120
  %5122 = vmatmul.f32.gmra.mxu0 %v4497
  %v5123 = vpop.f32.mrf.mxu0
  %v5124 = vadd.f32 %v4915, %v5123
  %5125 = vmatmul.f32.gmra.mxu0 %v4500
  %v5126 = vpop.f32.mrf.mxu0
  %v5127 = vadd.f32 %v4918, %v5126
  %5128 = vmatmul.f32.gmra.mxu0 %v4503
  %v5129 = vpop.f32.mrf.mxu0
  %v5130 = vadd.f32 %v4921, %v5129
  %5131 = vmatmul.f32.gmra.mxu0 %v4506
  %v5132 = vpop.f32.mrf.mxu0
  %v5133 = vadd.f32 %v4924, %v5132
  %5134 = vmatmul.f32.gmra.mxu0 %v4509
  %v5135 = vpop.f32.mrf.mxu0
  %v5136 = vadd.f32 %v4927, %v5135
  %5137 = vmatmul.f32.gmra.mxu0 %v4512
  %v5138 = vpop.f32.mrf.mxu0
  %v5139 = vadd.f32 %v4930, %v5138
  %5140 = vmatmul.f32.gmra.mxu0 %v4515
  %v5141 = vpop.f32.mrf.mxu0
  %v5142 = vadd.f32 %v4933, %v5141
  %5143 = vmatmul.f32.gmra.mxu0 %v4518
  %v5144 = vpop.f32.mrf.mxu0
  %v5145 = vadd.f32 %v4936, %v5144
  %5146 = vmatmul.f32.gmra.mxu0 %v4521
  %v5147 = vpop.f32.mrf.mxu0
  %v5148 = vadd.f32 %v4939, %v5147
  %5149 = vmatmul.f32.gmra.mxu0 %v4524
  %v5150 = vpop.f32.mrf.mxu0
  %v5151 = vadd.f32 %v4942, %v5150
  %5152 = vmatmul.f32.gmra.mxu0 %v4527
  %v5153 = vpop.f32.mrf.mxu0
  %v5154 = vadd.f32 %v4945, %v5153
  %5155 = vmatmul.f32.gmra.mxu0 %v4530
  %v5156 = vpop.f32.mrf.mxu0
  %v5157 = vadd.f32 %v4948, %v5156
  %5158 = vmatmul.f32.gmra.mxu0 %v4533
  %v5159 = vpop.f32.mrf.mxu0
  %v5160 = vadd.f32 %v4951, %v5159
  %5161 = vmatmul.f32.gmra.mxu0 %v4536
  %v5162 = vpop.f32.mrf.mxu0
  %v5163 = vadd.f32 %v4954, %v5162
  %5164 = vmatmul.f32.gmra.mxu0 %v4539
  %v5165 = vpop.f32.mrf.mxu0
  %v5166 = vadd.f32 %v4957, %v5165
  %5167 = vmatmul.f32.gmra.mxu0 %v4542
  %v5168 = vpop.f32.mrf.mxu0
  %v5169 = vadd.f32 %v4960, %v5168
  %5170 = vmatmul.f32.gmra.mxu0 %v4545
  %v5171 = vpop.f32.mrf.mxu0
  %v5172 = vadd.f32 %v4963, %v5171
  %5173 = vmatmul.f32.gmra.mxu0 %v4548
  %v5174 = vpop.f32.mrf.mxu0
  %v5175 = vadd.f32 %v4966, %v5174
  %5176 = vmatmul.f32.gmra.mxu0 %v4551
  %v5177 = vpop.f32.mrf.mxu0
  %v5178 = vadd.f32 %v4969, %v5177
  %5179 = vdwg.mxu0
  %v5180 = vmax.f32 %v4989, 0.0
  %v5181 = vmax.f32 %v4992, 0.0
  %v5182 = vmax.f32 %v4995, 0.0
  %v5183 = vmax.f32 %v4998, 0.0
  %v5184 = vmax.f32 %v5001, 0.0
  %v5185 = vmax.f32 %v5004, 0.0
  %v5186 = vmax.f32 %v5007, 0.0
  %v5187 = vmax.f32 %v5010, 0.0
  %v5188 = vmax.f32 %v5013, 0.0
  %v5189 = vmax.f32 %v5016, 0.0
  %v5190 = vmax.f32 %v5019, 0.0
  %v5191 = vmax.f32 %v5022, 0.0
  %v5192 = vmax.f32 %v5025, 0.0
  %v5193 = vmax.f32 %v5028, 0.0
  %v5194 = vmax.f32 %v5031, 0.0
  %v5195 = vmax.f32 %v5034, 0.0
  %v5196 = vmax.f32 %v5037, 0.0
  %v5197 = vmax.f32 %v5040, 0.0
  %v5198 = vmax.f32 %v5043, 0.0
  %v5199 = vmax.f32 %v5046, 0.0
  %v5200 = vmax.f32 %v5049, 0.0
  %v5201 = vmax.f32 %v5052, 0.0
  %v5202 = vmax.f32 %v5055, 0.0
  %v5203 = vmax.f32 %v5058, 0.0
  %v5204 = vmax.f32 %v5061, 0.0
  %v5205 = vmax.f32 %v5064, 0.0
  %v5206 = vmax.f32 %v5067, 0.0
  %v5207 = vmax.f32 %v5070, 0.0
  %v5208 = vmax.f32 %v5073, 0.0
  %v5209 = vmax.f32 %v5076, 0.0
  %v5210 = vmax.f32 %v5079, 0.0
  %v5211 = vmax.f32 %v5082, 0.0
  %v5212 = vmax.f32 %v5085, 0.0
  %v5213 = vmax.f32 %v5088, 0.0
  %v5214 = vmax.f32 %v5091, 0.0
  %v5215 = vmax.f32 %v5094, 0.0
  %v5216 = vmax.f32 %v5097, 0.0
  %v5217 = vmax.f32 %v5100, 0.0
  %v5218 = vmax.f32 %v5103, 0.0
  %v5219 = vmax.f32 %v5106, 0.0
  %v5220 = vmax.f32 %v5109, 0.0
  %v5221 = vmax.f32 %v5112, 0.0
  %v5222 = vmax.f32 %v5115, 0.0
  %v5223 = vmax.f32 %v5118, 0.0
  %v5224 = vmax.f32 %v5121, 0.0
  %v5225 = vmax.f32 %v5124, 0.0
  %v5226 = vmax.f32 %v5127, 0.0
  %v5227 = vmax.f32 %v5130, 0.0
  %v5228 = vmax.f32 %v5133, 0.0
  %v5229 = vmax.f32 %v5136, 0.0
  %v5230 = vmax.f32 %v5139, 0.0
  %v5231 = vmax.f32 %v5142, 0.0
  %v5232 = vmax.f32 %v5145, 0.0
  %v5233 = vmax.f32 %v5148, 0.0
  %v5234 = vmax.f32 %v5151, 0.0
  %v5235 = vmax.f32 %v5154, 0.0
  %v5236 = vmax.f32 %v5157, 0.0
  %v5237 = vmax.f32 %v5160, 0.0
  %v5238 = vmax.f32 %v5163, 0.0
  %v5239 = vmax.f32 %v5166, 0.0
  %v5240 = vmax.f32 %v5169, 0.0
  %v5241 = vmax.f32 %v5172, 0.0
  %v5242 = vmax.f32 %v5175, 0.0
  %v5243 = vmax.f32 %v5178, 0.0
  %vm5244 = vcmask 523264
  %5245 = vst.msk [vmem:[#allocation4] sm:$0xff] %vm5244, %v5180
  %5246 = vst.msk [vmem:[#allocation4 + $0x8] sm:$0xff] %vm5244, %v5181
  %5247 = vst.msk [vmem:[#allocation4 + $0x10] sm:$0xff] %vm5244, %v5182
  %5248 = vst.msk [vmem:[#allocation4 + $0x18] sm:$0xff] %vm5244, %v5183
  %5249 = vst.msk [vmem:[#allocation4 + $0x20] sm:$0xff] %vm5244, %v5184
  %5250 = vst.msk [vmem:[#allocation4 + $0x28] sm:$0xff] %vm5244, %v5185
  %5251 = vst.msk [vmem:[#allocation4 + $0x30] sm:$0xff] %vm5244, %v5186
  %5252 = vst.msk [vmem:[#allocation4 + $0x38] sm:$0xff] %vm5244, %v5187
  %5253 = vst.msk [vmem:[#allocation4 + $0x40] sm:$0xff] %vm5244, %v5188
  %5254 = vst.msk [vmem:[#allocation4 + $0x48] sm:$0xff] %vm5244, %v5189
  %5255 = vst.msk [vmem:[#allocation4 + $0x50] sm:$0xff] %vm5244, %v5190
  %5256 = vst.msk [vmem:[#allocation4 + $0x58] sm:$0xff] %vm5244, %v5191
  %5257 = vst.msk [vmem:[#allocation4 + $0x60] sm:$0xff] %vm5244, %v5192
  %5258 = vst.msk [vmem:[#allocation4 + $0x68] sm:$0xff] %vm5244, %v5193
  %5259 = vst.msk [vmem:[#allocation4 + $0x70] sm:$0xff] %vm5244, %v5194
  %5260 = vst.msk [vmem:[#allocation4 + $0x78] sm:$0xff] %vm5244, %v5195
  %5261 = vst.msk [vmem:[#allocation4 + $0x80] sm:$0xff] %vm5244, %v5196
  %5262 = vst.msk [vmem:[#allocation4 + $0x88] sm:$0xff] %vm5244, %v5197
  %5263 = vst.msk [vmem:[#allocation4 + $0x90] sm:$0xff] %vm5244, %v5198
  %5264 = vst.msk [vmem:[#allocation4 + $0x98] sm:$0xff] %vm5244, %v5199
  %5265 = vst.msk [vmem:[#allocation4 + $0xa0] sm:$0xff] %vm5244, %v5200
  %5266 = vst.msk [vmem:[#allocation4 + $0xa8] sm:$0xff] %vm5244, %v5201
  %5267 = vst.msk [vmem:[#allocation4 + $0xb0] sm:$0xff] %vm5244, %v5202
  %5268 = vst.msk [vmem:[#allocation4 + $0xb8] sm:$0xff] %vm5244, %v5203
  %5269 = vst.msk [vmem:[#allocation4 + $0xc0] sm:$0xff] %vm5244, %v5204
  %5270 = vst.msk [vmem:[#allocation4 + $0xc8] sm:$0xff] %vm5244, %v5205
  %5271 = vst.msk [vmem:[#allocation4 + $0xd0] sm:$0xff] %vm5244, %v5206
  %5272 = vst.msk [vmem:[#allocation4 + $0xd8] sm:$0xff] %vm5244, %v5207
  %5273 = vst.msk [vmem:[#allocation4 + $0xe0] sm:$0xff] %vm5244, %v5208
  %5274 = vst.msk [vmem:[#allocation4 + $0xe8] sm:$0xff] %vm5244, %v5209
  %5275 = vst.msk [vmem:[#allocation4 + $0xf0] sm:$0xff] %vm5244, %v5210
  %5276 = vst.msk [vmem:[#allocation4 + $0xf8] sm:$0xff] %vm5244, %v5211
  %5277 = vst.msk [vmem:[#allocation4 + $0x100] sm:$0xff] %vm5244, %v5212
  %5278 = vst.msk [vmem:[#allocation4 + $0x108] sm:$0xff] %vm5244, %v5213
  %5279 = vst.msk [vmem:[#allocation4 + $0x110] sm:$0xff] %vm5244, %v5214
  %5280 = vst.msk [vmem:[#allocation4 + $0x118] sm:$0xff] %vm5244, %v5215
  %5281 = vst.msk [vmem:[#allocation4 + $0x120] sm:$0xff] %vm5244, %v5216
  %5282 = vst.msk [vmem:[#allocation4 + $0x128] sm:$0xff] %vm5244, %v5217
  %5283 = vst.msk [vmem:[#allocation4 + $0x130] sm:$0xff] %vm5244, %v5218
  %5284 = vst.msk [vmem:[#allocation4 + $0x138] sm:$0xff] %vm5244, %v5219
  %5285 = vst.msk [vmem:[#allocation4 + $0x140] sm:$0xff] %vm5244, %v5220
  %5286 = vst.msk [vmem:[#allocation4 + $0x148] sm:$0xff] %vm5244, %v5221
  %5287 = vst.msk [vmem:[#allocation4 + $0x150] sm:$0xff] %vm5244, %v5222
  %5288 = vst.msk [vmem:[#allocation4 + $0x158] sm:$0xff] %vm5244, %v5223
  %5289 = vst.msk [vmem:[#allocation4 + $0x160] sm:$0xff] %vm5244, %v5224
  %5290 = vst.msk [vmem:[#allocation4 + $0x168] sm:$0xff] %vm5244, %v5225
  %5291 = vst.msk [vmem:[#allocation4 + $0x170] sm:$0xff] %vm5244, %v5226
  %5292 = vst.msk [vmem:[#allocation4 + $0x178] sm:$0xff] %vm5244, %v5227
  %5293 = vst.msk [vmem:[#allocation4 + $0x180] sm:$0xff] %vm5244, %v5228
  %5294 = vst.msk [vmem:[#allocation4 + $0x188] sm:$0xff] %vm5244, %v5229
  %5295 = vst.msk [vmem:[#allocation4 + $0x190] sm:$0xff] %vm5244, %v5230
  %5296 = vst.msk [vmem:[#allocation4 + $0x198] sm:$0xff] %vm5244, %v5231
  %5297 = vst.msk [vmem:[#allocation4 + $0x1a0] sm:$0xff] %vm5244, %v5232
  %5298 = vst.msk [vmem:[#allocation4 + $0x1a8] sm:$0xff] %vm5244, %v5233
  %5299 = vst.msk [vmem:[#allocation4 + $0x1b0] sm:$0xff] %vm5244, %v5234
  %5300 = vst.msk [vmem:[#allocation4 + $0x1b8] sm:$0xff] %vm5244, %v5235
  %5301 = vst.msk [vmem:[#allocation4 + $0x1c0] sm:$0xff] %vm5244, %v5236
  %5302 = vst.msk [vmem:[#allocation4 + $0x1c8] sm:$0xff] %vm5244, %v5237
  %5303 = vst.msk [vmem:[#allocation4 + $0x1d0] sm:$0xff] %vm5244, %v5238
  %5304 = vst.msk [vmem:[#allocation4 + $0x1d8] sm:$0xff] %vm5244, %v5239
  %5305 = vst.msk [vmem:[#allocation4 + $0x1e0] sm:$0xff] %vm5244, %v5240
  %5306 = vst.msk [vmem:[#allocation4 + $0x1e8] sm:$0xff] %vm5244, %v5241
  %5307 = vst.msk [vmem:[#allocation4 + $0x1f0] sm:$0xff] %vm5244, %v5242
  %5308 = vst.msk [vmem:[#allocation4 + $0x1f8] sm:$0xff] %vm5244, %v5243
  %v5309 = vld [vmem:[#allocation4] sm:$0x1]
  %v5310 = vld [vmem:[#allocation4 + $0x40] sm:$0x1]
  %v5311 = vld [vmem:[#allocation4 + $0x80] sm:$0x1]
  %v5312 = vld [vmem:[#allocation4 + $0xc0] sm:$0x1]
  %v5313 = vld [vmem:[#allocation4 + $0x100] sm:$0x1]
  %v5314 = vld [vmem:[#allocation4 + $0x140] sm:$0x1]
  %v5315 = vld [vmem:[#allocation4 + $0x180] sm:$0x1]
  %v5316 = vld [vmem:[#allocation4 + $0x1c0] sm:$0x1]
  %v5317 = vld [vmem:[#allocation4 + $0x1] sm:$0x1]
  %v5318 = vld [vmem:[#allocation4 + $0x41] sm:$0x1]
  %v5319 = vld [vmem:[#allocation4 + $0x81] sm:$0x1]
  %v5320 = vld [vmem:[#allocation4 + $0xc1] sm:$0x1]
  %v5321 = vld [vmem:[#allocation4 + $0x101] sm:$0x1]
  %v5322 = vld [vmem:[#allocation4 + $0x141] sm:$0x1]
  %v5323 = vld [vmem:[#allocation4 + $0x181] sm:$0x1]
  %v5324 = vld [vmem:[#allocation4 + $0x1c1] sm:$0x1]
  %s5325 = scalar_lea.vmem [#allocation4], 8
  %v5326 = vld [vmem:[%s5325] sm:$0x1]
  %v5327 = vld [vmem:[%s5325 + $0x40] sm:$0x1]
  %v5328 = vld [vmem:[%s5325 + $0x80] sm:$0x1]
  %v5329 = vld [vmem:[%s5325 + $0xc0] sm:$0x1]
  %v5330 = vld [vmem:[%s5325 + $0x100] sm:$0x1]
  %v5331 = vld [vmem:[%s5325 + $0x140] sm:$0x1]
  %v5332 = vld [vmem:[%s5325 + $0x180] sm:$0x1]
  %v5333 = vld [vmem:[%s5325 + $0x1c0] sm:$0x1]
  %v5334 = vld [vmem:[%s5325 + $0x1] sm:$0x1]
  %v5335 = vld [vmem:[%s5325 + $0x41] sm:$0x1]
  %v5336 = vld [vmem:[%s5325 + $0x81] sm:$0x1]
  %v5337 = vld [vmem:[%s5325 + $0xc1] sm:$0x1]
  %v5338 = vld [vmem:[%s5325 + $0x101] sm:$0x1]
  %v5339 = vld [vmem:[%s5325 + $0x141] sm:$0x1]
  %v5340 = vld [vmem:[%s5325 + $0x181] sm:$0x1]
  %v5341 = vld [vmem:[%s5325 + $0x1c1] sm:$0x1]
  %v5342 = vmax.f32 %v5309, %v5317
  %v5343 = vmax.f32 %v5310, %v5318
  %v5344 = vmax.f32 %v5311, %v5319
  %v5345 = vmax.f32 %v5312, %v5320
  %v5346 = vmax.f32 %v5313, %v5321
  %v5347 = vmax.f32 %v5314, %v5322
  %v5348 = vmax.f32 %v5315, %v5323
  %v5349 = vmax.f32 %v5316, %v5324
  %v5350 = vmax.f32 %v5326, %v5334
  %v5351 = vmax.f32 %v5327, %v5335
  %v5352 = vmax.f32 %v5328, %v5336
  %v5353 = vmax.f32 %v5329, %v5337
  %v5354 = vmax.f32 %v5330, %v5338
  %v5355 = vmax.f32 %v5331, %v5339
  %v5356 = vmax.f32 %v5332, %v5340
  %v5357 = vmax.f32 %v5333, %v5341
  %v5358 = vmax.f32 %v5342, %v5350
  %v5359 = vmax.f32 %v5343, %v5351
  %v5360 = vmax.f32 %v5344, %v5352
  %v5361 = vmax.f32 %v5345, %v5353
  %v5362 = vmax.f32 %v5346, %v5354
  %v5363 = vmax.f32 %v5347, %v5355
  %v5364 = vmax.f32 %v5348, %v5356
  %v5365 = vmax.f32 %v5349, %v5357
  %v5366 = vld [vmem:[#allocation4 + $0x2] sm:$0x1]
  %v5367 = vld [vmem:[#allocation4 + $0x42] sm:$0x1]
  %v5368 = vld [vmem:[#allocation4 + $0x82] sm:$0x1]
  %v5369 = vld [vmem:[#allocation4 + $0xc2] sm:$0x1]
  %v5370 = vld [vmem:[#allocation4 + $0x102] sm:$0x1]
  %v5371 = vld [vmem:[#allocation4 + $0x142] sm:$0x1]
  %v5372 = vld [vmem:[#allocation4 + $0x182] sm:$0x1]
  %v5373 = vld [vmem:[#allocation4 + $0x1c2] sm:$0x1]
  %v5374 = vld [vmem:[#allocation4 + $0x3] sm:$0x1]
  %v5375 = vld [vmem:[#allocation4 + $0x43] sm:$0x1]
  %v5376 = vld [vmem:[#allocation4 + $0x83] sm:$0x1]
  %v5377 = vld [vmem:[#allocation4 + $0xc3] sm:$0x1]
  %v5378 = vld [vmem:[#allocation4 + $0x103] sm:$0x1]
  %v5379 = vld [vmem:[#allocation4 + $0x143] sm:$0x1]
  %v5380 = vld [vmem:[#allocation4 + $0x183] sm:$0x1]
  %v5381 = vld [vmem:[#allocation4 + $0x1c3] sm:$0x1]
  %v5382 = vld [vmem:[%s5325 + $0x2] sm:$0x1]
  %v5383 = vld [vmem:[%s5325 + $0x42] sm:$0x1]
  %v5384 = vld [vmem:[%s5325 + $0x82] sm:$0x1]
  %v5385 = vld [vmem:[%s5325 + $0xc2] sm:$0x1]
  %v5386 = vld [vmem:[%s5325 + $0x102] sm:$0x1]
  %v5387 = vld [vmem:[%s5325 + $0x142] sm:$0x1]
  %v5388 = vld [vmem:[%s5325 + $0x182] sm:$0x1]
  %v5389 = vld [vmem:[%s5325 + $0x1c2] sm:$0x1]
  %v5390 = vld [vmem:[%s5325 + $0x3] sm:$0x1]
  %v5391 = vld [vmem:[%s5325 + $0x43] sm:$0x1]
  %v5392 = vld [vmem:[%s5325 + $0x83] sm:$0x1]
  %v5393 = vld [vmem:[%s5325 + $0xc3] sm:$0x1]
  %v5394 = vld [vmem:[%s5325 + $0x103] sm:$0x1]
  %v5395 = vld [vmem:[%s5325 + $0x143] sm:$0x1]
  %v5396 = vld [vmem:[%s5325 + $0x183] sm:$0x1]
  %v5397 = vld [vmem:[%s5325 + $0x1c3] sm:$0x1]
  %v5398 = vmax.f32 %v5366, %v5374
  %v5399 = vmax.f32 %v5367, %v5375
  %v5400 = vmax.f32 %v5368, %v5376
  %v5401 = vmax.f32 %v5369, %v5377
  %v5402 = vmax.f32 %v5370, %v5378
  %v5403 = vmax.f32 %v5371, %v5379
  %v5404 = vmax.f32 %v5372, %v5380
  %v5405 = vmax.f32 %v5373, %v5381
  %v5406 = vmax.f32 %v5382, %v5390
  %v5407 = vmax.f32 %v5383, %v5391
  %v5408 = vmax.f32 %v5384, %v5392
  %v5409 = vmax.f32 %v5385, %v5393
  %v5410 = vmax.f32 %v5386, %v5394
  %v5411 = vmax.f32 %v5387, %v5395
  %v5412 = vmax.f32 %v5388, %v5396
  %v5413 = vmax.f32 %v5389, %v5397
  %v5414 = vmax.f32 %v5398, %v5406
  %v5415 = vmax.f32 %v5399, %v5407
  %v5416 = vmax.f32 %v5400, %v5408
  %v5417 = vmax.f32 %v5401, %v5409
  %v5418 = vmax.f32 %v5402, %v5410
  %v5419 = vmax.f32 %v5403, %v5411
  %v5420 = vmax.f32 %v5404, %v5412
  %v5421 = vmax.f32 %v5405, %v5413
  %v5422 = vld [vmem:[#allocation4 + $0x4] sm:$0x1]
  %v5423 = vld [vmem:[#allocation4 + $0x44] sm:$0x1]
  %v5424 = vld [vmem:[#allocation4 + $0x84] sm:$0x1]
  %v5425 = vld [vmem:[#allocation4 + $0xc4] sm:$0x1]
  %v5426 = vld [vmem:[#allocation4 + $0x104] sm:$0x1]
  %v5427 = vld [vmem:[#allocation4 + $0x144] sm:$0x1]
  %v5428 = vld [vmem:[#allocation4 + $0x184] sm:$0x1]
  %v5429 = vld [vmem:[#allocation4 + $0x1c4] sm:$0x1]
  %v5430 = vld [vmem:[#allocation4 + $0x5] sm:$0x1]
  %v5431 = vld [vmem:[#allocation4 + $0x45] sm:$0x1]
  %v5432 = vld [vmem:[#allocation4 + $0x85] sm:$0x1]
  %v5433 = vld [vmem:[#allocation4 + $0xc5] sm:$0x1]
  %v5434 = vld [vmem:[#allocation4 + $0x105] sm:$0x1]
  %v5435 = vld [vmem:[#allocation4 + $0x145] sm:$0x1]
  %v5436 = vld [vmem:[#allocation4 + $0x185] sm:$0x1]
  %v5437 = vld [vmem:[#allocation4 + $0x1c5] sm:$0x1]
  %v5438 = vld [vmem:[%s5325 + $0x4] sm:$0x1]
  %v5439 = vld [vmem:[%s5325 + $0x44] sm:$0x1]
  %v5440 = vld [vmem:[%s5325 + $0x84] sm:$0x1]
  %v5441 = vld [vmem:[%s5325 + $0xc4] sm:$0x1]
  %v5442 = vld [vmem:[%s5325 + $0x104] sm:$0x1]
  %v5443 = vld [vmem:[%s5325 + $0x144] sm:$0x1]
  %v5444 = vld [vmem:[%s5325 + $0x184] sm:$0x1]
  %v5445 = vld [vmem:[%s5325 + $0x1c4] sm:$0x1]
  %v5446 = vld [vmem:[%s5325 + $0x5] sm:$0x1]
  %v5447 = vld [vmem:[%s5325 + $0x45] sm:$0x1]
  %v5448 = vld [vmem:[%s5325 + $0x85] sm:$0x1]
  %v5449 = vld [vmem:[%s5325 + $0xc5] sm:$0x1]
  %v5450 = vld [vmem:[%s5325 + $0x105] sm:$0x1]
  %v5451 = vld [vmem:[%s5325 + $0x145] sm:$0x1]
  %v5452 = vld [vmem:[%s5325 + $0x185] sm:$0x1]
  %v5453 = vld [vmem:[%s5325 + $0x1c5] sm:$0x1]
  %v5454 = vmax.f32 %v5422, %v5430
  %v5455 = vmax.f32 %v5423, %v5431
  %v5456 = vmax.f32 %v5424, %v5432
  %v5457 = vmax.f32 %v5425, %v5433
  %v5458 = vmax.f32 %v5426, %v5434
  %v5459 = vmax.f32 %v5427, %v5435
  %v5460 = vmax.f32 %v5428, %v5436
  %v5461 = vmax.f32 %v5429, %v5437
  %v5462 = vmax.f32 %v5438, %v5446
  %v5463 = vmax.f32 %v5439, %v5447
  %v5464 = vmax.f32 %v5440, %v5448
  %v5465 = vmax.f32 %v5441, %v5449
  %v5466 = vmax.f32 %v5442, %v5450
  %v5467 = vmax.f32 %v5443, %v5451
  %v5468 = vmax.f32 %v5444, %v5452
  %v5469 = vmax.f32 %v5445, %v5453
  %v5470 = vmax.f32 %v5454, %v5462
  %v5471 = vmax.f32 %v5455, %v5463
  %v5472 = vmax.f32 %v5456, %v5464
  %v5473 = vmax.f32 %v5457, %v5465
  %v5474 = vmax.f32 %v5458, %v5466
  %v5475 = vmax.f32 %v5459, %v5467
  %v5476 = vmax.f32 %v5460, %v5468
  %v5477 = vmax.f32 %v5461, %v5469
  %v5478 = vld [vmem:[#allocation4 + $0x6] sm:$0x1]
  %v5479 = vld [vmem:[#allocation4 + $0x46] sm:$0x1]
  %v5480 = vld [vmem:[#allocation4 + $0x86] sm:$0x1]
  %v5481 = vld [vmem:[#allocation4 + $0xc6] sm:$0x1]
  %v5482 = vld [vmem:[#allocation4 + $0x106] sm:$0x1]
  %v5483 = vld [vmem:[#allocation4 + $0x146] sm:$0x1]
  %v5484 = vld [vmem:[#allocation4 + $0x186] sm:$0x1]
  %v5485 = vld [vmem:[#allocation4 + $0x1c6] sm:$0x1]
  %v5486 = vld [vmem:[#allocation4 + $0x7] sm:$0x1]
  %v5487 = vld [vmem:[#allocation4 + $0x47] sm:$0x1]
  %v5488 = vld [vmem:[#allocation4 + $0x87] sm:$0x1]
  %v5489 = vld [vmem:[#allocation4 + $0xc7] sm:$0x1]
  %v5490 = vld [vmem:[#allocation4 + $0x107] sm:$0x1]
  %v5491 = vld [vmem:[#allocation4 + $0x147] sm:$0x1]
  %v5492 = vld [vmem:[#allocation4 + $0x187] sm:$0x1]
  %v5493 = vld [vmem:[#allocation4 + $0x1c7] sm:$0x1]
  %v5494 = vld [vmem:[%s5325 + $0x6] sm:$0x1]
  %v5495 = vld [vmem:[%s5325 + $0x46] sm:$0x1]
  %v5496 = vld [vmem:[%s5325 + $0x86] sm:$0x1]
  %v5497 = vld [vmem:[%s5325 + $0xc6] sm:$0x1]
  %v5498 = vld [vmem:[%s5325 + $0x106] sm:$0x1]
  %v5499 = vld [vmem:[%s5325 + $0x146] sm:$0x1]
  %v5500 = vld [vmem:[%s5325 + $0x186] sm:$0x1]
  %v5501 = vld [vmem:[%s5325 + $0x1c6] sm:$0x1]
  %v5502 = vld [vmem:[%s5325 + $0x7] sm:$0x1]
  %v5503 = vld [vmem:[%s5325 + $0x47] sm:$0x1]
  %v5504 = vld [vmem:[%s5325 + $0x87] sm:$0x1]
  %v5505 = vld [vmem:[%s5325 + $0xc7] sm:$0x1]
  %v5506 = vld [vmem:[%s5325 + $0x107] sm:$0x1]
  %v5507 = vld [vmem:[%s5325 + $0x147] sm:$0x1]
  %v5508 = vld [vmem:[%s5325 + $0x187] sm:$0x1]
  %v5509 = vld [vmem:[%s5325 + $0x1c7] sm:$0x1]
  %v5510 = vmax.f32 %v5478, %v5486
  %v5511 = vmax.f32 %v5479, %v5487
  %v5512 = vmax.f32 %v5480, %v5488
  %v5513 = vmax.f32 %v5481, %v5489
  %v5514 = vmax.f32 %v5482, %v5490
  %v5515 = vmax.f32 %v5483, %v5491
  %v5516 = vmax.f32 %v5484, %v5492
  %v5517 = vmax.f32 %v5485, %v5493
  %v5518 = vmax.f32 %v5494, %v5502
  %v5519 = vmax.f32 %v5495, %v5503
  %v5520 = vmax.f32 %v5496, %v5504
  %v5521 = vmax.f32 %v5497, %v5505
  %v5522 = vmax.f32 %v5498, %v5506
  %v5523 = vmax.f32 %v5499, %v5507
  %v5524 = vmax.f32 %v5500, %v5508
  %v5525 = vmax.f32 %v5501, %v5509
  %v5526 = vmax.f32 %v5510, %v5518
  %v5527 = vmax.f32 %v5511, %v5519
  %v5528 = vmax.f32 %v5512, %v5520
  %v5529 = vmax.f32 %v5513, %v5521
  %v5530 = vmax.f32 %v5514, %v5522
  %v5531 = vmax.f32 %v5515, %v5523
  %v5532 = vmax.f32 %v5516, %v5524
  %v5533 = vmax.f32 %v5517, %v5525
  %s5534 = scalar_lea.vmem [#allocation4], 16
  %v5535 = vld [vmem:[%s5534] sm:$0x1]
  %v5536 = vld [vmem:[%s5534 + $0x40] sm:$0x1]
  %v5537 = vld [vmem:[%s5534 + $0x80] sm:$0x1]
  %v5538 = vld [vmem:[%s5534 + $0xc0] sm:$0x1]
  %v5539 = vld [vmem:[%s5534 + $0x100] sm:$0x1]
  %v5540 = vld [vmem:[%s5534 + $0x140] sm:$0x1]
  %v5541 = vld [vmem:[%s5534 + $0x180] sm:$0x1]
  %v5542 = vld [vmem:[%s5534 + $0x1c0] sm:$0x1]
  %v5543 = vld [vmem:[%s5534 + $0x1] sm:$0x1]
  %v5544 = vld [vmem:[%s5534 + $0x41] sm:$0x1]
  %v5545 = vld [vmem:[%s5534 + $0x81] sm:$0x1]
  %v5546 = vld [vmem:[%s5534 + $0xc1] sm:$0x1]
  %v5547 = vld [vmem:[%s5534 + $0x101] sm:$0x1]
  %v5548 = vld [vmem:[%s5534 + $0x141] sm:$0x1]
  %v5549 = vld [vmem:[%s5534 + $0x181] sm:$0x1]
  %v5550 = vld [vmem:[%s5534 + $0x1c1] sm:$0x1]
  %s5551 = scalar_lea.vmem [#allocation4], 24
  %v5552 = vld [vmem:[%s5551] sm:$0x1]
  %v5553 = vld [vmem:[%s5551 + $0x40] sm:$0x1]
  %v5554 = vld [vmem:[%s5551 + $0x80] sm:$0x1]
  %v5555 = vld [vmem:[%s5551 + $0xc0] sm:$0x1]
  %v5556 = vld [vmem:[%s5551 + $0x100] sm:$0x1]
  %v5557 = vld [vmem:[%s5551 + $0x140] sm:$0x1]
  %v5558 = vld [vmem:[%s5551 + $0x180] sm:$0x1]
  %v5559 = vld [vmem:[%s5551 + $0x1c0] sm:$0x1]
  %v5560 = vld [vmem:[%s5551 + $0x1] sm:$0x1]
  %v5561 = vld [vmem:[%s5551 + $0x41] sm:$0x1]
  %v5562 = vld [vmem:[%s5551 + $0x81] sm:$0x1]
  %v5563 = vld [vmem:[%s5551 + $0xc1] sm:$0x1]
  %v5564 = vld [vmem:[%s5551 + $0x101] sm:$0x1]
  %v5565 = vld [vmem:[%s5551 + $0x141] sm:$0x1]
  %v5566 = vld [vmem:[%s5551 + $0x181] sm:$0x1]
  %v5567 = vld [vmem:[%s5551 + $0x1c1] sm:$0x1]
  %v5568 = vmax.f32 %v5535, %v5543
  %v5569 = vmax.f32 %v5536, %v5544
  %v5570 = vmax.f32 %v5537, %v5545
  %v5571 = vmax.f32 %v5538, %v5546
  %v5572 = vmax.f32 %v5539, %v5547
  %v5573 = vmax.f32 %v5540, %v5548
  %v5574 = vmax.f32 %v5541, %v5549
  %v5575 = vmax.f32 %v5542, %v5550
  %v5576 = vmax.f32 %v5552, %v5560
  %v5577 = vmax.f32 %v5553, %v5561
  %v5578 = vmax.f32 %v5554, %v5562
  %v5579 = vmax.f32 %v5555, %v5563
  %v5580 = vmax.f32 %v5556, %v5564
  %v5581 = vmax.f32 %v5557, %v5565
  %v5582 = vmax.f32 %v5558, %v5566
  %v5583 = vmax.f32 %v5559, %v5567
  %v5584 = vmax.f32 %v5568, %v5576
  %v5585 = vmax.f32 %v5569, %v5577
  %v5586 = vmax.f32 %v5570, %v5578
  %v5587 = vmax.f32 %v5571, %v5579
  %v5588 = vmax.f32 %v5572, %v5580
  %v5589 = vmax.f32 %v5573, %v5581
  %v5590 = vmax.f32 %v5574, %v5582
  %v5591 = vmax.f32 %v5575, %v5583
  %v5592 = vld [vmem:[%s5534 + $0x2] sm:$0x1]
  %v5593 = vld [vmem:[%s5534 + $0x42] sm:$0x1]
  %v5594 = vld [vmem:[%s5534 + $0x82] sm:$0x1]
  %v5595 = vld [vmem:[%s5534 + $0xc2] sm:$0x1]
  %v5596 = vld [vmem:[%s5534 + $0x102] sm:$0x1]
  %v5597 = vld [vmem:[%s5534 + $0x142] sm:$0x1]
  %v5598 = vld [vmem:[%s5534 + $0x182] sm:$0x1]
  %v5599 = vld [vmem:[%s5534 + $0x1c2] sm:$0x1]
  %v5600 = vld [vmem:[%s5534 + $0x3] sm:$0x1]
  %v5601 = vld [vmem:[%s5534 + $0x43] sm:$0x1]
  %v5602 = vld [vmem:[%s5534 + $0x83] sm:$0x1]
  %v5603 = vld [vmem:[%s5534 + $0xc3] sm:$0x1]
  %v5604 = vld [vmem:[%s5534 + $0x103] sm:$0x1]
  %v5605 = vld [vmem:[%s5534 + $0x143] sm:$0x1]
  %v5606 = vld [vmem:[%s5534 + $0x183] sm:$0x1]
  %v5607 = vld [vmem:[%s5534 + $0x1c3] sm:$0x1]
  %v5608 = vld [vmem:[%s5551 + $0x2] sm:$0x1]
  %v5609 = vld [vmem:[%s5551 + $0x42] sm:$0x1]
  %v5610 = vld [vmem:[%s5551 + $0x82] sm:$0x1]
  %v5611 = vld [vmem:[%s5551 + $0xc2] sm:$0x1]
  %v5612 = vld [vmem:[%s5551 + $0x102] sm:$0x1]
  %v5613 = vld [vmem:[%s5551 + $0x142] sm:$0x1]
  %v5614 = vld [vmem:[%s5551 + $0x182] sm:$0x1]
  %v5615 = vld [vmem:[%s5551 + $0x1c2] sm:$0x1]
  %v5616 = vld [vmem:[%s5551 + $0x3] sm:$0x1]
  %v5617 = vld [vmem:[%s5551 + $0x43] sm:$0x1]
  %v5618 = vld [vmem:[%s5551 + $0x83] sm:$0x1]
  %v5619 = vld [vmem:[%s5551 + $0xc3] sm:$0x1]
  %v5620 = vld [vmem:[%s5551 + $0x103] sm:$0x1]
  %v5621 = vld [vmem:[%s5551 + $0x143] sm:$0x1]
  %v5622 = vld [vmem:[%s5551 + $0x183] sm:$0x1]
  %v5623 = vld [vmem:[%s5551 + $0x1c3] sm:$0x1]
  %v5624 = vmax.f32 %v5592, %v5600
  %v5625 = vmax.f32 %v5593, %v5601
  %v5626 = vmax.f32 %v5594, %v5602
  %v5627 = vmax.f32 %v5595, %v5603
  %v5628 = vmax.f32 %v5596, %v5604
  %v5629 = vmax.f32 %v5597, %v5605
  %v5630 = vmax.f32 %v5598, %v5606
  %v5631 = vmax.f32 %v5599, %v5607
  %v5632 = vmax.f32 %v5608, %v5616
  %v5633 = vmax.f32 %v5609, %v5617
  %v5634 = vmax.f32 %v5610, %v5618
  %v5635 = vmax.f32 %v5611, %v5619
  %v5636 = vmax.f32 %v5612, %v5620
  %v5637 = vmax.f32 %v5613, %v5621
  %v5638 = vmax.f32 %v5614, %v5622
  %v5639 = vmax.f32 %v5615, %v5623
  %v5640 = vmax.f32 %v5624, %v5632
  %v5641 = vmax.f32 %v5625, %v5633
  %v5642 = vmax.f32 %v5626, %v5634
  %v5643 = vmax.f32 %v5627, %v5635
  %v5644 = vmax.f32 %v5628, %v5636
  %v5645 = vmax.f32 %v5629, %v5637
  %v5646 = vmax.f32 %v5630, %v5638
  %v5647 = vmax.f32 %v5631, %v5639
  %v5648 = vld [vmem:[%s5534 + $0x4] sm:$0x1]
  %v5649 = vld [vmem:[%s5534 + $0x44] sm:$0x1]
  %v5650 = vld [vmem:[%s5534 + $0x84] sm:$0x1]
  %v5651 = vld [vmem:[%s5534 + $0xc4] sm:$0x1]
  %v5652 = vld [vmem:[%s5534 + $0x104] sm:$0x1]
  %v5653 = vld [vmem:[%s5534 + $0x144] sm:$0x1]
  %v5654 = vld [vmem:[%s5534 + $0x184] sm:$0x1]
  %v5655 = vld [vmem:[%s5534 + $0x1c4] sm:$0x1]
  %v5656 = vld [vmem:[%s5534 + $0x5] sm:$0x1]
  %v5657 = vld [vmem:[%s5534 + $0x45] sm:$0x1]
  %v5658 = vld [vmem:[%s5534 + $0x85] sm:$0x1]
  %v5659 = vld [vmem:[%s5534 + $0xc5] sm:$0x1]
  %v5660 = vld [vmem:[%s5534 + $0x105] sm:$0x1]
  %v5661 = vld [vmem:[%s5534 + $0x145] sm:$0x1]
  %v5662 = vld [vmem:[%s5534 + $0x185] sm:$0x1]
  %v5663 = vld [vmem:[%s5534 + $0x1c5] sm:$0x1]
  %v5664 = vld [vmem:[%s5551 + $0x4] sm:$0x1]
  %v5665 = vld [vmem:[%s5551 + $0x44] sm:$0x1]
  %v5666 = vld [vmem:[%s5551 + $0x84] sm:$0x1]
  %v5667 = vld [vmem:[%s5551 + $0xc4] sm:$0x1]
  %v5668 = vld [vmem:[%s5551 + $0x104] sm:$0x1]
  %v5669 = vld [vmem:[%s5551 + $0x144] sm:$0x1]
  %v5670 = vld [vmem:[%s5551 + $0x184] sm:$0x1]
  %v5671 = vld [vmem:[%s5551 + $0x1c4] sm:$0x1]
  %v5672 = vld [vmem:[%s5551 + $0x5] sm:$0x1]
  %v5673 = vld [vmem:[%s5551 + $0x45] sm:$0x1]
  %v5674 = vld [vmem:[%s5551 + $0x85] sm:$0x1]
  %v5675 = vld [vmem:[%s5551 + $0xc5] sm:$0x1]
  %v5676 = vld [vmem:[%s5551 + $0x105] sm:$0x1]
  %v5677 = vld [vmem:[%s5551 + $0x145] sm:$0x1]
  %v5678 = vld [vmem:[%s5551 + $0x185] sm:$0x1]
  %v5679 = vld [vmem:[%s5551 + $0x1c5] sm:$0x1]
  %v5680 = vmax.f32 %v5648, %v5656
  %v5681 = vmax.f32 %v5649, %v5657
  %v5682 = vmax.f32 %v5650, %v5658
  %v5683 = vmax.f32 %v5651, %v5659
  %v5684 = vmax.f32 %v5652, %v5660
  %v5685 = vmax.f32 %v5653, %v5661
  %v5686 = vmax.f32 %v5654, %v5662
  %v5687 = vmax.f32 %v5655, %v5663
  %v5688 = vmax.f32 %v5664, %v5672
  %v5689 = vmax.f32 %v5665, %v5673
  %v5690 = vmax.f32 %v5666, %v5674
  %v5691 = vmax.f32 %v5667, %v5675
  %v5692 = vmax.f32 %v5668, %v5676
  %v5693 = vmax.f32 %v5669, %v5677
  %v5694 = vmax.f32 %v5670, %v5678
  %v5695 = vmax.f32 %v5671, %v5679
  %v5696 = vmax.f32 %v5680, %v5688
  %v5697 = vmax.f32 %v5681, %v5689
  %v5698 = vmax.f32 %v5682, %v5690
  %v5699 = vmax.f32 %v5683, %v5691
  %v5700 = vmax.f32 %v5684, %v5692
  %v5701 = vmax.f32 %v5685, %v5693
  %v5702 = vmax.f32 %v5686, %v5694
  %v5703 = vmax.f32 %v5687, %v5695
  %v5704 = vld [vmem:[%s5534 + $0x6] sm:$0x1]
  %v5705 = vld [vmem:[%s5534 + $0x46] sm:$0x1]
  %v5706 = vld [vmem:[%s5534 + $0x86] sm:$0x1]
  %v5707 = vld [vmem:[%s5534 + $0xc6] sm:$0x1]
  %v5708 = vld [vmem:[%s5534 + $0x106] sm:$0x1]
  %v5709 = vld [vmem:[%s5534 + $0x146] sm:$0x1]
  %v5710 = vld [vmem:[%s5534 + $0x186] sm:$0x1]
  %v5711 = vld [vmem:[%s5534 + $0x1c6] sm:$0x1]
  %v5712 = vld [vmem:[%s5534 + $0x7] sm:$0x1]
  %v5713 = vld [vmem:[%s5534 + $0x47] sm:$0x1]
  %v5714 = vld [vmem:[%s5534 + $0x87] sm:$0x1]
  %v5715 = vld [vmem:[%s5534 + $0xc7] sm:$0x1]
  %v5716 = vld [vmem:[%s5534 + $0x107] sm:$0x1]
  %v5717 = vld [vmem:[%s5534 + $0x147] sm:$0x1]
  %v5718 = vld [vmem:[%s5534 + $0x187] sm:$0x1]
  %v5719 = vld [vmem:[%s5534 + $0x1c7] sm:$0x1]
  %v5720 = vld [vmem:[%s5551 + $0x6] sm:$0x1]
  %v5721 = vld [vmem:[%s5551 + $0x46] sm:$0x1]
  %v5722 = vld [vmem:[%s5551 + $0x86] sm:$0x1]
  %v5723 = vld [vmem:[%s5551 + $0xc6] sm:$0x1]
  %v5724 = vld [vmem:[%s5551 + $0x106] sm:$0x1]
  %v5725 = vld [vmem:[%s5551 + $0x146] sm:$0x1]
  %v5726 = vld [vmem:[%s5551 + $0x186] sm:$0x1]
  %v5727 = vld [vmem:[%s5551 + $0x1c6] sm:$0x1]
  %v5728 = vld [vmem:[%s5551 + $0x7] sm:$0x1]
  %v5729 = vld [vmem:[%s5551 + $0x47] sm:$0x1]
  %v5730 = vld [vmem:[%s5551 + $0x87] sm:$0x1]
  %v5731 = vld [vmem:[%s5551 + $0xc7] sm:$0x1]
  %v5732 = vld [vmem:[%s5551 + $0x107] sm:$0x1]
  %v5733 = vld [vmem:[%s5551 + $0x147] sm:$0x1]
  %v5734 = vld [vmem:[%s5551 + $0x187] sm:$0x1]
  %v5735 = vld [vmem:[%s5551 + $0x1c7] sm:$0x1]
  %v5736 = vmax.f32 %v5704, %v5712
  %v5737 = vmax.f32 %v5705, %v5713
  %v5738 = vmax.f32 %v5706, %v5714
  %v5739 = vmax.f32 %v5707, %v5715
  %v5740 = vmax.f32 %v5708, %v5716
  %v5741 = vmax.f32 %v5709, %v5717
  %v5742 = vmax.f32 %v5710, %v5718
  %v5743 = vmax.f32 %v5711, %v5719
  %v5744 = vmax.f32 %v5720, %v5728
  %v5745 = vmax.f32 %v5721, %v5729
  %v5746 = vmax.f32 %v5722, %v5730
  %v5747 = vmax.f32 %v5723, %v5731
  %v5748 = vmax.f32 %v5724, %v5732
  %v5749 = vmax.f32 %v5725, %v5733
  %v5750 = vmax.f32 %v5726, %v5734
  %v5751 = vmax.f32 %v5727, %v5735
  %v5752 = vmax.f32 %v5736, %v5744
  %v5753 = vmax.f32 %v5737, %v5745
  %v5754 = vmax.f32 %v5738, %v5746
  %v5755 = vmax.f32 %v5739, %v5747
  %v5756 = vmax.f32 %v5740, %v5748
  %v5757 = vmax.f32 %v5741, %v5749
  %v5758 = vmax.f32 %v5742, %v5750
  %v5759 = vmax.f32 %v5743, %v5751
  %s5760 = scalar_lea.vmem [#allocation4], 32
  %v5761 = vld [vmem:[%s5760] sm:$0x1]
  %v5762 = vld [vmem:[%s5760 + $0x40] sm:$0x1]
  %v5763 = vld [vmem:[%s5760 + $0x80] sm:$0x1]
  %v5764 = vld [vmem:[%s5760 + $0xc0] sm:$0x1]
  %v5765 = vld [vmem:[%s5760 + $0x100] sm:$0x1]
  %v5766 = vld [vmem:[%s5760 + $0x140] sm:$0x1]
  %v5767 = vld [vmem:[%s5760 + $0x180] sm:$0x1]
  %v5768 = vld [vmem:[%s5760 + $0x1c0] sm:$0x1]
  %v5769 = vld [vmem:[%s5760 + $0x1] sm:$0x1]
  %v5770 = vld [vmem:[%s5760 + $0x41] sm:$0x1]
  %v5771 = vld [vmem:[%s5760 + $0x81] sm:$0x1]
  %v5772 = vld [vmem:[%s5760 + $0xc1] sm:$0x1]
  %v5773 = vld [vmem:[%s5760 + $0x101] sm:$0x1]
  %v5774 = vld [vmem:[%s5760 + $0x141] sm:$0x1]
  %v5775 = vld [vmem:[%s5760 + $0x181] sm:$0x1]
  %v5776 = vld [vmem:[%s5760 + $0x1c1] sm:$0x1]
  %s5777 = scalar_lea.vmem [#allocation4], 40
  %v5778 = vld [vmem:[%s5777] sm:$0x1]
  %v5779 = vld [vmem:[%s5777 + $0x40] sm:$0x1]
  %v5780 = vld [vmem:[%s5777 + $0x80] sm:$0x1]
  %v5781 = vld [vmem:[%s5777 + $0xc0] sm:$0x1]
  %v5782 = vld [vmem:[%s5777 + $0x100] sm:$0x1]
  %v5783 = vld [vmem:[%s5777 + $0x140] sm:$0x1]
  %v5784 = vld [vmem:[%s5777 + $0x180] sm:$0x1]
  %v5785 = vld [vmem:[%s5777 + $0x1c0] sm:$0x1]
  %v5786 = vld [vmem:[%s5777 + $0x1] sm:$0x1]
  %v5787 = vld [vmem:[%s5777 + $0x41] sm:$0x1]
  %v5788 = vld [vmem:[%s5777 + $0x81] sm:$0x1]
  %v5789 = vld [vmem:[%s5777 + $0xc1] sm:$0x1]
  %v5790 = vld [vmem:[%s5777 + $0x101] sm:$0x1]
  %v5791 = vld [vmem:[%s5777 + $0x141] sm:$0x1]
  %v5792 = vld [vmem:[%s5777 + $0x181] sm:$0x1]
  %v5793 = vld [vmem:[%s5777 + $0x1c1] sm:$0x1]
  %v5794 = vmax.f32 %v5761, %v5769
  %v5795 = vmax.f32 %v5762, %v5770
  %v5796 = vmax.f32 %v5763, %v5771
  %v5797 = vmax.f32 %v5764, %v5772
  %v5798 = vmax.f32 %v5765, %v5773
  %v5799 = vmax.f32 %v5766, %v5774
  %v5800 = vmax.f32 %v5767, %v5775
  %v5801 = vmax.f32 %v5768, %v5776
  %v5802 = vmax.f32 %v5778, %v5786
  %v5803 = vmax.f32 %v5779, %v5787
  %v5804 = vmax.f32 %v5780, %v5788
  %v5805 = vmax.f32 %v5781, %v5789
  %v5806 = vmax.f32 %v5782, %v5790
  %v5807 = vmax.f32 %v5783, %v5791
  %v5808 = vmax.f32 %v5784, %v5792
  %v5809 = vmax.f32 %v5785, %v5793
  %v5810 = vmax.f32 %v5794, %v5802
  %v5811 = vmax.f32 %v5795, %v5803
  %v5812 = vmax.f32 %v5796, %v5804
  %v5813 = vmax.f32 %v5797, %v5805
  %v5814 = vmax.f32 %v5798, %v5806
  %v5815 = vmax.f32 %v5799, %v5807
  %v5816 = vmax.f32 %v5800, %v5808
  %v5817 = vmax.f32 %v5801, %v5809
  %v5818 = vld [vmem:[%s5760 + $0x2] sm:$0x1]
  %v5819 = vld [vmem:[%s5760 + $0x42] sm:$0x1]
  %v5820 = vld [vmem:[%s5760 + $0x82] sm:$0x1]
  %v5821 = vld [vmem:[%s5760 + $0xc2] sm:$0x1]
  %v5822 = vld [vmem:[%s5760 + $0x102] sm:$0x1]
  %v5823 = vld [vmem:[%s5760 + $0x142] sm:$0x1]
  %v5824 = vld [vmem:[%s5760 + $0x182] sm:$0x1]
  %v5825 = vld [vmem:[%s5760 + $0x1c2] sm:$0x1]
  %v5826 = vld [vmem:[%s5760 + $0x3] sm:$0x1]
  %v5827 = vld [vmem:[%s5760 + $0x43] sm:$0x1]
  %v5828 = vld [vmem:[%s5760 + $0x83] sm:$0x1]
  %v5829 = vld [vmem:[%s5760 + $0xc3] sm:$0x1]
  %v5830 = vld [vmem:[%s5760 + $0x103] sm:$0x1]
  %v5831 = vld [vmem:[%s5760 + $0x143] sm:$0x1]
  %v5832 = vld [vmem:[%s5760 + $0x183] sm:$0x1]
  %v5833 = vld [vmem:[%s5760 + $0x1c3] sm:$0x1]
  %v5834 = vld [vmem:[%s5777 + $0x2] sm:$0x1]
  %v5835 = vld [vmem:[%s5777 + $0x42] sm:$0x1]
  %v5836 = vld [vmem:[%s5777 + $0x82] sm:$0x1]
  %v5837 = vld [vmem:[%s5777 + $0xc2] sm:$0x1]
  %v5838 = vld [vmem:[%s5777 + $0x102] sm:$0x1]
  %v5839 = vld [vmem:[%s5777 + $0x142] sm:$0x1]
  %v5840 = vld [vmem:[%s5777 + $0x182] sm:$0x1]
  %v5841 = vld [vmem:[%s5777 + $0x1c2] sm:$0x1]
  %v5842 = vld [vmem:[%s5777 + $0x3] sm:$0x1]
  %v5843 = vld [vmem:[%s5777 + $0x43] sm:$0x1]
  %v5844 = vld [vmem:[%s5777 + $0x83] sm:$0x1]
  %v5845 = vld [vmem:[%s5777 + $0xc3] sm:$0x1]
  %v5846 = vld [vmem:[%s5777 + $0x103] sm:$0x1]
  %v5847 = vld [vmem:[%s5777 + $0x143] sm:$0x1]
  %v5848 = vld [vmem:[%s5777 + $0x183] sm:$0x1]
  %v5849 = vld [vmem:[%s5777 + $0x1c3] sm:$0x1]
  %v5850 = vmax.f32 %v5818, %v5826
  %v5851 = vmax.f32 %v5819, %v5827
  %v5852 = vmax.f32 %v5820, %v5828
  %v5853 = vmax.f32 %v5821, %v5829
  %v5854 = vmax.f32 %v5822, %v5830
  %v5855 = vmax.f32 %v5823, %v5831
  %v5856 = vmax.f32 %v5824, %v5832
  %v5857 = vmax.f32 %v5825, %v5833
  %v5858 = vmax.f32 %v5834, %v5842
  %v5859 = vmax.f32 %v5835, %v5843
  %v5860 = vmax.f32 %v5836, %v5844
  %v5861 = vmax.f32 %v5837, %v5845
  %v5862 = vmax.f32 %v5838, %v5846
  %v5863 = vmax.f32 %v5839, %v5847
  %v5864 = vmax.f32 %v5840, %v5848
  %v5865 = vmax.f32 %v5841, %v5849
  %v5866 = vmax.f32 %v5850, %v5858
  %v5867 = vmax.f32 %v5851, %v5859
  %v5868 = vmax.f32 %v5852, %v5860
  %v5869 = vmax.f32 %v5853, %v5861
  %v5870 = vmax.f32 %v5854, %v5862
  %v5871 = vmax.f32 %v5855, %v5863
  %v5872 = vmax.f32 %v5856, %v5864
  %v5873 = vmax.f32 %v5857, %v5865
  %v5874 = vld [vmem:[%s5760 + $0x4] sm:$0x1]
  %v5875 = vld [vmem:[%s5760 + $0x44] sm:$0x1]
  %v5876 = vld [vmem:[%s5760 + $0x84] sm:$0x1]
  %v5877 = vld [vmem:[%s5760 + $0xc4] sm:$0x1]
  %v5878 = vld [vmem:[%s5760 + $0x104] sm:$0x1]
  %v5879 = vld [vmem:[%s5760 + $0x144] sm:$0x1]
  %v5880 = vld [vmem:[%s5760 + $0x184] sm:$0x1]
  %v5881 = vld [vmem:[%s5760 + $0x1c4] sm:$0x1]
  %v5882 = vld [vmem:[%s5760 + $0x5] sm:$0x1]
  %v5883 = vld [vmem:[%s5760 + $0x45] sm:$0x1]
  %v5884 = vld [vmem:[%s5760 + $0x85] sm:$0x1]
  %v5885 = vld [vmem:[%s5760 + $0xc5] sm:$0x1]
  %v5886 = vld [vmem:[%s5760 + $0x105] sm:$0x1]
  %v5887 = vld [vmem:[%s5760 + $0x145] sm:$0x1]
  %v5888 = vld [vmem:[%s5760 + $0x185] sm:$0x1]
  %v5889 = vld [vmem:[%s5760 + $0x1c5] sm:$0x1]
  %v5890 = vld [vmem:[%s5777 + $0x4] sm:$0x1]
  %v5891 = vld [vmem:[%s5777 + $0x44] sm:$0x1]
  %v5892 = vld [vmem:[%s5777 + $0x84] sm:$0x1]
  %v5893 = vld [vmem:[%s5777 + $0xc4] sm:$0x1]
  %v5894 = vld [vmem:[%s5777 + $0x104] sm:$0x1]
  %v5895 = vld [vmem:[%s5777 + $0x144] sm:$0x1]
  %v5896 = vld [vmem:[%s5777 + $0x184] sm:$0x1]
  %v5897 = vld [vmem:[%s5777 + $0x1c4] sm:$0x1]
  %v5898 = vld [vmem:[%s5777 + $0x5] sm:$0x1]
  %v5899 = vld [vmem:[%s5777 + $0x45] sm:$0x1]
  %v5900 = vld [vmem:[%s5777 + $0x85] sm:$0x1]
  %v5901 = vld [vmem:[%s5777 + $0xc5] sm:$0x1]
  %v5902 = vld [vmem:[%s5777 + $0x105] sm:$0x1]
  %v5903 = vld [vmem:[%s5777 + $0x145] sm:$0x1]
  %v5904 = vld [vmem:[%s5777 + $0x185] sm:$0x1]
  %v5905 = vld [vmem:[%s5777 + $0x1c5] sm:$0x1]
  %v5906 = vmax.f32 %v5874, %v5882
  %v5907 = vmax.f32 %v5875, %v5883
  %v5908 = vmax.f32 %v5876, %v5884
  %v5909 = vmax.f32 %v5877, %v5885
  %v5910 = vmax.f32 %v5878, %v5886
  %v5911 = vmax.f32 %v5879, %v5887
  %v5912 = vmax.f32 %v5880, %v5888
  %v5913 = vmax.f32 %v5881, %v5889
  %v5914 = vmax.f32 %v5890, %v5898
  %v5915 = vmax.f32 %v5891, %v5899
  %v5916 = vmax.f32 %v5892, %v5900
  %v5917 = vmax.f32 %v5893, %v5901
  %v5918 = vmax.f32 %v5894, %v5902
  %v5919 = vmax.f32 %v5895, %v5903
  %v5920 = vmax.f32 %v5896, %v5904
  %v5921 = vmax.f32 %v5897, %v5905
  %v5922 = vmax.f32 %v5906, %v5914
  %v5923 = vmax.f32 %v5907, %v5915
  %v5924 = vmax.f32 %v5908, %v5916
  %v5925 = vmax.f32 %v5909, %v5917
  %v5926 = vmax.f32 %v5910, %v5918
  %v5927 = vmax.f32 %v5911, %v5919
  %v5928 = vmax.f32 %v5912, %v5920
  %v5929 = vmax.f32 %v5913, %v5921
  %v5930 = vld [vmem:[%s5760 + $0x6] sm:$0x1]
  %v5931 = vld [vmem:[%s5760 + $0x46] sm:$0x1]
  %v5932 = vld [vmem:[%s5760 + $0x86] sm:$0x1]
  %v5933 = vld [vmem:[%s5760 + $0xc6] sm:$0x1]
  %v5934 = vld [vmem:[%s5760 + $0x106] sm:$0x1]
  %v5935 = vld [vmem:[%s5760 + $0x146] sm:$0x1]
  %v5936 = vld [vmem:[%s5760 + $0x186] sm:$0x1]
  %v5937 = vld [vmem:[%s5760 + $0x1c6] sm:$0x1]
  %v5938 = vld [vmem:[%s5760 + $0x7] sm:$0x1]
  %v5939 = vld [vmem:[%s5760 + $0x47] sm:$0x1]
  %v5940 = vld [vmem:[%s5760 + $0x87] sm:$0x1]
  %v5941 = vld [vmem:[%s5760 + $0xc7] sm:$0x1]
  %v5942 = vld [vmem:[%s5760 + $0x107] sm:$0x1]
  %v5943 = vld [vmem:[%s5760 + $0x147] sm:$0x1]
  %v5944 = vld [vmem:[%s5760 + $0x187] sm:$0x1]
  %v5945 = vld [vmem:[%s5760 + $0x1c7] sm:$0x1]
  %v5946 = vld [vmem:[%s5777 + $0x6] sm:$0x1]
  %v5947 = vld [vmem:[%s5777 + $0x46] sm:$0x1]
  %v5948 = vld [vmem:[%s5777 + $0x86] sm:$0x1]
  %v5949 = vld [vmem:[%s5777 + $0xc6] sm:$0x1]
  %v5950 = vld [vmem:[%s5777 + $0x106] sm:$0x1]
  %v5951 = vld [vmem:[%s5777 + $0x146] sm:$0x1]
  %v5952 = vld [vmem:[%s5777 + $0x186] sm:$0x1]
  %v5953 = vld [vmem:[%s5777 + $0x1c6] sm:$0x1]
  %v5954 = vld [vmem:[%s5777 + $0x7] sm:$0x1]
  %v5955 = vld [vmem:[%s5777 + $0x47] sm:$0x1]
  %v5956 = vld [vmem:[%s5777 + $0x87] sm:$0x1]
  %v5957 = vld [vmem:[%s5777 + $0xc7] sm:$0x1]
  %v5958 = vld [vmem:[%s5777 + $0x107] sm:$0x1]
  %v5959 = vld [vmem:[%s5777 + $0x147] sm:$0x1]
  %v5960 = vld [vmem:[%s5777 + $0x187] sm:$0x1]
  %v5961 = vld [vmem:[%s5777 + $0x1c7] sm:$0x1]
  %v5962 = vmax.f32 %v5930, %v5938
  %v5963 = vmax.f32 %v5931, %v5939
  %v5964 = vmax.f32 %v5932, %v5940
  %v5965 = vmax.f32 %v5933, %v5941
  %v5966 = vmax.f32 %v5934, %v5942
  %v5967 = vmax.f32 %v5935, %v5943
  %v5968 = vmax.f32 %v5936, %v5944
  %v5969 = vmax.f32 %v5937, %v5945
  %v5970 = vmax.f32 %v5946, %v5954
  %v5971 = vmax.f32 %v5947, %v5955
  %v5972 = vmax.f32 %v5948, %v5956
  %v5973 = vmax.f32 %v5949, %v5957
  %v5974 = vmax.f32 %v5950, %v5958
  %v5975 = vmax.f32 %v5951, %v5959
  %v5976 = vmax.f32 %v5952, %v5960
  %v5977 = vmax.f32 %v5953, %v5961
  %v5978 = vmax.f32 %v5962, %v5970
  %v5979 = vmax.f32 %v5963, %v5971
  %v5980 = vmax.f32 %v5964, %v5972
  %v5981 = vmax.f32 %v5965, %v5973
  %v5982 = vmax.f32 %v5966, %v5974
  %v5983 = vmax.f32 %v5967, %v5975
  %v5984 = vmax.f32 %v5968, %v5976
  %v5985 = vmax.f32 %v5969, %v5977
  %s5986 = scalar_lea.vmem [#allocation4], 48
  %v5987 = vld [vmem:[%s5986] sm:$0x1]
  %v5988 = vld [vmem:[%s5986 + $0x40] sm:$0x1]
  %v5989 = vld [vmem:[%s5986 + $0x80] sm:$0x1]
  %v5990 = vld [vmem:[%s5986 + $0xc0] sm:$0x1]
  %v5991 = vld [vmem:[%s5986 + $0x100] sm:$0x1]
  %v5992 = vld [vmem:[%s5986 + $0x140] sm:$0x1]
  %v5993 = vld [vmem:[%s5986 + $0x180] sm:$0x1]
  %v5994 = vld [vmem:[%s5986 + $0x1c0] sm:$0x1]
  %v5995 = vld [vmem:[%s5986 + $0x1] sm:$0x1]
  %v5996 = vld [vmem:[%s5986 + $0x41] sm:$0x1]
  %v5997 = vld [vmem:[%s5986 + $0x81] sm:$0x1]
  %v5998 = vld [vmem:[%s5986 + $0xc1] sm:$0x1]
  %v5999 = vld [vmem:[%s5986 + $0x101] sm:$0x1]
  %v6000 = vld [vmem:[%s5986 + $0x141] sm:$0x1]
  %v6001 = vld [vmem:[%s5986 + $0x181] sm:$0x1]
  %v6002 = vld [vmem:[%s5986 + $0x1c1] sm:$0x1]
  %s6003 = scalar_lea.vmem [#allocation4], 56
  %v6004 = vld [vmem:[%s6003] sm:$0x1]
  %v6005 = vld [vmem:[%s6003 + $0x40] sm:$0x1]
  %v6006 = vld [vmem:[%s6003 + $0x80] sm:$0x1]
  %v6007 = vld [vmem:[%s6003 + $0xc0] sm:$0x1]
  %v6008 = vld [vmem:[%s6003 + $0x100] sm:$0x1]
  %v6009 = vld [vmem:[%s6003 + $0x140] sm:$0x1]
  %v6010 = vld [vmem:[%s6003 + $0x180] sm:$0x1]
  %v6011 = vld [vmem:[%s6003 + $0x1c0] sm:$0x1]
  %v6012 = vld [vmem:[%s6003 + $0x1] sm:$0x1]
  %v6013 = vld [vmem:[%s6003 + $0x41] sm:$0x1]
  %v6014 = vld [vmem:[%s6003 + $0x81] sm:$0x1]
  %v6015 = vld [vmem:[%s6003 + $0xc1] sm:$0x1]
  %v6016 = vld [vmem:[%s6003 + $0x101] sm:$0x1]
  %v6017 = vld [vmem:[%s6003 + $0x141] sm:$0x1]
  %v6018 = vld [vmem:[%s6003 + $0x181] sm:$0x1]
  %v6019 = vld [vmem:[%s6003 + $0x1c1] sm:$0x1]
  %v6020 = vmax.f32 %v5987, %v5995
  %v6021 = vmax.f32 %v5988, %v5996
  %v6022 = vmax.f32 %v5989, %v5997
  %v6023 = vmax.f32 %v5990, %v5998
  %v6024 = vmax.f32 %v5991, %v5999
  %v6025 = vmax.f32 %v5992, %v6000
  %v6026 = vmax.f32 %v5993, %v6001
  %v6027 = vmax.f32 %v5994, %v6002
  %v6028 = vmax.f32 %v6004, %v6012
  %v6029 = vmax.f32 %v6005, %v6013
  %v6030 = vmax.f32 %v6006, %v6014
  %v6031 = vmax.f32 %v6007, %v6015
  %v6032 = vmax.f32 %v6008, %v6016
  %v6033 = vmax.f32 %v6009, %v6017
  %v6034 = vmax.f32 %v6010, %v6018
  %v6035 = vmax.f32 %v6011, %v6019
  %v6036 = vmax.f32 %v6020, %v6028
  %v6037 = vmax.f32 %v6021, %v6029
  %v6038 = vmax.f32 %v6022, %v6030
  %v6039 = vmax.f32 %v6023, %v6031
  %v6040 = vmax.f32 %v6024, %v6032
  %v6041 = vmax.f32 %v6025, %v6033
  %v6042 = vmax.f32 %v6026, %v6034
  %v6043 = vmax.f32 %v6027, %v6035
  %v6044 = vld [vmem:[%s5986 + $0x2] sm:$0x1]
  %v6045 = vld [vmem:[%s5986 + $0x42] sm:$0x1]
  %v6046 = vld [vmem:[%s5986 + $0x82] sm:$0x1]
  %v6047 = vld [vmem:[%s5986 + $0xc2] sm:$0x1]
  %v6048 = vld [vmem:[%s5986 + $0x102] sm:$0x1]
  %v6049 = vld [vmem:[%s5986 + $0x142] sm:$0x1]
  %v6050 = vld [vmem:[%s5986 + $0x182] sm:$0x1]
  %v6051 = vld [vmem:[%s5986 + $0x1c2] sm:$0x1]
  %v6052 = vld [vmem:[%s5986 + $0x3] sm:$0x1]
  %v6053 = vld [vmem:[%s5986 + $0x43] sm:$0x1]
  %v6054 = vld [vmem:[%s5986 + $0x83] sm:$0x1]
  %v6055 = vld [vmem:[%s5986 + $0xc3] sm:$0x1]
  %v6056 = vld [vmem:[%s5986 + $0x103] sm:$0x1]
  %v6057 = vld [vmem:[%s5986 + $0x143] sm:$0x1]
  %v6058 = vld [vmem:[%s5986 + $0x183] sm:$0x1]
  %v6059 = vld [vmem:[%s5986 + $0x1c3] sm:$0x1]
  %v6060 = vld [vmem:[%s6003 + $0x2] sm:$0x1]
  %v6061 = vld [vmem:[%s6003 + $0x42] sm:$0x1]
  %v6062 = vld [vmem:[%s6003 + $0x82] sm:$0x1]
  %v6063 = vld [vmem:[%s6003 + $0xc2] sm:$0x1]
  %v6064 = vld [vmem:[%s6003 + $0x102] sm:$0x1]
  %v6065 = vld [vmem:[%s6003 + $0x142] sm:$0x1]
  %v6066 = vld [vmem:[%s6003 + $0x182] sm:$0x1]
  %v6067 = vld [vmem:[%s6003 + $0x1c2] sm:$0x1]
  %v6068 = vld [vmem:[%s6003 + $0x3] sm:$0x1]
  %v6069 = vld [vmem:[%s6003 + $0x43] sm:$0x1]
  %v6070 = vld [vmem:[%s6003 + $0x83] sm:$0x1]
  %v6071 = vld [vmem:[%s6003 + $0xc3] sm:$0x1]
  %v6072 = vld [vmem:[%s6003 + $0x103] sm:$0x1]
  %v6073 = vld [vmem:[%s6003 + $0x143] sm:$0x1]
  %v6074 = vld [vmem:[%s6003 + $0x183] sm:$0x1]
  %v6075 = vld [vmem:[%s6003 + $0x1c3] sm:$0x1]
  %v6076 = vmax.f32 %v6044, %v6052
  %v6077 = vmax.f32 %v6045, %v6053
  %v6078 = vmax.f32 %v6046, %v6054
  %v6079 = vmax.f32 %v6047, %v6055
  %v6080 = vmax.f32 %v6048, %v6056
  %v6081 = vmax.f32 %v6049, %v6057
  %v6082 = vmax.f32 %v6050, %v6058
  %v6083 = vmax.f32 %v6051, %v6059
  %v6084 = vmax.f32 %v6060, %v6068
  %v6085 = vmax.f32 %v6061, %v6069
  %v6086 = vmax.f32 %v6062, %v6070
  %v6087 = vmax.f32 %v6063, %v6071
  %v6088 = vmax.f32 %v6064, %v6072
  %v6089 = vmax.f32 %v6065, %v6073
  %v6090 = vmax.f32 %v6066, %v6074
  %v6091 = vmax.f32 %v6067, %v6075
  %v6092 = vmax.f32 %v6076, %v6084
  %v6093 = vmax.f32 %v6077, %v6085
  %v6094 = vmax.f32 %v6078, %v6086
  %v6095 = vmax.f32 %v6079, %v6087
  %v6096 = vmax.f32 %v6080, %v6088
  %v6097 = vmax.f32 %v6081, %v6089
  %v6098 = vmax.f32 %v6082, %v6090
  %v6099 = vmax.f32 %v6083, %v6091
  %v6100 = vld [vmem:[%s5986 + $0x4] sm:$0x1]
  %v6101 = vld [vmem:[%s5986 + $0x44] sm:$0x1]
  %v6102 = vld [vmem:[%s5986 + $0x84] sm:$0x1]
  %v6103 = vld [vmem:[%s5986 + $0xc4] sm:$0x1]
  %v6104 = vld [vmem:[%s5986 + $0x104] sm:$0x1]
  %v6105 = vld [vmem:[%s5986 + $0x144] sm:$0x1]
  %v6106 = vld [vmem:[%s5986 + $0x184] sm:$0x1]
  %v6107 = vld [vmem:[%s5986 + $0x1c4] sm:$0x1]
  %v6108 = vld [vmem:[%s5986 + $0x5] sm:$0x1]
  %v6109 = vld [vmem:[%s5986 + $0x45] sm:$0x1]
  %v6110 = vld [vmem:[%s5986 + $0x85] sm:$0x1]
  %v6111 = vld [vmem:[%s5986 + $0xc5] sm:$0x1]
  %v6112 = vld [vmem:[%s5986 + $0x105] sm:$0x1]
  %v6113 = vld [vmem:[%s5986 + $0x145] sm:$0x1]
  %v6114 = vld [vmem:[%s5986 + $0x185] sm:$0x1]
  %v6115 = vld [vmem:[%s5986 + $0x1c5] sm:$0x1]
  %v6116 = vld [vmem:[%s6003 + $0x4] sm:$0x1]
  %v6117 = vld [vmem:[%s6003 + $0x44] sm:$0x1]
  %v6118 = vld [vmem:[%s6003 + $0x84] sm:$0x1]
  %v6119 = vld [vmem:[%s6003 + $0xc4] sm:$0x1]
  %v6120 = vld [vmem:[%s6003 + $0x104] sm:$0x1]
  %v6121 = vld [vmem:[%s6003 + $0x144] sm:$0x1]
  %v6122 = vld [vmem:[%s6003 + $0x184] sm:$0x1]
  %v6123 = vld [vmem:[%s6003 + $0x1c4] sm:$0x1]
  %v6124 = vld [vmem:[%s6003 + $0x5] sm:$0x1]
  %v6125 = vld [vmem:[%s6003 + $0x45] sm:$0x1]
  %v6126 = vld [vmem:[%s6003 + $0x85] sm:$0x1]
  %v6127 = vld [vmem:[%s6003 + $0xc5] sm:$0x1]
  %v6128 = vld [vmem:[%s6003 + $0x105] sm:$0x1]
  %v6129 = vld [vmem:[%s6003 + $0x145] sm:$0x1]
  %v6130 = vld [vmem:[%s6003 + $0x185] sm:$0x1]
  %v6131 = vld [vmem:[%s6003 + $0x1c5] sm:$0x1]
  %v6132 = vmax.f32 %v6100, %v6108
  %v6133 = vmax.f32 %v6101, %v6109
  %v6134 = vmax.f32 %v6102, %v6110
  %v6135 = vmax.f32 %v6103, %v6111
  %v6136 = vmax.f32 %v6104, %v6112
  %v6137 = vmax.f32 %v6105, %v6113
  %v6138 = vmax.f32 %v6106, %v6114
  %v6139 = vmax.f32 %v6107, %v6115
  %v6140 = vmax.f32 %v6116, %v6124
  %v6141 = vmax.f32 %v6117, %v6125
  %v6142 = vmax.f32 %v6118, %v6126
  %v6143 = vmax.f32 %v6119, %v6127
  %v6144 = vmax.f32 %v6120, %v6128
  %v6145 = vmax.f32 %v6121, %v6129
  %v6146 = vmax.f32 %v6122, %v6130
  %v6147 = vmax.f32 %v6123, %v6131
  %v6148 = vmax.f32 %v6132, %v6140
  %v6149 = vmax.f32 %v6133, %v6141
  %v6150 = vmax.f32 %v6134, %v6142
  %v6151 = vmax.f32 %v6135, %v6143
  %v6152 = vmax.f32 %v6136, %v6144
  %v6153 = vmax.f32 %v6137, %v6145
  %v6154 = vmax.f32 %v6138, %v6146
  %v6155 = vmax.f32 %v6139, %v6147
  %v6156 = vld [vmem:[%s5986 + $0x6] sm:$0x1]
  %v6157 = vld [vmem:[%s5986 + $0x46] sm:$0x1]
  %v6158 = vld [vmem:[%s5986 + $0x86] sm:$0x1]
  %v6159 = vld [vmem:[%s5986 + $0xc6] sm:$0x1]
  %v6160 = vld [vmem:[%s5986 + $0x106] sm:$0x1]
  %v6161 = vld [vmem:[%s5986 + $0x146] sm:$0x1]
  %v6162 = vld [vmem:[%s5986 + $0x186] sm:$0x1]
  %v6163 = vld [vmem:[%s5986 + $0x1c6] sm:$0x1]
  %v6164 = vld [vmem:[%s5986 + $0x7] sm:$0x1]
  %v6165 = vld [vmem:[%s5986 + $0x47] sm:$0x1]
  %v6166 = vld [vmem:[%s5986 + $0x87] sm:$0x1]
  %v6167 = vld [vmem:[%s5986 + $0xc7] sm:$0x1]
  %v6168 = vld [vmem:[%s5986 + $0x107] sm:$0x1]
  %v6169 = vld [vmem:[%s5986 + $0x147] sm:$0x1]
  %v6170 = vld [vmem:[%s5986 + $0x187] sm:$0x1]
  %v6171 = vld [vmem:[%s5986 + $0x1c7] sm:$0x1]
  %v6172 = vld [vmem:[%s6003 + $0x6] sm:$0x1]
  %v6173 = vld [vmem:[%s6003 + $0x46] sm:$0x1]
  %v6174 = vld [vmem:[%s6003 + $0x86] sm:$0x1]
  %v6175 = vld [vmem:[%s6003 + $0xc6] sm:$0x1]
  %v6176 = vld [vmem:[%s6003 + $0x106] sm:$0x1]
  %v6177 = vld [vmem:[%s6003 + $0x146] sm:$0x1]
  %v6178 = vld [vmem:[%s6003 + $0x186] sm:$0x1]
  %v6179 = vld [vmem:[%s6003 + $0x1c6] sm:$0x1]
  %v6180 = vld [vmem:[%s6003 + $0x7] sm:$0x1]
  %v6181 = vld [vmem:[%s6003 + $0x47] sm:$0x1]
  %v6182 = vld [vmem:[%s6003 + $0x87] sm:$0x1]
  %v6183 = vld [vmem:[%s6003 + $0xc7] sm:$0x1]
  %v6184 = vld [vmem:[%s6003 + $0x107] sm:$0x1]
  %v6185 = vld [vmem:[%s6003 + $0x147] sm:$0x1]
  %v6186 = vld [vmem:[%s6003 + $0x187] sm:$0x1]
  %v6187 = vld [vmem:[%s6003 + $0x1c7] sm:$0x1]
  %v6188 = vmax.f32 %v6156, %v6164
  %v6189 = vmax.f32 %v6157, %v6165
  %v6190 = vmax.f32 %v6158, %v6166
  %v6191 = vmax.f32 %v6159, %v6167
  %v6192 = vmax.f32 %v6160, %v6168
  %v6193 = vmax.f32 %v6161, %v6169
  %v6194 = vmax.f32 %v6162, %v6170
  %v6195 = vmax.f32 %v6163, %v6171
  %v6196 = vmax.f32 %v6172, %v6180
  %v6197 = vmax.f32 %v6173, %v6181
  %v6198 = vmax.f32 %v6174, %v6182
  %v6199 = vmax.f32 %v6175, %v6183
  %v6200 = vmax.f32 %v6176, %v6184
  %v6201 = vmax.f32 %v6177, %v6185
  %v6202 = vmax.f32 %v6178, %v6186
  %v6203 = vmax.f32 %v6179, %v6187
  %v6204 = vmax.f32 %v6188, %v6196
  %v6205 = vmax.f32 %v6189, %v6197
  %v6206 = vmax.f32 %v6190, %v6198
  %v6207 = vmax.f32 %v6191, %v6199
  %v6208 = vmax.f32 %v6192, %v6200
  %v6209 = vmax.f32 %v6193, %v6201
  %v6210 = vmax.f32 %v6194, %v6202
  %v6211 = vmax.f32 %v6195, %v6203
  %v6220 = vrot.slane %v5359, 7
  %vm6221 = vcmask 1041409
  %v6222 = vsel %vm6221, %v6220, %v5358
  %v6223 = vrot.slane %v5360, 6
  %vm6224 = vcmask 1042434
  %v6225 = vsel %vm6224, %v6223, %v6222
  %v6226 = vrot.slane %v5361, 5
  %vm6227 = vcmask 1043459
  %v6228 = vsel %vm6227, %v6226, %v6225
  %v6229 = vrot.slane %v5362, 4
  %vm6230 = vcmask 1044484
  %v6231 = vsel %vm6230, %v6229, %v6228
  %v6232 = vrot.slane %v5363, 3
  %vm6233 = vcmask 1045509
  %v6234 = vsel %vm6233, %v6232, %v6231
  %v6235 = vrot.slane %v5364, 2
  %vm6236 = vcmask 1046534
  %v6237 = vsel %vm6236, %v6235, %v6234
  %v6238 = vrot.slane %v5365, 1
  %vm6239 = vcmask 1047559
  %v6240 = vsel %vm6239, %v6238, %v6237
  %v6250 = vrot.slane %v5415, 7
  %v6251 = vsel %vm6221, %v6250, %v5414
  %v6252 = vrot.slane %v5416, 6
  %v6253 = vsel %vm6224, %v6252, %v6251
  %v6254 = vrot.slane %v5417, 5
  %v6255 = vsel %vm6227, %v6254, %v6253
  %v6256 = vrot.slane %v5418, 4
  %v6257 = vsel %vm6230, %v6256, %v6255
  %v6258 = vrot.slane %v5419, 3
  %v6259 = vsel %vm6233, %v6258, %v6257
  %v6260 = vrot.slane %v5420, 2
  %v6261 = vsel %vm6236, %v6260, %v6259
  %v6262 = vrot.slane %v5421, 1
  %v6263 = vsel %vm6239, %v6262, %v6261
  %6264 = vrot.lane.b32.xlu0 %v6263, 64
  %v6265 = vpop.permute.xlu0 %6264
  %v6275 = vrot.slane %v5471, 7
  %v6276 = vsel %vm6221, %v6275, %v5470
  %v6277 = vrot.slane %v5472, 6
  %v6278 = vsel %vm6224, %v6277, %v6276
  %v6279 = vrot.slane %v5473, 5
  %v6280 = vsel %vm6227, %v6279, %v6278
  %v6281 = vrot.slane %v5474, 4
  %v6282 = vsel %vm6230, %v6281, %v6280
  %v6283 = vrot.slane %v5475, 3
  %v6284 = vsel %vm6233, %v6283, %v6282
  %v6285 = vrot.slane %v5476, 2
  %v6286 = vsel %vm6236, %v6285, %v6284
  %v6287 = vrot.slane %v5477, 1
  %v6288 = vsel %vm6239, %v6287, %v6286
  %v6298 = vrot.slane %v5527, 7
  %v6299 = vsel %vm6221, %v6298, %v5526
  %v6300 = vrot.slane %v5528, 6
  %v6301 = vsel %vm6224, %v6300, %v6299
  %v6302 = vrot.slane %v5529, 5
  %v6303 = vsel %vm6227, %v6302, %v6301
  %v6304 = vrot.slane %v5530, 4
  %v6305 = vsel %vm6230, %v6304, %v6303
  %v6306 = vrot.slane %v5531, 3
  %v6307 = vsel %vm6233, %v6306, %v6305
  %v6308 = vrot.slane %v5532, 2
  %v6309 = vsel %vm6236, %v6308, %v6307
  %v6310 = vrot.slane %v5533, 1
  %v6311 = vsel %vm6239, %v6310, %v6309
  %6312 = vrot.lane.b32.xlu0 %v6311, 64
  %v6313 = vpop.permute.xlu0 %6312
  %v6323 = vrot.slane %v5585, 7
  %v6324 = vsel %vm6221, %v6323, %v5584
  %v6325 = vrot.slane %v5586, 6
  %v6326 = vsel %vm6224, %v6325, %v6324
  %v6327 = vrot.slane %v5587, 5
  %v6328 = vsel %vm6227, %v6327, %v6326
  %v6329 = vrot.slane %v5588, 4
  %v6330 = vsel %vm6230, %v6329, %v6328
  %v6331 = vrot.slane %v5589, 3
  %v6332 = vsel %vm6233, %v6331, %v6330
  %v6333 = vrot.slane %v5590, 2
  %v6334 = vsel %vm6236, %v6333, %v6332
  %v6335 = vrot.slane %v5591, 1
  %v6336 = vsel %vm6239, %v6335, %v6334
  %v6346 = vrot.slane %v5641, 7
  %v6347 = vsel %vm6221, %v6346, %v5640
  %v6348 = vrot.slane %v5642, 6
  %v6349 = vsel %vm6224, %v6348, %v6347
  %v6350 = vrot.slane %v5643, 5
  %v6351 = vsel %vm6227, %v6350, %v6349
  %v6352 = vrot.slane %v5644, 4
  %v6353 = vsel %vm6230, %v6352, %v6351
  %v6354 = vrot.slane %v5645, 3
  %v6355 = vsel %vm6233, %v6354, %v6353
  %v6356 = vrot.slane %v5646, 2
  %v6357 = vsel %vm6236, %v6356, %v6355
  %v6358 = vrot.slane %v5647, 1
  %v6359 = vsel %vm6239, %v6358, %v6357
  %6360 = vrot.lane.b32.xlu0 %v6359, 64
  %v6361 = vpop.permute.xlu0 %6360
  %v6371 = vrot.slane %v5697, 7
  %v6372 = vsel %vm6221, %v6371, %v5696
  %v6373 = vrot.slane %v5698, 6
  %v6374 = vsel %vm6224, %v6373, %v6372
  %v6375 = vrot.slane %v5699, 5
  %v6376 = vsel %vm6227, %v6375, %v6374
  %v6377 = vrot.slane %v5700, 4
  %v6378 = vsel %vm6230, %v6377, %v6376
  %v6379 = vrot.slane %v5701, 3
  %v6380 = vsel %vm6233, %v6379, %v6378
  %v6381 = vrot.slane %v5702, 2
  %v6382 = vsel %vm6236, %v6381, %v6380
  %v6383 = vrot.slane %v5703, 1
  %v6384 = vsel %vm6239, %v6383, %v6382
  %v6394 = vrot.slane %v5753, 7
  %v6395 = vsel %vm6221, %v6394, %v5752
  %v6396 = vrot.slane %v5754, 6
  %v6397 = vsel %vm6224, %v6396, %v6395
  %v6398 = vrot.slane %v5755, 5
  %v6399 = vsel %vm6227, %v6398, %v6397
  %v6400 = vrot.slane %v5756, 4
  %v6401 = vsel %vm6230, %v6400, %v6399
  %v6402 = vrot.slane %v5757, 3
  %v6403 = vsel %vm6233, %v6402, %v6401
  %v6404 = vrot.slane %v5758, 2
  %v6405 = vsel %vm6236, %v6404, %v6403
  %v6406 = vrot.slane %v5759, 1
  %v6407 = vsel %vm6239, %v6406, %v6405
  %6408 = vrot.lane.b32.xlu0 %v6407, 64
  %v6409 = vpop.permute.xlu0 %6408
  %v6419 = vrot.slane %v5811, 7
  %v6420 = vsel %vm6221, %v6419, %v5810
  %v6421 = vrot.slane %v5812, 6
  %v6422 = vsel %vm6224, %v6421, %v6420
  %v6423 = vrot.slane %v5813, 5
  %v6424 = vsel %vm6227, %v6423, %v6422
  %v6425 = vrot.slane %v5814, 4
  %v6426 = vsel %vm6230, %v6425, %v6424
  %v6427 = vrot.slane %v5815, 3
  %v6428 = vsel %vm6233, %v6427, %v6426
  %v6429 = vrot.slane %v5816, 2
  %v6430 = vsel %vm6236, %v6429, %v6428
  %v6431 = vrot.slane %v5817, 1
  %v6432 = vsel %vm6239, %v6431, %v6430
  %v6442 = vrot.slane %v5867, 7
  %v6443 = vsel %vm6221, %v6442, %v5866
  %v6444 = vrot.slane %v5868, 6
  %v6445 = vsel %vm6224, %v6444, %v6443
  %v6446 = vrot.slane %v5869, 5
  %v6447 = vsel %vm6227, %v6446, %v6445
  %v6448 = vrot.slane %v5870, 4
  %v6449 = vsel %vm6230, %v6448, %v6447
  %v6450 = vrot.slane %v5871, 3
  %v6451 = vsel %vm6233, %v6450, %v6449
  %v6452 = vrot.slane %v5872, 2
  %v6453 = vsel %vm6236, %v6452, %v6451
  %v6454 = vrot.slane %v5873, 1
  %v6455 = vsel %vm6239, %v6454, %v6453
  %6456 = vrot.lane.b32.xlu0 %v6455, 64
  %v6457 = vpop.permute.xlu0 %6456
  %v6467 = vrot.slane %v5923, 7
  %v6468 = vsel %vm6221, %v6467, %v5922
  %v6469 = vrot.slane %v5924, 6
  %v6470 = vsel %vm6224, %v6469, %v6468
  %v6471 = vrot.slane %v5925, 5
  %v6472 = vsel %vm6227, %v6471, %v6470
  %v6473 = vrot.slane %v5926, 4
  %v6474 = vsel %vm6230, %v6473, %v6472
  %v6475 = vrot.slane %v5927, 3
  %v6476 = vsel %vm6233, %v6475, %v6474
  %v6477 = vrot.slane %v5928, 2
  %v6478 = vsel %vm6236, %v6477, %v6476
  %v6479 = vrot.slane %v5929, 1
  %v6480 = vsel %vm6239, %v6479, %v6478
  %v6490 = vrot.slane %v5979, 7
  %v6491 = vsel %vm6221, %v6490, %v5978
  %v6492 = vrot.slane %v5980, 6
  %v6493 = vsel %vm6224, %v6492, %v6491
  %v6494 = vrot.slane %v5981, 5
  %v6495 = vsel %vm6227, %v6494, %v6493
  %v6496 = vrot.slane %v5982, 4
  %v6497 = vsel %vm6230, %v6496, %v6495
  %v6498 = vrot.slane %v5983, 3
  %v6499 = vsel %vm6233, %v6498, %v6497
  %v6500 = vrot.slane %v5984, 2
  %v6501 = vsel %vm6236, %v6500, %v6499
  %v6502 = vrot.slane %v5985, 1
  %v6503 = vsel %vm6239, %v6502, %v6501
  %6504 = vrot.lane.b32.xlu0 %v6503, 64
  %v6505 = vpop.permute.xlu0 %6504
  %v6515 = vrot.slane %v6037, 7
  %v6516 = vsel %vm6221, %v6515, %v6036
  %v6517 = vrot.slane %v6038, 6
  %v6518 = vsel %vm6224, %v6517, %v6516
  %v6519 = vrot.slane %v6039, 5
  %v6520 = vsel %vm6227, %v6519, %v6518
  %v6521 = vrot.slane %v6040, 4
  %v6522 = vsel %vm6230, %v6521, %v6520
  %v6523 = vrot.slane %v6041, 3
  %v6524 = vsel %vm6233, %v6523, %v6522
  %v6525 = vrot.slane %v6042, 2
  %v6526 = vsel %vm6236, %v6525, %v6524
  %v6527 = vrot.slane %v6043, 1
  %v6528 = vsel %vm6239, %v6527, %v6526
  %v6538 = vrot.slane %v6093, 7
  %v6539 = vsel %vm6221, %v6538, %v6092
  %v6540 = vrot.slane %v6094, 6
  %v6541 = vsel %vm6224, %v6540, %v6539
  %v6542 = vrot.slane %v6095, 5
  %v6543 = vsel %vm6227, %v6542, %v6541
  %v6544 = vrot.slane %v6096, 4
  %v6545 = vsel %vm6230, %v6544, %v6543
  %v6546 = vrot.slane %v6097, 3
  %v6547 = vsel %vm6233, %v6546, %v6545
  %v6548 = vrot.slane %v6098, 2
  %v6549 = vsel %vm6236, %v6548, %v6547
  %v6550 = vrot.slane %v6099, 1
  %v6551 = vsel %vm6239, %v6550, %v6549
  %6552 = vrot.lane.b32.xlu0 %v6551, 64
  %v6553 = vpop.permute.xlu0 %6552
  %v6563 = vrot.slane %v6149, 7
  %v6564 = vsel %vm6221, %v6563, %v6148
  %v6565 = vrot.slane %v6150, 6
  %v6566 = vsel %vm6224, %v6565, %v6564
  %v6567 = vrot.slane %v6151, 5
  %v6568 = vsel %vm6227, %v6567, %v6566
  %v6569 = vrot.slane %v6152, 4
  %v6570 = vsel %vm6230, %v6569, %v6568
  %v6571 = vrot.slane %v6153, 3
  %v6572 = vsel %vm6233, %v6571, %v6570
  %v6573 = vrot.slane %v6154, 2
  %v6574 = vsel %vm6236, %v6573, %v6572
  %v6575 = vrot.slane %v6155, 1
  %v6576 = vsel %vm6239, %v6575, %v6574
  %v6586 = vrot.slane %v6205, 7
  %v6587 = vsel %vm6221, %v6586, %v6204
  %v6588 = vrot.slane %v6206, 6
  %v6589 = vsel %vm6224, %v6588, %v6587
  %v6590 = vrot.slane %v6207, 5
  %v6591 = vsel %vm6227, %v6590, %v6589
  %v6592 = vrot.slane %v6208, 4
  %v6593 = vsel %vm6230, %v6592, %v6591
  %v6594 = vrot.slane %v6209, 3
  %v6595 = vsel %vm6233, %v6594, %v6593
  %v6596 = vrot.slane %v6210, 2
  %v6597 = vsel %vm6236, %v6596, %v6595
  %v6598 = vrot.slane %v6211, 1
  %v6599 = vsel %vm6239, %v6598, %v6597
  %6600 = vrot.lane.b32.xlu0 %v6599, 64
  %v6601 = vpop.permute.xlu0 %6600
  %v6603 = vsel %vm5244, %v6240, %v6265
  %v6604 = vsel %vm5244, %v6288, %v6313
  %v6605 = vsel %vm5244, %v6336, %v6361
  %v6606 = vsel %vm5244, %v6384, %v6409
  %v6607 = vsel %vm5244, %v6432, %v6457
  %v6608 = vsel %vm5244, %v6480, %v6505
  %v6609 = vsel %vm5244, %v6528, %v6553
  %v6610 = vsel %vm5244, %v6576, %v6601
  %v6611 = vld [vmem:[%s5] sm:$0xff]
  %v6612 = vld [vmem:[%s5 + $0x8] sm:$0xff]
  %v6613 = vld [vmem:[%s5 + $0x10] sm:$0xff]
  %v6614 = vld [vmem:[%s5 + $0x18] sm:$0xff]
  %v6615 = vld [vmem:[%s5 + $0x20] sm:$0xff]
  %v6616 = vld [vmem:[%s5 + $0x28] sm:$0xff]
  %v6617 = vld [vmem:[%s5 + $0x30] sm:$0xff]
  %v6618 = vld [vmem:[%s5 + $0x38] sm:$0xff]
  %v6619 = vld [vmem:[%s5 + $0x40] sm:$0xff]
  %v6620 = vld [vmem:[%s5 + $0x48] sm:$0xff]
  %v6621 = vld [vmem:[%s5 + $0x50] sm:$0xff]
  %v6622 = vld [vmem:[%s5 + $0x58] sm:$0xff]
  %v6623 = vld [vmem:[%s5 + $0x60] sm:$0xff]
  %v6624 = vld [vmem:[%s5 + $0x68] sm:$0xff]
  %v6625 = vld [vmem:[%s5 + $0x70] sm:$0xff]
  %v6626 = vld [vmem:[%s5 + $0x78] sm:$0xff]
  %v6627 = vld [vmem:[%s5 + $0x80] sm:$0xff]
  %v6628 = vld [vmem:[%s5 + $0x88] sm:$0xff]
  %v6629 = vld [vmem:[%s5 + $0x90] sm:$0xff]
  %v6630 = vld [vmem:[%s5 + $0x98] sm:$0xff]
  %v6631 = vld [vmem:[%s5 + $0xa0] sm:$0xff]
  %v6632 = vld [vmem:[%s5 + $0xa8] sm:$0xff]
  %v6633 = vld [vmem:[%s5 + $0xb0] sm:$0xff]
  %v6634 = vld [vmem:[%s5 + $0xb8] sm:$0xff]
  %v6635 = vld [vmem:[%s5 + $0xc0] sm:$0xff]
  %v6636 = vld [vmem:[%s5 + $0xc8] sm:$0xff]
  %v6637 = vld [vmem:[%s5 + $0xd0] sm:$0xff]
  %v6638 = vld [vmem:[%s5 + $0xd8] sm:$0xff]
  %v6639 = vld [vmem:[%s5 + $0xe0] sm:$0xff]
  %v6640 = vld [vmem:[%s5 + $0xe8] sm:$0xff]
  %v6641 = vld [vmem:[%s5 + $0xf0] sm:$0xff]
  %v6642 = vld [vmem:[%s5 + $0xf8] sm:$0xff]
  %v6643 = vld [vmem:[%s5 + $0x100] sm:$0xff]
  %v6644 = vld [vmem:[%s5 + $0x108] sm:$0xff]
  %v6645 = vld [vmem:[%s5 + $0x110] sm:$0xff]
  %v6646 = vld [vmem:[%s5 + $0x118] sm:$0xff]
  %v6647 = vld [vmem:[%s5 + $0x120] sm:$0xff]
  %v6648 = vld [vmem:[%s5 + $0x128] sm:$0xff]
  %v6649 = vld [vmem:[%s5 + $0x130] sm:$0xff]
  %v6650 = vld [vmem:[%s5 + $0x138] sm:$0xff]
  %v6651 = vld [vmem:[%s5 + $0x140] sm:$0xff]
  %v6652 = vld [vmem:[%s5 + $0x148] sm:$0xff]
  %v6653 = vld [vmem:[%s5 + $0x150] sm:$0xff]
  %v6654 = vld [vmem:[%s5 + $0x158] sm:$0xff]
  %v6655 = vld [vmem:[%s5 + $0x160] sm:$0xff]
  %v6656 = vld [vmem:[%s5 + $0x168] sm:$0xff]
  %v6657 = vld [vmem:[%s5 + $0x170] sm:$0xff]
  %v6658 = vld [vmem:[%s5 + $0x178] sm:$0xff]
  %v6659 = vld [vmem:[%s5 + $0x180] sm:$0xff]
  %v6660 = vld [vmem:[%s5 + $0x188] sm:$0xff]
  %v6661 = vld [vmem:[%s5 + $0x190] sm:$0xff]
  %v6662 = vld [vmem:[%s5 + $0x198] sm:$0xff]
  %v6663 = vld [vmem:[%s5 + $0x1a0] sm:$0xff]
  %v6664 = vld [vmem:[%s5 + $0x1a8] sm:$0xff]
  %v6665 = vld [vmem:[%s5 + $0x1b0] sm:$0xff]
  %v6666 = vld [vmem:[%s5 + $0x1b8] sm:$0xff]
  %v6667 = vld [vmem:[%s5 + $0x1c0] sm:$0xff]
  %v6668 = vld [vmem:[%s5 + $0x1c8] sm:$0xff]
  %v6669 = vld [vmem:[%s5 + $0x1d0] sm:$0xff]
  %v6670 = vld [vmem:[%s5 + $0x1d8] sm:$0xff]
  %v6671 = vld [vmem:[%s5 + $0x1e0] sm:$0xff]
  %v6672 = vld [vmem:[%s5 + $0x1e8] sm:$0xff]
  %v6673 = vld [vmem:[%s5 + $0x1f0] sm:$0xff]
  %v6674 = vld [vmem:[%s5 + $0x1f8] sm:$0xff]
  %v6675 = vld [vmem:[%s5 + $0x200] sm:$0xff]
  %v6676 = vld [vmem:[%s5 + $0x208] sm:$0xff]
  %v6677 = vld [vmem:[%s5 + $0x210] sm:$0xff]
  %v6678 = vld [vmem:[%s5 + $0x218] sm:$0xff]
  %v6679 = vld [vmem:[%s5 + $0x220] sm:$0xff]
  %v6680 = vld [vmem:[%s5 + $0x228] sm:$0xff]
  %v6681 = vld [vmem:[%s5 + $0x230] sm:$0xff]
  %v6682 = vld [vmem:[%s5 + $0x238] sm:$0xff]
  %v6683 = vld [vmem:[%s5 + $0x240] sm:$0xff]
  %v6684 = vld [vmem:[%s5 + $0x248] sm:$0xff]
  %v6685 = vld [vmem:[%s5 + $0x250] sm:$0xff]
  %v6686 = vld [vmem:[%s5 + $0x258] sm:$0xff]
  %v6687 = vld [vmem:[%s5 + $0x260] sm:$0xff]
  %v6688 = vld [vmem:[%s5 + $0x268] sm:$0xff]
  %v6689 = vld [vmem:[%s5 + $0x270] sm:$0xff]
  %v6690 = vld [vmem:[%s5 + $0x278] sm:$0xff]
  %v6691 = vld [vmem:[%s5 + $0x280] sm:$0xff]
  %v6692 = vld [vmem:[%s5 + $0x288] sm:$0xff]
  %v6693 = vld [vmem:[%s5 + $0x290] sm:$0xff]
  %v6694 = vld [vmem:[%s5 + $0x298] sm:$0xff]
  %v6695 = vld [vmem:[%s5 + $0x2a0] sm:$0xff]
  %v6696 = vld [vmem:[%s5 + $0x2a8] sm:$0xff]
  %v6697 = vld [vmem:[%s5 + $0x2b0] sm:$0xff]
  %v6698 = vld [vmem:[%s5 + $0x2b8] sm:$0xff]
  %v6699 = vld [vmem:[%s5 + $0x2c0] sm:$0xff]
  %v6700 = vld [vmem:[%s5 + $0x2c8] sm:$0xff]
  %v6701 = vld [vmem:[%s5 + $0x2d0] sm:$0xff]
  %v6702 = vld [vmem:[%s5 + $0x2d8] sm:$0xff]
  %v6703 = vld [vmem:[%s5 + $0x2e0] sm:$0xff]
  %v6704 = vld [vmem:[%s5 + $0x2e8] sm:$0xff]
  %v6705 = vld [vmem:[%s5 + $0x2f0] sm:$0xff]
  %v6706 = vld [vmem:[%s5 + $0x2f8] sm:$0xff]
  %v6707 = vld [vmem:[%s5 + $0x300] sm:$0xff]
  %v6708 = vld [vmem:[%s5 + $0x308] sm:$0xff]
  %v6709 = vld [vmem:[%s5 + $0x310] sm:$0xff]
  %v6710 = vld [vmem:[%s5 + $0x318] sm:$0xff]
  %v6711 = vld [vmem:[%s5 + $0x320] sm:$0xff]
  %v6712 = vld [vmem:[%s5 + $0x328] sm:$0xff]
  %v6713 = vld [vmem:[%s5 + $0x330] sm:$0xff]
  %v6714 = vld [vmem:[%s5 + $0x338] sm:$0xff]
  %v6715 = vld [vmem:[%s5 + $0x340] sm:$0xff]
  %v6716 = vld [vmem:[%s5 + $0x348] sm:$0xff]
  %v6717 = vld [vmem:[%s5 + $0x350] sm:$0xff]
  %v6718 = vld [vmem:[%s5 + $0x358] sm:$0xff]
  %v6719 = vld [vmem:[%s5 + $0x360] sm:$0xff]
  %v6720 = vld [vmem:[%s5 + $0x368] sm:$0xff]
  %v6721 = vld [vmem:[%s5 + $0x370] sm:$0xff]
  %v6722 = vld [vmem:[%s5 + $0x378] sm:$0xff]
  %v6723 = vld [vmem:[%s5 + $0x380] sm:$0xff]
  %v6724 = vld [vmem:[%s5 + $0x388] sm:$0xff]
  %v6725 = vld [vmem:[%s5 + $0x390] sm:$0xff]
  %v6726 = vld [vmem:[%s5 + $0x398] sm:$0xff]
  %v6727 = vld [vmem:[%s5 + $0x3a0] sm:$0xff]
  %v6728 = vld [vmem:[%s5 + $0x3a8] sm:$0xff]
  %v6729 = vld [vmem:[%s5 + $0x3b0] sm:$0xff]
  %v6730 = vld [vmem:[%s5 + $0x3b8] sm:$0xff]
  %v6731 = vld [vmem:[%s5 + $0x3c0] sm:$0xff]
  %v6732 = vld [vmem:[%s5 + $0x3c8] sm:$0xff]
  %v6733 = vld [vmem:[%s5 + $0x3d0] sm:$0xff]
  %v6734 = vld [vmem:[%s5 + $0x3d8] sm:$0xff]
  %v6735 = vld [vmem:[%s5 + $0x3e0] sm:$0xff]
  %v6736 = vld [vmem:[%s5 + $0x3e8] sm:$0xff]
  %v6737 = vld [vmem:[%s5 + $0x3f0] sm:$0xff]
  %v6738 = vld [vmem:[%s5 + $0x3f8] sm:$0xff]
  %v6739 = vld [vmem:[%s6] sm:$0x1]
  %v6741 = vperm.slane %v6739, 0
  %6743 = vmatpush.msra.mxu0 %v6626
  %6744 = vmatpush.msra.mxu0 %v6625
  %6745 = vmatpush.msra.mxu0 %v6624
  %6746 = vmatpush.msra.mxu0 %v6623
  %6747 = vmatpush.msra.mxu0 %v6622
  %6748 = vmatpush.msra.mxu0 %v6621
  %6749 = vmatpush.msra.mxu0 %v6620
  %6750 = vmatpush.msra.mxu0 %v6619
  %6751 = vmatpush.msra.mxu0 %v6618
  %6752 = vmatpush.msra.mxu0 %v6617
  %6753 = vmatpush.msra.mxu0 %v6616
  %6754 = vmatpush.msra.mxu0 %v6615
  %6755 = vmatpush.msra.mxu0 %v6614
  %6756 = vmatpush.msra.mxu0 %v6613
  %6757 = vmatpush.msra.mxu0 %v6612
  %6758 = vmatpush.msra.mxu0 %v6611
  %6759 = vmatmul.f32.gmra.mxu0 %v6603
  %v6760 = vpop.f32.mrf.mxu0
  %v6761 = vadd.f32 %v6741, %v6760
  %6762 = vdwg.mxu0
  %6763 = vmatpush.msra.mxu0 %v6642
  %6764 = vmatpush.msra.mxu0 %v6641
  %6765 = vmatpush.msra.mxu0 %v6640
  %6766 = vmatpush.msra.mxu0 %v6639
  %6767 = vmatpush.msra.mxu0 %v6638
  %6768 = vmatpush.msra.mxu0 %v6637
  %6769 = vmatpush.msra.mxu0 %v6636
  %6770 = vmatpush.msra.mxu0 %v6635
  %6771 = vmatpush.msra.mxu0 %v6634
  %6772 = vmatpush.msra.mxu0 %v6633
  %6773 = vmatpush.msra.mxu0 %v6632
  %6774 = vmatpush.msra.mxu0 %v6631
  %6775 = vmatpush.msra.mxu0 %v6630
  %6776 = vmatpush.msra.mxu0 %v6629
  %6777 = vmatpush.msra.mxu0 %v6628
  %6778 = vmatpush.msra.mxu0 %v6627
  %6779 = vmatmul.f32.gmra.mxu0 %v6604
  %v6780 = vpop.f32.mrf.mxu0
  %v6781 = vadd.f32 %v6761, %v6780
  %6782 = vdwg.mxu0
  %6783 = vmatpush.msra.mxu0 %v6658
  %6784 = vmatpush.msra.mxu0 %v6657
  %6785 = vmatpush.msra.mxu0 %v6656
  %6786 = vmatpush.msra.mxu0 %v6655
  %6787 = vmatpush.msra.mxu0 %v6654
  %6788 = vmatpush.msra.mxu0 %v6653
  %6789 = vmatpush.msra.mxu0 %v6652
  %6790 = vmatpush.msra.mxu0 %v6651
  %6791 = vmatpush.msra.mxu0 %v6650
  %6792 = vmatpush.msra.mxu0 %v6649
  %6793 = vmatpush.msra.mxu0 %v6648
  %6794 = vmatpush.msra.mxu0 %v6647
  %6795 = vmatpush.msra.mxu0 %v6646
  %6796 = vmatpush.msra.mxu0 %v6645
  %6797 = vmatpush.msra.mxu0 %v6644
  %6798 = vmatpush.msra.mxu0 %v6643
  %6799 = vmatmul.f32.gmra.mxu0 %v6605
  %v6800 = vpop.f32.mrf.mxu0
  %v6801 = vadd.f32 %v6781, %v6800
  %6802 = vdwg.mxu0
  %6803 = vmatpush.msra.mxu0 %v6674
  %6804 = vmatpush.msra.mxu0 %v6673
  %6805 = vmatpush.msra.mxu0 %v6672
  %6806 = vmatpush.msra.mxu0 %v6671
  %6807 = vmatpush.msra.mxu0 %v6670
  %6808 = vmatpush.msra.mxu0 %v6669
  %6809 = vmatpush.msra.mxu0 %v6668
  %6810 = vmatpush.msra.mxu0 %v6667
  %6811 = vmatpush.msra.mxu0 %v6666
  %6812 = vmatpush.msra.mxu0 %v6665
  %6813 = vmatpush.msra.mxu0 %v6664
  %6814 = vmatpush.msra.mxu0 %v6663
  %6815 = vmatpush.msra.mxu0 %v6662
  %6816 = vmatpush.msra.mxu0 %v6661
  %6817 = vmatpush.msra.mxu0 %v6660
  %6818 = vmatpush.msra.mxu0 %v6659
  %6819 = vmatmul.f32.gmra.mxu0 %v6606
  %v6820 = vpop.f32.mrf.mxu0
  %v6821 = vadd.f32 %v6801, %v6820
  %6822 = vdwg.mxu0
  %6823 = vmatpush.msra.mxu0 %v6690
  %6824 = vmatpush.msra.mxu0 %v6689
  %6825 = vmatpush.msra.mxu0 %v6688
  %6826 = vmatpush.msra.mxu0 %v6687
  %6827 = vmatpush.msra.mxu0 %v6686
  %6828 = vmatpush.msra.mxu0 %v6685
  %6829 = vmatpush.msra.mxu0 %v6684
  %6830 = vmatpush.msra.mxu0 %v6683
  %6831 = vmatpush.msra.mxu0 %v6682
  %6832 = vmatpush.msra.mxu0 %v6681
  %6833 = vmatpush.msra.mxu0 %v6680
  %6834 = vmatpush.msra.mxu0 %v6679
  %6835 = vmatpush.msra.mxu0 %v6678
  %6836 = vmatpush.msra.mxu0 %v6677
  %6837 = vmatpush.msra.mxu0 %v6676
  %6838 = vmatpush.msra.mxu0 %v6675
  %6839 = vmatmul.f32.gmra.mxu0 %v6607
  %v6840 = vpop.f32.mrf.mxu0
  %v6841 = vadd.f32 %v6821, %v6840
  %6842 = vdwg.mxu0
  %6843 = vmatpush.msra.mxu0 %v6706
  %6844 = vmatpush.msra.mxu0 %v6705
  %6845 = vmatpush.msra.mxu0 %v6704
  %6846 = vmatpush.msra.mxu0 %v6703
  %6847 = vmatpush.msra.mxu0 %v6702
  %6848 = vmatpush.msra.mxu0 %v6701
  %6849 = vmatpush.msra.mxu0 %v6700
  %6850 = vmatpush.msra.mxu0 %v6699
  %6851 = vmatpush.msra.mxu0 %v6698
  %6852 = vmatpush.msra.mxu0 %v6697
  %6853 = vmatpush.msra.mxu0 %v6696
  %6854 = vmatpush.msra.mxu0 %v6695
  %6855 = vmatpush.msra.mxu0 %v6694
  %6856 = vmatpush.msra.mxu0 %v6693
  %6857 = vmatpush.msra.mxu0 %v6692
  %6858 = vmatpush.msra.mxu0 %v6691
  %6859 = vmatmul.f32.gmra.mxu0 %v6608
  %v6860 = vpop.f32.mrf.mxu0
  %v6861 = vadd.f32 %v6841, %v6860
  %6862 = vdwg.mxu0
  %6863 = vmatpush.msra.mxu0 %v6722
  %6864 = vmatpush.msra.mxu0 %v6721
  %6865 = vmatpush.msra.mxu0 %v6720
  %6866 = vmatpush.msra.mxu0 %v6719
  %6867 = vmatpush.msra.mxu0 %v6718
  %6868 = vmatpush.msra.mxu0 %v6717
  %6869 = vmatpush.msra.mxu0 %v6716
  %6870 = vmatpush.msra.mxu0 %v6715
  %6871 = vmatpush.msra.mxu0 %v6714
  %6872 = vmatpush.msra.mxu0 %v6713
  %6873 = vmatpush.msra.mxu0 %v6712
  %6874 = vmatpush.msra.mxu0 %v6711
  %6875 = vmatpush.msra.mxu0 %v6710
  %6876 = vmatpush.msra.mxu0 %v6709
  %6877 = vmatpush.msra.mxu0 %v6708
  %6878 = vmatpush.msra.mxu0 %v6707
  %6879 = vmatmul.f32.gmra.mxu0 %v6609
  %v6880 = vpop.f32.mrf.mxu0
  %v6881 = vadd.f32 %v6861, %v6880
  %6882 = vdwg.mxu0
  %6883 = vmatpush.msra.mxu0 %v6738
  %6884 = vmatpush.msra.mxu0 %v6737
  %6885 = vmatpush.msra.mxu0 %v6736
  %6886 = vmatpush.msra.mxu0 %v6735
  %6887 = vmatpush.msra.mxu0 %v6734
  %6888 = vmatpush.msra.mxu0 %v6733
  %6889 = vmatpush.msra.mxu0 %v6732
  %6890 = vmatpush.msra.mxu0 %v6731
  %6891 = vmatpush.msra.mxu0 %v6730
  %6892 = vmatpush.msra.mxu0 %v6729
  %6893 = vmatpush.msra.mxu0 %v6728
  %6894 = vmatpush.msra.mxu0 %v6727
  %6895 = vmatpush.msra.mxu0 %v6726
  %6896 = vmatpush.msra.mxu0 %v6725
  %6897 = vmatpush.msra.mxu0 %v6724
  %6898 = vmatpush.msra.mxu0 %v6723
  %6899 = vmatmul.f32.gmra.mxu0 %v6610
  %v6900 = vpop.f32.mrf.mxu0
  %v6901 = vadd.f32 %v6881, %v6900
  %6902 = vdwg.mxu0
  %v6903 = vmax.f32 %v6901, 0.0
  %v6904 = vld [vmem:[%s7] sm:$0xff]
  %v6905 = vld [vmem:[%s7 + $0x8] sm:$0xff]
  %v6906 = vld [vmem:[%s7 + $0x10] sm:$0xff]
  %v6907 = vld [vmem:[%s7 + $0x18] sm:$0xff]
  %v6908 = vld [vmem:[%s7 + $0x20] sm:$0xff]
  %v6909 = vld [vmem:[%s7 + $0x28] sm:$0xff]
  %v6910 = vld [vmem:[%s7 + $0x30] sm:$0xff]
  %v6911 = vld [vmem:[%s7 + $0x38] sm:$0xff]
  %v6912 = vld [vmem:[%s8] sm:$0x1]
  %v6914 = vperm.slane %v6912, 0
  %v6917 = vsel %vm5244, %v6903, 0
  %6919 = vmatpush.msra.mxu0 0.0
  %6920 = vmatpush.msra.mxu0 0.0
  %6921 = vmatpush.msra.mxu0 0.0
  %6922 = vmatpush.msra.mxu0 0.0
  %6923 = vmatpush.msra.mxu0 0.0
  %6924 = vmatpush.msra.mxu0 0.0
  %6925 = vmatpush.msra.mxu0 0.0
  %6926 = vmatpush.msra.mxu0 0.0
  %6927 = vmatpush.msra.mxu0 %v6911
  %6928 = vmatpush.msra.mxu0 %v6910
  %6929 = vmatpush.msra.mxu0 %v6909
  %6930 = vmatpush.msra.mxu0 %v6908
  %6931 = vmatpush.msra.mxu0 %v6907
  %6932 = vmatpush.msra.mxu0 %v6906
  %6933 = vmatpush.msra.mxu0 %v6905
  %6934 = vmatpush.msra.mxu0 %v6904
  %6935 = vmatmul.f32.gmra.mxu0 %v6917
  %v6936 = vpop.f32.mrf.mxu0
  %v6937 = vadd.f32 %v6914, %v6936
  %6938 = vdwg.mxu0
  %vm6939 = vcmask 15360
  %v6940 = vsel %vm6939, %v6937, -inf
  %6941 = vmax.xlane.f32.xlu0 %v6940
  %v6942 = vpop.xlane.xlu0 %6941
  %v6943 = vsub.f32 %v6937, %v6942
  %v6944 = vmul.f32 %v6943, 1.442695
  %v6945 = vpow.pop %v6944
  %v6946 = vsel %vm6939, %v6945, 0.0
  %6947 = vadd.xlane.f32.xlu0 %v6946
  %v6948 = vpop.xlane.xlu0 %6947
  %v6949 = vrcp.pop %v6948
  %v6950 = vmul.f32 %v6948, %v6949
  %v6951 = vsub.f32 1.0, %v6950
  %v6952 = vmul.f32 %v6949, %v6951
  %v6953 = vadd.f32 %v6949, %v6952
  %vm6954 = vweird.f32 %v6948
  %vm6955 = vweird.f32 %v6949
  %vm6956 = vmor %vm6954, %vm6955
  %v6957 = vsel %vm6956, %v6949, %v6953
  %v6958 = vand.u32 2147483647, %v6948
  %vm6959 = vcmp.eq.f32.partialorder %v6958, 8.507059e+37
  %v6960 = vand.u32 %v6948, 2147483648
  %v6961 = vor.u32 1.1754944e-38, %v6960
  %v6962 = vsel %vm6959, %v6961, %v6957
  %v6963 = vmul.f32 %v6945, %v6962
  %6964 = vst.msk [vmem:[%s9] sm:$0xff] %vm6939, %v6963
  // Predicated region
  $region38: #{facemasknet_forward.1} parent=0 // pred_check
    _
  $region39: #{facemasknet_forward.1} parent=0 // pred_check_branch
    %6966 = sbr.rel (0) target = $region41
  $region40: #{facemasknet_forward.1} parent=0 // pred_region
    _
  $region41: #{facemasknet_forward.1} parent=0 // pred_fallthru
    _
  // Predicated region
  $region42: #{facemasknet_forward.1} parent=0 // pred_check
    _
  $region43: #{facemasknet_forward.1} parent=0 // pred_check_branch
    %6968 = sbr.rel (0) target = $region45
  $region44: #{facemasknet_forward.1} parent=0 // pred_region
    _
  $region45: #{facemasknet_forward.1} parent=0 // pred_fallthru
    _

</llo_original>
